<compile_context>
chip_gen: v7x
topology: tpu7x:2x2x1
jax: 0.10.0
libtpu: 0.0.40
codegen_flags: <defaults>
</compile_context>

<pallas_src>
import functools
import math

import jax
import jax.numpy as jnp
from jax.experimental import pallas as pl
from jax.experimental.pallas import tpu as pltpu


# ---------------------------------------------------------------------------
# Kernel: one full transformer block per batch-tile grid step.
# ---------------------------------------------------------------------------
def transformer_block_kernel(x_ref,
                             ln1w_ref, ln1b_ref,
                             wqkv_ref, bqkv_ref,
                             wo_ref, bo_ref,
                             ln2w_ref, ln2b_ref,
                             win_ref, bin_ref,
                             wout_ref, bout_ref,
                             out_ref,
                             k_scr, v_scr,
                             *, n_heads, d_head, eps, kv_chunk, n_kv_chunks,
                             n_mlp_chunks, gelu_dtype):
    Bt, S, D = x_ref.shape
    HD = n_heads * d_head
    BH = Bt * n_heads

    x = x_ref[...].astype(jnp.float32)            # (Bt, S, D)
    x2 = x.reshape(Bt * S, D)                     # token-major 2-D view

    def layer_norm(h, w, b):
        h = h - jnp.mean(h, axis=-1, keepdims=True)
        var = jnp.mean(h * h, axis=-1, keepdims=True)
        return h * jax.lax.rsqrt(var + eps) * w + b

    # --- ln1 (f32 elementwise) ---
    nrm1 = layer_norm(x2, ln1w_ref[...], ln1b_ref[...])                  # (Bt*S, D)

    # --- fused QKV projection: bf16 operands, f32 accumulate ---
    qkv = jnp.dot(nrm1.astype(jnp.bfloat16), wqkv_ref[...],
                  preferred_element_type=jnp.float32) + bqkv_ref[...]    # (Bt*S, 3*HD)

    def to_heads(mat):
        # (Bt*S, HD) -> (Bt*H, S, dh): head becomes a batch dim of the attention matmuls.
        m4 = mat.reshape(Bt, S, n_heads, d_head)
        return jnp.swapaxes(m4, 1, 2).reshape(BH, S, d_head).astype(jnp.bfloat16)

    q = to_heads(qkv[:, :HD])              # 1/sqrt(d_head) already folded into W_Q / b_Q
    k_scr[...] = to_heads(qkv[:, HD:2 * HD])
    v_scr[...] = to_heads(qkv[:, 2 * HD:])

    # --- flash-style attention: online softmax over KV chunks ---
    row = jax.lax.broadcasted_iota(jnp.int32, (1, S, kv_chunk), 1)
    col = jax.lax.broadcasted_iota(jnp.int32, (1, S, kv_chunk), 2)

    def attn_body(ci, carry):
        m, l, acc = carry
        kv0 = pl.multiple_of(ci * kv_chunk, kv_chunk)
        kc = k_scr[:, pl.ds(kv0, kv_chunk), :]                           # (BH, Tk, dh)
        vc = v_scr[:, pl.ds(kv0, kv_chunk), :]
        s = jnp.einsum('bqd,bkd->bqk', q, kc,
                       preferred_element_type=jnp.float32)               # (BH, S, Tk)
        # causal mask (strictly-upper triangle -> IGNORE = -1e5, matching the PyTorch buffer)
        s = jnp.where((col + kv0) > row, -100000.0, s)
        m_new = jnp.maximum(m, jnp.max(s, axis=-1, keepdims=True))
        a = jnp.exp(m - m_new)
        p = jnp.exp(s - m_new)
        l_new = a * l + jnp.sum(p, axis=-1, keepdims=True)
        acc_new = a * acc + jnp.einsum('bqk,bkd->bqd', p.astype(jnp.bfloat16), vc,
                                       preferred_element_type=jnp.float32)
        return m_new, l_new, acc_new

    m0 = jnp.full((BH, S, 1), -1e30, jnp.float32)
    l0 = jnp.zeros((BH, S, 1), jnp.float32)
    acc0 = jnp.zeros((BH, S, d_head), jnp.float32)
    _, l_fin, acc = jax.lax.fori_loop(0, n_kv_chunks, attn_body, (m0, l0, acc0))

    z = acc * pl.reciprocal(l_fin, approx=True)                          # (BH, S, dh)
    z = jnp.swapaxes(z.reshape(Bt, n_heads, S, d_head), 1, 2).reshape(Bt * S, HD)

    # single output projection over the full HD contraction
    attn_out = jnp.dot(z.astype(jnp.bfloat16), wo_ref[...],
                       preferred_element_type=jnp.float32) + bo_ref[...]

    # --- residual + ln2 ---
    resid_mid = x2 + attn_out
    nrm2 = layer_norm(resid_mid, ln2w_ref[...], ln2b_ref[...]).astype(jnp.bfloat16)

    # --- MLP with gelu_new, tiled over d_mlp chunks (weights pre-split on leading axis) ---
    c0 = math.sqrt(2.0 / math.pi)

    def mlp_body(ci, acc_mlp):
        pre = jnp.dot(nrm2, win_ref[ci],
                      preferred_element_type=jnp.float32) + bin_ref[ci]  # (Bt*S, chunk)
        g = pre.astype(gelu_dtype)
        post = 0.5 * g * (1.0 + jnp.tanh(c0 * (g + 0.044715 * (g * g * g))))
        return acc_mlp + jnp.dot(post.astype(jnp.bfloat16), wout_ref[ci],
                                 preferred_element_type=jnp.float32)

    mlp_out = jax.lax.fori_loop(0, n_mlp_chunks, mlp_body,
                                jnp.zeros((Bt * S, D), jnp.float32)) + bout_ref[...]

    out_ref[...] = (resid_mid + mlp_out).reshape(Bt, S, D).astype(out_ref.dtype)


# ---------------------------------------------------------------------------
# Wrapper
# ---------------------------------------------------------------------------
def _largest_divisor(total, cap):
    cap = min(total, max(1, cap))
    for c in range(cap, 0, -1):
        if total % c == 0:
            return c
    return 1


def transformer_block(x, params, *, n_heads, d_head, eps=1e-5, block_b=None):
    B, S, D = x.shape
    HD = n_heads * d_head
    d_mlp = params["W_in"].shape[1]

    # --- chip-adaptive knobs ---
    vmem_cap = 128 * 1024 * 1024
    try:
        vmem_cap = int(pltpu.get_tpu_info().vmem_capacity_bytes)
    except Exception:
        pass
    kind = ""
    try:
        kind = jax.devices()[0].device_kind.lower()
    except Exception:
        pass
    big_vmem = vmem_cap >= 100 * 1024 * 1024            # v5e/v6e (128 MiB) vs v7x (64 MiB)
    vmem_limit = min(max(vmem_cap * 3 // 4, 32 * 1024 * 1024), 112 * 1024 * 1024)
    tokens_cap = 2048 if big_vmem else 1024
    # bf16 VPU/EUP exists on v6e/v7x; keep elementwise gelu in f32 on v5e and older chips.
    bf16_eltwise = not any(t in kind for t in ("v2", "v3", "v4", "v5"))
    gelu_dtype = jnp.bfloat16 if bf16_eltwise else jnp.float32

    # Pack batch elements per grid step, but keep >= 2 grid steps when B > 1 so the
    # "parallel" axis can shard across v7x's two TensorCores.
    if block_b is None:
        upper = B if B == 1 else max(1, B // 2)
        block_b = 1
        for cand in range(upper, 0, -1):
            if B % cand == 0 and cand * S <= tokens_cap:
                block_b = cand
                break
    assert B % block_b == 0

    kv_chunk = _largest_divisor(S, 512 if big_vmem else 256)
    n_kv_chunks = S // kv_chunk
    mlp_chunk = _largest_divisor(d_mlp, 1024)
    n_mlp_chunks = d_mlp // mlp_chunk

    wdt = jnp.bfloat16  # MXU-native operand dtype (f32 accumulation in-kernel)
    inv_sqrt_dh = 1.0 / math.sqrt(d_head)

    # Fuse Q/K/V weights into one (D, 3*HD) matrix; fold 1/sqrt(d_head) into the Q columns.
    wq = jnp.transpose(params["W_Q"], (1, 0, 2)).reshape(D, HD) * inv_sqrt_dh
    wk = jnp.transpose(params["W_K"], (1, 0, 2)).reshape(D, HD)
    wv = jnp.transpose(params["W_V"], (1, 0, 2)).reshape(D, HD)
    wqkv = jnp.concatenate([wq, wk, wv], axis=1).astype(wdt)              # (D, 3*HD)
    bqkv = jnp.concatenate([params["b_Q"].reshape(1, HD) * inv_sqrt_dh,
                            params["b_K"].reshape(1, HD),
                            params["b_V"].reshape(1, HD)], axis=1).astype(jnp.float32)

    wo = params["W_O"].reshape(HD, D).astype(wdt)
    bo = params["b_O"].reshape(1, D).astype(jnp.float32)
    ln1w = params["ln1_w"].reshape(1, D).astype(jnp.float32)
    ln1b = params["ln1_b"].reshape(1, D).astype(jnp.float32)
    ln2w = params["ln2_w"].reshape(1, D).astype(jnp.float32)
    ln2b = params["ln2_b"].reshape(1, D).astype(jnp.float32)
    # MLP weights pre-split into d_mlp chunks along a leading axis (indexed in-kernel).
    win3 = (params["W_in"].reshape(D, n_mlp_chunks, mlp_chunk)
            .transpose(1, 0, 2).astype(wdt))                              # (nc, D, chunk)
    bin3 = params["b_in"].reshape(n_mlp_chunks, 1, mlp_chunk).astype(jnp.float32)
    wout3 = params["W_out"].reshape(n_mlp_chunks, mlp_chunk, D).astype(wdt)
    bout = params["b_out"].reshape(1, D).astype(jnp.float32)

    kernel = functools.partial(
        transformer_block_kernel,
        n_heads=n_heads, d_head=d_head, eps=eps,
        kv_chunk=kv_chunk, n_kv_chunks=n_kv_chunks,
        n_mlp_chunks=n_mlp_chunks, gelu_dtype=gelu_dtype)

    args = (x, ln1w, ln1b, wqkv, bqkv, wo, bo, ln2w, ln2b, win3, bin3, wout3, bout)

    def build(single_buffer_weights):
        def wspec(shape):
            nd = len(shape)
            imap = lambda b, _nd=nd: (0,) * _nd                           # grid-invariant
            if single_buffer_weights:
                return pl.BlockSpec(shape, imap, pipeline_mode=pl.Buffered(1))
            return pl.BlockSpec(shape, imap)

        in_specs = [
            pl.BlockSpec((block_b, S, D), lambda b: (b, 0, 0)),           # x (batch tile)
            wspec((1, D)), wspec((1, D)),                                 # ln1 w, b
            wspec((D, 3 * HD)), wspec((1, 3 * HD)),                       # fused W_QKV, b
            wspec((HD, D)), wspec((1, D)),                                # W_O, b_O
            wspec((1, D)), wspec((1, D)),                                 # ln2 w, b
            wspec((n_mlp_chunks, D, mlp_chunk)),                          # W_in (chunked)
            wspec((n_mlp_chunks, 1, mlp_chunk)),                          # b_in (chunked)
            wspec((n_mlp_chunks, mlp_chunk, D)),                          # W_out (chunked)
            wspec((1, D)),                                                # b_out
        ]

        return pl.pallas_call(
            kernel,
            out_shape=jax.ShapeDtypeStruct((B, S, D), x.dtype),
            grid=(B // block_b,),
            in_specs=in_specs,
            out_specs=pl.BlockSpec((block_b, S, D), lambda b: (b, 0, 0)),
            scratch_shapes=[
                pltpu.VMEM((block_b * n_heads, S, d_head), jnp.bfloat16),  # K (per-head)
                pltpu.VMEM((block_b * n_heads, S, d_head), jnp.bfloat16),  # V (per-head)
            ],
            compiler_params=pltpu.CompilerParams(
                dimension_semantics=("parallel",),
                vmem_limit_bytes=vmem_limit),
        )

    try:
        return build(True)(*args)
    except Exception:
        # Fallback for jax versions that reject single-buffered weight specs.
        return build(False)(*args)


# ---------------------------------------------------------------------------
# Pure-JAX f32 reference (mirrors the PyTorch forward exactly)
# ---------------------------------------------------------------------------
def reference_block(x, p, *, n_heads, d_head, eps=1e-5):
    def ln(h, w, b):
        h = h - h.mean(-1, keepdims=True)
        s = jnp.sqrt((h * h).mean(-1, keepdims=True) + eps)
        return h / s * w + b

    n1 = ln(x, p["ln1_w"], p["ln1_b"])
    q = jnp.einsum("bsd,hdk->bshk", n1, p["W_Q"]) + p["b_Q"]
    k = jnp.einsum("bsd,hdk->bshk", n1, p["W_K"]) + p["b_K"]
    v = jnp.einsum("bsd,hdk->bshk", n1, p["W_V"]) + p["b_V"]
    scores = jnp.einsum("bqhk,bthk->bhqt", q, k) / math.sqrt(d_head)
    S = x.shape[1]
    mask = jnp.triu(jnp.ones((S, S), bool), 1)
    scores = jnp.where(mask, -100000.0, scores)
    pattern = jax.nn.softmax(scores, axis=-1)
    z = jnp.einsum("bhqt,bthk->bqhk", pattern, v)
    attn_out = jnp.einsum("bqhk,hkd->bqd", z, p["W_O"]) + p["b_O"]
    resid_mid = x + attn_out
    n2 = ln(resid_mid, p["ln2_w"], p["ln2_b"])
    pre = n2 @ p["W_in"] + p["b_in"]
    c = math.sqrt(2.0 / math.pi)
    post = 0.5 * pre * (1.0 + jnp.tanh(c * (pre + 0.044715 * pre ** 3)))
    mlp_out = post @ p["W_out"] + p["b_out"]
    return resid_mid + mlp_out


# ---------------------------------------------------------------------------
# Main
# ---------------------------------------------------------------------------
if __name__ == "__main__":
    # Small config consistent with the module (d_model = n_heads * d_head).
    d_model, n_heads, d_head, d_mlp = 128, 4, 32, 256
    batch, seq = 2, 16
    init_range = 0.02
    eps = 1e-5

    key = jax.random.PRNGKey(0)
    ks = jax.random.split(key, 8)

    params = {
        "ln1_w": jnp.ones((d_model,), jnp.float32),
        "ln1_b": jnp.zeros((d_model,), jnp.float32),
        "W_Q": init_range * jax.random.normal(ks[0], (n_heads, d_model, d_head), jnp.float32),
        "b_Q": jnp.zeros((n_heads, d_head), jnp.float32),
        "W_K": init_range * jax.random.normal(ks[1], (n_heads, d_model, d_head), jnp.float32),
        "b_K": jnp.zeros((n_heads, d_head), jnp.float32),
        "W_V": init_range * jax.random.normal(ks[2], (n_heads, d_model, d_head), jnp.float32),
        "b_V": jnp.zeros((n_heads, d_head), jnp.float32),
        "W_O": init_range * jax.random.normal(ks[3], (n_heads, d_head, d_model), jnp.float32),
        "b_O": jnp.zeros((d_model,), jnp.float32),
        "ln2_w": jnp.ones((d_model,), jnp.float32),
        "ln2_b": jnp.zeros((d_model,), jnp.float32),
        "W_in": init_range * jax.random.normal(ks[4], (d_model, d_mlp), jnp.float32),
        "b_in": jnp.zeros((d_mlp,), jnp.float32),
        "W_out": init_range * jax.random.normal(ks[5], (d_mlp, d_model), jnp.float32),
        "b_out": jnp.zeros((d_model,), jnp.float32),
    }

    x = jax.random.normal(ks[6], (batch, seq, d_model), jnp.float32)

    out = transformer_block(x, params, n_heads=n_heads, d_head=d_head, eps=eps)
    out = jax.block_until_ready(out)

    ref = reference_block(x, params, n_heads=n_heads, d_head=d_head, eps=eps)
    ref = jax.block_until_ready(ref)

    assert out.shape == (batch, seq, d_model)
    # bf16 MXU operands + approximate reciprocal -> compare against the f32 reference
    # with a correspondingly loosened tolerance.
    max_err = float(jnp.max(jnp.abs(out - ref)))
    assert jnp.allclose(out, ref, rtol=2e-2, atol=2e-2), max_err

    print("KERNEL_OK")
</pallas_src>

<mosaic_0001>
module attributes {stable_mosaic.version = 11 : i64} {
  func.func @transformer_block_kernel(%arg0: i32, %arg1: memref<1x16x128xf32, #tpu.memory_space<vmem>>, %arg2: memref<1x128xf32, #tpu.memory_space<vmem>>, %arg3: memref<1x128xf32, #tpu.memory_space<vmem>>, %arg4: memref<128x384xbf16, #tpu.memory_space<vmem>>, %arg5: memref<1x384xf32, #tpu.memory_space<vmem>>, %arg6: memref<128x128xbf16, #tpu.memory_space<vmem>>, %arg7: memref<1x128xf32, #tpu.memory_space<vmem>>, %arg8: memref<1x128xf32, #tpu.memory_space<vmem>>, %arg9: memref<1x128xf32, #tpu.memory_space<vmem>>, %arg10: memref<1x128x256xbf16, #tpu.memory_space<vmem>>, %arg11: memref<1x1x256xf32, #tpu.memory_space<vmem>>, %arg12: memref<1x256x128xbf16, #tpu.memory_space<vmem>>, %arg13: memref<1x128xf32, #tpu.memory_space<vmem>>, %arg14: memref<1x16x128xf32, #tpu.memory_space<vmem>>, %arg15: memref<4x16x32xbf16, #tpu.memory_space<vmem>>, %arg16: memref<4x16x32xbf16, #tpu.memory_space<vmem>>) attributes {dimension_semantics = [#tpu.dimension_semantics<parallel>], iteration_bounds = array<i64: 2>, scalar_prefetch = 0 : i64, scratch_operands = 2 : i64, tpu.core_type = #tpu.core_type<tc>, window_params = [{transform_indices = @transform_0, window_bounds = array<i64: 1, 16, 128>}, {pipeline_mode = #tpu.pipeline_mode<synchronous>, transform_indices = @transform_1, window_bounds = array<i64: 1, 128>}, {pipeline_mode = #tpu.pipeline_mode<synchronous>, transform_indices = @transform_2, window_bounds = array<i64: 1, 128>}, {pipeline_mode = #tpu.pipeline_mode<synchronous>, transform_indices = @transform_3, window_bounds = array<i64: 128, 384>}, {pipeline_mode = #tpu.pipeline_mode<synchronous>, transform_indices = @transform_4, window_bounds = array<i64: 1, 384>}, {pipeline_mode = #tpu.pipeline_mode<synchronous>, transform_indices = @transform_5, window_bounds = array<i64: 128, 128>}, {pipeline_mode = #tpu.pipeline_mode<synchronous>, transform_indices = @transform_6, window_bounds = array<i64: 1, 128>}, {pipeline_mode = #tpu.pipeline_mode<synchronous>, transform_indices = @transform_7, window_bounds = array<i64: 1, 128>}, {pipeline_mode = #tpu.pipeline_mode<synchronous>, transform_indices = @transform_8, window_bounds = array<i64: 1, 128>}, {pipeline_mode = #tpu.pipeline_mode<synchronous>, transform_indices = @transform_9, window_bounds = array<i64: 1, 128, 256>}, {pipeline_mode = #tpu.pipeline_mode<synchronous>, transform_indices = @transform_10, window_bounds = array<i64: 1, 1, 256>}, {pipeline_mode = #tpu.pipeline_mode<synchronous>, transform_indices = @transform_11, window_bounds = array<i64: 1, 256, 128>}, {pipeline_mode = #tpu.pipeline_mode<synchronous>, transform_indices = @transform_12, window_bounds = array<i64: 1, 128>}, {transform_indices = @transform_13, window_bounds = array<i64: 1, 16, 128>}]} {
    %c0 = arith.constant 0 : index
    %c0_0 = arith.constant 0 : index
    %c0_1 = arith.constant 0 : index
    %0 = vector.load %arg1[%c0, %c0_0, %c0_1] : memref<1x16x128xf32, #tpu.memory_space<vmem>>, vector<1x16x128xf32>
    %1 = vector.shape_cast %0 : vector<1x16x128xf32> to vector<16x128xf32>
    %c0_2 = arith.constant 0 : index
    %c0_3 = arith.constant 0 : index
    %2 = vector.load %arg2[%c0_2, %c0_3] : memref<1x128xf32, #tpu.memory_space<vmem>>, vector<1x128xf32>
    %c0_4 = arith.constant 0 : index
    %c0_5 = arith.constant 0 : index
    %3 = vector.load %arg3[%c0_4, %c0_5] : memref<1x128xf32, #tpu.memory_space<vmem>>, vector<1x128xf32>
    %cst = arith.constant dense<0.000000e+00> : vector<16xf32>
    %4 = vector.multi_reduction <add>, %1, %cst [1] : vector<16x128xf32> to vector<16xf32>
    %5 = vector.shape_cast %4 : vector<16xf32> to vector<16x1xf32>
    %cst_6 = arith.constant 1.280000e+02 : f32
    %6 = vector.broadcast %cst_6 : f32 to vector<16x1xf32>
    %7 = arith.divf %5, %6 : vector<16x1xf32>
    %8 = vector.broadcast %7 : vector<16x1xf32> to vector<16x128xf32>
    %9 = arith.subf %1, %8 : vector<16x128xf32>
    %10 = arith.mulf %9, %9 : vector<16x128xf32>
    %cst_7 = arith.constant dense<0.000000e+00> : vector<16xf32>
    %11 = vector.multi_reduction <add>, %10, %cst_7 [1] : vector<16x128xf32> to vector<16xf32>
    %12 = vector.shape_cast %11 : vector<16xf32> to vector<16x1xf32>
    %cst_8 = arith.constant 1.280000e+02 : f32
    %13 = vector.broadcast %cst_8 : f32 to vector<16x1xf32>
    %14 = arith.divf %12, %13 : vector<16x1xf32>
    %cst_9 = arith.constant 9.99999974E-6 : f32
    %15 = vector.broadcast %cst_9 : f32 to vector<16x1xf32>
    %16 = arith.addf %14, %15 : vector<16x1xf32>
    %17 = math.rsqrt %16 : vector<16x1xf32>
    %18 = vector.broadcast %17 : vector<16x1xf32> to vector<16x128xf32>
    %19 = arith.mulf %9, %18 : vector<16x128xf32>
    %20 = vector.broadcast %2 : vector<1x128xf32> to vector<16x128xf32>
    %21 = arith.mulf %19, %20 : vector<16x128xf32>
    %22 = vector.broadcast %3 : vector<1x128xf32> to vector<16x128xf32>
    %23 = arith.addf %21, %22 : vector<16x128xf32>
    %24 = arith.truncf %23 : vector<16x128xf32> to vector<16x128xbf16>
    %c0_10 = arith.constant 0 : index
    %c0_11 = arith.constant 0 : index
    %25 = vector.load %arg4[%c0_10, %c0_11] : memref<128x384xbf16, #tpu.memory_space<vmem>>, vector<128x384xbf16>
    %cst_12 = arith.constant dense<0.000000e+00> : vector<16x384xf32>
    %26 = tpu.matmul %24, %25, %cst_12 {dimension_numbers = #tpu.dot_dimension_numbers<[1], [0], [0], [1], [0, 0, 1, 1], [], []>} : vector<16x128xbf16>, vector<128x384xbf16>, vector<16x384xf32> -> vector<16x384xf32>
    %c0_13 = arith.constant 0 : index
    %c0_14 = arith.constant 0 : index
    %27 = vector.load %arg5[%c0_13, %c0_14] : memref<1x384xf32, #tpu.memory_space<vmem>>, vector<1x384xf32>
    %28 = vector.broadcast %27 : vector<1x384xf32> to vector<16x384xf32>
    %29 = arith.addf %26, %28 : vector<16x384xf32>
    %30 = vector.extract_strided_slice %29 {offsets = [0, 0], sizes = [16, 128], strides = [1, 1]} : vector<16x384xf32> to vector<16x128xf32>
    %31 = vector.shape_cast %30 : vector<16x128xf32> to vector<1x16x4x32xf32>
    %32 = tpu.transpose %31, [0, 2, 1, 3] : vector<1x16x4x32xf32> -> vector<1x4x16x32xf32>
    %33 = vector.shape_cast %32 : vector<1x4x16x32xf32> to vector<4x16x32xf32>
    %34 = arith.truncf %33 : vector<4x16x32xf32> to vector<4x16x32xbf16>
    %35 = vector.extract_strided_slice %29 {offsets = [0, 128], sizes = [16, 128], strides = [1, 1]} : vector<16x384xf32> to vector<16x128xf32>
    %36 = vector.shape_cast %35 : vector<16x128xf32> to vector<1x16x4x32xf32>
    %37 = tpu.transpose %36, [0, 2, 1, 3] : vector<1x16x4x32xf32> -> vector<1x4x16x32xf32>
    %38 = vector.shape_cast %37 : vector<1x4x16x32xf32> to vector<4x16x32xf32>
    %39 = arith.truncf %38 : vector<4x16x32xf32> to vector<4x16x32xbf16>
    %c0_15 = arith.constant 0 : index
    %c0_16 = arith.constant 0 : index
    %c0_17 = arith.constant 0 : index
    %40 = vector.load %arg15[%c0_15, %c0_16, %c0_17] : memref<4x16x32xbf16, #tpu.memory_space<vmem>>, vector<4x16x32xbf16>
    tpu.vector_store %arg15[%c0_15, %c0_16, %c0_17], %39 {strides = array<i32>} : memref<4x16x32xbf16, #tpu.memory_space<vmem>>, vector<4x16x32xbf16>,
    %41 = vector.extract_strided_slice %29 {offsets = [0, 256], sizes = [16, 128], strides = [1, 1]} : vector<16x384xf32> to vector<16x128xf32>
    %42 = vector.shape_cast %41 : vector<16x128xf32> to vector<1x16x4x32xf32>
    %43 = tpu.transpose %42, [0, 2, 1, 3] : vector<1x16x4x32xf32> -> vector<1x4x16x32xf32>
    %44 = vector.shape_cast %43 : vector<1x4x16x32xf32> to vector<4x16x32xf32>
    %45 = arith.truncf %44 : vector<4x16x32xf32> to vector<4x16x32xbf16>
    %c0_18 = arith.constant 0 : index
    %c0_19 = arith.constant 0 : index
    %c0_20 = arith.constant 0 : index
    %46 = vector.load %arg16[%c0_18, %c0_19, %c0_20] : memref<4x16x32xbf16, #tpu.memory_space<vmem>>, vector<4x16x32xbf16>
    tpu.vector_store %arg16[%c0_18, %c0_19, %c0_20], %45 {strides = array<i32>} : memref<4x16x32xbf16, #tpu.memory_space<vmem>>, vector<4x16x32xbf16>,
    %47 = tpu.iota {dimensions = array<i32: 1>} : vector<1x16x16xi32>
    %48 = tpu.iota {dimensions = array<i32: 2>} : vector<1x16x16xi32>
    %cst_21 = arith.constant -1.000000e+30 : f32
    %49 = vector.broadcast %cst_21 : f32 to vector<4x16x1xf32>
    %cst_22 = arith.constant 0.000000e+00 : f32
    %50 = vector.broadcast %cst_22 : f32 to vector<4x16x1xf32>
    %cst_23 = arith.constant 0.000000e+00 : f32
    %51 = vector.broadcast %cst_23 : f32 to vector<4x16x32xf32>
    %c0_i32 = arith.constant 0 : i32
    %c16_i32 = arith.constant 16 : i32
    %52 = arith.muli %c0_i32, %c16_i32 : i32
    %53 = tpu.assume_multiple %52, 16 : i32
    %c0_24 = arith.constant 0 : index
    %54 = arith.index_cast %53 : i32 to index
    %c0_25 = arith.constant 0 : index
    %55 = vector.load %arg15[%c0_24, %54, %c0_25] : memref<4x16x32xbf16, #tpu.memory_space<vmem>>, vector<4x16x32xbf16>
    %c0_26 = arith.constant 0 : index
    %56 = arith.index_cast %53 : i32 to index
    %c0_27 = arith.constant 0 : index
    %57 = vector.load %arg16[%c0_26, %56, %c0_27] : memref<4x16x32xbf16, #tpu.memory_space<vmem>>, vector<4x16x32xbf16>
    "tpu.trace_start"() <{level = 10 : i32, message = "bqd,bkd->bqk"}> : () -> ()
    %cst_28 = arith.constant dense<0.000000e+00> : vector<4x16x16xf32>
    %58 = tpu.matmul %34, %55, %cst_28 {dimension_numbers = #tpu.dot_dimension_numbers<[2], [2], [1], [1], [0, 0, 0, 1, 1, 1], [0], [0]>} : vector<4x16x32xbf16>, vector<4x16x32xbf16>, vector<4x16x16xf32> -> vector<4x16x16xf32>
    "tpu.trace_stop"() : () -> ()
    %59 = vector.broadcast %53 : i32 to vector<1x16x16xi32>
    %60 = arith.addi %48, %59 : vector<1x16x16xi32>
    %61 = arith.cmpi sgt, %60, %47 : vector<1x16x16xi32>
    %cst_29 = arith.constant -1.000000e+05 : f32
    %62 = vector.shape_cast %61 : vector<1x16x16xi1> to vector<1x16x16xi1>
    %63 = vector.broadcast %62 : vector<1x16x16xi1> to vector<4x16x16xi1>
    %64 = vector.broadcast %cst_29 : f32 to vector<4x16x16xf32>
    %65 = arith.select %63, %64, %58 : vector<4x16x16xi1>, vector<4x16x16xf32>
    %cst_30 = arith.constant dense<0xFF800000> : vector<4x16xf32>
    %66 = vector.multi_reduction <maximumf>, %65, %cst_30 [2] : vector<4x16x16xf32> to vector<4x16xf32>
    %67 = vector.shape_cast %66 : vector<4x16xf32> to vector<4x16x1xf32>
    %68 = arith.maximumf %49, %67 : vector<4x16x1xf32>
    %69 = arith.subf %49, %68 : vector<4x16x1xf32>
    %70 = math.exp %69 : vector<4x16x1xf32>
    %71 = vector.broadcast %68 : vector<4x16x1xf32> to vector<4x16x16xf32>
    %72 = arith.subf %65, %71 : vector<4x16x16xf32>
    %73 = math.exp %72 : vector<4x16x16xf32>
    %74 = arith.mulf %70, %50 : vector<4x16x1xf32>
    %cst_31 = arith.constant dense<0.000000e+00> : vector<4x16xf32>
    %75 = vector.multi_reduction <add>, %73, %cst_31 [2] : vector<4x16x16xf32> to vector<4x16xf32>
    %76 = vector.shape_cast %75 : vector<4x16xf32> to vector<4x16x1xf32>
    %77 = arith.addf %74, %76 : vector<4x16x1xf32>
    %78 = vector.broadcast %70 : vector<4x16x1xf32> to vector<4x16x32xf32>
    %79 = arith.mulf %78, %51 : vector<4x16x32xf32>
    %80 = arith.truncf %73 : vector<4x16x16xf32> to vector<4x16x16xbf16>
    "tpu.trace_start"() <{level = 10 : i32, message = "bqk,bkd->bqd"}> : () -> ()
    %cst_32 = arith.constant dense<0.000000e+00> : vector<4x16x32xf32>
    %81 = tpu.matmul %80, %57, %cst_32 {dimension_numbers = #tpu.dot_dimension_numbers<[2], [1], [1], [2], [0, 0, 0, 1, 1, 2], [0], [0]>} : vector<4x16x16xbf16>, vector<4x16x32xbf16>, vector<4x16x32xf32> -> vector<4x16x32xf32>
    "tpu.trace_stop"() : () -> ()
    %82 = arith.addf %79, %81 : vector<4x16x32xf32>
    %c1_i32 = arith.constant 1 : i32
    %83 = tpu.reciprocal %77 {approx = true} : vector<4x16x1xf32> -> vector<4x16x1xf32>
    %84 = vector.broadcast %83 : vector<4x16x1xf32> to vector<4x16x32xf32>
    %85 = arith.mulf %82, %84 : vector<4x16x32xf32>
    %86 = vector.shape_cast %85 : vector<4x16x32xf32> to vector<1x4x16x32xf32>
    %87 = tpu.transpose %86, [0, 2, 1, 3] : vector<1x4x16x32xf32> -> vector<1x16x4x32xf32>
    %88 = vector.shape_cast %87 : vector<1x16x4x32xf32> to vector<16x128xf32>
    %89 = arith.truncf %88 : vector<16x128xf32> to vector<16x128xbf16>
    %c0_33 = arith.constant 0 : index
    %c0_34 = arith.constant 0 : index
    %90 = vector.load %arg6[%c0_33, %c0_34] : memref<128x128xbf16, #tpu.memory_space<vmem>>, vector<128x128xbf16>
    %cst_35 = arith.constant dense<0.000000e+00> : vector<16x128xf32>
    %91 = tpu.matmul %89, %90, %cst_35 {dimension_numbers = #tpu.dot_dimension_numbers<[1], [0], [0], [1], [0, 0, 1, 1], [], []>} : vector<16x128xbf16>, vector<128x128xbf16>, vector<16x128xf32> -> vector<16x128xf32>
    %c0_36 = arith.constant 0 : index
    %c0_37 = arith.constant 0 : index
    %92 = vector.load %arg7[%c0_36, %c0_37] : memref<1x128xf32, #tpu.memory_space<vmem>>, vector<1x128xf32>
    %93 = vector.broadcast %92 : vector<1x128xf32> to vector<16x128xf32>
    %94 = arith.addf %91, %93 : vector<16x128xf32>
    %95 = arith.addf %1, %94 : vector<16x128xf32>
    %c0_38 = arith.constant 0 : index
    %c0_39 = arith.constant 0 : index
    %96 = vector.load %arg8[%c0_38, %c0_39] : memref<1x128xf32, #tpu.memory_space<vmem>>, vector<1x128xf32>
    %c0_40 = arith.constant 0 : index
    %c0_41 = arith.constant 0 : index
    %97 = vector.load %arg9[%c0_40, %c0_41] : memref<1x128xf32, #tpu.memory_space<vmem>>, vector<1x128xf32>
    %cst_42 = arith.constant dense<0.000000e+00> : vector<16xf32>
    %98 = vector.multi_reduction <add>, %95, %cst_42 [1] : vector<16x128xf32> to vector<16xf32>
    %99 = vector.shape_cast %98 : vector<16xf32> to vector<16x1xf32>
    %cst_43 = arith.constant 1.280000e+02 : f32
    %100 = vector.broadcast %cst_43 : f32 to vector<16x1xf32>
    %101 = arith.divf %99, %100 : vector<16x1xf32>
    %102 = vector.broadcast %101 : vector<16x1xf32> to vector<16x128xf32>
    %103 = arith.subf %95, %102 : vector<16x128xf32>
    %104 = arith.mulf %103, %103 : vector<16x128xf32>
    %cst_44 = arith.constant dense<0.000000e+00> : vector<16xf32>
    %105 = vector.multi_reduction <add>, %104, %cst_44 [1] : vector<16x128xf32> to vector<16xf32>
    %106 = vector.shape_cast %105 : vector<16xf32> to vector<16x1xf32>
    %cst_45 = arith.constant 1.280000e+02 : f32
    %107 = vector.broadcast %cst_45 : f32 to vector<16x1xf32>
    %108 = arith.divf %106, %107 : vector<16x1xf32>
    %cst_46 = arith.constant 9.99999974E-6 : f32
    %109 = vector.broadcast %cst_46 : f32 to vector<16x1xf32>
    %110 = arith.addf %108, %109 : vector<16x1xf32>
    %111 = math.rsqrt %110 : vector<16x1xf32>
    %112 = vector.broadcast %111 : vector<16x1xf32> to vector<16x128xf32>
    %113 = arith.mulf %103, %112 : vector<16x128xf32>
    %114 = vector.broadcast %96 : vector<1x128xf32> to vector<16x128xf32>
    %115 = arith.mulf %113, %114 : vector<16x128xf32>
    %116 = vector.broadcast %97 : vector<1x128xf32> to vector<16x128xf32>
    %117 = arith.addf %115, %116 : vector<16x128xf32>
    %118 = arith.truncf %117 : vector<16x128xf32> to vector<16x128xbf16>
    %cst_47 = arith.constant 0.000000e+00 : f32
    %119 = vector.broadcast %cst_47 : f32 to vector<16x128xf32>
    %c0_i32_48 = arith.constant 0 : i32
    %120 = arith.index_cast %c0_i32_48 : i32 to index
    %c0_49 = arith.constant 0 : index
    %c0_50 = arith.constant 0 : index
    %121 = vector.load %arg10[%120, %c0_49, %c0_50] : memref<1x128x256xbf16, #tpu.memory_space<vmem>>, vector<1x128x256xbf16>
    %122 = vector.shape_cast %121 : vector<1x128x256xbf16> to vector<128x256xbf16>
    %cst_51 = arith.constant dense<0.000000e+00> : vector<16x256xf32>
    %123 = tpu.matmul %118, %122, %cst_51 {dimension_numbers = #tpu.dot_dimension_numbers<[1], [0], [0], [1], [0, 0, 1, 1], [], []>} : vector<16x128xbf16>, vector<128x256xbf16>, vector<16x256xf32> -> vector<16x256xf32>
    %124 = arith.index_cast %c0_i32_48 : i32 to index
    %c0_52 = arith.constant 0 : index
    %c0_53 = arith.constant 0 : index
    %125 = vector.load %arg11[%124, %c0_52, %c0_53] : memref<1x1x256xf32, #tpu.memory_space<vmem>>, vector<1x1x256xf32>
    %126 = vector.shape_cast %125 : vector<1x1x256xf32> to vector<1x256xf32>
    %127 = vector.broadcast %126 : vector<1x256xf32> to vector<16x256xf32>
    %128 = arith.addf %123, %127 : vector<16x256xf32>
    %129 = arith.truncf %128 : vector<16x256xf32> to vector<16x256xbf16>
    %cst_54 = arith.constant 5.000000e-01 : bf16
    %130 = vector.broadcast %cst_54 : bf16 to vector<16x256xbf16>
    %131 = arith.mulf %130, %129 : vector<16x256xbf16>
    %132 = arith.mulf %129, %129 : vector<16x256xbf16>
    %133 = arith.mulf %132, %129 : vector<16x256xbf16>
    %cst_55 = arith.constant 4.467770e-02 : bf16
    %134 = vector.broadcast %cst_55 : bf16 to vector<16x256xbf16>
    %135 = arith.mulf %134, %133 : vector<16x256xbf16>
    %136 = arith.addf %129, %135 : vector<16x256xbf16>
    %cst_56 = arith.constant 7.968750e-01 : bf16
    %137 = vector.broadcast %cst_56 : bf16 to vector<16x256xbf16>
    %138 = arith.mulf %137, %136 : vector<16x256xbf16>
    %139 = math.tanh %138 : vector<16x256xbf16>
    %cst_57 = arith.constant 1.000000e+00 : bf16
    %140 = vector.broadcast %cst_57 : bf16 to vector<16x256xbf16>
    %141 = arith.addf %140, %139 : vector<16x256xbf16>
    %142 = arith.mulf %131, %141 : vector<16x256xbf16>
    %143 = arith.index_cast %c0_i32_48 : i32 to index
    %c0_58 = arith.constant 0 : index
    %c0_59 = arith.constant 0 : index
    %144 = vector.load %arg12[%143, %c0_58, %c0_59] : memref<1x256x128xbf16, #tpu.memory_space<vmem>>, vector<1x256x128xbf16>
    %145 = vector.shape_cast %144 : vector<1x256x128xbf16> to vector<256x128xbf16>
    %cst_60 = arith.constant dense<0.000000e+00> : vector<16x128xf32>
    %146 = tpu.matmul %142, %145, %cst_60 {dimension_numbers = #tpu.dot_dimension_numbers<[1], [0], [0], [1], [0, 0, 1, 1], [], []>} : vector<16x256xbf16>, vector<256x128xbf16>, vector<16x128xf32> -> vector<16x128xf32>
    %147 = arith.addf %119, %146 : vector<16x128xf32>
    %c1_i32_61 = arith.constant 1 : i32
    %c0_62 = arith.constant 0 : index
    %c0_63 = arith.constant 0 : index
    %148 = vector.load %arg13[%c0_62, %c0_63] : memref<1x128xf32, #tpu.memory_space<vmem>>, vector<1x128xf32>
    %149 = vector.broadcast %148 : vector<1x128xf32> to vector<16x128xf32>
    %150 = arith.addf %147, %149 : vector<16x128xf32>
    %151 = arith.addf %95, %150 : vector<16x128xf32>
    %152 = vector.shape_cast %151 : vector<16x128xf32> to vector<1x16x128xf32>
    %c0_64 = arith.constant 0 : index
    %c0_65 = arith.constant 0 : index
    %c0_66 = arith.constant 0 : index
    %153 = vector.load %arg14[%c0_64, %c0_65, %c0_66] : memref<1x16x128xf32, #tpu.memory_space<vmem>>, vector<1x16x128xf32>
    tpu.vector_store %arg14[%c0_64, %c0_65, %c0_66], %152 {strides = array<i32>} : memref<1x16x128xf32, #tpu.memory_space<vmem>>, vector<1x16x128xf32>,
    return
  }
  func.func @transform_0(%arg0: i32) -> (i32, i32, i32) {
    %c0_i32 = arith.constant 0 : i32
    %c0_i32_0 = arith.constant 0 : i32
    %c0_i32_1 = arith.constant 0 : i32
    return %arg0, %c0_i32, %c0_i32_0 : i32, i32, i32
  }
  func.func @transform_1(%arg0: i32) -> (i32, i32) {
    %c0_i32 = arith.constant 0 : i32
    %c0_i32_0 = arith.constant 0 : i32
    %c0_i32_1 = arith.constant 0 : i32
    return %c0_i32, %c0_i32_0 : i32, i32
  }
  func.func @transform_2(%arg0: i32) -> (i32, i32) {
    %c0_i32 = arith.constant 0 : i32
    %c0_i32_0 = arith.constant 0 : i32
    %c0_i32_1 = arith.constant 0 : i32
    return %c0_i32, %c0_i32_0 : i32, i32
  }
  func.func @transform_3(%arg0: i32) -> (i32, i32) {
    %c0_i32 = arith.constant 0 : i32
    %c0_i32_0 = arith.constant 0 : i32
    %c0_i32_1 = arith.constant 0 : i32
    return %c0_i32, %c0_i32_0 : i32, i32
  }
  func.func @transform_4(%arg0: i32) -> (i32, i32) {
    %c0_i32 = arith.constant 0 : i32
    %c0_i32_0 = arith.constant 0 : i32
    %c0_i32_1 = arith.constant 0 : i32
    return %c0_i32, %c0_i32_0 : i32, i32
  }
  func.func @transform_5(%arg0: i32) -> (i32, i32) {
    %c0_i32 = arith.constant 0 : i32
    %c0_i32_0 = arith.constant 0 : i32
    %c0_i32_1 = arith.constant 0 : i32
    return %c0_i32, %c0_i32_0 : i32, i32
  }
  func.func @transform_6(%arg0: i32) -> (i32, i32) {
    %c0_i32 = arith.constant 0 : i32
    %c0_i32_0 = arith.constant 0 : i32
    %c0_i32_1 = arith.constant 0 : i32
    return %c0_i32, %c0_i32_0 : i32, i32
  }
  func.func @transform_7(%arg0: i32) -> (i32, i32) {
    %c0_i32 = arith.constant 0 : i32
    %c0_i32_0 = arith.constant 0 : i32
    %c0_i32_1 = arith.constant 0 : i32
    return %c0_i32, %c0_i32_0 : i32, i32
  }
  func.func @transform_8(%arg0: i32) -> (i32, i32) {
    %c0_i32 = arith.constant 0 : i32
    %c0_i32_0 = arith.constant 0 : i32
    %c0_i32_1 = arith.constant 0 : i32
    return %c0_i32, %c0_i32_0 : i32, i32
  }
  func.func @transform_9(%arg0: i32) -> (i32, i32, i32) {
    %c0_i32 = arith.constant 0 : i32
    %c0_i32_0 = arith.constant 0 : i32
    %c0_i32_1 = arith.constant 0 : i32
    %c0_i32_2 = arith.constant 0 : i32
    return %c0_i32, %c0_i32_0, %c0_i32_1 : i32, i32, i32
  }
  func.func @transform_10(%arg0: i32) -> (i32, i32, i32) {
    %c0_i32 = arith.constant 0 : i32
    %c0_i32_0 = arith.constant 0 : i32
    %c0_i32_1 = arith.constant 0 : i32
    %c0_i32_2 = arith.constant 0 : i32
    return %c0_i32, %c0_i32_0, %c0_i32_1 : i32, i32, i32
  }
  func.func @transform_11(%arg0: i32) -> (i32, i32, i32) {
    %c0_i32 = arith.constant 0 : i32
    %c0_i32_0 = arith.constant 0 : i32
    %c0_i32_1 = arith.constant 0 : i32
    %c0_i32_2 = arith.constant 0 : i32
    return %c0_i32, %c0_i32_0, %c0_i32_1 : i32, i32, i32
  }
  func.func @transform_12(%arg0: i32) -> (i32, i32) {
    %c0_i32 = arith.constant 0 : i32
    %c0_i32_0 = arith.constant 0 : i32
    %c0_i32_1 = arith.constant 0 : i32
    return %c0_i32, %c0_i32_0 : i32, i32
  }
  func.func @transform_13(%arg0: i32) -> (i32, i32, i32) {
    %c0_i32 = arith.constant 0 : i32
    %c0_i32_0 = arith.constant 0 : i32
    %c0_i32_1 = arith.constant 0 : i32
    return %arg0, %c0_i32, %c0_i32_0 : i32, i32, i32
  }
}

module attributes {stable_mosaic.version = 11 : i64} {
  func.func @transformer_block_kernel(%arg0: i32, %arg1: memref<1x16x128xf32, #tpu.memory_space<vmem>>, %arg2: memref<1x128xf32, #tpu.memory_space<vmem>>, %arg3: memref<1x128xf32, #tpu.memory_space<vmem>>, %arg4: memref<128x384xbf16, #tpu.memory_space<vmem>>, %arg5: memref<1x384xf32, #tpu.memory_space<vmem>>, %arg6: memref<128x128xbf16, #tpu.memory_space<vmem>>, %arg7: memref<1x128xf32, #tpu.memory_space<vmem>>, %arg8: memref<1x128xf32, #tpu.memory_space<vmem>>, %arg9: memref<1x128xf32, #tpu.memory_space<vmem>>, %arg10: memref<1x128x256xbf16, #tpu.memory_space<vmem>>, %arg11: memref<1x1x256xf32, #tpu.memory_space<vmem>>, %arg12: memref<1x256x128xbf16, #tpu.memory_space<vmem>>, %arg13: memref<1x128xf32, #tpu.memory_space<vmem>>, %arg14: memref<1x16x128xf32, #tpu.memory_space<vmem>>, %arg15: memref<4x16x32xbf16, #tpu.memory_space<vmem>>, %arg16: memref<4x16x32xbf16, #tpu.memory_space<vmem>>) attributes {dimension_semantics = [#tpu.dimension_semantics<parallel>], iteration_bounds = array<i64: 2>, scalar_prefetch = 0 : i64, scratch_operands = 2 : i64, tpu.core_type = #tpu.core_type<tc>, window_params = [{transform_indices = @transform_0, window_bounds = array<i64: 1, 16, 128>}, {pipeline_mode = #tpu.pipeline_mode<synchronous>, transform_indices = @transform_1, window_bounds = array<i64: 1, 128>}, {pipeline_mode = #tpu.pipeline_mode<synchronous>, transform_indices = @transform_2, window_bounds = array<i64: 1, 128>}, {pipeline_mode = #tpu.pipeline_mode<synchronous>, transform_indices = @transform_3, window_bounds = array<i64: 128, 384>}, {pipeline_mode = #tpu.pipeline_mode<synchronous>, transform_indices = @transform_4, window_bounds = array<i64: 1, 384>}, {pipeline_mode = #tpu.pipeline_mode<synchronous>, transform_indices = @transform_5, window_bounds = array<i64: 128, 128>}, {pipeline_mode = #tpu.pipeline_mode<synchronous>, transform_indices = @transform_6, window_bounds = array<i64: 1, 128>}, {pipeline_mode = #tpu.pipeline_mode<synchronous>, transform_indices = @transform_7, window_bounds = array<i64: 1, 128>}, {pipeline_mode = #tpu.pipeline_mode<synchronous>, transform_indices = @transform_8, window_bounds = array<i64: 1, 128>}, {pipeline_mode = #tpu.pipeline_mode<synchronous>, transform_indices = @transform_9, window_bounds = array<i64: 1, 128, 256>}, {pipeline_mode = #tpu.pipeline_mode<synchronous>, transform_indices = @transform_10, window_bounds = array<i64: 1, 1, 256>}, {pipeline_mode = #tpu.pipeline_mode<synchronous>, transform_indices = @transform_11, window_bounds = array<i64: 1, 256, 128>}, {pipeline_mode = #tpu.pipeline_mode<synchronous>, transform_indices = @transform_12, window_bounds = array<i64: 1, 128>}, {transform_indices = @transform_13, window_bounds = array<i64: 1, 16, 128>}]} {
    %c0 = arith.constant 0 : index
    %c0_0 = arith.constant 0 : index
    %c0_1 = arith.constant 0 : index
    %0 = vector.load %arg1[%c0, %c0_0, %c0_1] : memref<1x16x128xf32, #tpu.memory_space<vmem>>, vector<1x16x128xf32>
    %1 = vector.shape_cast %0 : vector<1x16x128xf32> to vector<16x128xf32>
    %c0_2 = arith.constant 0 : index
    %c0_3 = arith.constant 0 : index
    %2 = vector.load %arg2[%c0_2, %c0_3] : memref<1x128xf32, #tpu.memory_space<vmem>>, vector<1x128xf32>
    %c0_4 = arith.constant 0 : index
    %c0_5 = arith.constant 0 : index
    %3 = vector.load %arg3[%c0_4, %c0_5] : memref<1x128xf32, #tpu.memory_space<vmem>>, vector<1x128xf32>
    %cst = arith.constant dense<0.000000e+00> : vector<16xf32>
    %4 = vector.multi_reduction <add>, %1, %cst [1] : vector<16x128xf32> to vector<16xf32>
    %5 = vector.shape_cast %4 : vector<16xf32> to vector<16x1xf32>
    %cst_6 = arith.constant 1.280000e+02 : f32
    %6 = vector.broadcast %cst_6 : f32 to vector<16x1xf32>
    %7 = arith.divf %5, %6 : vector<16x1xf32>
    %8 = vector.broadcast %7 : vector<16x1xf32> to vector<16x128xf32>
    %9 = arith.subf %1, %8 : vector<16x128xf32>
    %10 = arith.mulf %9, %9 : vector<16x128xf32>
    %cst_7 = arith.constant dense<0.000000e+00> : vector<16xf32>
    %11 = vector.multi_reduction <add>, %10, %cst_7 [1] : vector<16x128xf32> to vector<16xf32>
    %12 = vector.shape_cast %11 : vector<16xf32> to vector<16x1xf32>
    %cst_8 = arith.constant 1.280000e+02 : f32
    %13 = vector.broadcast %cst_8 : f32 to vector<16x1xf32>
    %14 = arith.divf %12, %13 : vector<16x1xf32>
    %cst_9 = arith.constant 9.99999974E-6 : f32
    %15 = vector.broadcast %cst_9 : f32 to vector<16x1xf32>
    %16 = arith.addf %14, %15 : vector<16x1xf32>
    %17 = math.rsqrt %16 : vector<16x1xf32>
    %18 = vector.broadcast %17 : vector<16x1xf32> to vector<16x128xf32>
    %19 = arith.mulf %9, %18 : vector<16x128xf32>
    %20 = vector.broadcast %2 : vector<1x128xf32> to vector<16x128xf32>
    %21 = arith.mulf %19, %20 : vector<16x128xf32>
    %22 = vector.broadcast %3 : vector<1x128xf32> to vector<16x128xf32>
    %23 = arith.addf %21, %22 : vector<16x128xf32>
    %24 = arith.truncf %23 : vector<16x128xf32> to vector<16x128xbf16>
    %c0_10 = arith.constant 0 : index
    %c0_11 = arith.constant 0 : index
    %25 = vector.load %arg4[%c0_10, %c0_11] : memref<128x384xbf16, #tpu.memory_space<vmem>>, vector<128x384xbf16>
    %cst_12 = arith.constant dense<0.000000e+00> : vector<16x384xf32>
    %26 = tpu.matmul %24, %25, %cst_12 {dimension_numbers = #tpu.dot_dimension_numbers<[1], [0], [0], [1], [0, 0, 1, 1], [], []>} : vector<16x128xbf16>, vector<128x384xbf16>, vector<16x384xf32> -> vector<16x384xf32>
    %c0_13 = arith.constant 0 : index
    %c0_14 = arith.constant 0 : index
    %27 = vector.load %arg5[%c0_13, %c0_14] : memref<1x384xf32, #tpu.memory_space<vmem>>, vector<1x384xf32>
    %28 = vector.broadcast %27 : vector<1x384xf32> to vector<16x384xf32>
    %29 = arith.addf %26, %28 : vector<16x384xf32>
    %30 = vector.extract_strided_slice %29 {offsets = [0, 0], sizes = [16, 128], strides = [1, 1]} : vector<16x384xf32> to vector<16x128xf32>
    %31 = vector.shape_cast %30 : vector<16x128xf32> to vector<1x16x4x32xf32>
    %32 = tpu.transpose %31, [0, 2, 1, 3] : vector<1x16x4x32xf32> -> vector<1x4x16x32xf32>
    %33 = vector.shape_cast %32 : vector<1x4x16x32xf32> to vector<4x16x32xf32>
    %34 = arith.truncf %33 : vector<4x16x32xf32> to vector<4x16x32xbf16>
    %35 = vector.extract_strided_slice %29 {offsets = [0, 128], sizes = [16, 128], strides = [1, 1]} : vector<16x384xf32> to vector<16x128xf32>
    %36 = vector.shape_cast %35 : vector<16x128xf32> to vector<1x16x4x32xf32>
    %37 = tpu.transpose %36, [0, 2, 1, 3] : vector<1x16x4x32xf32> -> vector<1x4x16x32xf32>
    %38 = vector.shape_cast %37 : vector<1x4x16x32xf32> to vector<4x16x32xf32>
    %39 = arith.truncf %38 : vector<4x16x32xf32> to vector<4x16x32xbf16>
    %c0_15 = arith.constant 0 : index
    %c0_16 = arith.constant 0 : index
    %c0_17 = arith.constant 0 : index
    %40 = vector.load %arg15[%c0_15, %c0_16, %c0_17] : memref<4x16x32xbf16, #tpu.memory_space<vmem>>, vector<4x16x32xbf16>
    tpu.vector_store %arg15[%c0_15, %c0_16, %c0_17], %39 {strides = array<i32>} : memref<4x16x32xbf16, #tpu.memory_space<vmem>>, vector<4x16x32xbf16>,
    %41 = vector.extract_strided_slice %29 {offsets = [0, 256], sizes = [16, 128], strides = [1, 1]} : vector<16x384xf32> to vector<16x128xf32>
    %42 = vector.shape_cast %41 : vector<16x128xf32> to vector<1x16x4x32xf32>
    %43 = tpu.transpose %42, [0, 2, 1, 3] : vector<1x16x4x32xf32> -> vector<1x4x16x32xf32>
    %44 = vector.shape_cast %43 : vector<1x4x16x32xf32> to vector<4x16x32xf32>
    %45 = arith.truncf %44 : vector<4x16x32xf32> to vector<4x16x32xbf16>
    %c0_18 = arith.constant 0 : index
    %c0_19 = arith.constant 0 : index
    %c0_20 = arith.constant 0 : index
    %46 = vector.load %arg16[%c0_18, %c0_19, %c0_20] : memref<4x16x32xbf16, #tpu.memory_space<vmem>>, vector<4x16x32xbf16>
    tpu.vector_store %arg16[%c0_18, %c0_19, %c0_20], %45 {strides = array<i32>} : memref<4x16x32xbf16, #tpu.memory_space<vmem>>, vector<4x16x32xbf16>,
    %47 = tpu.iota {dimensions = array<i32: 1>} : vector<1x16x16xi32>
    %48 = tpu.iota {dimensions = array<i32: 2>} : vector<1x16x16xi32>
    %cst_21 = arith.constant -1.000000e+30 : f32
    %49 = vector.broadcast %cst_21 : f32 to vector<4x16x1xf32>
    %cst_22 = arith.constant 0.000000e+00 : f32
    %50 = vector.broadcast %cst_22 : f32 to vector<4x16x1xf32>
    %cst_23 = arith.constant 0.000000e+00 : f32
    %51 = vector.broadcast %cst_23 : f32 to vector<4x16x32xf32>
    %c0_i32 = arith.constant 0 : i32
    %c16_i32 = arith.constant 16 : i32
    %52 = arith.muli %c0_i32, %c16_i32 : i32
    %53 = tpu.assume_multiple %52, 16 : i32
    %c0_24 = arith.constant 0 : index
    %54 = arith.index_cast %53 : i32 to index
    %c0_25 = arith.constant 0 : index
    %55 = vector.load %arg15[%c0_24, %54, %c0_25] : memref<4x16x32xbf16, #tpu.memory_space<vmem>>, vector<4x16x32xbf16>
    %c0_26 = arith.constant 0 : index
    %56 = arith.index_cast %53 : i32 to index
    %c0_27 = arith.constant 0 : index
    %57 = vector.load %arg16[%c0_26, %56, %c0_27] : memref<4x16x32xbf16, #tpu.memory_space<vmem>>, vector<4x16x32xbf16>
    "tpu.trace_start"() <{level = 10 : i32, message = "bqd,bkd->bqk"}> : () -> ()
    %cst_28 = arith.constant dense<0.000000e+00> : vector<4x16x16xf32>
    %58 = tpu.matmul %34, %55, %cst_28 {dimension_numbers = #tpu.dot_dimension_numbers<[2], [2], [1], [1], [0, 0, 0, 1, 1, 1], [0], [0]>} : vector<4x16x32xbf16>, vector<4x16x32xbf16>, vector<4x16x16xf32> -> vector<4x16x16xf32>
    "tpu.trace_stop"() : () -> ()
    %59 = vector.broadcast %53 : i32 to vector<1x16x16xi32>
    %60 = arith.addi %48, %59 : vector<1x16x16xi32>
    %61 = arith.cmpi sgt, %60, %47 : vector<1x16x16xi32>
    %cst_29 = arith.constant -1.000000e+05 : f32
    %62 = vector.shape_cast %61 : vector<1x16x16xi1> to vector<1x16x16xi1>
    %63 = vector.broadcast %62 : vector<1x16x16xi1> to vector<4x16x16xi1>
    %64 = vector.broadcast %cst_29 : f32 to vector<4x16x16xf32>
    %65 = arith.select %63, %64, %58 : vector<4x16x16xi1>, vector<4x16x16xf32>
    %cst_30 = arith.constant dense<0xFF800000> : vector<4x16xf32>
    %66 = vector.multi_reduction <maximumf>, %65, %cst_30 [2] : vector<4x16x16xf32> to vector<4x16xf32>
    %67 = vector.shape_cast %66 : vector<4x16xf32> to vector<4x16x1xf32>
    %68 = arith.maximumf %49, %67 : vector<4x16x1xf32>
    %69 = arith.subf %49, %68 : vector<4x16x1xf32>
    %70 = math.exp %69 : vector<4x16x1xf32>
    %71 = vector.broadcast %68 : vector<4x16x1xf32> to vector<4x16x16xf32>
    %72 = arith.subf %65, %71 : vector<4x16x16xf32>
    %73 = math.exp %72 : vector<4x16x16xf32>
    %74 = arith.mulf %70, %50 : vector<4x16x1xf32>
    %cst_31 = arith.constant dense<0.000000e+00> : vector<4x16xf32>
    %75 = vector.multi_reduction <add>, %73, %cst_31 [2] : vector<4x16x16xf32> to vector<4x16xf32>
    %76 = vector.shape_cast %75 : vector<4x16xf32> to vector<4x16x1xf32>
    %77 = arith.addf %74, %76 : vector<4x16x1xf32>
    %78 = vector.broadcast %70 : vector<4x16x1xf32> to vector<4x16x32xf32>
    %79 = arith.mulf %78, %51 : vector<4x16x32xf32>
    %80 = arith.truncf %73 : vector<4x16x16xf32> to vector<4x16x16xbf16>
    "tpu.trace_start"() <{level = 10 : i32, message = "bqk,bkd->bqd"}> : () -> ()
    %cst_32 = arith.constant dense<0.000000e+00> : vector<4x16x32xf32>
    %81 = tpu.matmul %80, %57, %cst_32 {dimension_numbers = #tpu.dot_dimension_numbers<[2], [1], [1], [2], [0, 0, 0, 1, 1, 2], [0], [0]>} : vector<4x16x16xbf16>, vector<4x16x32xbf16>, vector<4x16x32xf32> -> vector<4x16x32xf32>
    "tpu.trace_stop"() : () -> ()
    %82 = arith.addf %79, %81 : vector<4x16x32xf32>
    %c1_i32 = arith.constant 1 : i32
    %83 = tpu.reciprocal %77 {approx = true} : vector<4x16x1xf32> -> vector<4x16x1xf32>
    %84 = vector.broadcast %83 : vector<4x16x1xf32> to vector<4x16x32xf32>
    %85 = arith.mulf %82, %84 : vector<4x16x32xf32>
    %86 = vector.shape_cast %85 : vector<4x16x32xf32> to vector<1x4x16x32xf32>
    %87 = tpu.transpose %86, [0, 2, 1, 3] : vector<1x4x16x32xf32> -> vector<1x16x4x32xf32>
    %88 = vector.shape_cast %87 : vector<1x16x4x32xf32> to vector<16x128xf32>
    %89 = arith.truncf %88 : vector<16x128xf32> to vector<16x128xbf16>
    %c0_33 = arith.constant 0 : index
    %c0_34 = arith.constant 0 : index
    %90 = vector.load %arg6[%c0_33, %c0_34] : memref<128x128xbf16, #tpu.memory_space<vmem>>, vector<128x128xbf16>
    %cst_35 = arith.constant dense<0.000000e+00> : vector<16x128xf32>
    %91 = tpu.matmul %89, %90, %cst_35 {dimension_numbers = #tpu.dot_dimension_numbers<[1], [0], [0], [1], [0, 0, 1, 1], [], []>} : vector<16x128xbf16>, vector<128x128xbf16>, vector<16x128xf32> -> vector<16x128xf32>
    %c0_36 = arith.constant 0 : index
    %c0_37 = arith.constant 0 : index
    %92 = vector.load %arg7[%c0_36, %c0_37] : memref<1x128xf32, #tpu.memory_space<vmem>>, vector<1x128xf32>
    %93 = vector.broadcast %92 : vector<1x128xf32> to vector<16x128xf32>
    %94 = arith.addf %91, %93 : vector<16x128xf32>
    %95 = arith.addf %1, %94 : vector<16x128xf32>
    %c0_38 = arith.constant 0 : index
    %c0_39 = arith.constant 0 : index
    %96 = vector.load %arg8[%c0_38, %c0_39] : memref<1x128xf32, #tpu.memory_space<vmem>>, vector<1x128xf32>
    %c0_40 = arith.constant 0 : index
    %c0_41 = arith.constant 0 : index
    %97 = vector.load %arg9[%c0_40, %c0_41] : memref<1x128xf32, #tpu.memory_space<vmem>>, vector<1x128xf32>
    %cst_42 = arith.constant dense<0.000000e+00> : vector<16xf32>
    %98 = vector.multi_reduction <add>, %95, %cst_42 [1] : vector<16x128xf32> to vector<16xf32>
    %99 = vector.shape_cast %98 : vector<16xf32> to vector<16x1xf32>
    %cst_43 = arith.constant 1.280000e+02 : f32
    %100 = vector.broadcast %cst_43 : f32 to vector<16x1xf32>
    %101 = arith.divf %99, %100 : vector<16x1xf32>
    %102 = vector.broadcast %101 : vector<16x1xf32> to vector<16x128xf32>
    %103 = arith.subf %95, %102 : vector<16x128xf32>
    %104 = arith.mulf %103, %103 : vector<16x128xf32>
    %cst_44 = arith.constant dense<0.000000e+00> : vector<16xf32>
    %105 = vector.multi_reduction <add>, %104, %cst_44 [1] : vector<16x128xf32> to vector<16xf32>
    %106 = vector.shape_cast %105 : vector<16xf32> to vector<16x1xf32>
    %cst_45 = arith.constant 1.280000e+02 : f32
    %107 = vector.broadcast %cst_45 : f32 to vector<16x1xf32>
    %108 = arith.divf %106, %107 : vector<16x1xf32>
    %cst_46 = arith.constant 9.99999974E-6 : f32
    %109 = vector.broadcast %cst_46 : f32 to vector<16x1xf32>
    %110 = arith.addf %108, %109 : vector<16x1xf32>
    %111 = math.rsqrt %110 : vector<16x1xf32>
    %112 = vector.broadcast %111 : vector<16x1xf32> to vector<16x128xf32>
    %113 = arith.mulf %103, %112 : vector<16x128xf32>
    %114 = vector.broadcast %96 : vector<1x128xf32> to vector<16x128xf32>
    %115 = arith.mulf %113, %114 : vector<16x128xf32>
    %116 = vector.broadcast %97 : vector<1x128xf32> to vector<16x128xf32>
    %117 = arith.addf %115, %116 : vector<16x128xf32>
    %118 = arith.truncf %117 : vector<16x128xf32> to vector<16x128xbf16>
    %cst_47 = arith.constant 0.000000e+00 : f32
    %119 = vector.broadcast %cst_47 : f32 to vector<16x128xf32>
    %c0_i32_48 = arith.constant 0 : i32
    %120 = arith.index_cast %c0_i32_48 : i32 to index
    %c0_49 = arith.constant 0 : index
    %c0_50 = arith.constant 0 : index
    %121 = vector.load %arg10[%120, %c0_49, %c0_50] : memref<1x128x256xbf16, #tpu.memory_space<vmem>>, vector<1x128x256xbf16>
    %122 = vector.shape_cast %121 : vector<1x128x256xbf16> to vector<128x256xbf16>
    %cst_51 = arith.constant dense<0.000000e+00> : vector<16x256xf32>
    %123 = tpu.matmul %118, %122, %cst_51 {dimension_numbers = #tpu.dot_dimension_numbers<[1], [0], [0], [1], [0, 0, 1, 1], [], []>} : vector<16x128xbf16>, vector<128x256xbf16>, vector<16x256xf32> -> vector<16x256xf32>
    %124 = arith.index_cast %c0_i32_48 : i32 to index
    %c0_52 = arith.constant 0 : index
    %c0_53 = arith.constant 0 : index
    %125 = vector.load %arg11[%124, %c0_52, %c0_53] : memref<1x1x256xf32, #tpu.memory_space<vmem>>, vector<1x1x256xf32>
    %126 = vector.shape_cast %125 : vector<1x1x256xf32> to vector<1x256xf32>
    %127 = vector.broadcast %126 : vector<1x256xf32> to vector<16x256xf32>
    %128 = arith.addf %123, %127 : vector<16x256xf32>
    %129 = arith.truncf %128 : vector<16x256xf32> to vector<16x256xbf16>
    %cst_54 = arith.constant 5.000000e-01 : bf16
    %130 = vector.broadcast %cst_54 : bf16 to vector<16x256xbf16>
    %131 = arith.mulf %130, %129 : vector<16x256xbf16>
    %132 = arith.mulf %129, %129 : vector<16x256xbf16>
    %133 = arith.mulf %132, %129 : vector<16x256xbf16>
    %cst_55 = arith.constant 4.467770e-02 : bf16
    %134 = vector.broadcast %cst_55 : bf16 to vector<16x256xbf16>
    %135 = arith.mulf %134, %133 : vector<16x256xbf16>
    %136 = arith.addf %129, %135 : vector<16x256xbf16>
    %cst_56 = arith.constant 7.968750e-01 : bf16
    %137 = vector.broadcast %cst_56 : bf16 to vector<16x256xbf16>
    %138 = arith.mulf %137, %136 : vector<16x256xbf16>
    %139 = math.tanh %138 : vector<16x256xbf16>
    %cst_57 = arith.constant 1.000000e+00 : bf16
    %140 = vector.broadcast %cst_57 : bf16 to vector<16x256xbf16>
    %141 = arith.addf %140, %139 : vector<16x256xbf16>
    %142 = arith.mulf %131, %141 : vector<16x256xbf16>
    %143 = arith.index_cast %c0_i32_48 : i32 to index
    %c0_58 = arith.constant 0 : index
    %c0_59 = arith.constant 0 : index
    %144 = vector.load %arg12[%143, %c0_58, %c0_59] : memref<1x256x128xbf16, #tpu.memory_space<vmem>>, vector<1x256x128xbf16>
    %145 = vector.shape_cast %144 : vector<1x256x128xbf16> to vector<256x128xbf16>
    %cst_60 = arith.constant dense<0.000000e+00> : vector<16x128xf32>
    %146 = tpu.matmul %142, %145, %cst_60 {dimension_numbers = #tpu.dot_dimension_numbers<[1], [0], [0], [1], [0, 0, 1, 1], [], []>} : vector<16x256xbf16>, vector<256x128xbf16>, vector<16x128xf32> -> vector<16x128xf32>
    %147 = arith.addf %119, %146 : vector<16x128xf32>
    %c1_i32_61 = arith.constant 1 : i32
    %c0_62 = arith.constant 0 : index
    %c0_63 = arith.constant 0 : index
    %148 = vector.load %arg13[%c0_62, %c0_63] : memref<1x128xf32, #tpu.memory_space<vmem>>, vector<1x128xf32>
    %149 = vector.broadcast %148 : vector<1x128xf32> to vector<16x128xf32>
    %150 = arith.addf %147, %149 : vector<16x128xf32>
    %151 = arith.addf %95, %150 : vector<16x128xf32>
    %152 = vector.shape_cast %151 : vector<16x128xf32> to vector<1x16x128xf32>
    %c0_64 = arith.constant 0 : index
    %c0_65 = arith.constant 0 : index
    %c0_66 = arith.constant 0 : index
    %153 = vector.load %arg14[%c0_64, %c0_65, %c0_66] : memref<1x16x128xf32, #tpu.memory_space<vmem>>, vector<1x16x128xf32>
    tpu.vector_store %arg14[%c0_64, %c0_65, %c0_66], %152 {strides = array<i32>} : memref<1x16x128xf32, #tpu.memory_space<vmem>>, vector<1x16x128xf32>,
    return
  }
  func.func @transform_0(%arg0: i32) -> (i32, i32, i32) {
    %c0_i32 = arith.constant 0 : i32
    %c0_i32_0 = arith.constant 0 : i32
    %c0_i32_1 = arith.constant 0 : i32
    return %arg0, %c0_i32, %c0_i32_0 : i32, i32, i32
  }
  func.func @transform_1(%arg0: i32) -> (i32, i32) {
    %c0_i32 = arith.constant 0 : i32
    %c0_i32_0 = arith.constant 0 : i32
    %c0_i32_1 = arith.constant 0 : i32
    return %c0_i32, %c0_i32_0 : i32, i32
  }
  func.func @transform_2(%arg0: i32) -> (i32, i32) {
    %c0_i32 = arith.constant 0 : i32
    %c0_i32_0 = arith.constant 0 : i32
    %c0_i32_1 = arith.constant 0 : i32
    return %c0_i32, %c0_i32_0 : i32, i32
  }
  func.func @transform_3(%arg0: i32) -> (i32, i32) {
    %c0_i32 = arith.constant 0 : i32
    %c0_i32_0 = arith.constant 0 : i32
    %c0_i32_1 = arith.constant 0 : i32
    return %c0_i32, %c0_i32_0 : i32, i32
  }
  func.func @transform_4(%arg0: i32) -> (i32, i32) {
    %c0_i32 = arith.constant 0 : i32
    %c0_i32_0 = arith.constant 0 : i32
    %c0_i32_1 = arith.constant 0 : i32
    return %c0_i32, %c0_i32_0 : i32, i32
  }
  func.func @transform_5(%arg0: i32) -> (i32, i32) {
    %c0_i32 = arith.constant 0 : i32
    %c0_i32_0 = arith.constant 0 : i32
    %c0_i32_1 = arith.constant 0 : i32
    return %c0_i32, %c0_i32_0 : i32, i32
  }
  func.func @transform_6(%arg0: i32) -> (i32, i32) {
    %c0_i32 = arith.constant 0 : i32
    %c0_i32_0 = arith.constant 0 : i32
    %c0_i32_1 = arith.constant 0 : i32
    return %c0_i32, %c0_i32_0 : i32, i32
  }
  func.func @transform_7(%arg0: i32) -> (i32, i32) {
    %c0_i32 = arith.constant 0 : i32
    %c0_i32_0 = arith.constant 0 : i32
    %c0_i32_1 = arith.constant 0 : i32
    return %c0_i32, %c0_i32_0 : i32, i32
  }
  func.func @transform_8(%arg0: i32) -> (i32, i32) {
    %c0_i32 = arith.constant 0 : i32
    %c0_i32_0 = arith.constant 0 : i32
    %c0_i32_1 = arith.constant 0 : i32
    return %c0_i32, %c0_i32_0 : i32, i32
  }
  func.func @transform_9(%arg0: i32) -> (i32, i32, i32) {
    %c0_i32 = arith.constant 0 : i32
    %c0_i32_0 = arith.constant 0 : i32
    %c0_i32_1 = arith.constant 0 : i32
    %c0_i32_2 = arith.constant 0 : i32
    return %c0_i32, %c0_i32_0, %c0_i32_1 : i32, i32, i32
  }
  func.func @transform_10(%arg0: i32) -> (i32, i32, i32) {
    %c0_i32 = arith.constant 0 : i32
    %c0_i32_0 = arith.constant 0 : i32
    %c0_i32_1 = arith.constant 0 : i32
    %c0_i32_2 = arith.constant 0 : i32
    return %c0_i32, %c0_i32_0, %c0_i32_1 : i32, i32, i32
  }
  func.func @transform_11(%arg0: i32) -> (i32, i32, i32) {
    %c0_i32 = arith.constant 0 : i32
    %c0_i32_0 = arith.constant 0 : i32
    %c0_i32_1 = arith.constant 0 : i32
    %c0_i32_2 = arith.constant 0 : i32
    return %c0_i32, %c0_i32_0, %c0_i32_1 : i32, i32, i32
  }
  func.func @transform_12(%arg0: i32) -> (i32, i32) {
    %c0_i32 = arith.constant 0 : i32
    %c0_i32_0 = arith.constant 0 : i32
    %c0_i32_1 = arith.constant 0 : i32
    return %c0_i32, %c0_i32_0 : i32, i32
  }
  func.func @transform_13(%arg0: i32) -> (i32, i32, i32) {
    %c0_i32 = arith.constant 0 : i32
    %c0_i32_0 = arith.constant 0 : i32
    %c0_i32_1 = arith.constant 0 : i32
    return %arg0, %c0_i32, %c0_i32_0 : i32, i32, i32
  }
}

</mosaic_0001>

<llo_original>
// kernel: tpu_custom_call.1
$region0: #{tpu_custom_call.1}
  #allocation0 [shape = 'u32[]', space=smem, size = 0x4, offset = 0x4, fixed_abs, tag = 'smem constant byte address 0x4 - core index']
  #allocation1 [shape = 'u32[144,128]{1,0:T(1,128)}', space=vmem, size = 0x12000, scoped, tag = 'internal scratch']
  #allocation2 [shape = 'bf16[4,16,32]{2,1,0:T(16,128)(2,1)}', space=vmem, size = 0x4000, scoped, tag = 'scratch operand']
  #allocation3 [shape = 'bf16[4,16,32]{2,1,0:T(16,128)(2,1)}', space=vmem, size = 0x4000, scoped, tag = 'scratch operand']
  %s0 = inlined_call_operand.hbm [shape: f32[2,16,128], index: 0, kind: input, shape index: {}]
  %s1 = inlined_call_operand.hbm [shape: f32[1,128], index: 1, kind: input, shape index: {}]
  %s2 = inlined_call_operand.hbm [shape: f32[1,128], index: 2, kind: input, shape index: {}]
  %s3 = inlined_call_operand.hbm [shape: bf16[128,384], index: 3, kind: input, shape index: {}]
  %s4 = inlined_call_operand.hbm [shape: f32[1,384], index: 4, kind: input, shape index: {}]
  %s5 = inlined_call_operand.hbm [shape: bf16[128,128], index: 5, kind: input, shape index: {}]
  %s6 = inlined_call_operand.hbm [shape: f32[1,128], index: 6, kind: input, shape index: {}]
  %s7 = inlined_call_operand.hbm [shape: f32[1,128], index: 7, kind: input, shape index: {}]
  %s8 = inlined_call_operand.hbm [shape: f32[1,128], index: 8, kind: input, shape index: {}]
  %s9 = inlined_call_operand.hbm [shape: bf16[1,128,256], index: 9, kind: input, shape index: {}]
  %s10 = inlined_call_operand.hbm [shape: f32[1,1,256], index: 10, kind: input, shape index: {}]
  %s11 = inlined_call_operand.hbm [shape: bf16[1,256,128], index: 11, kind: input, shape index: {}]
  %s12 = inlined_call_operand.hbm [shape: f32[1,128], index: 12, kind: input, shape index: {}]
  %s13 = inlined_call_operand.hbm [shape: f32[2,16,128], index: 13, kind: output, shape index: {}]
  %s14 = sld [smem:[#allocation0]]
  $region137: #{tpu_custom_call.1} parent=0
    _
  %s16 = ssub.s32 1, %s14
  %s17 = scalar_select 0, %s16, %s14
  $region1: #{tpu_custom_call.1} parent=0
    #allocation4 [shape = 'u8[16384]{0}', space=vmem, size = 0x4000, scoped, tag = 'input window, operand 0']
    #allocation5 [shape = 's32[2]{0}', space=sflag, size = 0x8, scoped, tag = 'scoped memory for tpu_custom_call.1']
    #allocation6 [shape = 's32[2]{0}', space=sflag, size = 0x8, scoped, tag = 'scoped memory for tpu_custom_call.1']
    #allocation7 [shape = 'u8[512]{0}', space=vmem, size = 0x400, scoped, tag = 'input window, operand 1, single buffered']
    #allocation8 [shape = 's32[1]{0}', space=sflag, size = 0x4, scoped, tag = 'scoped memory for tpu_custom_call.1']
    #allocation9 [shape = 'u8[512]{0}', space=vmem, size = 0x400, scoped, tag = 'input window, operand 2, single buffered']
    #allocation10 [shape = 'u8[98304]{0}', space=vmem, size = 0x18000, scoped, tag = 'input window, operand 3, single buffered']
    #allocation11 [shape = 's32[1]{0}', space=sflag, size = 0x4, scoped, tag = 'scoped memory for tpu_custom_call.1']
    #allocation12 [shape = 'u8[1536]{0}', space=vmem, size = 0x800, scoped, tag = 'input window, operand 4, single buffered']
    #allocation13 [shape = 'u8[32768]{0}', space=vmem, size = 0x8000, scoped, tag = 'input window, operand 5, single buffered']
    #allocation14 [shape = 's32[1]{0}', space=sflag, size = 0x4, scoped, tag = 'scoped memory for tpu_custom_call.1']
    #allocation15 [shape = 'u8[512]{0}', space=vmem, size = 0x400, scoped, tag = 'input window, operand 6, single buffered']
    #allocation16 [shape = 'u8[512]{0}', space=vmem, size = 0x400, scoped, tag = 'input window, operand 7, single buffered']
    #allocation17 [shape = 's32[1]{0}', space=sflag, size = 0x4, scoped, tag = 'scoped memory for tpu_custom_call.1']
    #allocation18 [shape = 'u8[512]{0}', space=vmem, size = 0x400, scoped, tag = 'input window, operand 8, single buffered']
    #allocation19 [shape = 'u8[65536]{0}', space=vmem, size = 0x10000, scoped, tag = 'input window, operand 9, single buffered']
    #allocation20 [shape = 's32[1]{0}', space=sflag, size = 0x4, scoped, tag = 'scoped memory for tpu_custom_call.1']
    #allocation21 [shape = 'u8[1024]{0}', space=vmem, size = 0x400, scoped, tag = 'input window, operand 10, single buffered']
    #allocation22 [shape = 'u8[65536]{0}', space=vmem, size = 0x10000, scoped, tag = 'input window, operand 11, single buffered']
    #allocation23 [shape = 's32[1]{0}', space=sflag, size = 0x4, scoped, tag = 'scoped memory for tpu_custom_call.1']
    #allocation24 [shape = 'u8[512]{0}', space=vmem, size = 0x400, scoped, tag = 'input window, operand 12, single buffered']
    #allocation25 [shape = 'u8[16384]{0}', space=vmem, size = 0x4000, scoped, tag = 'output window, operand 0']
    %18 = vsyncpa [#allocation5], 0
    %s19 = scalar_lea.sflag [#allocation5], 1
    %20 = vsyncpa %s19, 0
    %21 = vsyncpa [#allocation8], 0
    %22 = vsyncpa [#allocation11], 0
    %23 = vsyncpa [#allocation14], 0
    %24 = vsyncpa [#allocation17], 0
    %25 = vsyncpa [#allocation20], 0
    %26 = vsyncpa [#allocation23], 0
    %27 = vsyncpa [#allocation6], 0
    %s28 = scalar_lea.sflag [#allocation6], 1
    %29 = vsyncpa %s28, 0
    loop: start=0, step=1, limit=4
    $region2: #{tpu_custom_call.1} parent=1 // loop_pre_header
      _
    $region3: #{tpu_custom_call.1} parent=1 // loop_header
      %s31 = sphi 0, %s35
      %p32 = scmp.ge.s32.totalorder %s31, 4
      %s41 = sphi 0, %s43
      %s44 = sphi 0, %s41
      %s45 = sphi 0, %s44
      %s61 = sphi 0, %s45
      %s65 = sphi 0, %s65
      %s67 = sphi 0, %s65
      %s68 = sphi 0, %s67
      %s82 = sphi 0, %s68
      %s86 = sphi 0, %s86
      %s88 = sphi 0, %s86
      %s89 = sphi 0, %s88
      %s103 = sphi 0, %s89
      %s107 = sphi 0, %s107
      %s109 = sphi 0, %s107
      %s110 = sphi 0, %s109
      %s124 = sphi 0, %s110
      %s128 = sphi 0, %s128
      %s130 = sphi 0, %s128
      %s131 = sphi 0, %s130
      %s145 = sphi 0, %s131
      %s149 = sphi 0, %s149
      %s151 = sphi 0, %s149
      %s152 = sphi 0, %s151
      %s166 = sphi 0, %s152
      %s170 = sphi 0, %s170
      %s172 = sphi 0, %s170
      %s173 = sphi 0, %s172
      %s187 = sphi 0, %s173
      %s191 = sphi 0, %s191
      %s193 = sphi 0, %s191
      %s194 = sphi 0, %s193
      %s208 = sphi 0, %s194
      %s212 = sphi 0, %s212
      %s214 = sphi 0, %s212
      %s215 = sphi 0, %s214
      %s229 = sphi 0, %s215
      %s233 = sphi 0, %s233
      %s235 = sphi 0, %s233
      %s236 = sphi 0, %s235
      %s250 = sphi 0, %s236
      %s254 = sphi 0, %s254
      %s256 = sphi 0, %s254
      %s257 = sphi 0, %s256
      %s271 = sphi 0, %s257
      %s275 = sphi 0, %s275
      %s277 = sphi 0, %s275
      %s278 = sphi 0, %s277
      %s292 = sphi 0, %s278
      %s296 = sphi 0, %s296
      %s298 = sphi 0, %s296
      %s299 = sphi 0, %s298
      %s313 = sphi 0, %s299
      %s319 = sphi 0, %s321
      %s322 = sphi 0, %s319
      %s323 = sphi 0, %s322
      %s339 = sphi 0, %s323
    $region4: #{tpu_custom_call.1} parent=1 // loop_header_branch
      %34 = sbr.rel (%p32) target = $region8
    $region5: #{tpu_custom_call.1} parent=1 // loop_body
      %s36 = ssub.s32 %s31, 1
      %s37 = ssub.s32 %s31, 2
      %s38 = sadd.s32 %s31, 1
      %s39 = ssub.s32 %s31, %s38
      %p40 = scmp.eq.s32.totalorder %s39, 0
      %s42 = sadd.s32 %s41, 1
      %s43 = scalar_select %p40, %s41, %s42
      %p46 = pneg %p40
      %p47 = scmp.eq.s32.totalorder %s31, 1
      %p48 = por %p46, %p47
      %p49 = scmp.ne.s32.totalorder %s41, %s44
      %p50 = scmp.eq.s32.totalorder %s31, 0
      %p51 = por %p49, %p50
      %p52 = scmp.ne.s32.totalorder %s41, %s44
      %p53 = scmp.eq.s32.totalorder %s36, 1
      %p54 = por %p52, %p53
      %p55 = scmp.ne.s32.totalorder %s44, %s45
      %p56 = scmp.eq.s32.totalorder %s36, 0
      %p57 = por %p55, %p56
      %p58 = scmp.ne.s32.totalorder %s44, %s45
      %p59 = scmp.eq.s32.totalorder %s37, 1
      %p60 = por %p58, %p59
      %p62 = scmp.ne.s32.totalorder %s45, %s61
      %p63 = scmp.eq.s32.totalorder %s37, 0
      %p64 = por %p62, %p63
      %s66 = sadd.s32 %s65, 1
      %p69 = scmp.eq.s32.totalorder %s31, 1
      %p70 = scmp.ne.s32.totalorder %s65, %s67
      %p71 = scmp.eq.s32.totalorder %s31, 0
      %p72 = por %p70, %p71
      %p73 = scmp.ne.s32.totalorder %s65, %s67
      %p74 = scmp.eq.s32.totalorder %s36, 1
      %p75 = por %p73, %p74
      %p76 = scmp.ne.s32.totalorder %s67, %s68
      %p77 = scmp.eq.s32.totalorder %s36, 0
      %p78 = por %p76, %p77
      %p79 = scmp.ne.s32.totalorder %s67, %s68
      %p80 = scmp.eq.s32.totalorder %s37, 1
      %p81 = por %p79, %p80
      %p83 = scmp.ne.s32.totalorder %s68, %s82
      %p84 = scmp.eq.s32.totalorder %s37, 0
      %p85 = por %p83, %p84
      %s87 = sadd.s32 %s86, 1
      %p90 = scmp.eq.s32.totalorder %s31, 1
      %p91 = scmp.ne.s32.totalorder %s86, %s88
      %p92 = scmp.eq.s32.totalorder %s31, 0
      %p93 = por %p91, %p92
      %p94 = scmp.ne.s32.totalorder %s86, %s88
      %p95 = scmp.eq.s32.totalorder %s36, 1
      %p96 = por %p94, %p95
      %p97 = scmp.ne.s32.totalorder %s88, %s89
      %p98 = scmp.eq.s32.totalorder %s36, 0
      %p99 = por %p97, %p98
      %p100 = scmp.ne.s32.totalorder %s88, %s89
      %p101 = scmp.eq.s32.totalorder %s37, 1
      %p102 = por %p100, %p101
      %p104 = scmp.ne.s32.totalorder %s89, %s103
      %p105 = scmp.eq.s32.totalorder %s37, 0
      %p106 = por %p104, %p105
      %s108 = sadd.s32 %s107, 1
      %p111 = scmp.eq.s32.totalorder %s31, 1
      %p112 = scmp.ne.s32.totalorder %s107, %s109
      %p113 = scmp.eq.s32.totalorder %s31, 0
      %p114 = por %p112, %p113
      %p115 = scmp.ne.s32.totalorder %s107, %s109
      %p116 = scmp.eq.s32.totalorder %s36, 1
      %p117 = por %p115, %p116
      %p118 = scmp.ne.s32.totalorder %s109, %s110
      %p119 = scmp.eq.s32.totalorder %s36, 0
      %p120 = por %p118, %p119
      %p121 = scmp.ne.s32.totalorder %s109, %s110
      %p122 = scmp.eq.s32.totalorder %s37, 1
      %p123 = por %p121, %p122
      %p125 = scmp.ne.s32.totalorder %s110, %s124
      %p126 = scmp.eq.s32.totalorder %s37, 0
      %p127 = por %p125, %p126
      %s129 = sadd.s32 %s128, 1
      %p132 = scmp.eq.s32.totalorder %s31, 1
      %p133 = scmp.ne.s32.totalorder %s128, %s130
      %p134 = scmp.eq.s32.totalorder %s31, 0
      %p135 = por %p133, %p134
      %p136 = scmp.ne.s32.totalorder %s128, %s130
      %p137 = scmp.eq.s32.totalorder %s36, 1
      %p138 = por %p136, %p137
      %p139 = scmp.ne.s32.totalorder %s130, %s131
      %p140 = scmp.eq.s32.totalorder %s36, 0
      %p141 = por %p139, %p140
      %p142 = scmp.ne.s32.totalorder %s130, %s131
      %p143 = scmp.eq.s32.totalorder %s37, 1
      %p144 = por %p142, %p143
      %p146 = scmp.ne.s32.totalorder %s131, %s145
      %p147 = scmp.eq.s32.totalorder %s37, 0
      %p148 = por %p146, %p147
      %s150 = sadd.s32 %s149, 1
      %p153 = scmp.eq.s32.totalorder %s31, 1
      %p154 = scmp.ne.s32.totalorder %s149, %s151
      %p155 = scmp.eq.s32.totalorder %s31, 0
      %p156 = por %p154, %p155
      %p157 = scmp.ne.s32.totalorder %s149, %s151
      %p158 = scmp.eq.s32.totalorder %s36, 1
      %p159 = por %p157, %p158
      %p160 = scmp.ne.s32.totalorder %s151, %s152
      %p161 = scmp.eq.s32.totalorder %s36, 0
      %p162 = por %p160, %p161
      %p163 = scmp.ne.s32.totalorder %s151, %s152
      %p164 = scmp.eq.s32.totalorder %s37, 1
      %p165 = por %p163, %p164
      %p167 = scmp.ne.s32.totalorder %s152, %s166
      %p168 = scmp.eq.s32.totalorder %s37, 0
      %p169 = por %p167, %p168
      %s171 = sadd.s32 %s170, 1
      %p174 = scmp.eq.s32.totalorder %s31, 1
      %p175 = scmp.ne.s32.totalorder %s170, %s172
      %p176 = scmp.eq.s32.totalorder %s31, 0
      %p177 = por %p175, %p176
      %p178 = scmp.ne.s32.totalorder %s170, %s172
      %p179 = scmp.eq.s32.totalorder %s36, 1
      %p180 = por %p178, %p179
      %p181 = scmp.ne.s32.totalorder %s172, %s173
      %p182 = scmp.eq.s32.totalorder %s36, 0
      %p183 = por %p181, %p182
      %p184 = scmp.ne.s32.totalorder %s172, %s173
      %p185 = scmp.eq.s32.totalorder %s37, 1
      %p186 = por %p184, %p185
      %p188 = scmp.ne.s32.totalorder %s173, %s187
      %p189 = scmp.eq.s32.totalorder %s37, 0
      %p190 = por %p188, %p189
      %s192 = sadd.s32 %s191, 1
      %p195 = scmp.eq.s32.totalorder %s31, 1
      %p196 = scmp.ne.s32.totalorder %s191, %s193
      %p197 = scmp.eq.s32.totalorder %s31, 0
      %p198 = por %p196, %p197
      %p199 = scmp.ne.s32.totalorder %s191, %s193
      %p200 = scmp.eq.s32.totalorder %s36, 1
      %p201 = por %p199, %p200
      %p202 = scmp.ne.s32.totalorder %s193, %s194
      %p203 = scmp.eq.s32.totalorder %s36, 0
      %p204 = por %p202, %p203
      %p205 = scmp.ne.s32.totalorder %s193, %s194
      %p206 = scmp.eq.s32.totalorder %s37, 1
      %p207 = por %p205, %p206
      %p209 = scmp.ne.s32.totalorder %s194, %s208
      %p210 = scmp.eq.s32.totalorder %s37, 0
      %p211 = por %p209, %p210
      %s213 = sadd.s32 %s212, 1
      %p216 = scmp.eq.s32.totalorder %s31, 1
      %p217 = scmp.ne.s32.totalorder %s212, %s214
      %p218 = scmp.eq.s32.totalorder %s31, 0
      %p219 = por %p217, %p218
      %p220 = scmp.ne.s32.totalorder %s212, %s214
      %p221 = scmp.eq.s32.totalorder %s36, 1
      %p222 = por %p220, %p221
      %p223 = scmp.ne.s32.totalorder %s214, %s215
      %p224 = scmp.eq.s32.totalorder %s36, 0
      %p225 = por %p223, %p224
      %p226 = scmp.ne.s32.totalorder %s214, %s215
      %p227 = scmp.eq.s32.totalorder %s37, 1
      %p228 = por %p226, %p227
      %p230 = scmp.ne.s32.totalorder %s215, %s229
      %p231 = scmp.eq.s32.totalorder %s37, 0
      %p232 = por %p230, %p231
      %s234 = sadd.s32 %s233, 1
      %p237 = scmp.eq.s32.totalorder %s31, 1
      %p238 = scmp.ne.s32.totalorder %s233, %s235
      %p239 = scmp.eq.s32.totalorder %s31, 0
      %p240 = por %p238, %p239
      %p241 = scmp.ne.s32.totalorder %s233, %s235
      %p242 = scmp.eq.s32.totalorder %s36, 1
      %p243 = por %p241, %p242
      %p244 = scmp.ne.s32.totalorder %s235, %s236
      %p245 = scmp.eq.s32.totalorder %s36, 0
      %p246 = por %p244, %p245
      %p247 = scmp.ne.s32.totalorder %s235, %s236
      %p248 = scmp.eq.s32.totalorder %s37, 1
      %p249 = por %p247, %p248
      %p251 = scmp.ne.s32.totalorder %s236, %s250
      %p252 = scmp.eq.s32.totalorder %s37, 0
      %p253 = por %p251, %p252
      %s255 = sadd.s32 %s254, 1
      %p258 = scmp.eq.s32.totalorder %s31, 1
      %p259 = scmp.ne.s32.totalorder %s254, %s256
      %p260 = scmp.eq.s32.totalorder %s31, 0
      %p261 = por %p259, %p260
      %p262 = scmp.ne.s32.totalorder %s254, %s256
      %p263 = scmp.eq.s32.totalorder %s36, 1
      %p264 = por %p262, %p263
      %p265 = scmp.ne.s32.totalorder %s256, %s257
      %p266 = scmp.eq.s32.totalorder %s36, 0
      %p267 = por %p265, %p266
      %p268 = scmp.ne.s32.totalorder %s256, %s257
      %p269 = scmp.eq.s32.totalorder %s37, 1
      %p270 = por %p268, %p269
      %p272 = scmp.ne.s32.totalorder %s257, %s271
      %p273 = scmp.eq.s32.totalorder %s37, 0
      %p274 = por %p272, %p273
      %s276 = sadd.s32 %s275, 1
      %p279 = scmp.eq.s32.totalorder %s31, 1
      %p280 = scmp.ne.s32.totalorder %s275, %s277
      %p281 = scmp.eq.s32.totalorder %s31, 0
      %p282 = por %p280, %p281
      %p283 = scmp.ne.s32.totalorder %s275, %s277
      %p284 = scmp.eq.s32.totalorder %s36, 1
      %p285 = por %p283, %p284
      %p286 = scmp.ne.s32.totalorder %s277, %s278
      %p287 = scmp.eq.s32.totalorder %s36, 0
      %p288 = por %p286, %p287
      %p289 = scmp.ne.s32.totalorder %s277, %s278
      %p290 = scmp.eq.s32.totalorder %s37, 1
      %p291 = por %p289, %p290
      %p293 = scmp.ne.s32.totalorder %s278, %s292
      %p294 = scmp.eq.s32.totalorder %s37, 0
      %p295 = por %p293, %p294
      %s297 = sadd.s32 %s296, 1
      %p300 = scmp.eq.s32.totalorder %s31, 1
      %p301 = scmp.ne.s32.totalorder %s296, %s298
      %p302 = scmp.eq.s32.totalorder %s31, 0
      %p303 = por %p301, %p302
      %p304 = scmp.ne.s32.totalorder %s296, %s298
      %p305 = scmp.eq.s32.totalorder %s36, 1
      %p306 = por %p304, %p305
      %p307 = scmp.ne.s32.totalorder %s298, %s299
      %p308 = scmp.eq.s32.totalorder %s36, 0
      %p309 = por %p307, %p308
      %p310 = scmp.ne.s32.totalorder %s298, %s299
      %p311 = scmp.eq.s32.totalorder %s37, 1
      %p312 = por %p310, %p311
      %p314 = scmp.ne.s32.totalorder %s299, %s313
      %p315 = scmp.eq.s32.totalorder %s37, 0
      %p316 = por %p314, %p315
      %s317 = ssub.s32 %s31, %s38
      %p318 = scmp.eq.s32.totalorder %s317, 0
      %s320 = sadd.s32 %s319, 1
      %s321 = scalar_select %p318, %s319, %s320
      %p324 = pneg %p318
      %p325 = scmp.eq.s32.totalorder %s31, 1
      %p326 = por %p324, %p325
      %p327 = scmp.ne.s32.totalorder %s319, %s322
      %p328 = scmp.eq.s32.totalorder %s31, 0
      %p329 = por %p327, %p328
      %p330 = scmp.ne.s32.totalorder %s319, %s322
      %p331 = scmp.eq.s32.totalorder %s36, 1
      %p332 = por %p330, %p331
      %p333 = scmp.ne.s32.totalorder %s322, %s323
      %p334 = scmp.eq.s32.totalorder %s36, 0
      %p335 = por %p333, %p334
      %p336 = scmp.ne.s32.totalorder %s322, %s323
      %p337 = scmp.eq.s32.totalorder %s37, 1
      %p338 = por %p336, %p337
      %p340 = scmp.ne.s32.totalorder %s323, %s339
      %p341 = scmp.eq.s32.totalorder %s37, 0
      %p342 = por %p340, %p341
      %p343 = scmp.le.s32.totalorder 1, %s31
      %p344 = scmp.lt.s32.totalorder %s31, 3
      %p345 = pnand %p343, %p344
      %p346 = pneg %p345
      // Predicated region
      $region9: #{tpu_custom_call.1} parent=5 // pred_check
        _
      $region10: #{tpu_custom_call.1} parent=5 // pred_check_branch
        %348 = sbr.rel (%p345) target = $region12
      $region11: #{tpu_custom_call.1} parent=5 // pred_region
        %s349 = ssub.s32 %s31, 1
        // Predicated region
        $region13: #{tpu_custom_call.1} parent=11 // pred_check
          %p350 = pneg %p78
        $region14: #{tpu_custom_call.1} parent=11 // pred_check_branch
          %352 = sbr.rel (%p350) target = $region16
        $region15: #{tpu_custom_call.1} parent=11 // pred_region
          %s354 = ssub.s32 16, 16
          %355 = vsyncadd [#allocation8], %s354
          %s357 = sshll.u32 [#allocation7], 4
          %s358 = int_to_ptr.vmem [resolvable:$true] %s357
          %360 = dma.hbm_to_vmem [thread:$0]  %s1, 16, %s358, [#allocation8]
        $region16: #{tpu_custom_call.1} parent=11 // pred_fallthru
          _
        // Predicated region
        $region17: #{tpu_custom_call.1} parent=11 // pred_check
          %p361 = pneg %p99
        $region18: #{tpu_custom_call.1} parent=11 // pred_check_branch
          %363 = sbr.rel (%p361) target = $region20
        $region19: #{tpu_custom_call.1} parent=11 // pred_region
          %s365 = ssub.s32 16, 16
          %366 = vsyncadd [#allocation8], %s365
          %s368 = sshll.u32 [#allocation9], 4
          %s369 = int_to_ptr.vmem [resolvable:$true] %s368
          %371 = dma.hbm_to_vmem [thread:$0]  %s2, 16, %s369, [#allocation8]
        $region20: #{tpu_custom_call.1} parent=11 // pred_fallthru
          _
        // Predicated region
        $region21: #{tpu_custom_call.1} parent=11 // pred_check
          %p372 = pneg %p120
        $region22: #{tpu_custom_call.1} parent=11 // pred_check_branch
          %374 = sbr.rel (%p372) target = $region24
        $region23: #{tpu_custom_call.1} parent=11 // pred_region
          %s376 = ssub.s32 3072, 3072
          %377 = vsyncadd [#allocation11], %s376
          %s378 = sshll.u32 [#allocation10], 4
          %s379 = int_to_ptr.vmem [resolvable:$true] %s378
          %384 = dma.hbm_to_vmem [thread:$0]  %s3, 3072, %s379, [#allocation11], 192, 192, 12
        $region24: #{tpu_custom_call.1} parent=11 // pred_fallthru
          _
        // Predicated region
        $region25: #{tpu_custom_call.1} parent=11 // pred_check
          %p385 = pneg %p141
        $region26: #{tpu_custom_call.1} parent=11 // pred_check_branch
          %387 = sbr.rel (%p385) target = $region28
        $region27: #{tpu_custom_call.1} parent=11 // pred_region
          %s389 = ssub.s32 48, 48
          %390 = vsyncadd [#allocation11], %s389
          %s392 = sshll.u32 [#allocation12], 4
          %s393 = int_to_ptr.vmem [resolvable:$true] %s392
          %395 = dma.hbm_to_vmem [thread:$0]  %s4, 48, %s393, [#allocation11]
        $region28: #{tpu_custom_call.1} parent=11 // pred_fallthru
          _
        // Predicated region
        $region29: #{tpu_custom_call.1} parent=11 // pred_check
          %p396 = pneg %p162
        $region30: #{tpu_custom_call.1} parent=11 // pred_check_branch
          %398 = sbr.rel (%p396) target = $region32
        $region31: #{tpu_custom_call.1} parent=11 // pred_region
          %s400 = ssub.s32 1024, 1024
          %401 = vsyncadd [#allocation14], %s400
          %s402 = sshll.u32 [#allocation13], 4
          %s403 = int_to_ptr.vmem [resolvable:$true] %s402
          %408 = dma.hbm_to_vmem [thread:$0]  %s5, 1024, %s403, [#allocation14], 64, 64, 4
        $region32: #{tpu_custom_call.1} parent=11 // pred_fallthru
          _
        // Predicated region
        $region33: #{tpu_custom_call.1} parent=11 // pred_check
          %p409 = pneg %p183
        $region34: #{tpu_custom_call.1} parent=11 // pred_check_branch
          %411 = sbr.rel (%p409) target = $region36
        $region35: #{tpu_custom_call.1} parent=11 // pred_region
          %s413 = ssub.s32 16, 16
          %414 = vsyncadd [#allocation14], %s413
          %s416 = sshll.u32 [#allocation15], 4
          %s417 = int_to_ptr.vmem [resolvable:$true] %s416
          %419 = dma.hbm_to_vmem [thread:$0]  %s6, 16, %s417, [#allocation14]
        $region36: #{tpu_custom_call.1} parent=11 // pred_fallthru
          _
        // Predicated region
        $region37: #{tpu_custom_call.1} parent=11 // pred_check
          %p420 = pneg %p204
        $region38: #{tpu_custom_call.1} parent=11 // pred_check_branch
          %422 = sbr.rel (%p420) target = $region40
        $region39: #{tpu_custom_call.1} parent=11 // pred_region
          %s424 = ssub.s32 16, 16
          %425 = vsyncadd [#allocation17], %s424
          %s427 = sshll.u32 [#allocation16], 4
          %s428 = int_to_ptr.vmem [resolvable:$true] %s427
          %430 = dma.hbm_to_vmem [thread:$0]  %s7, 16, %s428, [#allocation17]
        $region40: #{tpu_custom_call.1} parent=11 // pred_fallthru
          _
        // Predicated region
        $region41: #{tpu_custom_call.1} parent=11 // pred_check
          %p431 = pneg %p225
        $region42: #{tpu_custom_call.1} parent=11 // pred_check_branch
          %433 = sbr.rel (%p431) target = $region44
        $region43: #{tpu_custom_call.1} parent=11 // pred_region
          %s435 = ssub.s32 16, 16
          %436 = vsyncadd [#allocation17], %s435
          %s438 = sshll.u32 [#allocation18], 4
          %s439 = int_to_ptr.vmem [resolvable:$true] %s438
          %441 = dma.hbm_to_vmem [thread:$0]  %s8, 16, %s439, [#allocation17]
        $region44: #{tpu_custom_call.1} parent=11 // pred_fallthru
          _
        // Predicated region
        $region45: #{tpu_custom_call.1} parent=11 // pred_check
          %p442 = pneg %p246
        $region46: #{tpu_custom_call.1} parent=11 // pred_check_branch
          %444 = sbr.rel (%p442) target = $region48
        $region47: #{tpu_custom_call.1} parent=11 // pred_region
          %s446 = ssub.s32 2048, 2048
          %447 = vsyncadd [#allocation20], %s446
          %s448 = sshll.u32 [#allocation19], 4
          %s449 = int_to_ptr.vmem [resolvable:$true] %s448
          %454 = dma.hbm_to_vmem [thread:$0]  %s9, 2048, %s449, [#allocation20], 128, 128, 8
        $region48: #{tpu_custom_call.1} parent=11 // pred_fallthru
          _
        // Predicated region
        $region49: #{tpu_custom_call.1} parent=11 // pred_check
          %p455 = pneg %p267
        $region50: #{tpu_custom_call.1} parent=11 // pred_check_branch
          %457 = sbr.rel (%p455) target = $region52
        $region51: #{tpu_custom_call.1} parent=11 // pred_region
          %s459 = ssub.s32 32, 32
          %460 = vsyncadd [#allocation20], %s459
          %s462 = sshll.u32 [#allocation21], 4
          %s463 = int_to_ptr.vmem [resolvable:$true] %s462
          %465 = dma.hbm_to_vmem [thread:$0]  %s10, 32, %s463, [#allocation20]
        $region52: #{tpu_custom_call.1} parent=11 // pred_fallthru
          _
        // Predicated region
        $region53: #{tpu_custom_call.1} parent=11 // pred_check
          %p466 = pneg %p288
        $region54: #{tpu_custom_call.1} parent=11 // pred_check_branch
          %468 = sbr.rel (%p466) target = $region56
        $region55: #{tpu_custom_call.1} parent=11 // pred_region
          %s470 = ssub.s32 2048, 2048
          %471 = vsyncadd [#allocation23], %s470
          %s472 = sshll.u32 [#allocation22], 4
          %s473 = int_to_ptr.vmem [resolvable:$true] %s472
          %478 = dma.hbm_to_vmem [thread:$0]  %s11, 2048, %s473, [#allocation23], 64, 64, 4
        $region56: #{tpu_custom_call.1} parent=11 // pred_fallthru
          _
        // Predicated region
        $region57: #{tpu_custom_call.1} parent=11 // pred_check
          %p479 = pneg %p309
        $region58: #{tpu_custom_call.1} parent=11 // pred_check_branch
          %481 = sbr.rel (%p479) target = $region60
        $region59: #{tpu_custom_call.1} parent=11 // pred_region
          %s483 = ssub.s32 16, 16
          %484 = vsyncadd [#allocation23], %s483
          %s486 = sshll.u32 [#allocation24], 4
          %s487 = int_to_ptr.vmem [resolvable:$true] %s486
          %489 = dma.hbm_to_vmem [thread:$0]  %s12, 16, %s487, [#allocation23]
        $region60: #{tpu_custom_call.1} parent=11 // pred_fallthru
          _
      $region12: #{tpu_custom_call.1} parent=5 // pred_fallthru
        _
      %p490 = scmp.lt.s32.totalorder %s31, 2
      // Predicated region
      $region61: #{tpu_custom_call.1} parent=5 // pred_check
        %p491 = pneg %p490
      $region62: #{tpu_custom_call.1} parent=5 // pred_check_branch
        %493 = sbr.rel (%p491) target = $region64
      $region63: #{tpu_custom_call.1} parent=5 // pred_region
        // Predicated region
        $region65: #{tpu_custom_call.1} parent=63 // pred_check
          %p494 = pneg %p51
        $region66: #{tpu_custom_call.1} parent=63 // pred_check_branch
          %496 = sbr.rel (%p494) target = $region68
        $region67: #{tpu_custom_call.1} parent=63 // pred_region
          %s497 = sand.u32 %s41, 1
          %s498 = scalar_lea.sflag [#allocation5], %s497
          %s499 = sand.u32 %s41, 1
          %s500 = smul.addr %s499, 16
          %s501 = scalar_lea.vmem [#allocation4], %s500
          %s503 = ssub.s32 256, 256
          %504 = vsyncadd %s498, %s503
          %s505 = smul.addr %s31, 2
          %s506 = smul.addr %s505, 128
          %s507 = scalar_lea.hbm %s0, %s506
          %s508 = sshll.u32 %s501, 4
          %s509 = int_to_ptr.vmem [resolvable:$true] %s508
          %514 = dma.hbm_to_vmem [thread:$0]  %s507, 256, %s509, %s498, 128, 128, 8
        $region68: #{tpu_custom_call.1} parent=63 // pred_fallthru
          _
      $region64: #{tpu_custom_call.1} parent=5 // pred_fallthru
        _
      %p515 = scmp.le.s32.totalorder 1, %s31
      %p516 = scmp.lt.s32.totalorder %s31, 3
      %p517 = pnand %p515, %p516
      %p518 = pneg %p517
      // Predicated region
      $region69: #{tpu_custom_call.1} parent=5 // pred_check
        _
      $region70: #{tpu_custom_call.1} parent=5 // pred_check_branch
        %520 = sbr.rel (%p517) target = $region72
      $region71: #{tpu_custom_call.1} parent=5 // pred_region
        %s521 = ssub.s32 %s31, 1
        %s522 = sand.u32 %s44, 1
        %s523 = scalar_lea.sflag [#allocation5], %s522
        %s524 = sand.u32 %s44, 1
        %s525 = smul.addr %s524, 16
        %s526 = scalar_lea.vmem [#allocation4], %s525
        // Predicated region
        $region73: #{tpu_custom_call.1} parent=71 // pred_check
          %p527 = pneg %p57
        $region74: #{tpu_custom_call.1} parent=71 // pred_check_branch
          %529 = sbr.rel (%p527) target = $region76
        $region75: #{tpu_custom_call.1} parent=71 // pred_region
          %530 = dma.done %s523, 256
        $region76: #{tpu_custom_call.1} parent=71 // pred_fallthru
          _
        // Predicated region
        $region77: #{tpu_custom_call.1} parent=71 // pred_check
          %p531 = pneg %p78
        $region78: #{tpu_custom_call.1} parent=71 // pred_check_branch
          %533 = sbr.rel (%p531) target = $region80
        $region79: #{tpu_custom_call.1} parent=71 // pred_region
          %534 = dma.done [#allocation8], 16
        $region80: #{tpu_custom_call.1} parent=71 // pred_fallthru
          _
        // Predicated region
        $region81: #{tpu_custom_call.1} parent=71 // pred_check
          %p535 = pneg %p99
        $region82: #{tpu_custom_call.1} parent=71 // pred_check_branch
          %537 = sbr.rel (%p535) target = $region84
        $region83: #{tpu_custom_call.1} parent=71 // pred_region
          %538 = dma.done [#allocation8], 16
        $region84: #{tpu_custom_call.1} parent=71 // pred_fallthru
          _
        // Predicated region
        $region85: #{tpu_custom_call.1} parent=71 // pred_check
          %p539 = pneg %p120
        $region86: #{tpu_custom_call.1} parent=71 // pred_check_branch
          %541 = sbr.rel (%p539) target = $region88
        $region87: #{tpu_custom_call.1} parent=71 // pred_region
          %542 = dma.done [#allocation11], 3072
        $region88: #{tpu_custom_call.1} parent=71 // pred_fallthru
          _
        // Predicated region
        $region89: #{tpu_custom_call.1} parent=71 // pred_check
          %p543 = pneg %p141
        $region90: #{tpu_custom_call.1} parent=71 // pred_check_branch
          %545 = sbr.rel (%p543) target = $region92
        $region91: #{tpu_custom_call.1} parent=71 // pred_region
          %546 = dma.done [#allocation11], 48
        $region92: #{tpu_custom_call.1} parent=71 // pred_fallthru
          _
        // Predicated region
        $region93: #{tpu_custom_call.1} parent=71 // pred_check
          %p547 = pneg %p162
        $region94: #{tpu_custom_call.1} parent=71 // pred_check_branch
          %549 = sbr.rel (%p547) target = $region96
        $region95: #{tpu_custom_call.1} parent=71 // pred_region
          %550 = dma.done [#allocation14], 1024
        $region96: #{tpu_custom_call.1} parent=71 // pred_fallthru
          _
        // Predicated region
        $region97: #{tpu_custom_call.1} parent=71 // pred_check
          %p551 = pneg %p183
        $region98: #{tpu_custom_call.1} parent=71 // pred_check_branch
          %553 = sbr.rel (%p551) target = $region100
        $region99: #{tpu_custom_call.1} parent=71 // pred_region
          %554 = dma.done [#allocation14], 16
        $region100: #{tpu_custom_call.1} parent=71 // pred_fallthru
          _
        // Predicated region
        $region101: #{tpu_custom_call.1} parent=71 // pred_check
          %p555 = pneg %p204
        $region102: #{tpu_custom_call.1} parent=71 // pred_check_branch
          %557 = sbr.rel (%p555) target = $region104
        $region103: #{tpu_custom_call.1} parent=71 // pred_region
          %558 = dma.done [#allocation17], 16
        $region104: #{tpu_custom_call.1} parent=71 // pred_fallthru
          _
        // Predicated region
        $region105: #{tpu_custom_call.1} parent=71 // pred_check
          %p559 = pneg %p225
        $region106: #{tpu_custom_call.1} parent=71 // pred_check_branch
          %561 = sbr.rel (%p559) target = $region108
        $region107: #{tpu_custom_call.1} parent=71 // pred_region
          %562 = dma.done [#allocation17], 16
        $region108: #{tpu_custom_call.1} parent=71 // pred_fallthru
          _
        // Predicated region
        $region109: #{tpu_custom_call.1} parent=71 // pred_check
          %p563 = pneg %p246
        $region110: #{tpu_custom_call.1} parent=71 // pred_check_branch
          %565 = sbr.rel (%p563) target = $region112
        $region111: #{tpu_custom_call.1} parent=71 // pred_region
          %566 = dma.done [#allocation20], 2048
        $region112: #{tpu_custom_call.1} parent=71 // pred_fallthru
          _
        // Predicated region
        $region113: #{tpu_custom_call.1} parent=71 // pred_check
          %p567 = pneg %p267
        $region114: #{tpu_custom_call.1} parent=71 // pred_check_branch
          %569 = sbr.rel (%p567) target = $region116
        $region115: #{tpu_custom_call.1} parent=71 // pred_region
          %570 = dma.done [#allocation20], 32
        $region116: #{tpu_custom_call.1} parent=71 // pred_fallthru
          _
        // Predicated region
        $region117: #{tpu_custom_call.1} parent=71 // pred_check
          %p571 = pneg %p288
        $region118: #{tpu_custom_call.1} parent=71 // pred_check_branch
          %573 = sbr.rel (%p571) target = $region120
        $region119: #{tpu_custom_call.1} parent=71 // pred_region
          %574 = dma.done [#allocation23], 2048
        $region120: #{tpu_custom_call.1} parent=71 // pred_fallthru
          _
        // Predicated region
        $region121: #{tpu_custom_call.1} parent=71 // pred_check
          %p575 = pneg %p309
        $region122: #{tpu_custom_call.1} parent=71 // pred_check_branch
          %577 = sbr.rel (%p575) target = $region124
        $region123: #{tpu_custom_call.1} parent=71 // pred_region
          %578 = dma.done [#allocation23], 16
        $region124: #{tpu_custom_call.1} parent=71 // pred_fallthru
          _
        %s579 = sand.u32 %s44, 1
        %s580 = scalar_lea.sflag [#allocation5], %s579
        %s581 = sand.u32 %s44, 1
        %s582 = smul.addr %s581, 16
        %s583 = scalar_lea.vmem [#allocation4], %s582
        %p584 = pneg %p57
        %p585 = pneg %p54
        %p586 = pneg %p78
        %p587 = pneg %p75
        %p588 = pneg %p99
        %p589 = pneg %p96
        %p590 = pneg %p120
        %p591 = pneg %p117
        %p592 = pneg %p141
        %p593 = pneg %p138
        %p594 = pneg %p162
        %p595 = pneg %p159
        %p596 = pneg %p183
        %p597 = pneg %p180
        %p598 = pneg %p204
        %p599 = pneg %p201
        %p600 = pneg %p225
        %p601 = pneg %p222
        %p602 = pneg %p246
        %p603 = pneg %p243
        %p604 = pneg %p267
        %p605 = pneg %p264
        %p606 = pneg %p288
        %p607 = pneg %p285
        %p608 = pneg %p309
        %p609 = pneg %p306
        %p610 = pneg %p335
        %p611 = pneg %p332
        %s612 = sand.u32 %s322, 1
        %s613 = scalar_lea.sflag [#allocation6], %s612
        %s614 = sand.u32 %s322, 1
        %s615 = smul.addr %s614, 16
        %s616 = scalar_lea.vmem [#allocation25], %s615
        %v622 = vld [vmem:[%s526] sm:$0xff]
        %v623 = vld [vmem:[%s526 + $0x8] sm:$0xff]
        %v624 = vld [vmem:[#allocation7] sm:$0x1]
        %v625 = vld [vmem:[#allocation9] sm:$0x1]
        %626 = vadd.xlane.f32.xlu0 %v622
        %v627 = vpop.xlane.xlu0 %626
        %628 = vadd.xlane.f32.xlu0 %v623
        %v629 = vpop.xlane.xlu0 %628
        %v630 = vrcp.pop 128.0
        %v631 = vmul.f32 %v627, %v630
        %v632 = vmul.f32 %v629, %v630
        %v633 = vsub.f32 %v622, %v631
        %v634 = vsub.f32 %v623, %v632
        %v635 = vmul.f32 %v633, %v633
        %v636 = vmul.f32 %v634, %v634
        %637 = vadd.xlane.f32.xlu0 %v635
        %v638 = vpop.xlane.xlu0 %637
        %639 = vadd.xlane.f32.xlu0 %v636
        %v640 = vpop.xlane.xlu0 %639
        %v641 = vmul.f32 %v638, %v630
        %v642 = vmul.f32 %v640, %v630
        %v643 = vadd.f32 %v641, 1e-05
        %v644 = vadd.f32 %v642, 1e-05
        %v645 = vrsqrt.pop %v643
        %v646 = vrsqrt.pop %v644
        %v647 = vmul.f32 %v633, %v645
        %v648 = vmul.f32 %v634, %v646
        %v650 = vlaneseq
        %v651 = vshrl.u32 %v650, 7
        %v652 = vsub.s32 0, %v651
        %v653 = vrot.slane %v624, %v652
        %v655 = vmul.f32 %v647, %v653
        %v656 = vmul.f32 %v648, %v653
        %v658 = vlaneseq
        %v659 = vshrl.u32 %v658, 7
        %v660 = vsub.s32 0, %v659
        %v661 = vrot.slane %v625, %v660
        %v663 = vadd.f32 %v655, %v661
        %v664 = vadd.f32 %v656, %v661
        %v665 = vpack.c.bf16 %v664, %v663
        %v666 = vld [vmem:[#allocation10] sm:$0xff]
        %v667 = vld [vmem:[#allocation10 + $0x8] sm:$0xf]
        %v668 = vld [vmem:[#allocation10 + $0xc] sm:$0xff]
        %v669 = vld [vmem:[#allocation10 + $0x14] sm:$0xf]
        %v670 = vld [vmem:[#allocation10 + $0x18] sm:$0xff]
        %v671 = vld [vmem:[#allocation10 + $0x20] sm:$0xf]
        %v672 = vld [vmem:[#allocation10 + $0x24] sm:$0xff]
        %v673 = vld [vmem:[#allocation10 + $0x2c] sm:$0xf]
        %v674 = vld [vmem:[#allocation10 + $0x30] sm:$0xff]
        %v675 = vld [vmem:[#allocation10 + $0x38] sm:$0xf]
        %v676 = vld [vmem:[#allocation10 + $0x3c] sm:$0xff]
        %v677 = vld [vmem:[#allocation10 + $0x44] sm:$0xf]
        %v678 = vld [vmem:[#allocation10 + $0x48] sm:$0xff]
        %v679 = vld [vmem:[#allocation10 + $0x50] sm:$0xf]
        %v680 = vld [vmem:[#allocation10 + $0x54] sm:$0xff]
        %v681 = vld [vmem:[#allocation10 + $0x5c] sm:$0xf]
        %v682 = vld [vmem:[#allocation10 + $0x60] sm:$0xff]
        %v683 = vld [vmem:[#allocation10 + $0x68] sm:$0xf]
        %v684 = vld [vmem:[#allocation10 + $0x6c] sm:$0xff]
        %v685 = vld [vmem:[#allocation10 + $0x74] sm:$0xf]
        %v686 = vld [vmem:[#allocation10 + $0x78] sm:$0xff]
        %v687 = vld [vmem:[#allocation10 + $0x80] sm:$0xf]
        %v688 = vld [vmem:[#allocation10 + $0x84] sm:$0xff]
        %v689 = vld [vmem:[#allocation10 + $0x8c] sm:$0xf]
        %v690 = vld [vmem:[#allocation10 + $0x90] sm:$0xff]
        %v691 = vld [vmem:[#allocation10 + $0x98] sm:$0xf]
        %v692 = vld [vmem:[#allocation10 + $0x9c] sm:$0xff]
        %v693 = vld [vmem:[#allocation10 + $0xa4] sm:$0xf]
        %v694 = vld [vmem:[#allocation10 + $0xa8] sm:$0xff]
        %v695 = vld [vmem:[#allocation10 + $0xb0] sm:$0xf]
        %v696 = vld [vmem:[#allocation10 + $0xb4] sm:$0xff]
        %v697 = vld [vmem:[#allocation10 + $0xbc] sm:$0xf]
        %v698 = vld [vmem:[#allocation12] sm:$0x7]
        %v700 = vlaneseq
        %v701 = vshrl.u32 %v700, 7
        %v702 = vsub.s32 0, %v701
        %v703 = vrot.slane %v698, %v702
        %v704 = vlaneseq
        %v705 = vshrl.u32 %v704, 7
        %v706 = vsub.s32 1, %v705
        %v707 = vrot.slane %v698, %v706
        %v708 = vlaneseq
        %v709 = vshrl.u32 %v708, 7
        %v710 = vsub.s32 2, %v709
        %v711 = vrot.slane %v698, %v710
        %v747 = vunpack.c.l.b16 %v666
        %v748 = vunpack.c.h.b16 %v666
        %v749 = vunpack.c.l.b16 %v667
        %v750 = vunpack.c.l.b16 %v668
        %v751 = vunpack.c.h.b16 %v668
        %v752 = vunpack.c.l.b16 %v669
        %v753 = vunpack.c.l.b16 %v670
        %v754 = vunpack.c.h.b16 %v670
        %v755 = vunpack.c.l.b16 %v671
        %v756 = vunpack.c.l.b16 %v672
        %v757 = vunpack.c.h.b16 %v672
        %v758 = vunpack.c.l.b16 %v673
        %v759 = vunpack.c.l.b16 %v674
        %v760 = vunpack.c.h.b16 %v674
        %v761 = vunpack.c.l.b16 %v675
        %v762 = vunpack.c.l.b16 %v676
        %v763 = vunpack.c.h.b16 %v676
        %v764 = vunpack.c.l.b16 %v677
        %v765 = vunpack.c.l.b16 %v678
        %v766 = vunpack.c.h.b16 %v678
        %v767 = vunpack.c.l.b16 %v679
        %v768 = vunpack.c.l.b16 %v680
        %v769 = vunpack.c.h.b16 %v680
        %v770 = vunpack.c.l.b16 %v681
        %v771 = vunpack.c.l.b16 %v682
        %v772 = vunpack.c.h.b16 %v682
        %v773 = vunpack.c.l.b16 %v683
        %v774 = vunpack.c.l.b16 %v684
        %v775 = vunpack.c.h.b16 %v684
        %v776 = vunpack.c.l.b16 %v685
        %v777 = vunpack.c.l.b16 %v686
        %v778 = vunpack.c.h.b16 %v686
        %v779 = vunpack.c.l.b16 %v687
        %v780 = vunpack.c.l.b16 %v688
        %v781 = vunpack.c.h.b16 %v688
        %v782 = vunpack.c.l.b16 %v689
        %v783 = vunpack.c.l.b16 %v690
        %v784 = vunpack.c.h.b16 %v690
        %v785 = vunpack.c.l.b16 %v691
        %v786 = vunpack.c.l.b16 %v692
        %v787 = vunpack.c.h.b16 %v692
        %v788 = vunpack.c.l.b16 %v693
        %v789 = vunpack.c.l.b16 %v694
        %v790 = vunpack.c.h.b16 %v694
        %v791 = vunpack.c.l.b16 %v695
        %v792 = vunpack.c.l.b16 %v696
        %v793 = vunpack.c.h.b16 %v696
        %v794 = vunpack.c.l.b16 %v697
        %v795 = vpack.c.b16 %v750, %v747
        %v796 = vpack.c.b16 %v751, %v748
        %v797 = vpack.c.b16 %v752, %v749
        %v798 = vpack.c.b16 %v756, %v753
        %v799 = vpack.c.b16 %v757, %v754
        %v800 = vpack.c.b16 %v758, %v755
        %v801 = vpack.c.b16 %v762, %v759
        %v802 = vpack.c.b16 %v763, %v760
        %v803 = vpack.c.b16 %v764, %v761
        %v804 = vpack.c.b16 %v768, %v765
        %v805 = vpack.c.b16 %v769, %v766
        %v806 = vpack.c.b16 %v770, %v767
        %v807 = vpack.c.b16 %v774, %v771
        %v808 = vpack.c.b16 %v775, %v772
        %v809 = vpack.c.b16 %v776, %v773
        %v810 = vpack.c.b16 %v780, %v777
        %v811 = vpack.c.b16 %v781, %v778
        %v812 = vpack.c.b16 %v782, %v779
        %v813 = vpack.c.b16 %v786, %v783
        %v814 = vpack.c.b16 %v787, %v784
        %v815 = vpack.c.b16 %v788, %v785
        %v816 = vpack.c.b16 %v792, %v789
        %v817 = vpack.c.b16 %v793, %v790
        %v818 = vpack.c.b16 %v794, %v791
        %843 = vmatprep.subr.bf16.mxu0 %v796
        %844 = vmatpush1.bf16.msra.mxu0 %v795
        %845 = vmatprep.subr.bf16.mxu0 %v799
        %846 = vmatpush1.bf16.msra.mxu0 %v798
        %847 = vmatprep.subr.bf16.mxu0 %v802
        %848 = vmatpush1.bf16.msra.mxu0 %v801
        %849 = vmatprep.subr.bf16.mxu0 %v805
        %850 = vmatpush1.bf16.msra.mxu0 %v804
        %851 = vmatprep.subr.bf16.mxu0 %v808
        %852 = vmatpush1.bf16.msra.mxu0 %v807
        %853 = vmatprep.subr.bf16.mxu0 %v811
        %854 = vmatpush1.bf16.msra.mxu0 %v810
        %855 = vmatprep.subr.bf16.mxu0 %v814
        %856 = vmatpush1.bf16.msra.mxu0 %v813
        %857 = vmatprep.subr.bf16.mxu0 %v817
        %858 = vmatpush1.bf16.msra.mxu0 %v816
        %859 = vmatprep.subr.bf16.mxu0 0
        %860 = vmatpush1.bf16.msra.mxu0 0
        %861 = vmatprep.subr.bf16.mxu0 0
        %862 = vmatpush1.bf16.msra.mxu0 0
        %863 = vmatprep.subr.bf16.mxu0 0
        %864 = vmatpush1.bf16.msra.mxu0 0
        %865 = vmatprep.subr.bf16.mxu0 0
        %866 = vmatpush1.bf16.msra.mxu0 0
        %867 = vmatprep.subr.bf16.mxu0 0
        %868 = vmatpush1.bf16.msra.mxu0 0
        %869 = vmatprep.subr.bf16.mxu0 0
        %870 = vmatpush1.bf16.msra.mxu0 0
        %871 = vmatprep.subr.bf16.mxu0 0
        %872 = vmatpush1.bf16.msra.mxu0 0
        %873 = vmatprep.subr.bf16.mxu0 0
        %874 = vmatpush1.bf16.msra.mxu0 0
        %875 = vmatprep.mubr.bf16.mxu0 0
        %876 = vmatmul.mubr.bf16.gmra.mrb[0].mxu0 %v665
        %v877 = vpop.f32.mrb[0].mxu0
        %v878 = vadd.f32 %v703, %v877
        %v879 = vpop.f32.mrb[0].mxu0
        %v880 = vadd.f32 %v707, %v879
        %v881 = vpop.f32.mrb[0].mxu0
        %v882 = vadd.f32 %v703, %v881
        %v883 = vpop.f32.mrb[0].mxu0
        %v884 = vadd.f32 %v707, %v883
        %885 = vdwg.mxu0
        %886 = vmatprep.subr.bf16.mxu0 0
        %887 = vmatpush1.bf16.msra.mxu0 %v797
        %888 = vmatprep.subr.bf16.mxu0 0
        %889 = vmatpush1.bf16.msra.mxu0 %v800
        %890 = vmatprep.subr.bf16.mxu0 0
        %891 = vmatpush1.bf16.msra.mxu0 %v803
        %892 = vmatprep.subr.bf16.mxu0 0
        %893 = vmatpush1.bf16.msra.mxu0 %v806
        %894 = vmatprep.subr.bf16.mxu0 0
        %895 = vmatpush1.bf16.msra.mxu0 %v809
        %896 = vmatprep.subr.bf16.mxu0 0
        %897 = vmatpush1.bf16.msra.mxu0 %v812
        %898 = vmatprep.subr.bf16.mxu0 0
        %899 = vmatpush1.bf16.msra.mxu0 %v815
        %900 = vmatprep.subr.bf16.mxu0 0
        %901 = vmatpush1.bf16.msra.mxu0 %v818
        %902 = vmatprep.subr.bf16.mxu0 0
        %903 = vmatpush1.bf16.msra.mxu0 0
        %904 = vmatprep.subr.bf16.mxu0 0
        %905 = vmatpush1.bf16.msra.mxu0 0
        %906 = vmatprep.subr.bf16.mxu0 0
        %907 = vmatpush1.bf16.msra.mxu0 0
        %908 = vmatprep.subr.bf16.mxu0 0
        %909 = vmatpush1.bf16.msra.mxu0 0
        %910 = vmatprep.subr.bf16.mxu0 0
        %911 = vmatpush1.bf16.msra.mxu0 0
        %912 = vmatprep.subr.bf16.mxu0 0
        %913 = vmatpush1.bf16.msra.mxu0 0
        %914 = vmatprep.subr.bf16.mxu0 0
        %915 = vmatpush1.bf16.msra.mxu0 0
        %916 = vmatprep.subr.bf16.mxu0 0
        %917 = vmatpush1.bf16.msra.mxu0 0
        %918 = vmatprep.mubr.bf16.mxu0 0
        %919 = vmatmul.mubr.bf16.gmra.mrb[0].mxu0 %v665
        %v920 = vpop.f32.mrb[0].mxu0
        %v921 = vadd.f32 %v711, %v920
        %v922 = vpop.f32.mrb[0].mxu0
        %v923 = vpop.f32.mrb[0].mxu0
        %v924 = vadd.f32 %v711, %v923
        %v925 = vpop.f32.mrb[0].mxu0
        %926 = vdwg.mxu0
        %929 = vrot.lane.b32.xlu0 %v878, 96
        %v930 = vpop.permute.xlu0 %929
        %931 = vrot.lane.b32.xlu0 %v882, 96
        %v932 = vpop.permute.xlu0 %931
        %935 = vrot.lane.b32.xlu0 %v878, 64
        %v936 = vpop.permute.xlu0 %935
        %937 = vrot.lane.b32.xlu0 %v882, 64
        %v938 = vpop.permute.xlu0 %937
        %941 = vrot.lane.b32.xlu0 %v878, 32
        %v942 = vpop.permute.xlu0 %941
        %943 = vrot.lane.b32.xlu0 %v882, 32
        %v944 = vpop.permute.xlu0 %943
        %v947 = vcombine.low %v878, %v936
        %v948 = vcombine.high %v878, %v936
        %v950 = vunpack.c.l.s4 1983009808
        %v951 = vunpack.c.0.s8 %v950
        %v952 = vlaneseq
        %v953 = vshrl.u32 %v952, 7
        %v954 = vsub.s32 %v951, %v953
        %v955 = vrot.slane %v947, %v954
        %v957 = vunpack.c.l.s4 1983009808
        %v958 = vunpack.c.0.s8 %v957
        %v959 = vlaneseq
        %v960 = vshrl.u32 %v959, 7
        %v961 = vsub.s32 %v958, %v960
        %v962 = vrot.slane %v948, %v961
        %v963 = vcombine.low %v930, %v942
        %v964 = vcombine.high %v930, %v942
        %v966 = vunpack.c.l.s4 1983009808
        %v967 = vunpack.c.0.s8 %v966
        %v968 = vlaneseq
        %v969 = vshrl.u32 %v968, 7
        %v970 = vsub.s32 %v967, %v969
        %v971 = vrot.slane %v963, %v970
        %v973 = vunpack.c.l.s4 1983009808
        %v974 = vunpack.c.0.s8 %v973
        %v975 = vlaneseq
        %v976 = vshrl.u32 %v975, 7
        %v977 = vsub.s32 %v974, %v976
        %v978 = vrot.slane %v964, %v977
        %v979 = vcombine.low %v955, %v971
        %v980 = vcombine.high %v955, %v971
        %v982 = vunpack.c.l.s4 1934713408
        %v983 = vunpack.c.0.s8 %v982
        %v984 = vlaneseq
        %v985 = vshrl.u32 %v984, 7
        %v986 = vsub.s32 %v983, %v985
        %v987 = vrot.slane %v979, %v986
        %v989 = vunpack.c.l.s4 1934713408
        %v990 = vunpack.c.0.s8 %v989
        %v991 = vlaneseq
        %v992 = vshrl.u32 %v991, 7
        %v993 = vsub.s32 %v990, %v992
        %v994 = vrot.slane %v980, %v993
        %v995 = vcombine.low %v962, %v978
        %v996 = vcombine.high %v962, %v978
        %v998 = vunpack.c.l.s4 1934713408
        %v999 = vunpack.c.0.s8 %v998
        %v1000 = vlaneseq
        %v1001 = vshrl.u32 %v1000, 7
        %v1002 = vsub.s32 %v999, %v1001
        %v1003 = vrot.slane %v995, %v1002
        %v1005 = vunpack.c.l.s4 1934713408
        %v1006 = vunpack.c.0.s8 %v1005
        %v1007 = vlaneseq
        %v1008 = vshrl.u32 %v1007, 7
        %v1009 = vsub.s32 %v1006, %v1008
        %v1010 = vrot.slane %v996, %v1009
        %v1011 = vcombine.high %v987, 0.0
        %v1012 = vcombine.high %v994, 0.0
        %v1013 = vcombine.high %v1003, 0.0
        %v1014 = vcombine.high %v1010, 0.0
        %v1015 = vcombine.low %v882, %v938
        %v1016 = vcombine.high %v882, %v938
        %v1018 = vunpack.c.l.s4 1983009808
        %v1019 = vunpack.c.0.s8 %v1018
        %v1020 = vlaneseq
        %v1021 = vshrl.u32 %v1020, 7
        %v1022 = vsub.s32 %v1019, %v1021
        %v1023 = vrot.slane %v1015, %v1022
        %v1025 = vunpack.c.l.s4 1983009808
        %v1026 = vunpack.c.0.s8 %v1025
        %v1027 = vlaneseq
        %v1028 = vshrl.u32 %v1027, 7
        %v1029 = vsub.s32 %v1026, %v1028
        %v1030 = vrot.slane %v1016, %v1029
        %v1031 = vcombine.low %v932, %v944
        %v1032 = vcombine.high %v932, %v944
        %v1034 = vunpack.c.l.s4 1983009808
        %v1035 = vunpack.c.0.s8 %v1034
        %v1036 = vlaneseq
        %v1037 = vshrl.u32 %v1036, 7
        %v1038 = vsub.s32 %v1035, %v1037
        %v1039 = vrot.slane %v1031, %v1038
        %v1041 = vunpack.c.l.s4 1983009808
        %v1042 = vunpack.c.0.s8 %v1041
        %v1043 = vlaneseq
        %v1044 = vshrl.u32 %v1043, 7
        %v1045 = vsub.s32 %v1042, %v1044
        %v1046 = vrot.slane %v1032, %v1045
        %v1047 = vcombine.low %v1023, %v1039
        %v1048 = vcombine.high %v1023, %v1039
        %v1050 = vunpack.c.l.s4 1934713408
        %v1051 = vunpack.c.0.s8 %v1050
        %v1052 = vlaneseq
        %v1053 = vshrl.u32 %v1052, 7
        %v1054 = vsub.s32 %v1051, %v1053
        %v1055 = vrot.slane %v1047, %v1054
        %v1057 = vunpack.c.l.s4 1934713408
        %v1058 = vunpack.c.0.s8 %v1057
        %v1059 = vlaneseq
        %v1060 = vshrl.u32 %v1059, 7
        %v1061 = vsub.s32 %v1058, %v1060
        %v1062 = vrot.slane %v1048, %v1061
        %v1063 = vcombine.low %v1030, %v1046
        %v1064 = vcombine.high %v1030, %v1046
        %v1066 = vunpack.c.l.s4 1934713408
        %v1067 = vunpack.c.0.s8 %v1066
        %v1068 = vlaneseq
        %v1069 = vshrl.u32 %v1068, 7
        %v1070 = vsub.s32 %v1067, %v1069
        %v1071 = vrot.slane %v1063, %v1070
        %v1073 = vunpack.c.l.s4 1934713408
        %v1074 = vunpack.c.0.s8 %v1073
        %v1075 = vlaneseq
        %v1076 = vshrl.u32 %v1075, 7
        %v1077 = vsub.s32 %v1074, %v1076
        %v1078 = vrot.slane %v1064, %v1077
        %v1079 = vcombine.high %v1055, 0.0
        %v1080 = vcombine.high %v1062, 0.0
        %v1081 = vcombine.high %v1071, 0.0
        %v1082 = vcombine.high %v1078, 0.0
        %v1083 = vcombine.low %v987, %v994
        %v1085 = vunpack.c.l.s4 1983009808
        %v1086 = vunpack.c.0.s8 %v1085
        %v1087 = vlaneseq
        %v1088 = vshrl.u32 %v1087, 7
        %v1089 = vsub.s32 %v1086, %v1088
        %v1090 = vrot.slane %v1083, %v1089
        %v1091 = vcombine.low %v1011, %v1012
        %v1093 = vunpack.c.l.s4 1983009808
        %v1094 = vunpack.c.0.s8 %v1093
        %v1095 = vlaneseq
        %v1096 = vshrl.u32 %v1095, 7
        %v1097 = vsub.s32 %v1094, %v1096
        %v1098 = vrot.slane %v1091, %v1097
        %v1099 = vcombine.low %v1003, %v1010
        %v1101 = vunpack.c.l.s4 1983009808
        %v1102 = vunpack.c.0.s8 %v1101
        %v1103 = vlaneseq
        %v1104 = vshrl.u32 %v1103, 7
        %v1105 = vsub.s32 %v1102, %v1104
        %v1106 = vrot.slane %v1099, %v1105
        %v1107 = vcombine.low %v1013, %v1014
        %v1109 = vunpack.c.l.s4 1983009808
        %v1110 = vunpack.c.0.s8 %v1109
        %v1111 = vlaneseq
        %v1112 = vshrl.u32 %v1111, 7
        %v1113 = vsub.s32 %v1110, %v1112
        %v1114 = vrot.slane %v1107, %v1113
        %v1115 = vcombine.low %v1090, %v1098
        %v1116 = vcombine.high %v1090, %v1098
        %v1118 = vunpack.c.l.s4 1934713408
        %v1119 = vunpack.c.0.s8 %v1118
        %v1120 = vlaneseq
        %v1121 = vshrl.u32 %v1120, 7
        %v1122 = vsub.s32 %v1119, %v1121
        %v1123 = vrot.slane %v1115, %v1122
        %v1125 = vunpack.c.l.s4 1934713408
        %v1126 = vunpack.c.0.s8 %v1125
        %v1127 = vlaneseq
        %v1128 = vshrl.u32 %v1127, 7
        %v1129 = vsub.s32 %v1126, %v1128
        %v1130 = vrot.slane %v1116, %v1129
        %v1131 = vcombine.low %v1106, %v1114
        %v1132 = vcombine.high %v1106, %v1114
        %v1134 = vunpack.c.l.s4 1934713408
        %v1135 = vunpack.c.0.s8 %v1134
        %v1136 = vlaneseq
        %v1137 = vshrl.u32 %v1136, 7
        %v1138 = vsub.s32 %v1135, %v1137
        %v1139 = vrot.slane %v1131, %v1138
        %v1141 = vunpack.c.l.s4 1934713408
        %v1142 = vunpack.c.0.s8 %v1141
        %v1143 = vlaneseq
        %v1144 = vshrl.u32 %v1143, 7
        %v1145 = vsub.s32 %v1142, %v1144
        %v1146 = vrot.slane %v1132, %v1145
        %v1147 = vcombine.low %v1123, %v1139
        %v1148 = vcombine.high %v1123, %v1139
        %v1149 = vcombine.low %v1130, %v1146
        %v1150 = vcombine.high %v1130, %v1146
        %v1151 = vcombine.low %v1055, %v1062
        %v1153 = vunpack.c.l.s4 1983009808
        %v1154 = vunpack.c.0.s8 %v1153
        %v1155 = vlaneseq
        %v1156 = vshrl.u32 %v1155, 7
        %v1157 = vsub.s32 %v1154, %v1156
        %v1158 = vrot.slane %v1151, %v1157
        %v1159 = vcombine.low %v1079, %v1080
        %v1161 = vunpack.c.l.s4 1983009808
        %v1162 = vunpack.c.0.s8 %v1161
        %v1163 = vlaneseq
        %v1164 = vshrl.u32 %v1163, 7
        %v1165 = vsub.s32 %v1162, %v1164
        %v1166 = vrot.slane %v1159, %v1165
        %v1167 = vcombine.low %v1071, %v1078
        %v1169 = vunpack.c.l.s4 1983009808
        %v1170 = vunpack.c.0.s8 %v1169
        %v1171 = vlaneseq
        %v1172 = vshrl.u32 %v1171, 7
        %v1173 = vsub.s32 %v1170, %v1172
        %v1174 = vrot.slane %v1167, %v1173
        %v1175 = vcombine.low %v1081, %v1082
        %v1177 = vunpack.c.l.s4 1983009808
        %v1178 = vunpack.c.0.s8 %v1177
        %v1179 = vlaneseq
        %v1180 = vshrl.u32 %v1179, 7
        %v1181 = vsub.s32 %v1178, %v1180
        %v1182 = vrot.slane %v1175, %v1181
        %v1183 = vcombine.low %v1158, %v1166
        %v1184 = vcombine.high %v1158, %v1166
        %v1186 = vunpack.c.l.s4 1934713408
        %v1187 = vunpack.c.0.s8 %v1186
        %v1188 = vlaneseq
        %v1189 = vshrl.u32 %v1188, 7
        %v1190 = vsub.s32 %v1187, %v1189
        %v1191 = vrot.slane %v1183, %v1190
        %v1193 = vunpack.c.l.s4 1934713408
        %v1194 = vunpack.c.0.s8 %v1193
        %v1195 = vlaneseq
        %v1196 = vshrl.u32 %v1195, 7
        %v1197 = vsub.s32 %v1194, %v1196
        %v1198 = vrot.slane %v1184, %v1197
        %v1199 = vcombine.low %v1174, %v1182
        %v1200 = vcombine.high %v1174, %v1182
        %v1202 = vunpack.c.l.s4 1934713408
        %v1203 = vunpack.c.0.s8 %v1202
        %v1204 = vlaneseq
        %v1205 = vshrl.u32 %v1204, 7
        %v1206 = vsub.s32 %v1203, %v1205
        %v1207 = vrot.slane %v1199, %v1206
        %v1209 = vunpack.c.l.s4 1934713408
        %v1210 = vunpack.c.0.s8 %v1209
        %v1211 = vlaneseq
        %v1212 = vshrl.u32 %v1211, 7
        %v1213 = vsub.s32 %v1210, %v1212
        %v1214 = vrot.slane %v1200, %v1213
        %v1215 = vcombine.low %v1191, %v1207
        %v1216 = vcombine.high %v1191, %v1207
        %v1217 = vcombine.low %v1198, %v1214
        %v1218 = vcombine.high %v1198, %v1214
        %v1219 = vpack.c.bf16 %v1215, %v1147
        %v1220 = vpack.c.bf16 %v1216, %v1148
        %v1221 = vpack.c.bf16 %v1217, %v1149
        %v1222 = vpack.c.bf16 %v1218, %v1150
        %1225 = vrot.lane.b32.xlu0 %v880, 96
        %v1226 = vpop.permute.xlu0 %1225
        %1227 = vrot.lane.b32.xlu0 %v884, 96
        %v1228 = vpop.permute.xlu0 %1227
        %1231 = vrot.lane.b32.xlu0 %v880, 64
        %v1232 = vpop.permute.xlu0 %1231
        %1233 = vrot.lane.b32.xlu0 %v884, 64
        %v1234 = vpop.permute.xlu0 %1233
        %1237 = vrot.lane.b32.xlu0 %v880, 32
        %v1238 = vpop.permute.xlu0 %1237
        %1239 = vrot.lane.b32.xlu0 %v884, 32
        %v1240 = vpop.permute.xlu0 %1239
        %v1243 = vcombine.low %v880, %v1232
        %v1244 = vcombine.high %v880, %v1232
        %v1246 = vunpack.c.l.s4 1983009808
        %v1247 = vunpack.c.0.s8 %v1246
        %v1248 = vlaneseq
        %v1249 = vshrl.u32 %v1248, 7
        %v1250 = vsub.s32 %v1247, %v1249
        %v1251 = vrot.slane %v1243, %v1250
        %v1253 = vunpack.c.l.s4 1983009808
        %v1254 = vunpack.c.0.s8 %v1253
        %v1255 = vlaneseq
        %v1256 = vshrl.u32 %v1255, 7
        %v1257 = vsub.s32 %v1254, %v1256
        %v1258 = vrot.slane %v1244, %v1257
        %v1259 = vcombine.low %v1226, %v1238
        %v1260 = vcombine.high %v1226, %v1238
        %v1262 = vunpack.c.l.s4 1983009808
        %v1263 = vunpack.c.0.s8 %v1262
        %v1264 = vlaneseq
        %v1265 = vshrl.u32 %v1264, 7
        %v1266 = vsub.s32 %v1263, %v1265
        %v1267 = vrot.slane %v1259, %v1266
        %v1269 = vunpack.c.l.s4 1983009808
        %v1270 = vunpack.c.0.s8 %v1269
        %v1271 = vlaneseq
        %v1272 = vshrl.u32 %v1271, 7
        %v1273 = vsub.s32 %v1270, %v1272
        %v1274 = vrot.slane %v1260, %v1273
        %v1275 = vcombine.low %v1251, %v1267
        %v1276 = vcombine.high %v1251, %v1267
        %v1278 = vunpack.c.l.s4 1934713408
        %v1279 = vunpack.c.0.s8 %v1278
        %v1280 = vlaneseq
        %v1281 = vshrl.u32 %v1280, 7
        %v1282 = vsub.s32 %v1279, %v1281
        %v1283 = vrot.slane %v1275, %v1282
        %v1285 = vunpack.c.l.s4 1934713408
        %v1286 = vunpack.c.0.s8 %v1285
        %v1287 = vlaneseq
        %v1288 = vshrl.u32 %v1287, 7
        %v1289 = vsub.s32 %v1286, %v1288
        %v1290 = vrot.slane %v1276, %v1289
        %v1291 = vcombine.low %v1258, %v1274
        %v1292 = vcombine.high %v1258, %v1274
        %v1294 = vunpack.c.l.s4 1934713408
        %v1295 = vunpack.c.0.s8 %v1294
        %v1296 = vlaneseq
        %v1297 = vshrl.u32 %v1296, 7
        %v1298 = vsub.s32 %v1295, %v1297
        %v1299 = vrot.slane %v1291, %v1298
        %v1301 = vunpack.c.l.s4 1934713408
        %v1302 = vunpack.c.0.s8 %v1301
        %v1303 = vlaneseq
        %v1304 = vshrl.u32 %v1303, 7
        %v1305 = vsub.s32 %v1302, %v1304
        %v1306 = vrot.slane %v1292, %v1305
        %v1307 = vcombine.high %v1283, 0.0
        %v1308 = vcombine.high %v1290, 0.0
        %v1309 = vcombine.high %v1299, 0.0
        %v1310 = vcombine.high %v1306, 0.0
        %v1311 = vcombine.low %v884, %v1234
        %v1312 = vcombine.high %v884, %v1234
        %v1314 = vunpack.c.l.s4 1983009808
        %v1315 = vunpack.c.0.s8 %v1314
        %v1316 = vlaneseq
        %v1317 = vshrl.u32 %v1316, 7
        %v1318 = vsub.s32 %v1315, %v1317
        %v1319 = vrot.slane %v1311, %v1318
        %v1321 = vunpack.c.l.s4 1983009808
        %v1322 = vunpack.c.0.s8 %v1321
        %v1323 = vlaneseq
        %v1324 = vshrl.u32 %v1323, 7
        %v1325 = vsub.s32 %v1322, %v1324
        %v1326 = vrot.slane %v1312, %v1325
        %v1327 = vcombine.low %v1228, %v1240
        %v1328 = vcombine.high %v1228, %v1240
        %v1330 = vunpack.c.l.s4 1983009808
        %v1331 = vunpack.c.0.s8 %v1330
        %v1332 = vlaneseq
        %v1333 = vshrl.u32 %v1332, 7
        %v1334 = vsub.s32 %v1331, %v1333
        %v1335 = vrot.slane %v1327, %v1334
        %v1337 = vunpack.c.l.s4 1983009808
        %v1338 = vunpack.c.0.s8 %v1337
        %v1339 = vlaneseq
        %v1340 = vshrl.u32 %v1339, 7
        %v1341 = vsub.s32 %v1338, %v1340
        %v1342 = vrot.slane %v1328, %v1341
        %v1343 = vcombine.low %v1319, %v1335
        %v1344 = vcombine.high %v1319, %v1335
        %v1346 = vunpack.c.l.s4 1934713408
        %v1347 = vunpack.c.0.s8 %v1346
        %v1348 = vlaneseq
        %v1349 = vshrl.u32 %v1348, 7
        %v1350 = vsub.s32 %v1347, %v1349
        %v1351 = vrot.slane %v1343, %v1350
        %v1353 = vunpack.c.l.s4 1934713408
        %v1354 = vunpack.c.0.s8 %v1353
        %v1355 = vlaneseq
        %v1356 = vshrl.u32 %v1355, 7
        %v1357 = vsub.s32 %v1354, %v1356
        %v1358 = vrot.slane %v1344, %v1357
        %v1359 = vcombine.low %v1326, %v1342
        %v1360 = vcombine.high %v1326, %v1342
        %v1362 = vunpack.c.l.s4 1934713408
        %v1363 = vunpack.c.0.s8 %v1362
        %v1364 = vlaneseq
        %v1365 = vshrl.u32 %v1364, 7
        %v1366 = vsub.s32 %v1363, %v1365
        %v1367 = vrot.slane %v1359, %v1366
        %v1369 = vunpack.c.l.s4 1934713408
        %v1370 = vunpack.c.0.s8 %v1369
        %v1371 = vlaneseq
        %v1372 = vshrl.u32 %v1371, 7
        %v1373 = vsub.s32 %v1370, %v1372
        %v1374 = vrot.slane %v1360, %v1373
        %v1375 = vcombine.high %v1351, 0.0
        %v1376 = vcombine.high %v1358, 0.0
        %v1377 = vcombine.high %v1367, 0.0
        %v1378 = vcombine.high %v1374, 0.0
        %v1379 = vcombine.low %v1283, %v1290
        %v1381 = vunpack.c.l.s4 1983009808
        %v1382 = vunpack.c.0.s8 %v1381
        %v1383 = vlaneseq
        %v1384 = vshrl.u32 %v1383, 7
        %v1385 = vsub.s32 %v1382, %v1384
        %v1386 = vrot.slane %v1379, %v1385
        %v1387 = vcombine.low %v1307, %v1308
        %v1389 = vunpack.c.l.s4 1983009808
        %v1390 = vunpack.c.0.s8 %v1389
        %v1391 = vlaneseq
        %v1392 = vshrl.u32 %v1391, 7
        %v1393 = vsub.s32 %v1390, %v1392
        %v1394 = vrot.slane %v1387, %v1393
        %v1395 = vcombine.low %v1299, %v1306
        %v1397 = vunpack.c.l.s4 1983009808
        %v1398 = vunpack.c.0.s8 %v1397
        %v1399 = vlaneseq
        %v1400 = vshrl.u32 %v1399, 7
        %v1401 = vsub.s32 %v1398, %v1400
        %v1402 = vrot.slane %v1395, %v1401
        %v1403 = vcombine.low %v1309, %v1310
        %v1405 = vunpack.c.l.s4 1983009808
        %v1406 = vunpack.c.0.s8 %v1405
        %v1407 = vlaneseq
        %v1408 = vshrl.u32 %v1407, 7
        %v1409 = vsub.s32 %v1406, %v1408
        %v1410 = vrot.slane %v1403, %v1409
        %v1411 = vcombine.low %v1386, %v1394
        %v1412 = vcombine.high %v1386, %v1394
        %v1414 = vunpack.c.l.s4 1934713408
        %v1415 = vunpack.c.0.s8 %v1414
        %v1416 = vlaneseq
        %v1417 = vshrl.u32 %v1416, 7
        %v1418 = vsub.s32 %v1415, %v1417
        %v1419 = vrot.slane %v1411, %v1418
        %v1421 = vunpack.c.l.s4 1934713408
        %v1422 = vunpack.c.0.s8 %v1421
        %v1423 = vlaneseq
        %v1424 = vshrl.u32 %v1423, 7
        %v1425 = vsub.s32 %v1422, %v1424
        %v1426 = vrot.slane %v1412, %v1425
        %v1427 = vcombine.low %v1402, %v1410
        %v1428 = vcombine.high %v1402, %v1410
        %v1430 = vunpack.c.l.s4 1934713408
        %v1431 = vunpack.c.0.s8 %v1430
        %v1432 = vlaneseq
        %v1433 = vshrl.u32 %v1432, 7
        %v1434 = vsub.s32 %v1431, %v1433
        %v1435 = vrot.slane %v1427, %v1434
        %v1437 = vunpack.c.l.s4 1934713408
        %v1438 = vunpack.c.0.s8 %v1437
        %v1439 = vlaneseq
        %v1440 = vshrl.u32 %v1439, 7
        %v1441 = vsub.s32 %v1438, %v1440
        %v1442 = vrot.slane %v1428, %v1441
        %v1443 = vcombine.low %v1419, %v1435
        %v1444 = vcombine.high %v1419, %v1435
        %v1445 = vcombine.low %v1426, %v1442
        %v1446 = vcombine.high %v1426, %v1442
        %v1447 = vcombine.low %v1351, %v1358
        %v1449 = vunpack.c.l.s4 1983009808
        %v1450 = vunpack.c.0.s8 %v1449
        %v1451 = vlaneseq
        %v1452 = vshrl.u32 %v1451, 7
        %v1453 = vsub.s32 %v1450, %v1452
        %v1454 = vrot.slane %v1447, %v1453
        %v1455 = vcombine.low %v1375, %v1376
        %v1457 = vunpack.c.l.s4 1983009808
        %v1458 = vunpack.c.0.s8 %v1457
        %v1459 = vlaneseq
        %v1460 = vshrl.u32 %v1459, 7
        %v1461 = vsub.s32 %v1458, %v1460
        %v1462 = vrot.slane %v1455, %v1461
        %v1463 = vcombine.low %v1367, %v1374
        %v1465 = vunpack.c.l.s4 1983009808
        %v1466 = vunpack.c.0.s8 %v1465
        %v1467 = vlaneseq
        %v1468 = vshrl.u32 %v1467, 7
        %v1469 = vsub.s32 %v1466, %v1468
        %v1470 = vrot.slane %v1463, %v1469
        %v1471 = vcombine.low %v1377, %v1378
        %v1473 = vunpack.c.l.s4 1983009808
        %v1474 = vunpack.c.0.s8 %v1473
        %v1475 = vlaneseq
        %v1476 = vshrl.u32 %v1475, 7
        %v1477 = vsub.s32 %v1474, %v1476
        %v1478 = vrot.slane %v1471, %v1477
        %v1479 = vcombine.low %v1454, %v1462
        %v1480 = vcombine.high %v1454, %v1462
        %v1482 = vunpack.c.l.s4 1934713408
        %v1483 = vunpack.c.0.s8 %v1482
        %v1484 = vlaneseq
        %v1485 = vshrl.u32 %v1484, 7
        %v1486 = vsub.s32 %v1483, %v1485
        %v1487 = vrot.slane %v1479, %v1486
        %v1489 = vunpack.c.l.s4 1934713408
        %v1490 = vunpack.c.0.s8 %v1489
        %v1491 = vlaneseq
        %v1492 = vshrl.u32 %v1491, 7
        %v1493 = vsub.s32 %v1490, %v1492
        %v1494 = vrot.slane %v1480, %v1493
        %v1495 = vcombine.low %v1470, %v1478
        %v1496 = vcombine.high %v1470, %v1478
        %v1498 = vunpack.c.l.s4 1934713408
        %v1499 = vunpack.c.0.s8 %v1498
        %v1500 = vlaneseq
        %v1501 = vshrl.u32 %v1500, 7
        %v1502 = vsub.s32 %v1499, %v1501
        %v1503 = vrot.slane %v1495, %v1502
        %v1505 = vunpack.c.l.s4 1934713408
        %v1506 = vunpack.c.0.s8 %v1505
        %v1507 = vlaneseq
        %v1508 = vshrl.u32 %v1507, 7
        %v1509 = vsub.s32 %v1506, %v1508
        %v1510 = vrot.slane %v1496, %v1509
        %v1511 = vcombine.low %v1487, %v1503
        %v1512 = vcombine.high %v1487, %v1503
        %v1513 = vcombine.low %v1494, %v1510
        %v1514 = vcombine.high %v1494, %v1510
        %v1515 = vpack.c.bf16 %v1511, %v1443
        %v1516 = vpack.c.bf16 %v1512, %v1444
        %v1517 = vpack.c.bf16 %v1513, %v1445
        %v1518 = vpack.c.bf16 %v1514, %v1446
        %vm1519 = vcmask 261120
        %1520 = vst.msk [vmem:[#allocation2] sm:$0xff] %vm1519, %v1515
        %1521 = vst.msk [vmem:[#allocation2 + $0x8] sm:$0xff] %vm1519, %v1516
        %1522 = vst.msk [vmem:[#allocation2 + $0x10] sm:$0xff] %vm1519, %v1517
        %1523 = vst.msk [vmem:[#allocation2 + $0x18] sm:$0xff] %vm1519, %v1518
        %1526 = vrot.lane.b32.xlu0 %v921, 96
        %v1527 = vpop.permute.xlu0 %1526
        %1528 = vrot.lane.b32.xlu0 %v924, 96
        %v1529 = vpop.permute.xlu0 %1528
        %1532 = vrot.lane.b32.xlu0 %v921, 64
        %v1533 = vpop.permute.xlu0 %1532
        %1534 = vrot.lane.b32.xlu0 %v924, 64
        %v1535 = vpop.permute.xlu0 %1534
        %1538 = vrot.lane.b32.xlu0 %v921, 32
        %v1539 = vpop.permute.xlu0 %1538
        %1540 = vrot.lane.b32.xlu0 %v924, 32
        %v1541 = vpop.permute.xlu0 %1540
        %v1544 = vcombine.low %v921, %v1533
        %v1545 = vcombine.high %v921, %v1533
        %v1547 = vunpack.c.l.s4 1983009808
        %v1548 = vunpack.c.0.s8 %v1547
        %v1549 = vlaneseq
        %v1550 = vshrl.u32 %v1549, 7
        %v1551 = vsub.s32 %v1548, %v1550
        %v1552 = vrot.slane %v1544, %v1551
        %v1554 = vunpack.c.l.s4 1983009808
        %v1555 = vunpack.c.0.s8 %v1554
        %v1556 = vlaneseq
        %v1557 = vshrl.u32 %v1556, 7
        %v1558 = vsub.s32 %v1555, %v1557
        %v1559 = vrot.slane %v1545, %v1558
        %v1560 = vcombine.low %v1527, %v1539
        %v1561 = vcombine.high %v1527, %v1539
        %v1563 = vunpack.c.l.s4 1983009808
        %v1564 = vunpack.c.0.s8 %v1563
        %v1565 = vlaneseq
        %v1566 = vshrl.u32 %v1565, 7
        %v1567 = vsub.s32 %v1564, %v1566
        %v1568 = vrot.slane %v1560, %v1567
        %v1570 = vunpack.c.l.s4 1983009808
        %v1571 = vunpack.c.0.s8 %v1570
        %v1572 = vlaneseq
        %v1573 = vshrl.u32 %v1572, 7
        %v1574 = vsub.s32 %v1571, %v1573
        %v1575 = vrot.slane %v1561, %v1574
        %v1576 = vcombine.low %v1552, %v1568
        %v1577 = vcombine.high %v1552, %v1568
        %v1579 = vunpack.c.l.s4 1934713408
        %v1580 = vunpack.c.0.s8 %v1579
        %v1581 = vlaneseq
        %v1582 = vshrl.u32 %v1581, 7
        %v1583 = vsub.s32 %v1580, %v1582
        %v1584 = vrot.slane %v1576, %v1583
        %v1586 = vunpack.c.l.s4 1934713408
        %v1587 = vunpack.c.0.s8 %v1586
        %v1588 = vlaneseq
        %v1589 = vshrl.u32 %v1588, 7
        %v1590 = vsub.s32 %v1587, %v1589
        %v1591 = vrot.slane %v1577, %v1590
        %v1592 = vcombine.low %v1559, %v1575
        %v1593 = vcombine.high %v1559, %v1575
        %v1595 = vunpack.c.l.s4 1934713408
        %v1596 = vunpack.c.0.s8 %v1595
        %v1597 = vlaneseq
        %v1598 = vshrl.u32 %v1597, 7
        %v1599 = vsub.s32 %v1596, %v1598
        %v1600 = vrot.slane %v1592, %v1599
        %v1602 = vunpack.c.l.s4 1934713408
        %v1603 = vunpack.c.0.s8 %v1602
        %v1604 = vlaneseq
        %v1605 = vshrl.u32 %v1604, 7
        %v1606 = vsub.s32 %v1603, %v1605
        %v1607 = vrot.slane %v1593, %v1606
        %v1608 = vcombine.high %v1584, 0.0
        %v1609 = vcombine.high %v1591, 0.0
        %v1610 = vcombine.high %v1600, 0.0
        %v1611 = vcombine.high %v1607, 0.0
        %v1612 = vcombine.low %v924, %v1535
        %v1613 = vcombine.high %v924, %v1535
        %v1615 = vunpack.c.l.s4 1983009808
        %v1616 = vunpack.c.0.s8 %v1615
        %v1617 = vlaneseq
        %v1618 = vshrl.u32 %v1617, 7
        %v1619 = vsub.s32 %v1616, %v1618
        %v1620 = vrot.slane %v1612, %v1619
        %v1622 = vunpack.c.l.s4 1983009808
        %v1623 = vunpack.c.0.s8 %v1622
        %v1624 = vlaneseq
        %v1625 = vshrl.u32 %v1624, 7
        %v1626 = vsub.s32 %v1623, %v1625
        %v1627 = vrot.slane %v1613, %v1626
        %v1628 = vcombine.low %v1529, %v1541
        %v1629 = vcombine.high %v1529, %v1541
        %v1631 = vunpack.c.l.s4 1983009808
        %v1632 = vunpack.c.0.s8 %v1631
        %v1633 = vlaneseq
        %v1634 = vshrl.u32 %v1633, 7
        %v1635 = vsub.s32 %v1632, %v1634
        %v1636 = vrot.slane %v1628, %v1635
        %v1638 = vunpack.c.l.s4 1983009808
        %v1639 = vunpack.c.0.s8 %v1638
        %v1640 = vlaneseq
        %v1641 = vshrl.u32 %v1640, 7
        %v1642 = vsub.s32 %v1639, %v1641
        %v1643 = vrot.slane %v1629, %v1642
        %v1644 = vcombine.low %v1620, %v1636
        %v1645 = vcombine.high %v1620, %v1636
        %v1647 = vunpack.c.l.s4 1934713408
        %v1648 = vunpack.c.0.s8 %v1647
        %v1649 = vlaneseq
        %v1650 = vshrl.u32 %v1649, 7
        %v1651 = vsub.s32 %v1648, %v1650
        %v1652 = vrot.slane %v1644, %v1651
        %v1654 = vunpack.c.l.s4 1934713408
        %v1655 = vunpack.c.0.s8 %v1654
        %v1656 = vlaneseq
        %v1657 = vshrl.u32 %v1656, 7
        %v1658 = vsub.s32 %v1655, %v1657
        %v1659 = vrot.slane %v1645, %v1658
        %v1660 = vcombine.low %v1627, %v1643
        %v1661 = vcombine.high %v1627, %v1643
        %v1663 = vunpack.c.l.s4 1934713408
        %v1664 = vunpack.c.0.s8 %v1663
        %v1665 = vlaneseq
        %v1666 = vshrl.u32 %v1665, 7
        %v1667 = vsub.s32 %v1664, %v1666
        %v1668 = vrot.slane %v1660, %v1667
        %v1670 = vunpack.c.l.s4 1934713408
        %v1671 = vunpack.c.0.s8 %v1670
        %v1672 = vlaneseq
        %v1673 = vshrl.u32 %v1672, 7
        %v1674 = vsub.s32 %v1671, %v1673
        %v1675 = vrot.slane %v1661, %v1674
        %v1676 = vcombine.high %v1652, 0.0
        %v1677 = vcombine.high %v1659, 0.0
        %v1678 = vcombine.high %v1668, 0.0
        %v1679 = vcombine.high %v1675, 0.0
        %v1680 = vcombine.low %v1584, %v1591
        %v1682 = vunpack.c.l.s4 1983009808
        %v1683 = vunpack.c.0.s8 %v1682
        %v1684 = vlaneseq
        %v1685 = vshrl.u32 %v1684, 7
        %v1686 = vsub.s32 %v1683, %v1685
        %v1687 = vrot.slane %v1680, %v1686
        %v1688 = vcombine.low %v1608, %v1609
        %v1690 = vunpack.c.l.s4 1983009808
        %v1691 = vunpack.c.0.s8 %v1690
        %v1692 = vlaneseq
        %v1693 = vshrl.u32 %v1692, 7
        %v1694 = vsub.s32 %v1691, %v1693
        %v1695 = vrot.slane %v1688, %v1694
        %v1696 = vcombine.low %v1600, %v1607
        %v1698 = vunpack.c.l.s4 1983009808
        %v1699 = vunpack.c.0.s8 %v1698
        %v1700 = vlaneseq
        %v1701 = vshrl.u32 %v1700, 7
        %v1702 = vsub.s32 %v1699, %v1701
        %v1703 = vrot.slane %v1696, %v1702
        %v1704 = vcombine.low %v1610, %v1611
        %v1706 = vunpack.c.l.s4 1983009808
        %v1707 = vunpack.c.0.s8 %v1706
        %v1708 = vlaneseq
        %v1709 = vshrl.u32 %v1708, 7
        %v1710 = vsub.s32 %v1707, %v1709
        %v1711 = vrot.slane %v1704, %v1710
        %v1712 = vcombine.low %v1687, %v1695
        %v1713 = vcombine.high %v1687, %v1695
        %v1715 = vunpack.c.l.s4 1934713408
        %v1716 = vunpack.c.0.s8 %v1715
        %v1717 = vlaneseq
        %v1718 = vshrl.u32 %v1717, 7
        %v1719 = vsub.s32 %v1716, %v1718
        %v1720 = vrot.slane %v1712, %v1719
        %v1722 = vunpack.c.l.s4 1934713408
        %v1723 = vunpack.c.0.s8 %v1722
        %v1724 = vlaneseq
        %v1725 = vshrl.u32 %v1724, 7
        %v1726 = vsub.s32 %v1723, %v1725
        %v1727 = vrot.slane %v1713, %v1726
        %v1728 = vcombine.low %v1703, %v1711
        %v1729 = vcombine.high %v1703, %v1711
        %v1731 = vunpack.c.l.s4 1934713408
        %v1732 = vunpack.c.0.s8 %v1731
        %v1733 = vlaneseq
        %v1734 = vshrl.u32 %v1733, 7
        %v1735 = vsub.s32 %v1732, %v1734
        %v1736 = vrot.slane %v1728, %v1735
        %v1738 = vunpack.c.l.s4 1934713408
        %v1739 = vunpack.c.0.s8 %v1738
        %v1740 = vlaneseq
        %v1741 = vshrl.u32 %v1740, 7
        %v1742 = vsub.s32 %v1739, %v1741
        %v1743 = vrot.slane %v1729, %v1742
        %v1744 = vcombine.low %v1720, %v1736
        %v1745 = vcombine.high %v1720, %v1736
        %v1746 = vcombine.low %v1727, %v1743
        %v1747 = vcombine.high %v1727, %v1743
        %v1748 = vcombine.low %v1652, %v1659
        %v1750 = vunpack.c.l.s4 1983009808
        %v1751 = vunpack.c.0.s8 %v1750
        %v1752 = vlaneseq
        %v1753 = vshrl.u32 %v1752, 7
        %v1754 = vsub.s32 %v1751, %v1753
        %v1755 = vrot.slane %v1748, %v1754
        %v1756 = vcombine.low %v1676, %v1677
        %v1758 = vunpack.c.l.s4 1983009808
        %v1759 = vunpack.c.0.s8 %v1758
        %v1760 = vlaneseq
        %v1761 = vshrl.u32 %v1760, 7
        %v1762 = vsub.s32 %v1759, %v1761
        %v1763 = vrot.slane %v1756, %v1762
        %v1764 = vcombine.low %v1668, %v1675
        %v1766 = vunpack.c.l.s4 1983009808
        %v1767 = vunpack.c.0.s8 %v1766
        %v1768 = vlaneseq
        %v1769 = vshrl.u32 %v1768, 7
        %v1770 = vsub.s32 %v1767, %v1769
        %v1771 = vrot.slane %v1764, %v1770
        %v1772 = vcombine.low %v1678, %v1679
        %v1774 = vunpack.c.l.s4 1983009808
        %v1775 = vunpack.c.0.s8 %v1774
        %v1776 = vlaneseq
        %v1777 = vshrl.u32 %v1776, 7
        %v1778 = vsub.s32 %v1775, %v1777
        %v1779 = vrot.slane %v1772, %v1778
        %v1780 = vcombine.low %v1755, %v1763
        %v1781 = vcombine.high %v1755, %v1763
        %v1783 = vunpack.c.l.s4 1934713408
        %v1784 = vunpack.c.0.s8 %v1783
        %v1785 = vlaneseq
        %v1786 = vshrl.u32 %v1785, 7
        %v1787 = vsub.s32 %v1784, %v1786
        %v1788 = vrot.slane %v1780, %v1787
        %v1790 = vunpack.c.l.s4 1934713408
        %v1791 = vunpack.c.0.s8 %v1790
        %v1792 = vlaneseq
        %v1793 = vshrl.u32 %v1792, 7
        %v1794 = vsub.s32 %v1791, %v1793
        %v1795 = vrot.slane %v1781, %v1794
        %v1796 = vcombine.low %v1771, %v1779
        %v1797 = vcombine.high %v1771, %v1779
        %v1799 = vunpack.c.l.s4 1934713408
        %v1800 = vunpack.c.0.s8 %v1799
        %v1801 = vlaneseq
        %v1802 = vshrl.u32 %v1801, 7
        %v1803 = vsub.s32 %v1800, %v1802
        %v1804 = vrot.slane %v1796, %v1803
        %v1806 = vunpack.c.l.s4 1934713408
        %v1807 = vunpack.c.0.s8 %v1806
        %v1808 = vlaneseq
        %v1809 = vshrl.u32 %v1808, 7
        %v1810 = vsub.s32 %v1807, %v1809
        %v1811 = vrot.slane %v1797, %v1810
        %v1812 = vcombine.low %v1788, %v1804
        %v1813 = vcombine.high %v1788, %v1804
        %v1814 = vcombine.low %v1795, %v1811
        %v1815 = vcombine.high %v1795, %v1811
        %v1816 = vpack.c.bf16 %v1812, %v1744
        %v1817 = vpack.c.bf16 %v1813, %v1745
        %v1818 = vpack.c.bf16 %v1814, %v1746
        %v1819 = vpack.c.bf16 %v1815, %v1747
        %1820 = vst.msk [vmem:[#allocation3] sm:$0xff] %vm1519, %v1816
        %1821 = vst.msk [vmem:[#allocation3 + $0x8] sm:$0xff] %vm1519, %v1817
        %1822 = vst.msk [vmem:[#allocation3 + $0x10] sm:$0xff] %vm1519, %v1818
        %1823 = vst.msk [vmem:[#allocation3 + $0x18] sm:$0xff] %vm1519, %v1819
        %v1824 = vlaneseq
        %v1825 = vshrl.u32 %v1824, 7
        %v1826 = vadd.s32 %v1825, 8
        %v1827 = vlaneseq
        %v1828 = vand.u32 %v1827, 127
        %v1829 = vld [vmem:[#allocation2] sm:$0xff]
        %v1830 = vld [vmem:[#allocation2 + $0x8] sm:$0xff]
        %v1831 = vld [vmem:[#allocation2 + $0x10] sm:$0xff]
        %v1832 = vld [vmem:[#allocation2 + $0x18] sm:$0xff]
        %v1833 = vld [vmem:[#allocation3] sm:$0xff]
        %v1834 = vld [vmem:[#allocation3 + $0x8] sm:$0xff]
        %v1835 = vld [vmem:[#allocation3 + $0x10] sm:$0xff]
        %v1836 = vld [vmem:[#allocation3 + $0x18] sm:$0xff]
        %v1838 = vsel %vm1519, %v1219, 0
        %v1841 = vsel %vm1519, %v1829, 0
        %1843 = vmatprep.subr.bf16.mxu0 0
        %1844 = vmatpush1.bf16.xpose.msra.mxu0 %v1841
        %1845 = vmatprep.subr.bf16.mxu0 0
        %1846 = vmatpush1.bf16.xpose.msra.mxu0 0
        %1847 = vmatprep.subr.bf16.mxu0 0
        %1848 = vmatpush1.bf16.xpose.msra.mxu0 0
        %1849 = vmatprep.subr.bf16.mxu0 0
        %1850 = vmatpush1.bf16.xpose.msra.mxu0 0
        %1851 = vmatprep.subr.bf16.mxu0 0
        %1852 = vmatpush1.bf16.xpose.msra.mxu0 0
        %1853 = vmatprep.subr.bf16.mxu0 0
        %1854 = vmatpush1.bf16.xpose.msra.mxu0 0
        %1855 = vmatprep.subr.bf16.mxu0 0
        %1856 = vmatpush1.bf16.xpose.msra.mxu0 0
        %1857 = vmatprep.subr.bf16.mxu0 0
        %1858 = vmatpush1.bf16.xpose.msra.mxu0 0
        %1859 = vmatprep.subr.bf16.mxu0 0
        %1860 = vmatpush1.bf16.xpose.msra.mxu0 0
        %1861 = vmatprep.subr.bf16.mxu0 0
        %1862 = vmatpush1.bf16.xpose.msra.mxu0 0
        %1863 = vmatprep.subr.bf16.mxu0 0
        %1864 = vmatpush1.bf16.xpose.msra.mxu0 0
        %1865 = vmatprep.subr.bf16.mxu0 0
        %1866 = vmatpush1.bf16.xpose.msra.mxu0 0
        %1867 = vmatprep.subr.bf16.mxu0 0
        %1868 = vmatpush1.bf16.xpose.msra.mxu0 0
        %1869 = vmatprep.subr.bf16.mxu0 0
        %1870 = vmatpush1.bf16.xpose.msra.mxu0 0
        %1871 = vmatprep.subr.bf16.mxu0 0
        %1872 = vmatpush1.bf16.xpose.msra.mxu0 0
        %1873 = vmatprep.subr.bf16.mxu0 0
        %1874 = vmatpush1.bf16.xpose.msra.mxu0 0
        %1875 = vmatprep.mubr.bf16.mxu0 0
        %1876 = vmatmul.mubr.bf16.gmra.mrb[0].mxu0 %v1838
        %v1877 = vpop.f32.mrb[0].mxu0
        %v1878 = vadd.f32 0.0, %v1877
        %v1879 = vpop.f32.mrb[0].mxu0
        %v1880 = vpop.f32.mrb[0].mxu0
        %v1881 = vadd.f32 0.0, %v1880
        %v1882 = vpop.f32.mrb[0].mxu0
        %1883 = vdwg.mxu0
        %v1885 = vsel %vm1519, %v1220, 0
        %v1888 = vsel %vm1519, %v1830, 0
        %1890 = vmatprep.subr.bf16.mxu0 0
        %1891 = vmatpush1.bf16.xpose.msra.mxu0 %v1888
        %1892 = vmatprep.subr.bf16.mxu0 0
        %1893 = vmatpush1.bf16.xpose.msra.mxu0 0
        %1894 = vmatprep.subr.bf16.mxu0 0
        %1895 = vmatpush1.bf16.xpose.msra.mxu0 0
        %1896 = vmatprep.subr.bf16.mxu0 0
        %1897 = vmatpush1.bf16.xpose.msra.mxu0 0
        %1898 = vmatprep.subr.bf16.mxu0 0
        %1899 = vmatpush1.bf16.xpose.msra.mxu0 0
        %1900 = vmatprep.subr.bf16.mxu0 0
        %1901 = vmatpush1.bf16.xpose.msra.mxu0 0
        %1902 = vmatprep.subr.bf16.mxu0 0
        %1903 = vmatpush1.bf16.xpose.msra.mxu0 0
        %1904 = vmatprep.subr.bf16.mxu0 0
        %1905 = vmatpush1.bf16.xpose.msra.mxu0 0
        %1906 = vmatprep.subr.bf16.mxu0 0
        %1907 = vmatpush1.bf16.xpose.msra.mxu0 0
        %1908 = vmatprep.subr.bf16.mxu0 0
        %1909 = vmatpush1.bf16.xpose.msra.mxu0 0
        %1910 = vmatprep.subr.bf16.mxu0 0
        %1911 = vmatpush1.bf16.xpose.msra.mxu0 0
        %1912 = vmatprep.subr.bf16.mxu0 0
        %1913 = vmatpush1.bf16.xpose.msra.mxu0 0
        %1914 = vmatprep.subr.bf16.mxu0 0
        %1915 = vmatpush1.bf16.xpose.msra.mxu0 0
        %1916 = vmatprep.subr.bf16.mxu0 0
        %1917 = vmatpush1.bf16.xpose.msra.mxu0 0
        %1918 = vmatprep.subr.bf16.mxu0 0
        %1919 = vmatpush1.bf16.xpose.msra.mxu0 0
        %1920 = vmatprep.subr.bf16.mxu0 0
        %1921 = vmatpush1.bf16.xpose.msra.mxu0 0
        %1922 = vmatprep.mubr.bf16.mxu0 0
        %1923 = vmatmul.mubr.bf16.gmra.mrb[0].mxu0 %v1885
        %v1924 = vpop.f32.mrb[0].mxu0
        %v1925 = vadd.f32 0.0, %v1924
        %v1926 = vpop.f32.mrb[0].mxu0
        %v1927 = vpop.f32.mrb[0].mxu0
        %v1928 = vadd.f32 0.0, %v1927
        %v1929 = vpop.f32.mrb[0].mxu0
        %1930 = vdwg.mxu0
        %v1932 = vsel %vm1519, %v1221, 0
        %v1935 = vsel %vm1519, %v1831, 0
        %1937 = vmatprep.subr.bf16.mxu0 0
        %1938 = vmatpush1.bf16.xpose.msra.mxu0 %v1935
        %1939 = vmatprep.subr.bf16.mxu0 0
        %1940 = vmatpush1.bf16.xpose.msra.mxu0 0
        %1941 = vmatprep.subr.bf16.mxu0 0
        %1942 = vmatpush1.bf16.xpose.msra.mxu0 0
        %1943 = vmatprep.subr.bf16.mxu0 0
        %1944 = vmatpush1.bf16.xpose.msra.mxu0 0
        %1945 = vmatprep.subr.bf16.mxu0 0
        %1946 = vmatpush1.bf16.xpose.msra.mxu0 0
        %1947 = vmatprep.subr.bf16.mxu0 0
        %1948 = vmatpush1.bf16.xpose.msra.mxu0 0
        %1949 = vmatprep.subr.bf16.mxu0 0
        %1950 = vmatpush1.bf16.xpose.msra.mxu0 0
        %1951 = vmatprep.subr.bf16.mxu0 0
        %1952 = vmatpush1.bf16.xpose.msra.mxu0 0
        %1953 = vmatprep.subr.bf16.mxu0 0
        %1954 = vmatpush1.bf16.xpose.msra.mxu0 0
        %1955 = vmatprep.subr.bf16.mxu0 0
        %1956 = vmatpush1.bf16.xpose.msra.mxu0 0
        %1957 = vmatprep.subr.bf16.mxu0 0
        %1958 = vmatpush1.bf16.xpose.msra.mxu0 0
        %1959 = vmatprep.subr.bf16.mxu0 0
        %1960 = vmatpush1.bf16.xpose.msra.mxu0 0
        %1961 = vmatprep.subr.bf16.mxu0 0
        %1962 = vmatpush1.bf16.xpose.msra.mxu0 0
        %1963 = vmatprep.subr.bf16.mxu0 0
        %1964 = vmatpush1.bf16.xpose.msra.mxu0 0
        %1965 = vmatprep.subr.bf16.mxu0 0
        %1966 = vmatpush1.bf16.xpose.msra.mxu0 0
        %1967 = vmatprep.subr.bf16.mxu0 0
        %1968 = vmatpush1.bf16.xpose.msra.mxu0 0
        %1969 = vmatprep.mubr.bf16.mxu0 0
        %1970 = vmatmul.mubr.bf16.gmra.mrb[0].mxu0 %v1932
        %v1971 = vpop.f32.mrb[0].mxu0
        %v1972 = vadd.f32 0.0, %v1971
        %v1973 = vpop.f32.mrb[0].mxu0
        %v1974 = vpop.f32.mrb[0].mxu0
        %v1975 = vadd.f32 0.0, %v1974
        %v1976 = vpop.f32.mrb[0].mxu0
        %1977 = vdwg.mxu0
        %v1979 = vsel %vm1519, %v1222, 0
        %v1982 = vsel %vm1519, %v1832, 0
        %1984 = vmatprep.subr.bf16.mxu0 0
        %1985 = vmatpush1.bf16.xpose.msra.mxu0 %v1982
        %1986 = vmatprep.subr.bf16.mxu0 0
        %1987 = vmatpush1.bf16.xpose.msra.mxu0 0
        %1988 = vmatprep.subr.bf16.mxu0 0
        %1989 = vmatpush1.bf16.xpose.msra.mxu0 0
        %1990 = vmatprep.subr.bf16.mxu0 0
        %1991 = vmatpush1.bf16.xpose.msra.mxu0 0
        %1992 = vmatprep.subr.bf16.mxu0 0
        %1993 = vmatpush1.bf16.xpose.msra.mxu0 0
        %1994 = vmatprep.subr.bf16.mxu0 0
        %1995 = vmatpush1.bf16.xpose.msra.mxu0 0
        %1996 = vmatprep.subr.bf16.mxu0 0
        %1997 = vmatpush1.bf16.xpose.msra.mxu0 0
        %1998 = vmatprep.subr.bf16.mxu0 0
        %1999 = vmatpush1.bf16.xpose.msra.mxu0 0
        %2000 = vmatprep.subr.bf16.mxu0 0
        %2001 = vmatpush1.bf16.xpose.msra.mxu0 0
        %2002 = vmatprep.subr.bf16.mxu0 0
        %2003 = vmatpush1.bf16.xpose.msra.mxu0 0
        %2004 = vmatprep.subr.bf16.mxu0 0
        %2005 = vmatpush1.bf16.xpose.msra.mxu0 0
        %2006 = vmatprep.subr.bf16.mxu0 0
        %2007 = vmatpush1.bf16.xpose.msra.mxu0 0
        %2008 = vmatprep.subr.bf16.mxu0 0
        %2009 = vmatpush1.bf16.xpose.msra.mxu0 0
        %2010 = vmatprep.subr.bf16.mxu0 0
        %2011 = vmatpush1.bf16.xpose.msra.mxu0 0
        %2012 = vmatprep.subr.bf16.mxu0 0
        %2013 = vmatpush1.bf16.xpose.msra.mxu0 0
        %2014 = vmatprep.subr.bf16.mxu0 0
        %2015 = vmatpush1.bf16.xpose.msra.mxu0 0
        %2016 = vmatprep.mubr.bf16.mxu0 0
        %2017 = vmatmul.mubr.bf16.gmra.mrb[0].mxu0 %v1979
        %v2018 = vpop.f32.mrb[0].mxu0
        %v2019 = vadd.f32 0.0, %v2018
        %v2020 = vpop.f32.mrb[0].mxu0
        %v2021 = vpop.f32.mrb[0].mxu0
        %v2022 = vadd.f32 0.0, %v2021
        %v2023 = vpop.f32.mrb[0].mxu0
        %2024 = vdwg.mxu0
        %v2025 = vstv 0
        %v2026 = vadd.s32 %v1828, %v2025
        %vm2027 = vcmp.gt.s32.totalorder %v2026, %v1825
        %vm2028 = vcmp.gt.s32.totalorder %v2026, %v1826
        %v2029 = vsel %vm2027, 1, 0
        %v2030 = vsel %vm2028, 1, 0
        %vm2031 = vcmp.eq.s32.totalorder %v2029, 1
        %vm2032 = vcmp.eq.s32.totalorder %v2030, 1
        %v2033 = vsel %vm2031, -100000.0, %v1878
        %v2034 = vsel %vm2032, -100000.0, %v1881
        %v2035 = vsel %vm2031, -100000.0, %v1925
        %v2036 = vsel %vm2032, -100000.0, %v1928
        %v2037 = vsel %vm2031, -100000.0, %v1972
        %v2038 = vsel %vm2032, -100000.0, %v1975
        %v2039 = vsel %vm2031, -100000.0, %v2019
        %v2040 = vsel %vm2032, -100000.0, %v2022
        %vm2041 = vcmask 130048
        %v2042 = vsel %vm2041, %v2033, -inf
        %2043 = vmax.xlane.f32.xlu0 %v2042
        %v2044 = vpop.xlane.xlu0 %2043
        %v2045 = vsel %vm2041, %v2034, -inf
        %2046 = vmax.xlane.f32.xlu0 %v2045
        %v2047 = vpop.xlane.xlu0 %2046
        %v2048 = vsel %vm2041, %v2035, -inf
        %2049 = vmax.xlane.f32.xlu0 %v2048
        %v2050 = vpop.xlane.xlu0 %2049
        %v2051 = vsel %vm2041, %v2036, -inf
        %2052 = vmax.xlane.f32.xlu0 %v2051
        %v2053 = vpop.xlane.xlu0 %2052
        %v2054 = vsel %vm2041, %v2037, -inf
        %2055 = vmax.xlane.f32.xlu0 %v2054
        %v2056 = vpop.xlane.xlu0 %2055
        %v2057 = vsel %vm2041, %v2038, -inf
        %2058 = vmax.xlane.f32.xlu0 %v2057
        %v2059 = vpop.xlane.xlu0 %2058
        %v2060 = vsel %vm2041, %v2039, -inf
        %2061 = vmax.xlane.f32.xlu0 %v2060
        %v2062 = vpop.xlane.xlu0 %2061
        %v2063 = vsel %vm2041, %v2040, -inf
        %2064 = vmax.xlane.f32.xlu0 %v2063
        %v2065 = vpop.xlane.xlu0 %2064
        %v2066 = vmax.f32 %v2044, -1e+30
        %v2067 = vmax.f32 %v2047, -1e+30
        %v2068 = vmax.f32 %v2050, -1e+30
        %v2069 = vmax.f32 %v2053, -1e+30
        %v2070 = vmax.f32 %v2056, -1e+30
        %v2071 = vmax.f32 %v2059, -1e+30
        %v2072 = vmax.f32 %v2062, -1e+30
        %v2073 = vmax.f32 %v2065, -1e+30
        %v2074 = vsub.f32 -1e+30, %v2066
        %v2075 = vsub.f32 -1e+30, %v2067
        %v2076 = vsub.f32 -1e+30, %v2068
        %v2077 = vsub.f32 -1e+30, %v2069
        %v2078 = vsub.f32 -1e+30, %v2070
        %v2079 = vsub.f32 -1e+30, %v2071
        %v2080 = vsub.f32 -1e+30, %v2072
        %v2081 = vsub.f32 -1e+30, %v2073
        %v2082 = vmul.f32 %v2074, 1.442695
        %v2083 = vpow.pop %v2082
        %v2084 = vmul.f32 %v2075, 1.442695
        %v2085 = vpow.pop %v2084
        %v2086 = vmul.f32 %v2076, 1.442695
        %v2087 = vpow.pop %v2086
        %v2088 = vmul.f32 %v2077, 1.442695
        %v2089 = vpow.pop %v2088
        %v2090 = vmul.f32 %v2078, 1.442695
        %v2091 = vpow.pop %v2090
        %v2092 = vmul.f32 %v2079, 1.442695
        %v2093 = vpow.pop %v2092
        %v2094 = vmul.f32 %v2080, 1.442695
        %v2095 = vpow.pop %v2094
        %v2096 = vmul.f32 %v2081, 1.442695
        %v2097 = vpow.pop %v2096
        %v2098 = vsub.f32 %v2033, %v2066
        %v2099 = vsub.f32 %v2034, %v2067
        %v2100 = vsub.f32 %v2035, %v2068
        %v2101 = vsub.f32 %v2036, %v2069
        %v2102 = vsub.f32 %v2037, %v2070
        %v2103 = vsub.f32 %v2038, %v2071
        %v2104 = vsub.f32 %v2039, %v2072
        %v2105 = vsub.f32 %v2040, %v2073
        %v2106 = vmul.f32 %v2098, 1.442695
        %v2107 = vpow.pop %v2106
        %v2108 = vmul.f32 %v2099, 1.442695
        %v2109 = vpow.pop %v2108
        %v2110 = vmul.f32 %v2100, 1.442695
        %v2111 = vpow.pop %v2110
        %v2112 = vmul.f32 %v2101, 1.442695
        %v2113 = vpow.pop %v2112
        %v2114 = vmul.f32 %v2102, 1.442695
        %v2115 = vpow.pop %v2114
        %v2116 = vmul.f32 %v2103, 1.442695
        %v2117 = vpow.pop %v2116
        %v2118 = vmul.f32 %v2104, 1.442695
        %v2119 = vpow.pop %v2118
        %v2120 = vmul.f32 %v2105, 1.442695
        %v2121 = vpow.pop %v2120
        %v2122 = vmul.f32 %v2083, 0.0
        %v2123 = vmul.f32 %v2085, 0.0
        %v2124 = vmul.f32 %v2087, 0.0
        %v2125 = vmul.f32 %v2089, 0.0
        %v2126 = vmul.f32 %v2091, 0.0
        %v2127 = vmul.f32 %v2093, 0.0
        %v2128 = vmul.f32 %v2095, 0.0
        %v2129 = vmul.f32 %v2097, 0.0
        %v2130 = vsel %vm2041, %v2107, 0.0
        %2131 = vadd.xlane.f32.xlu0 %v2130
        %v2132 = vpop.xlane.xlu0 %2131
        %v2133 = vsel %vm2041, %v2109, 0.0
        %2134 = vadd.xlane.f32.xlu0 %v2133
        %v2135 = vpop.xlane.xlu0 %2134
        %v2136 = vsel %vm2041, %v2111, 0.0
        %2137 = vadd.xlane.f32.xlu0 %v2136
        %v2138 = vpop.xlane.xlu0 %2137
        %v2139 = vsel %vm2041, %v2113, 0.0
        %2140 = vadd.xlane.f32.xlu0 %v2139
        %v2141 = vpop.xlane.xlu0 %2140
        %v2142 = vsel %vm2041, %v2115, 0.0
        %2143 = vadd.xlane.f32.xlu0 %v2142
        %v2144 = vpop.xlane.xlu0 %2143
        %v2145 = vsel %vm2041, %v2117, 0.0
        %2146 = vadd.xlane.f32.xlu0 %v2145
        %v2147 = vpop.xlane.xlu0 %2146
        %v2148 = vsel %vm2041, %v2119, 0.0
        %2149 = vadd.xlane.f32.xlu0 %v2148
        %v2150 = vpop.xlane.xlu0 %2149
        %v2151 = vsel %vm2041, %v2121, 0.0
        %2152 = vadd.xlane.f32.xlu0 %v2151
        %v2153 = vpop.xlane.xlu0 %2152
        %v2154 = vadd.f32 %v2122, %v2132
        %v2155 = vadd.f32 %v2123, %v2135
        %v2156 = vadd.f32 %v2124, %v2138
        %v2157 = vadd.f32 %v2125, %v2141
        %v2158 = vadd.f32 %v2126, %v2144
        %v2159 = vadd.f32 %v2127, %v2147
        %v2160 = vadd.f32 %v2128, %v2150
        %v2161 = vadd.f32 %v2129, %v2153
        %v2162 = vpack.c.bf16 %v2109, %v2107
        %v2163 = vpack.c.bf16 %v2113, %v2111
        %v2164 = vpack.c.bf16 %v2117, %v2115
        %v2165 = vpack.c.bf16 %v2121, %v2119
        %v2167 = vsel %vm2041, %v2162, 0
        %2169 = vmatprep.subr.bf16.mxu0 0
        %2170 = vmatpush1.bf16.msra.mxu0 %v1833
        %2171 = vmatprep.subr.bf16.mxu0 0
        %2172 = vmatpush1.bf16.msra.mxu0 0
        %2173 = vmatprep.subr.bf16.mxu0 0
        %2174 = vmatpush1.bf16.msra.mxu0 0
        %2175 = vmatprep.subr.bf16.mxu0 0
        %2176 = vmatpush1.bf16.msra.mxu0 0
        %2177 = vmatprep.subr.bf16.mxu0 0
        %2178 = vmatpush1.bf16.msra.mxu0 0
        %2179 = vmatprep.subr.bf16.mxu0 0
        %2180 = vmatpush1.bf16.msra.mxu0 0
        %2181 = vmatprep.subr.bf16.mxu0 0
        %2182 = vmatpush1.bf16.msra.mxu0 0
        %2183 = vmatprep.subr.bf16.mxu0 0
        %2184 = vmatpush1.bf16.msra.mxu0 0
        %2185 = vmatprep.subr.bf16.mxu0 0
        %2186 = vmatpush1.bf16.msra.mxu0 0
        %2187 = vmatprep.subr.bf16.mxu0 0
        %2188 = vmatpush1.bf16.msra.mxu0 0
        %2189 = vmatprep.subr.bf16.mxu0 0
        %2190 = vmatpush1.bf16.msra.mxu0 0
        %2191 = vmatprep.subr.bf16.mxu0 0
        %2192 = vmatpush1.bf16.msra.mxu0 0
        %2193 = vmatprep.subr.bf16.mxu0 0
        %2194 = vmatpush1.bf16.msra.mxu0 0
        %2195 = vmatprep.subr.bf16.mxu0 0
        %2196 = vmatpush1.bf16.msra.mxu0 0
        %2197 = vmatprep.subr.bf16.mxu0 0
        %2198 = vmatpush1.bf16.msra.mxu0 0
        %2199 = vmatprep.subr.bf16.mxu0 0
        %2200 = vmatpush1.bf16.msra.mxu0 0
        %2201 = vmatprep.mubr.bf16.mxu0 0
        %2202 = vmatmul.mubr.bf16.gmra.mrb[0].mxu0 %v2167
        %v2203 = vpop.f32.mrb[0].mxu0
        %v2204 = vadd.f32 0.0, %v2203
        %v2205 = vpop.f32.mrb[0].mxu0
        %v2206 = vpop.f32.mrb[0].mxu0
        %v2207 = vadd.f32 0.0, %v2206
        %v2208 = vpop.f32.mrb[0].mxu0
        %2209 = vdwg.mxu0
        %v2211 = vsel %vm2041, %v2163, 0
        %2213 = vmatprep.subr.bf16.mxu0 0
        %2214 = vmatpush1.bf16.msra.mxu0 %v1834
        %2215 = vmatprep.subr.bf16.mxu0 0
        %2216 = vmatpush1.bf16.msra.mxu0 0
        %2217 = vmatprep.subr.bf16.mxu0 0
        %2218 = vmatpush1.bf16.msra.mxu0 0
        %2219 = vmatprep.subr.bf16.mxu0 0
        %2220 = vmatpush1.bf16.msra.mxu0 0
        %2221 = vmatprep.subr.bf16.mxu0 0
        %2222 = vmatpush1.bf16.msra.mxu0 0
        %2223 = vmatprep.subr.bf16.mxu0 0
        %2224 = vmatpush1.bf16.msra.mxu0 0
        %2225 = vmatprep.subr.bf16.mxu0 0
        %2226 = vmatpush1.bf16.msra.mxu0 0
        %2227 = vmatprep.subr.bf16.mxu0 0
        %2228 = vmatpush1.bf16.msra.mxu0 0
        %2229 = vmatprep.subr.bf16.mxu0 0
        %2230 = vmatpush1.bf16.msra.mxu0 0
        %2231 = vmatprep.subr.bf16.mxu0 0
        %2232 = vmatpush1.bf16.msra.mxu0 0
        %2233 = vmatprep.subr.bf16.mxu0 0
        %2234 = vmatpush1.bf16.msra.mxu0 0
        %2235 = vmatprep.subr.bf16.mxu0 0
        %2236 = vmatpush1.bf16.msra.mxu0 0
        %2237 = vmatprep.subr.bf16.mxu0 0
        %2238 = vmatpush1.bf16.msra.mxu0 0
        %2239 = vmatprep.subr.bf16.mxu0 0
        %2240 = vmatpush1.bf16.msra.mxu0 0
        %2241 = vmatprep.subr.bf16.mxu0 0
        %2242 = vmatpush1.bf16.msra.mxu0 0
        %2243 = vmatprep.subr.bf16.mxu0 0
        %2244 = vmatpush1.bf16.msra.mxu0 0
        %2245 = vmatprep.mubr.bf16.mxu0 0
        %2246 = vmatmul.mubr.bf16.gmra.mrb[0].mxu0 %v2211
        %v2247 = vpop.f32.mrb[0].mxu0
        %v2248 = vadd.f32 0.0, %v2247
        %v2249 = vpop.f32.mrb[0].mxu0
        %v2250 = vpop.f32.mrb[0].mxu0
        %v2251 = vadd.f32 0.0, %v2250
        %v2252 = vpop.f32.mrb[0].mxu0
        %2253 = vdwg.mxu0
        %v2255 = vsel %vm2041, %v2164, 0
        %2257 = vmatprep.subr.bf16.mxu0 0
        %2258 = vmatpush1.bf16.msra.mxu0 %v1835
        %2259 = vmatprep.subr.bf16.mxu0 0
        %2260 = vmatpush1.bf16.msra.mxu0 0
        %2261 = vmatprep.subr.bf16.mxu0 0
        %2262 = vmatpush1.bf16.msra.mxu0 0
        %2263 = vmatprep.subr.bf16.mxu0 0
        %2264 = vmatpush1.bf16.msra.mxu0 0
        %2265 = vmatprep.subr.bf16.mxu0 0
        %2266 = vmatpush1.bf16.msra.mxu0 0
        %2267 = vmatprep.subr.bf16.mxu0 0
        %2268 = vmatpush1.bf16.msra.mxu0 0
        %2269 = vmatprep.subr.bf16.mxu0 0
        %2270 = vmatpush1.bf16.msra.mxu0 0
        %2271 = vmatprep.subr.bf16.mxu0 0
        %2272 = vmatpush1.bf16.msra.mxu0 0
        %2273 = vmatprep.subr.bf16.mxu0 0
        %2274 = vmatpush1.bf16.msra.mxu0 0
        %2275 = vmatprep.subr.bf16.mxu0 0
        %2276 = vmatpush1.bf16.msra.mxu0 0
        %2277 = vmatprep.subr.bf16.mxu0 0
        %2278 = vmatpush1.bf16.msra.mxu0 0
        %2279 = vmatprep.subr.bf16.mxu0 0
        %2280 = vmatpush1.bf16.msra.mxu0 0
        %2281 = vmatprep.subr.bf16.mxu0 0
        %2282 = vmatpush1.bf16.msra.mxu0 0
        %2283 = vmatprep.subr.bf16.mxu0 0
        %2284 = vmatpush1.bf16.msra.mxu0 0
        %2285 = vmatprep.subr.bf16.mxu0 0
        %2286 = vmatpush1.bf16.msra.mxu0 0
        %2287 = vmatprep.subr.bf16.mxu0 0
        %2288 = vmatpush1.bf16.msra.mxu0 0
        %2289 = vmatprep.mubr.bf16.mxu0 0
        %2290 = vmatmul.mubr.bf16.gmra.mrb[0].mxu0 %v2255
        %v2291 = vpop.f32.mrb[0].mxu0
        %v2292 = vadd.f32 0.0, %v2291
        %v2293 = vpop.f32.mrb[0].mxu0
        %v2294 = vpop.f32.mrb[0].mxu0
        %v2295 = vadd.f32 0.0, %v2294
        %v2296 = vpop.f32.mrb[0].mxu0
        %2297 = vdwg.mxu0
        %v2299 = vsel %vm2041, %v2165, 0
        %2301 = vmatprep.subr.bf16.mxu0 0
        %2302 = vmatpush1.bf16.msra.mxu0 %v1836
        %2303 = vmatprep.subr.bf16.mxu0 0
        %2304 = vmatpush1.bf16.msra.mxu0 0
        %2305 = vmatprep.subr.bf16.mxu0 0
        %2306 = vmatpush1.bf16.msra.mxu0 0
        %2307 = vmatprep.subr.bf16.mxu0 0
        %2308 = vmatpush1.bf16.msra.mxu0 0
        %2309 = vmatprep.subr.bf16.mxu0 0
        %2310 = vmatpush1.bf16.msra.mxu0 0
        %2311 = vmatprep.subr.bf16.mxu0 0
        %2312 = vmatpush1.bf16.msra.mxu0 0
        %2313 = vmatprep.subr.bf16.mxu0 0
        %2314 = vmatpush1.bf16.msra.mxu0 0
        %2315 = vmatprep.subr.bf16.mxu0 0
        %2316 = vmatpush1.bf16.msra.mxu0 0
        %2317 = vmatprep.subr.bf16.mxu0 0
        %2318 = vmatpush1.bf16.msra.mxu0 0
        %2319 = vmatprep.subr.bf16.mxu0 0
        %2320 = vmatpush1.bf16.msra.mxu0 0
        %2321 = vmatprep.subr.bf16.mxu0 0
        %2322 = vmatpush1.bf16.msra.mxu0 0
        %2323 = vmatprep.subr.bf16.mxu0 0
        %2324 = vmatpush1.bf16.msra.mxu0 0
        %2325 = vmatprep.subr.bf16.mxu0 0
        %2326 = vmatpush1.bf16.msra.mxu0 0
        %2327 = vmatprep.subr.bf16.mxu0 0
        %2328 = vmatpush1.bf16.msra.mxu0 0
        %2329 = vmatprep.subr.bf16.mxu0 0
        %2330 = vmatpush1.bf16.msra.mxu0 0
        %2331 = vmatprep.subr.bf16.mxu0 0
        %2332 = vmatpush1.bf16.msra.mxu0 0
        %2333 = vmatprep.mubr.bf16.mxu0 0
        %2334 = vmatmul.mubr.bf16.gmra.mrb[0].mxu0 %v2299
        %v2335 = vpop.f32.mrb[0].mxu0
        %v2336 = vadd.f32 0.0, %v2335
        %v2337 = vpop.f32.mrb[0].mxu0
        %v2338 = vpop.f32.mrb[0].mxu0
        %v2339 = vadd.f32 0.0, %v2338
        %v2340 = vpop.f32.mrb[0].mxu0
        %2341 = vdwg.mxu0
        %v2342 = vadd.f32 %v2122, %v2204
        %v2343 = vadd.f32 %v2123, %v2207
        %v2344 = vadd.f32 %v2124, %v2248
        %v2345 = vadd.f32 %v2125, %v2251
        %v2346 = vadd.f32 %v2126, %v2292
        %v2347 = vadd.f32 %v2127, %v2295
        %v2348 = vadd.f32 %v2128, %v2336
        %v2349 = vadd.f32 %v2129, %v2339
        %v2350 = vrcp.pop %v2154
        %v2351 = vrcp.pop %v2155
        %v2352 = vrcp.pop %v2156
        %v2353 = vrcp.pop %v2157
        %v2354 = vrcp.pop %v2158
        %v2355 = vrcp.pop %v2159
        %v2356 = vrcp.pop %v2160
        %v2357 = vrcp.pop %v2161
        %v2358 = vmul.f32 %v2342, %v2350
        %v2359 = vmul.f32 %v2343, %v2351
        %v2360 = vmul.f32 %v2344, %v2352
        %v2361 = vmul.f32 %v2345, %v2353
        %v2362 = vmul.f32 %v2346, %v2354
        %v2363 = vmul.f32 %v2347, %v2355
        %v2364 = vmul.f32 %v2348, %v2356
        %v2365 = vmul.f32 %v2349, %v2357
        %v2366 = vcombine.low %v2358, %v2362
        %v2367 = vcombine.high %v2358, %v2362
        %v2369 = vunpack.c.l.s4 1983009808
        %v2370 = vunpack.c.0.s8 %v2369
        %v2371 = vlaneseq
        %v2372 = vshrl.u32 %v2371, 7
        %v2373 = vsub.s32 %v2370, %v2372
        %v2374 = vrot.slane %v2366, %v2373
        %v2376 = vunpack.c.l.s4 1983009808
        %v2377 = vunpack.c.0.s8 %v2376
        %v2378 = vlaneseq
        %v2379 = vshrl.u32 %v2378, 7
        %v2380 = vsub.s32 %v2377, %v2379
        %v2381 = vrot.slane %v2367, %v2380
        %v2382 = vcombine.low %v2360, %v2364
        %v2383 = vcombine.high %v2360, %v2364
        %v2385 = vunpack.c.l.s4 1983009808
        %v2386 = vunpack.c.0.s8 %v2385
        %v2387 = vlaneseq
        %v2388 = vshrl.u32 %v2387, 7
        %v2389 = vsub.s32 %v2386, %v2388
        %v2390 = vrot.slane %v2382, %v2389
        %v2392 = vunpack.c.l.s4 1983009808
        %v2393 = vunpack.c.0.s8 %v2392
        %v2394 = vlaneseq
        %v2395 = vshrl.u32 %v2394, 7
        %v2396 = vsub.s32 %v2393, %v2395
        %v2397 = vrot.slane %v2383, %v2396
        %v2398 = vcombine.low %v2374, %v2390
        %v2399 = vcombine.high %v2374, %v2390
        %v2401 = vunpack.c.l.s4 1934713408
        %v2402 = vunpack.c.0.s8 %v2401
        %v2403 = vlaneseq
        %v2404 = vshrl.u32 %v2403, 7
        %v2405 = vsub.s32 %v2402, %v2404
        %v2406 = vrot.slane %v2398, %v2405
        %v2408 = vunpack.c.l.s4 1934713408
        %v2409 = vunpack.c.0.s8 %v2408
        %v2410 = vlaneseq
        %v2411 = vshrl.u32 %v2410, 7
        %v2412 = vsub.s32 %v2409, %v2411
        %v2413 = vrot.slane %v2399, %v2412
        %v2414 = vcombine.low %v2381, %v2397
        %v2415 = vcombine.high %v2381, %v2397
        %v2417 = vunpack.c.l.s4 1934713408
        %v2418 = vunpack.c.0.s8 %v2417
        %v2419 = vlaneseq
        %v2420 = vshrl.u32 %v2419, 7
        %v2421 = vsub.s32 %v2418, %v2420
        %v2422 = vrot.slane %v2414, %v2421
        %v2424 = vunpack.c.l.s4 1934713408
        %v2425 = vunpack.c.0.s8 %v2424
        %v2426 = vlaneseq
        %v2427 = vshrl.u32 %v2426, 7
        %v2428 = vsub.s32 %v2425, %v2427
        %v2429 = vrot.slane %v2415, %v2428
        %v2430 = vcombine.high %v2406, 0.0
        %v2431 = vcombine.high %v2413, 0.0
        %v2432 = vcombine.high %v2422, 0.0
        %v2433 = vcombine.high %v2429, 0.0
        %v2434 = vcombine.low %v2359, %v2363
        %v2435 = vcombine.high %v2359, %v2363
        %v2437 = vunpack.c.l.s4 1983009808
        %v2438 = vunpack.c.0.s8 %v2437
        %v2439 = vlaneseq
        %v2440 = vshrl.u32 %v2439, 7
        %v2441 = vsub.s32 %v2438, %v2440
        %v2442 = vrot.slane %v2434, %v2441
        %v2444 = vunpack.c.l.s4 1983009808
        %v2445 = vunpack.c.0.s8 %v2444
        %v2446 = vlaneseq
        %v2447 = vshrl.u32 %v2446, 7
        %v2448 = vsub.s32 %v2445, %v2447
        %v2449 = vrot.slane %v2435, %v2448
        %v2450 = vcombine.low %v2361, %v2365
        %v2451 = vcombine.high %v2361, %v2365
        %v2453 = vunpack.c.l.s4 1983009808
        %v2454 = vunpack.c.0.s8 %v2453
        %v2455 = vlaneseq
        %v2456 = vshrl.u32 %v2455, 7
        %v2457 = vsub.s32 %v2454, %v2456
        %v2458 = vrot.slane %v2450, %v2457
        %v2460 = vunpack.c.l.s4 1983009808
        %v2461 = vunpack.c.0.s8 %v2460
        %v2462 = vlaneseq
        %v2463 = vshrl.u32 %v2462, 7
        %v2464 = vsub.s32 %v2461, %v2463
        %v2465 = vrot.slane %v2451, %v2464
        %v2466 = vcombine.low %v2442, %v2458
        %v2467 = vcombine.high %v2442, %v2458
        %v2469 = vunpack.c.l.s4 1934713408
        %v2470 = vunpack.c.0.s8 %v2469
        %v2471 = vlaneseq
        %v2472 = vshrl.u32 %v2471, 7
        %v2473 = vsub.s32 %v2470, %v2472
        %v2474 = vrot.slane %v2466, %v2473
        %v2476 = vunpack.c.l.s4 1934713408
        %v2477 = vunpack.c.0.s8 %v2476
        %v2478 = vlaneseq
        %v2479 = vshrl.u32 %v2478, 7
        %v2480 = vsub.s32 %v2477, %v2479
        %v2481 = vrot.slane %v2467, %v2480
        %v2482 = vcombine.low %v2449, %v2465
        %v2483 = vcombine.high %v2449, %v2465
        %v2485 = vunpack.c.l.s4 1934713408
        %v2486 = vunpack.c.0.s8 %v2485
        %v2487 = vlaneseq
        %v2488 = vshrl.u32 %v2487, 7
        %v2489 = vsub.s32 %v2486, %v2488
        %v2490 = vrot.slane %v2482, %v2489
        %v2492 = vunpack.c.l.s4 1934713408
        %v2493 = vunpack.c.0.s8 %v2492
        %v2494 = vlaneseq
        %v2495 = vshrl.u32 %v2494, 7
        %v2496 = vsub.s32 %v2493, %v2495
        %v2497 = vrot.slane %v2483, %v2496
        %v2498 = vcombine.high %v2474, 0.0
        %v2499 = vcombine.high %v2481, 0.0
        %v2500 = vcombine.high %v2490, 0.0
        %v2501 = vcombine.high %v2497, 0.0
        %v2502 = vcombine.low %v2406, %v2413
        %v2504 = vunpack.c.l.s4 1983009808
        %v2505 = vunpack.c.0.s8 %v2504
        %v2506 = vlaneseq
        %v2507 = vshrl.u32 %v2506, 7
        %v2508 = vsub.s32 %v2505, %v2507
        %v2509 = vrot.slane %v2502, %v2508
        %v2510 = vcombine.low %v2430, %v2431
        %v2512 = vunpack.c.l.s4 1983009808
        %v2513 = vunpack.c.0.s8 %v2512
        %v2514 = vlaneseq
        %v2515 = vshrl.u32 %v2514, 7
        %v2516 = vsub.s32 %v2513, %v2515
        %v2517 = vrot.slane %v2510, %v2516
        %v2518 = vcombine.low %v2422, %v2429
        %v2520 = vunpack.c.l.s4 1983009808
        %v2521 = vunpack.c.0.s8 %v2520
        %v2522 = vlaneseq
        %v2523 = vshrl.u32 %v2522, 7
        %v2524 = vsub.s32 %v2521, %v2523
        %v2525 = vrot.slane %v2518, %v2524
        %v2526 = vcombine.low %v2432, %v2433
        %v2528 = vunpack.c.l.s4 1983009808
        %v2529 = vunpack.c.0.s8 %v2528
        %v2530 = vlaneseq
        %v2531 = vshrl.u32 %v2530, 7
        %v2532 = vsub.s32 %v2529, %v2531
        %v2533 = vrot.slane %v2526, %v2532
        %v2534 = vcombine.low %v2509, %v2517
        %v2535 = vcombine.high %v2509, %v2517
        %v2537 = vunpack.c.l.s4 1934713408
        %v2538 = vunpack.c.0.s8 %v2537
        %v2539 = vlaneseq
        %v2540 = vshrl.u32 %v2539, 7
        %v2541 = vsub.s32 %v2538, %v2540
        %v2542 = vrot.slane %v2534, %v2541
        %v2544 = vunpack.c.l.s4 1934713408
        %v2545 = vunpack.c.0.s8 %v2544
        %v2546 = vlaneseq
        %v2547 = vshrl.u32 %v2546, 7
        %v2548 = vsub.s32 %v2545, %v2547
        %v2549 = vrot.slane %v2535, %v2548
        %v2550 = vcombine.low %v2525, %v2533
        %v2551 = vcombine.high %v2525, %v2533
        %v2553 = vunpack.c.l.s4 1934713408
        %v2554 = vunpack.c.0.s8 %v2553
        %v2555 = vlaneseq
        %v2556 = vshrl.u32 %v2555, 7
        %v2557 = vsub.s32 %v2554, %v2556
        %v2558 = vrot.slane %v2550, %v2557
        %v2560 = vunpack.c.l.s4 1934713408
        %v2561 = vunpack.c.0.s8 %v2560
        %v2562 = vlaneseq
        %v2563 = vshrl.u32 %v2562, 7
        %v2564 = vsub.s32 %v2561, %v2563
        %v2565 = vrot.slane %v2551, %v2564
        %v2566 = vcombine.low %v2542, %v2558
        %v2567 = vcombine.high %v2542, %v2558
        %v2568 = vcombine.low %v2549, %v2565
        %v2569 = vcombine.high %v2549, %v2565
        %v2570 = vcombine.low %v2474, %v2481
        %v2572 = vunpack.c.l.s4 1983009808
        %v2573 = vunpack.c.0.s8 %v2572
        %v2574 = vlaneseq
        %v2575 = vshrl.u32 %v2574, 7
        %v2576 = vsub.s32 %v2573, %v2575
        %v2577 = vrot.slane %v2570, %v2576
        %v2578 = vcombine.low %v2498, %v2499
        %v2580 = vunpack.c.l.s4 1983009808
        %v2581 = vunpack.c.0.s8 %v2580
        %v2582 = vlaneseq
        %v2583 = vshrl.u32 %v2582, 7
        %v2584 = vsub.s32 %v2581, %v2583
        %v2585 = vrot.slane %v2578, %v2584
        %v2586 = vcombine.low %v2490, %v2497
        %v2588 = vunpack.c.l.s4 1983009808
        %v2589 = vunpack.c.0.s8 %v2588
        %v2590 = vlaneseq
        %v2591 = vshrl.u32 %v2590, 7
        %v2592 = vsub.s32 %v2589, %v2591
        %v2593 = vrot.slane %v2586, %v2592
        %v2594 = vcombine.low %v2500, %v2501
        %v2596 = vunpack.c.l.s4 1983009808
        %v2597 = vunpack.c.0.s8 %v2596
        %v2598 = vlaneseq
        %v2599 = vshrl.u32 %v2598, 7
        %v2600 = vsub.s32 %v2597, %v2599
        %v2601 = vrot.slane %v2594, %v2600
        %v2602 = vcombine.low %v2577, %v2585
        %v2603 = vcombine.high %v2577, %v2585
        %v2605 = vunpack.c.l.s4 1934713408
        %v2606 = vunpack.c.0.s8 %v2605
        %v2607 = vlaneseq
        %v2608 = vshrl.u32 %v2607, 7
        %v2609 = vsub.s32 %v2606, %v2608
        %v2610 = vrot.slane %v2602, %v2609
        %v2612 = vunpack.c.l.s4 1934713408
        %v2613 = vunpack.c.0.s8 %v2612
        %v2614 = vlaneseq
        %v2615 = vshrl.u32 %v2614, 7
        %v2616 = vsub.s32 %v2613, %v2615
        %v2617 = vrot.slane %v2603, %v2616
        %v2618 = vcombine.low %v2593, %v2601
        %v2619 = vcombine.high %v2593, %v2601
        %v2621 = vunpack.c.l.s4 1934713408
        %v2622 = vunpack.c.0.s8 %v2621
        %v2623 = vlaneseq
        %v2624 = vshrl.u32 %v2623, 7
        %v2625 = vsub.s32 %v2622, %v2624
        %v2626 = vrot.slane %v2618, %v2625
        %v2628 = vunpack.c.l.s4 1934713408
        %v2629 = vunpack.c.0.s8 %v2628
        %v2630 = vlaneseq
        %v2631 = vshrl.u32 %v2630, 7
        %v2632 = vsub.s32 %v2629, %v2631
        %v2633 = vrot.slane %v2619, %v2632
        %v2634 = vcombine.low %v2610, %v2626
        %v2635 = vcombine.high %v2610, %v2626
        %v2636 = vcombine.low %v2617, %v2633
        %v2637 = vcombine.high %v2617, %v2633
        %2640 = vrot.lane.b32.xlu0 %v2567, 32
        %v2641 = vpop.permute.xlu0 %2640
        %2642 = vrot.lane.b32.xlu0 %v2635, 32
        %v2643 = vpop.permute.xlu0 %2642
        %2648 = vrot.lane.b32.xlu0 %v2568, 64
        %v2649 = vpop.permute.xlu0 %2648
        %2650 = vrot.lane.b32.xlu0 %v2636, 64
        %v2651 = vpop.permute.xlu0 %2650
        %2656 = vrot.lane.b32.xlu0 %v2569, 96
        %v2657 = vpop.permute.xlu0 %2656
        %2658 = vrot.lane.b32.xlu0 %v2637, 96
        %v2659 = vpop.permute.xlu0 %2658
        %v2662 = vsel %vm1519, %v2566, %v2641
        %v2663 = vsel %vm1519, %v2634, %v2643
        %vm2664 = vcmask 523264
        %v2665 = vsel %vm2664, %v2662, %v2649
        %v2666 = vsel %vm2664, %v2663, %v2651
        %vm2667 = vcmask 785408
        %v2668 = vsel %vm2667, %v2665, %v2657
        %v2669 = vsel %vm2667, %v2666, %v2659
        %v2670 = vpack.c.bf16 %v2669, %v2668
        %v2671 = vld [vmem:[#allocation13] sm:$0xf]
        %v2672 = vld [vmem:[#allocation13 + $0x4] sm:$0xf]
        %v2673 = vld [vmem:[#allocation13 + $0x8] sm:$0xf]
        %v2674 = vld [vmem:[#allocation13 + $0xc] sm:$0xf]
        %v2675 = vld [vmem:[#allocation13 + $0x10] sm:$0xf]
        %v2676 = vld [vmem:[#allocation13 + $0x14] sm:$0xf]
        %v2677 = vld [vmem:[#allocation13 + $0x18] sm:$0xf]
        %v2678 = vld [vmem:[#allocation13 + $0x1c] sm:$0xf]
        %v2679 = vld [vmem:[#allocation13 + $0x20] sm:$0xf]
        %v2680 = vld [vmem:[#allocation13 + $0x24] sm:$0xf]
        %v2681 = vld [vmem:[#allocation13 + $0x28] sm:$0xf]
        %v2682 = vld [vmem:[#allocation13 + $0x2c] sm:$0xf]
        %v2683 = vld [vmem:[#allocation13 + $0x30] sm:$0xf]
        %v2684 = vld [vmem:[#allocation13 + $0x34] sm:$0xf]
        %v2685 = vld [vmem:[#allocation13 + $0x38] sm:$0xf]
        %v2686 = vld [vmem:[#allocation13 + $0x3c] sm:$0xf]
        %v2687 = vld [vmem:[#allocation15] sm:$0x1]
        %v2689 = vlaneseq
        %v2690 = vshrl.u32 %v2689, 7
        %v2691 = vsub.s32 0, %v2690
        %v2692 = vrot.slane %v2687, %v2691
        %v2710 = vunpack.c.l.b16 %v2671
        %v2711 = vunpack.c.l.b16 %v2672
        %v2712 = vunpack.c.l.b16 %v2673
        %v2713 = vunpack.c.l.b16 %v2674
        %v2714 = vunpack.c.l.b16 %v2675
        %v2715 = vunpack.c.l.b16 %v2676
        %v2716 = vunpack.c.l.b16 %v2677
        %v2717 = vunpack.c.l.b16 %v2678
        %v2718 = vunpack.c.l.b16 %v2679
        %v2719 = vunpack.c.l.b16 %v2680
        %v2720 = vunpack.c.l.b16 %v2681
        %v2721 = vunpack.c.l.b16 %v2682
        %v2722 = vunpack.c.l.b16 %v2683
        %v2723 = vunpack.c.l.b16 %v2684
        %v2724 = vunpack.c.l.b16 %v2685
        %v2725 = vunpack.c.l.b16 %v2686
        %v2726 = vpack.c.b16 %v2711, %v2710
        %v2727 = vpack.c.b16 %v2713, %v2712
        %v2728 = vpack.c.b16 %v2715, %v2714
        %v2729 = vpack.c.b16 %v2717, %v2716
        %v2730 = vpack.c.b16 %v2719, %v2718
        %v2731 = vpack.c.b16 %v2721, %v2720
        %v2732 = vpack.c.b16 %v2723, %v2722
        %v2733 = vpack.c.b16 %v2725, %v2724
        %2742 = vmatprep.subr.bf16.mxu0 0
        %2743 = vmatpush1.bf16.msra.mxu0 %v2726
        %2744 = vmatprep.subr.bf16.mxu0 0
        %2745 = vmatpush1.bf16.msra.mxu0 %v2727
        %2746 = vmatprep.subr.bf16.mxu0 0
        %2747 = vmatpush1.bf16.msra.mxu0 %v2728
        %2748 = vmatprep.subr.bf16.mxu0 0
        %2749 = vmatpush1.bf16.msra.mxu0 %v2729
        %2750 = vmatprep.subr.bf16.mxu0 0
        %2751 = vmatpush1.bf16.msra.mxu0 %v2730
        %2752 = vmatprep.subr.bf16.mxu0 0
        %2753 = vmatpush1.bf16.msra.mxu0 %v2731
        %2754 = vmatprep.subr.bf16.mxu0 0
        %2755 = vmatpush1.bf16.msra.mxu0 %v2732
        %2756 = vmatprep.subr.bf16.mxu0 0
        %2757 = vmatpush1.bf16.msra.mxu0 %v2733
        %2758 = vmatprep.subr.bf16.mxu0 0
        %2759 = vmatpush1.bf16.msra.mxu0 0
        %2760 = vmatprep.subr.bf16.mxu0 0
        %2761 = vmatpush1.bf16.msra.mxu0 0
        %2762 = vmatprep.subr.bf16.mxu0 0
        %2763 = vmatpush1.bf16.msra.mxu0 0
        %2764 = vmatprep.subr.bf16.mxu0 0
        %2765 = vmatpush1.bf16.msra.mxu0 0
        %2766 = vmatprep.subr.bf16.mxu0 0
        %2767 = vmatpush1.bf16.msra.mxu0 0
        %2768 = vmatprep.subr.bf16.mxu0 0
        %2769 = vmatpush1.bf16.msra.mxu0 0
        %2770 = vmatprep.subr.bf16.mxu0 0
        %2771 = vmatpush1.bf16.msra.mxu0 0
        %2772 = vmatprep.subr.bf16.mxu0 0
        %2773 = vmatpush1.bf16.msra.mxu0 0
        %2774 = vmatprep.mubr.bf16.mxu0 0
        %2775 = vmatmul.mubr.bf16.gmra.mrb[0].mxu0 %v2670
        %v2776 = vpop.f32.mrb[0].mxu0
        %v2777 = vadd.f32 %v2692, %v2776
        %v2778 = vpop.f32.mrb[0].mxu0
        %v2779 = vpop.f32.mrb[0].mxu0
        %v2780 = vadd.f32 %v2692, %v2779
        %v2781 = vpop.f32.mrb[0].mxu0
        %2782 = vdwg.mxu0
        %v2783 = vadd.f32 %v622, %v2777
        %v2784 = vadd.f32 %v623, %v2780
        %v2785 = vld [vmem:[#allocation16] sm:$0x1]
        %v2786 = vld [vmem:[#allocation18] sm:$0x1]
        %2787 = vadd.xlane.f32.xlu0 %v2783
        %v2788 = vpop.xlane.xlu0 %2787
        %2789 = vadd.xlane.f32.xlu0 %v2784
        %v2790 = vpop.xlane.xlu0 %2789
        %v2791 = vmul.f32 %v2788, %v630
        %v2792 = vmul.f32 %v2790, %v630
        %v2793 = vsub.f32 %v2783, %v2791
        %v2794 = vsub.f32 %v2784, %v2792
        %v2795 = vmul.f32 %v2793, %v2793
        %v2796 = vmul.f32 %v2794, %v2794
        %2797 = vadd.xlane.f32.xlu0 %v2795
        %v2798 = vpop.xlane.xlu0 %2797
        %2799 = vadd.xlane.f32.xlu0 %v2796
        %v2800 = vpop.xlane.xlu0 %2799
        %v2801 = vmul.f32 %v2798, %v630
        %v2802 = vmul.f32 %v2800, %v630
        %v2803 = vadd.f32 %v2801, 1e-05
        %v2804 = vadd.f32 %v2802, 1e-05
        %v2805 = vrsqrt.pop %v2803
        %v2806 = vrsqrt.pop %v2804
        %v2807 = vmul.f32 %v2793, %v2805
        %v2808 = vmul.f32 %v2794, %v2806
        %v2810 = vlaneseq
        %v2811 = vshrl.u32 %v2810, 7
        %v2812 = vsub.s32 0, %v2811
        %v2813 = vrot.slane %v2785, %v2812
        %v2815 = vmul.f32 %v2807, %v2813
        %v2816 = vmul.f32 %v2808, %v2813
        %v2818 = vlaneseq
        %v2819 = vshrl.u32 %v2818, 7
        %v2820 = vsub.s32 0, %v2819
        %v2821 = vrot.slane %v2786, %v2820
        %v2823 = vadd.f32 %v2815, %v2821
        %v2824 = vadd.f32 %v2816, %v2821
        %v2825 = vpack.c.bf16 %v2824, %v2823
        %v2826 = vld [vmem:[#allocation19] sm:$0xff]
        %v2827 = vld [vmem:[#allocation19 + $0x8] sm:$0xff]
        %v2828 = vld [vmem:[#allocation19 + $0x10] sm:$0xff]
        %v2829 = vld [vmem:[#allocation19 + $0x18] sm:$0xff]
        %v2830 = vld [vmem:[#allocation19 + $0x20] sm:$0xff]
        %v2831 = vld [vmem:[#allocation19 + $0x28] sm:$0xff]
        %v2832 = vld [vmem:[#allocation19 + $0x30] sm:$0xff]
        %v2833 = vld [vmem:[#allocation19 + $0x38] sm:$0xff]
        %v2834 = vld [vmem:[#allocation19 + $0x40] sm:$0xff]
        %v2835 = vld [vmem:[#allocation19 + $0x48] sm:$0xff]
        %v2836 = vld [vmem:[#allocation19 + $0x50] sm:$0xff]
        %v2837 = vld [vmem:[#allocation19 + $0x58] sm:$0xff]
        %v2838 = vld [vmem:[#allocation19 + $0x60] sm:$0xff]
        %v2839 = vld [vmem:[#allocation19 + $0x68] sm:$0xff]
        %v2840 = vld [vmem:[#allocation19 + $0x70] sm:$0xff]
        %v2841 = vld [vmem:[#allocation19 + $0x78] sm:$0xff]
        %v2842 = vld [vmem:[#allocation21] sm:$0x3]
        %v2844 = vlaneseq
        %v2845 = vshrl.u32 %v2844, 7
        %v2846 = vsub.s32 0, %v2845
        %v2847 = vrot.slane %v2842, %v2846
        %v2848 = vlaneseq
        %v2849 = vshrl.u32 %v2848, 7
        %v2850 = vsub.s32 1, %v2849
        %v2851 = vrot.slane %v2842, %v2850
        %v2870 = vunpack.c.l.b16 %v2826
        %v2871 = vunpack.c.h.b16 %v2826
        %v2872 = vunpack.c.l.b16 %v2827
        %v2873 = vunpack.c.h.b16 %v2827
        %v2874 = vunpack.c.l.b16 %v2828
        %v2875 = vunpack.c.h.b16 %v2828
        %v2876 = vunpack.c.l.b16 %v2829
        %v2877 = vunpack.c.h.b16 %v2829
        %v2878 = vunpack.c.l.b16 %v2830
        %v2879 = vunpack.c.h.b16 %v2830
        %v2880 = vunpack.c.l.b16 %v2831
        %v2881 = vunpack.c.h.b16 %v2831
        %v2882 = vunpack.c.l.b16 %v2832
        %v2883 = vunpack.c.h.b16 %v2832
        %v2884 = vunpack.c.l.b16 %v2833
        %v2885 = vunpack.c.h.b16 %v2833
        %v2886 = vunpack.c.l.b16 %v2834
        %v2887 = vunpack.c.h.b16 %v2834
        %v2888 = vunpack.c.l.b16 %v2835
        %v2889 = vunpack.c.h.b16 %v2835
        %v2890 = vunpack.c.l.b16 %v2836
        %v2891 = vunpack.c.h.b16 %v2836
        %v2892 = vunpack.c.l.b16 %v2837
        %v2893 = vunpack.c.h.b16 %v2837
        %v2894 = vunpack.c.l.b16 %v2838
        %v2895 = vunpack.c.h.b16 %v2838
        %v2896 = vunpack.c.l.b16 %v2839
        %v2897 = vunpack.c.h.b16 %v2839
        %v2898 = vunpack.c.l.b16 %v2840
        %v2899 = vunpack.c.h.b16 %v2840
        %v2900 = vunpack.c.l.b16 %v2841
        %v2901 = vunpack.c.h.b16 %v2841
        %v2902 = vpack.c.b16 %v2872, %v2870
        %v2903 = vpack.c.b16 %v2873, %v2871
        %v2904 = vpack.c.b16 %v2876, %v2874
        %v2905 = vpack.c.b16 %v2877, %v2875
        %v2906 = vpack.c.b16 %v2880, %v2878
        %v2907 = vpack.c.b16 %v2881, %v2879
        %v2908 = vpack.c.b16 %v2884, %v2882
        %v2909 = vpack.c.b16 %v2885, %v2883
        %v2910 = vpack.c.b16 %v2888, %v2886
        %v2911 = vpack.c.b16 %v2889, %v2887
        %v2912 = vpack.c.b16 %v2892, %v2890
        %v2913 = vpack.c.b16 %v2893, %v2891
        %v2914 = vpack.c.b16 %v2896, %v2894
        %v2915 = vpack.c.b16 %v2897, %v2895
        %v2916 = vpack.c.b16 %v2900, %v2898
        %v2917 = vpack.c.b16 %v2901, %v2899
        %2934 = vmatprep.subr.bf16.mxu0 %v2903
        %2935 = vmatpush1.bf16.msra.mxu0 %v2902
        %2936 = vmatprep.subr.bf16.mxu0 %v2905
        %2937 = vmatpush1.bf16.msra.mxu0 %v2904
        %2938 = vmatprep.subr.bf16.mxu0 %v2907
        %2939 = vmatpush1.bf16.msra.mxu0 %v2906
        %2940 = vmatprep.subr.bf16.mxu0 %v2909
        %2941 = vmatpush1.bf16.msra.mxu0 %v2908
        %2942 = vmatprep.subr.bf16.mxu0 %v2911
        %2943 = vmatpush1.bf16.msra.mxu0 %v2910
        %2944 = vmatprep.subr.bf16.mxu0 %v2913
        %2945 = vmatpush1.bf16.msra.mxu0 %v2912
        %2946 = vmatprep.subr.bf16.mxu0 %v2915
        %2947 = vmatpush1.bf16.msra.mxu0 %v2914
        %2948 = vmatprep.subr.bf16.mxu0 %v2917
        %2949 = vmatpush1.bf16.msra.mxu0 %v2916
        %2950 = vmatprep.subr.bf16.mxu0 0
        %2951 = vmatpush1.bf16.msra.mxu0 0
        %2952 = vmatprep.subr.bf16.mxu0 0
        %2953 = vmatpush1.bf16.msra.mxu0 0
        %2954 = vmatprep.subr.bf16.mxu0 0
        %2955 = vmatpush1.bf16.msra.mxu0 0
        %2956 = vmatprep.subr.bf16.mxu0 0
        %2957 = vmatpush1.bf16.msra.mxu0 0
        %2958 = vmatprep.subr.bf16.mxu0 0
        %2959 = vmatpush1.bf16.msra.mxu0 0
        %2960 = vmatprep.subr.bf16.mxu0 0
        %2961 = vmatpush1.bf16.msra.mxu0 0
        %2962 = vmatprep.subr.bf16.mxu0 0
        %2963 = vmatpush1.bf16.msra.mxu0 0
        %2964 = vmatprep.subr.bf16.mxu0 0
        %2965 = vmatpush1.bf16.msra.mxu0 0
        %2966 = vmatprep.mubr.bf16.mxu0 0
        %2967 = vmatmul.mubr.bf16.gmra.mrb[0].mxu0 %v2825
        %v2968 = vpop.f32.mrb[0].mxu0
        %v2969 = vadd.f32 %v2847, %v2968
        %v2970 = vpop.f32.mrb[0].mxu0
        %v2971 = vadd.f32 %v2851, %v2970
        %v2972 = vpop.f32.mrb[0].mxu0
        %v2973 = vadd.f32 %v2847, %v2972
        %v2974 = vpop.f32.mrb[0].mxu0
        %v2975 = vadd.f32 %v2851, %v2974
        %2976 = vdwg.mxu0
        %v2977 = vpack.c.bf16 %v2973, %v2969
        %v2978 = vpack.c.bf16 %v2975, %v2971
        %v2979 = vmul.bf16 %v2977, 1056980736
        %v2980 = vmul.bf16 %v2978, 1056980736
        %v2981 = vmul.bf16 %v2977, %v2977
        %v2982 = vmul.bf16 %v2978, %v2978
        %v2983 = vmul.bf16 %v2981, %v2977
        %v2984 = vmul.bf16 %v2982, %v2978
        %v2985 = vmul.bf16 %v2983, 1027030327
        %v2986 = vmul.bf16 %v2984, 1027030327
        %v2987 = vadd.bf16 %v2977, %v2985
        %v2988 = vadd.bf16 %v2978, %v2986
        %v2989 = vmul.bf16 %v2987, 1061961548
        %v2990 = vmul.bf16 %v2988, 1061961548
        %v2991 = vtanh.bf16.pop %v2989
        %v2992 = vtanh.bf16.pop %v2990
        %v2993 = vadd.bf16 %v2991, 1065369472
        %v2994 = vadd.bf16 %v2992, 1065369472
        %v2995 = vmul.bf16 %v2979, %v2993
        %v2996 = vmul.bf16 %v2980, %v2994
        %v2997 = vld [vmem:[#allocation22] sm:$0xf]
        %v2998 = vld [vmem:[#allocation22 + $0x4] sm:$0xf]
        %v2999 = vld [vmem:[#allocation22 + $0x8] sm:$0xf]
        %v3000 = vld [vmem:[#allocation22 + $0xc] sm:$0xf]
        %v3001 = vld [vmem:[#allocation22 + $0x10] sm:$0xf]
        %v3002 = vld [vmem:[#allocation22 + $0x14] sm:$0xf]
        %v3003 = vld [vmem:[#allocation22 + $0x18] sm:$0xf]
        %v3004 = vld [vmem:[#allocation22 + $0x1c] sm:$0xf]
        %v3005 = vld [vmem:[#allocation22 + $0x20] sm:$0xf]
        %v3006 = vld [vmem:[#allocation22 + $0x24] sm:$0xf]
        %v3007 = vld [vmem:[#allocation22 + $0x28] sm:$0xf]
        %v3008 = vld [vmem:[#allocation22 + $0x2c] sm:$0xf]
        %v3009 = vld [vmem:[#allocation22 + $0x30] sm:$0xf]
        %v3010 = vld [vmem:[#allocation22 + $0x34] sm:$0xf]
        %v3011 = vld [vmem:[#allocation22 + $0x38] sm:$0xf]
        %v3012 = vld [vmem:[#allocation22 + $0x3c] sm:$0xf]
        %v3013 = vld [vmem:[#allocation22 + $0x40] sm:$0xf]
        %v3014 = vld [vmem:[#allocation22 + $0x44] sm:$0xf]
        %v3015 = vld [vmem:[#allocation22 + $0x48] sm:$0xf]
        %v3016 = vld [vmem:[#allocation22 + $0x4c] sm:$0xf]
        %v3017 = vld [vmem:[#allocation22 + $0x50] sm:$0xf]
        %v3018 = vld [vmem:[#allocation22 + $0x54] sm:$0xf]
        %v3019 = vld [vmem:[#allocation22 + $0x58] sm:$0xf]
        %v3020 = vld [vmem:[#allocation22 + $0x5c] sm:$0xf]
        %v3021 = vld [vmem:[#allocation22 + $0x60] sm:$0xf]
        %v3022 = vld [vmem:[#allocation22 + $0x64] sm:$0xf]
        %v3023 = vld [vmem:[#allocation22 + $0x68] sm:$0xf]
        %v3024 = vld [vmem:[#allocation22 + $0x6c] sm:$0xf]
        %v3025 = vld [vmem:[#allocation22 + $0x70] sm:$0xf]
        %v3026 = vld [vmem:[#allocation22 + $0x74] sm:$0xf]
        %v3027 = vld [vmem:[#allocation22 + $0x78] sm:$0xf]
        %v3028 = vld [vmem:[#allocation22 + $0x7c] sm:$0xf]
        %v3029 = vld [vmem:[#allocation24] sm:$0x1]
        %v3031 = vlaneseq
        %v3032 = vshrl.u32 %v3031, 7
        %v3033 = vsub.s32 0, %v3032
        %v3034 = vrot.slane %v3029, %v3033
        %v3068 = vunpack.c.l.b16 %v2997
        %v3069 = vunpack.c.l.b16 %v2998
        %v3070 = vunpack.c.l.b16 %v2999
        %v3071 = vunpack.c.l.b16 %v3000
        %v3072 = vunpack.c.l.b16 %v3001
        %v3073 = vunpack.c.l.b16 %v3002
        %v3074 = vunpack.c.l.b16 %v3003
        %v3075 = vunpack.c.l.b16 %v3004
        %v3076 = vunpack.c.l.b16 %v3005
        %v3077 = vunpack.c.l.b16 %v3006
        %v3078 = vunpack.c.l.b16 %v3007
        %v3079 = vunpack.c.l.b16 %v3008
        %v3080 = vunpack.c.l.b16 %v3009
        %v3081 = vunpack.c.l.b16 %v3010
        %v3082 = vunpack.c.l.b16 %v3011
        %v3083 = vunpack.c.l.b16 %v3012
        %v3084 = vunpack.c.l.b16 %v3013
        %v3085 = vunpack.c.l.b16 %v3014
        %v3086 = vunpack.c.l.b16 %v3015
        %v3087 = vunpack.c.l.b16 %v3016
        %v3088 = vunpack.c.l.b16 %v3017
        %v3089 = vunpack.c.l.b16 %v3018
        %v3090 = vunpack.c.l.b16 %v3019
        %v3091 = vunpack.c.l.b16 %v3020
        %v3092 = vunpack.c.l.b16 %v3021
        %v3093 = vunpack.c.l.b16 %v3022
        %v3094 = vunpack.c.l.b16 %v3023
        %v3095 = vunpack.c.l.b16 %v3024
        %v3096 = vunpack.c.l.b16 %v3025
        %v3097 = vunpack.c.l.b16 %v3026
        %v3098 = vunpack.c.l.b16 %v3027
        %v3099 = vunpack.c.l.b16 %v3028
        %v3100 = vpack.c.b16 %v3069, %v3068
        %v3101 = vpack.c.b16 %v3071, %v3070
        %v3102 = vpack.c.b16 %v3073, %v3072
        %v3103 = vpack.c.b16 %v3075, %v3074
        %v3104 = vpack.c.b16 %v3077, %v3076
        %v3105 = vpack.c.b16 %v3079, %v3078
        %v3106 = vpack.c.b16 %v3081, %v3080
        %v3107 = vpack.c.b16 %v3083, %v3082
        %v3108 = vpack.c.b16 %v3085, %v3084
        %v3109 = vpack.c.b16 %v3087, %v3086
        %v3110 = vpack.c.b16 %v3089, %v3088
        %v3111 = vpack.c.b16 %v3091, %v3090
        %v3112 = vpack.c.b16 %v3093, %v3092
        %v3113 = vpack.c.b16 %v3095, %v3094
        %v3114 = vpack.c.b16 %v3097, %v3096
        %v3115 = vpack.c.b16 %v3099, %v3098
        %3132 = vmatprep.subr.bf16.mxu0 0
        %3133 = vmatpush1.bf16.msra.mxu0 %v3100
        %3134 = vmatprep.subr.bf16.mxu0 0
        %3135 = vmatpush1.bf16.msra.mxu0 %v3101
        %3136 = vmatprep.subr.bf16.mxu0 0
        %3137 = vmatpush1.bf16.msra.mxu0 %v3102
        %3138 = vmatprep.subr.bf16.mxu0 0
        %3139 = vmatpush1.bf16.msra.mxu0 %v3103
        %3140 = vmatprep.subr.bf16.mxu0 0
        %3141 = vmatpush1.bf16.msra.mxu0 %v3104
        %3142 = vmatprep.subr.bf16.mxu0 0
        %3143 = vmatpush1.bf16.msra.mxu0 %v3105
        %3144 = vmatprep.subr.bf16.mxu0 0
        %3145 = vmatpush1.bf16.msra.mxu0 %v3106
        %3146 = vmatprep.subr.bf16.mxu0 0
        %3147 = vmatpush1.bf16.msra.mxu0 %v3107
        %3148 = vmatprep.subr.bf16.mxu0 0
        %3149 = vmatpush1.bf16.msra.mxu0 %v3108
        %3150 = vmatprep.subr.bf16.mxu0 0
        %3151 = vmatpush1.bf16.msra.mxu0 %v3109
        %3152 = vmatprep.subr.bf16.mxu0 0
        %3153 = vmatpush1.bf16.msra.mxu0 %v3110
        %3154 = vmatprep.subr.bf16.mxu0 0
        %3155 = vmatpush1.bf16.msra.mxu0 %v3111
        %3156 = vmatprep.subr.bf16.mxu0 0
        %3157 = vmatpush1.bf16.msra.mxu0 %v3112
        %3158 = vmatprep.subr.bf16.mxu0 0
        %3159 = vmatpush1.bf16.msra.mxu0 %v3113
        %3160 = vmatprep.subr.bf16.mxu0 0
        %3161 = vmatpush1.bf16.msra.mxu0 %v3114
        %3162 = vmatprep.subr.bf16.mxu0 0
        %3163 = vmatpush1.bf16.msra.mxu0 %v3115
        %3164 = vmatprep.mubr.bf16.mxu0 %v2996
        %3165 = vmatmul.mubr.bf16.gmra.mrb[0].mxu0 %v2995
        %v3166 = vpop.f32.mrb[0].mxu0
        %v3167 = vadd.f32 %v3034, %v3166
        %v3168 = vpop.f32.mrb[0].mxu0
        %v3169 = vpop.f32.mrb[0].mxu0
        %v3170 = vadd.f32 %v3034, %v3169
        %v3171 = vpop.f32.mrb[0].mxu0
        %3172 = vdwg.mxu0
        %v3173 = vadd.f32 %v2783, %v3167
        %v3174 = vadd.f32 %v2784, %v3170
        %3175 = vst [vmem:[%s616] sm:$0xff] %v3173
        %3176 = vst [vmem:[%s616 + $0x8] sm:$0xff] %v3174
        %s3177 = sand.u32 %s322, 1
        %s3178 = scalar_lea.sflag [#allocation6], %s3177
        %s3179 = sand.u32 %s322, 1
        %s3180 = smul.addr %s3179, 16
        %s3181 = scalar_lea.vmem [#allocation25], %s3180
        // Predicated region
        $region125: #{tpu_custom_call.1} parent=71 // pred_check
          %p3182 = pneg %p332
        $region126: #{tpu_custom_call.1} parent=71 // pred_check_branch
          %3184 = sbr.rel (%p3182) target = $region128
        $region127: #{tpu_custom_call.1} parent=71 // pred_region
          %s3186 = ssub.s32 256, 256
          %3187 = vsyncadd %s3178, %s3186
          %s3188 = smul.addr %s36, 2
          %s3189 = smul.addr %s3188, 128
          %s3190 = scalar_lea.hbm %s13, %s3189
          %s3191 = sshll.u32 %s3181, 4
          %s3192 = int_to_ptr.vmem [resolvable:$true] %s3191
          %3197 = dma.vmem_to_hbm [thread:$0]  %s3192, 256, %s3190, %s3178, 128, 128, 8
        $region128: #{tpu_custom_call.1} parent=71 // pred_fallthru
          _
      $region72: #{tpu_custom_call.1} parent=5 // pred_fallthru
        _
      %p3198 = scmp.le.s32.totalorder 2, %s31
      // Predicated region
      $region129: #{tpu_custom_call.1} parent=5 // pred_check
        %p3199 = pneg %p3198
      $region130: #{tpu_custom_call.1} parent=5 // pred_check_branch
        %3201 = sbr.rel (%p3199) target = $region132
      $region131: #{tpu_custom_call.1} parent=5 // pred_region
        %s3202 = ssub.s32 %s31, 2
        // Predicated region
        $region133: #{tpu_custom_call.1} parent=131 // pred_check
          %p3203 = pneg %p338
        $region134: #{tpu_custom_call.1} parent=131 // pred_check_branch
          %3205 = sbr.rel (%p3203) target = $region136
        $region135: #{tpu_custom_call.1} parent=131 // pred_region
          %s3206 = sand.u32 %s323, 1
          %s3207 = scalar_lea.sflag [#allocation6], %s3206
          %s3208 = sand.u32 %s323, 1
          %s3209 = smul.addr %s3208, 16
          %s3210 = scalar_lea.vmem [#allocation25], %s3209
          %3211 = dma.done %s3207, 256
        $region136: #{tpu_custom_call.1} parent=131 // pred_fallthru
          _
      $region132: #{tpu_custom_call.1} parent=5 // pred_fallthru
        _
    $region6: #{tpu_custom_call.1} parent=1 // loop_footer
      %s35 = sadd.s32 1, %s31
    $region7: #{tpu_custom_call.1} parent=1 // loop_footer_branch
      %30 = sbr.rel target = $region3
    $region8: #{tpu_custom_call.1} parent=1 // loop_exit
      _
    %3212 = vsyncpa [#allocation5], 1
    %s3213 = scalar_lea.sflag [#allocation5], 1
    %3214 = vsyncpa %s3213, 1
    %3215 = vsyncpa [#allocation8], 1
    %3216 = vsyncpa [#allocation11], 1
    %3217 = vsyncpa [#allocation14], 1
    %3218 = vsyncpa [#allocation17], 1
    %3219 = vsyncpa [#allocation20], 1
    %3220 = vsyncpa [#allocation23], 1
    %3221 = vsyncpa [#allocation6], 1
    %s3222 = scalar_lea.sflag [#allocation6], 1
    %3223 = vsyncpa %s3222, 1

// kernel: tpu_custom_call.1
$region0: #{tpu_custom_call.1}
  #allocation0 [shape = 'u32[]', space=smem, size = 0x4, offset = 0x4, fixed_abs, tag = 'smem constant byte address 0x4 - core index']
  #allocation1 [shape = 'u32[144,128]{1,0:T(1,128)}', space=vmem, size = 0x12000, scoped, tag = 'internal scratch']
  #allocation2 [shape = 'bf16[4,16,32]{2,1,0:T(16,128)(2,1)}', space=vmem, size = 0x4000, scoped, tag = 'scratch operand']
  #allocation3 [shape = 'bf16[4,16,32]{2,1,0:T(16,128)(2,1)}', space=vmem, size = 0x4000, scoped, tag = 'scratch operand']
  %s0 = inlined_call_operand.hbm [shape: f32[2,16,128], index: 0, kind: input, shape index: {}]
  %s1 = inlined_call_operand.hbm [shape: f32[1,128], index: 1, kind: input, shape index: {}]
  %s2 = inlined_call_operand.hbm [shape: f32[1,128], index: 2, kind: input, shape index: {}]
  %s3 = inlined_call_operand.hbm [shape: bf16[128,384], index: 3, kind: input, shape index: {}]
  %s4 = inlined_call_operand.hbm [shape: f32[1,384], index: 4, kind: input, shape index: {}]
  %s5 = inlined_call_operand.hbm [shape: bf16[128,128], index: 5, kind: input, shape index: {}]
  %s6 = inlined_call_operand.hbm [shape: f32[1,128], index: 6, kind: input, shape index: {}]
  %s7 = inlined_call_operand.hbm [shape: f32[1,128], index: 7, kind: input, shape index: {}]
  %s8 = inlined_call_operand.hbm [shape: f32[1,128], index: 8, kind: input, shape index: {}]
  %s9 = inlined_call_operand.hbm [shape: bf16[1,128,256], index: 9, kind: input, shape index: {}]
  %s10 = inlined_call_operand.hbm [shape: f32[1,1,256], index: 10, kind: input, shape index: {}]
  %s11 = inlined_call_operand.hbm [shape: bf16[1,256,128], index: 11, kind: input, shape index: {}]
  %s12 = inlined_call_operand.hbm [shape: f32[1,128], index: 12, kind: input, shape index: {}]
  %s13 = inlined_call_operand.hbm [shape: f32[2,16,128], index: 13, kind: output, shape index: {}]
  %s14 = sld [smem:[#allocation0]]
  $region137: #{tpu_custom_call.1} parent=0
    _
  %s16 = ssub.s32 1, %s14
  %s17 = scalar_select 0, %s16, %s14
  $region1: #{tpu_custom_call.1} parent=0
    #allocation4 [shape = 'u8[16384]{0}', space=vmem, size = 0x4000, scoped, tag = 'input window, operand 0']
    #allocation5 [shape = 's32[2]{0}', space=sflag, size = 0x8, scoped, tag = 'scoped memory for tpu_custom_call.1']
    #allocation6 [shape = 's32[2]{0}', space=sflag, size = 0x8, scoped, tag = 'scoped memory for tpu_custom_call.1']
    #allocation7 [shape = 'u8[512]{0}', space=vmem, size = 0x400, scoped, tag = 'input window, operand 1, single buffered']
    #allocation8 [shape = 's32[1]{0}', space=sflag, size = 0x4, scoped, tag = 'scoped memory for tpu_custom_call.1']
    #allocation9 [shape = 'u8[512]{0}', space=vmem, size = 0x400, scoped, tag = 'input window, operand 2, single buffered']
    #allocation10 [shape = 'u8[98304]{0}', space=vmem, size = 0x18000, scoped, tag = 'input window, operand 3, single buffered']
    #allocation11 [shape = 's32[1]{0}', space=sflag, size = 0x4, scoped, tag = 'scoped memory for tpu_custom_call.1']
    #allocation12 [shape = 'u8[1536]{0}', space=vmem, size = 0x800, scoped, tag = 'input window, operand 4, single buffered']
    #allocation13 [shape = 'u8[32768]{0}', space=vmem, size = 0x8000, scoped, tag = 'input window, operand 5, single buffered']
    #allocation14 [shape = 's32[1]{0}', space=sflag, size = 0x4, scoped, tag = 'scoped memory for tpu_custom_call.1']
    #allocation15 [shape = 'u8[512]{0}', space=vmem, size = 0x400, scoped, tag = 'input window, operand 6, single buffered']
    #allocation16 [shape = 'u8[512]{0}', space=vmem, size = 0x400, scoped, tag = 'input window, operand 7, single buffered']
    #allocation17 [shape = 's32[1]{0}', space=sflag, size = 0x4, scoped, tag = 'scoped memory for tpu_custom_call.1']
    #allocation18 [shape = 'u8[512]{0}', space=vmem, size = 0x400, scoped, tag = 'input window, operand 8, single buffered']
    #allocation19 [shape = 'u8[65536]{0}', space=vmem, size = 0x10000, scoped, tag = 'input window, operand 9, single buffered']
    #allocation20 [shape = 's32[1]{0}', space=sflag, size = 0x4, scoped, tag = 'scoped memory for tpu_custom_call.1']
    #allocation21 [shape = 'u8[1024]{0}', space=vmem, size = 0x400, scoped, tag = 'input window, operand 10, single buffered']
    #allocation22 [shape = 'u8[65536]{0}', space=vmem, size = 0x10000, scoped, tag = 'input window, operand 11, single buffered']
    #allocation23 [shape = 's32[1]{0}', space=sflag, size = 0x4, scoped, tag = 'scoped memory for tpu_custom_call.1']
    #allocation24 [shape = 'u8[512]{0}', space=vmem, size = 0x400, scoped, tag = 'input window, operand 12, single buffered']
    #allocation25 [shape = 'u8[16384]{0}', space=vmem, size = 0x4000, scoped, tag = 'output window, operand 0']
    %18 = vsyncpa [#allocation5], 0
    %s19 = scalar_lea.sflag [#allocation5], 1
    %20 = vsyncpa %s19, 0
    %21 = vsyncpa [#allocation8], 0
    %22 = vsyncpa [#allocation11], 0
    %23 = vsyncpa [#allocation14], 0
    %24 = vsyncpa [#allocation17], 0
    %25 = vsyncpa [#allocation20], 0
    %26 = vsyncpa [#allocation23], 0
    %27 = vsyncpa [#allocation6], 0
    %s28 = scalar_lea.sflag [#allocation6], 1
    %29 = vsyncpa %s28, 0
    loop: start=0, step=1, limit=4
    $region2: #{tpu_custom_call.1} parent=1 // loop_pre_header
      _
    $region3: #{tpu_custom_call.1} parent=1 // loop_header
      %s31 = sphi 0, %s35
      %p32 = scmp.ge.s32.totalorder %s31, 4
      %s41 = sphi 0, %s43
      %s44 = sphi 0, %s41
      %s45 = sphi 0, %s44
      %s61 = sphi 0, %s45
      %s65 = sphi 0, %s65
      %s67 = sphi 0, %s65
      %s68 = sphi 0, %s67
      %s82 = sphi 0, %s68
      %s86 = sphi 0, %s86
      %s88 = sphi 0, %s86
      %s89 = sphi 0, %s88
      %s103 = sphi 0, %s89
      %s107 = sphi 0, %s107
      %s109 = sphi 0, %s107
      %s110 = sphi 0, %s109
      %s124 = sphi 0, %s110
      %s128 = sphi 0, %s128
      %s130 = sphi 0, %s128
      %s131 = sphi 0, %s130
      %s145 = sphi 0, %s131
      %s149 = sphi 0, %s149
      %s151 = sphi 0, %s149
      %s152 = sphi 0, %s151
      %s166 = sphi 0, %s152
      %s170 = sphi 0, %s170
      %s172 = sphi 0, %s170
      %s173 = sphi 0, %s172
      %s187 = sphi 0, %s173
      %s191 = sphi 0, %s191
      %s193 = sphi 0, %s191
      %s194 = sphi 0, %s193
      %s208 = sphi 0, %s194
      %s212 = sphi 0, %s212
      %s214 = sphi 0, %s212
      %s215 = sphi 0, %s214
      %s229 = sphi 0, %s215
      %s233 = sphi 0, %s233
      %s235 = sphi 0, %s233
      %s236 = sphi 0, %s235
      %s250 = sphi 0, %s236
      %s254 = sphi 0, %s254
      %s256 = sphi 0, %s254
      %s257 = sphi 0, %s256
      %s271 = sphi 0, %s257
      %s275 = sphi 0, %s275
      %s277 = sphi 0, %s275
      %s278 = sphi 0, %s277
      %s292 = sphi 0, %s278
      %s296 = sphi 0, %s296
      %s298 = sphi 0, %s296
      %s299 = sphi 0, %s298
      %s313 = sphi 0, %s299
      %s319 = sphi 0, %s321
      %s322 = sphi 0, %s319
      %s323 = sphi 0, %s322
      %s339 = sphi 0, %s323
    $region4: #{tpu_custom_call.1} parent=1 // loop_header_branch
      %34 = sbr.rel (%p32) target = $region8
    $region5: #{tpu_custom_call.1} parent=1 // loop_body
      %s36 = ssub.s32 %s31, 1
      %s37 = ssub.s32 %s31, 2
      %s38 = sadd.s32 %s31, 1
      %s39 = ssub.s32 %s31, %s38
      %p40 = scmp.eq.s32.totalorder %s39, 0
      %s42 = sadd.s32 %s41, 1
      %s43 = scalar_select %p40, %s41, %s42
      %p46 = pneg %p40
      %p47 = scmp.eq.s32.totalorder %s31, 1
      %p48 = por %p46, %p47
      %p49 = scmp.ne.s32.totalorder %s41, %s44
      %p50 = scmp.eq.s32.totalorder %s31, 0
      %p51 = por %p49, %p50
      %p52 = scmp.ne.s32.totalorder %s41, %s44
      %p53 = scmp.eq.s32.totalorder %s36, 1
      %p54 = por %p52, %p53
      %p55 = scmp.ne.s32.totalorder %s44, %s45
      %p56 = scmp.eq.s32.totalorder %s36, 0
      %p57 = por %p55, %p56
      %p58 = scmp.ne.s32.totalorder %s44, %s45
      %p59 = scmp.eq.s32.totalorder %s37, 1
      %p60 = por %p58, %p59
      %p62 = scmp.ne.s32.totalorder %s45, %s61
      %p63 = scmp.eq.s32.totalorder %s37, 0
      %p64 = por %p62, %p63
      %s66 = sadd.s32 %s65, 1
      %p69 = scmp.eq.s32.totalorder %s31, 1
      %p70 = scmp.ne.s32.totalorder %s65, %s67
      %p71 = scmp.eq.s32.totalorder %s31, 0
      %p72 = por %p70, %p71
      %p73 = scmp.ne.s32.totalorder %s65, %s67
      %p74 = scmp.eq.s32.totalorder %s36, 1
      %p75 = por %p73, %p74
      %p76 = scmp.ne.s32.totalorder %s67, %s68
      %p77 = scmp.eq.s32.totalorder %s36, 0
      %p78 = por %p76, %p77
      %p79 = scmp.ne.s32.totalorder %s67, %s68
      %p80 = scmp.eq.s32.totalorder %s37, 1
      %p81 = por %p79, %p80
      %p83 = scmp.ne.s32.totalorder %s68, %s82
      %p84 = scmp.eq.s32.totalorder %s37, 0
      %p85 = por %p83, %p84
      %s87 = sadd.s32 %s86, 1
      %p90 = scmp.eq.s32.totalorder %s31, 1
      %p91 = scmp.ne.s32.totalorder %s86, %s88
      %p92 = scmp.eq.s32.totalorder %s31, 0
      %p93 = por %p91, %p92
      %p94 = scmp.ne.s32.totalorder %s86, %s88
      %p95 = scmp.eq.s32.totalorder %s36, 1
      %p96 = por %p94, %p95
      %p97 = scmp.ne.s32.totalorder %s88, %s89
      %p98 = scmp.eq.s32.totalorder %s36, 0
      %p99 = por %p97, %p98
      %p100 = scmp.ne.s32.totalorder %s88, %s89
      %p101 = scmp.eq.s32.totalorder %s37, 1
      %p102 = por %p100, %p101
      %p104 = scmp.ne.s32.totalorder %s89, %s103
      %p105 = scmp.eq.s32.totalorder %s37, 0
      %p106 = por %p104, %p105
      %s108 = sadd.s32 %s107, 1
      %p111 = scmp.eq.s32.totalorder %s31, 1
      %p112 = scmp.ne.s32.totalorder %s107, %s109
      %p113 = scmp.eq.s32.totalorder %s31, 0
      %p114 = por %p112, %p113
      %p115 = scmp.ne.s32.totalorder %s107, %s109
      %p116 = scmp.eq.s32.totalorder %s36, 1
      %p117 = por %p115, %p116
      %p118 = scmp.ne.s32.totalorder %s109, %s110
      %p119 = scmp.eq.s32.totalorder %s36, 0
      %p120 = por %p118, %p119
      %p121 = scmp.ne.s32.totalorder %s109, %s110
      %p122 = scmp.eq.s32.totalorder %s37, 1
      %p123 = por %p121, %p122
      %p125 = scmp.ne.s32.totalorder %s110, %s124
      %p126 = scmp.eq.s32.totalorder %s37, 0
      %p127 = por %p125, %p126
      %s129 = sadd.s32 %s128, 1
      %p132 = scmp.eq.s32.totalorder %s31, 1
      %p133 = scmp.ne.s32.totalorder %s128, %s130
      %p134 = scmp.eq.s32.totalorder %s31, 0
      %p135 = por %p133, %p134
      %p136 = scmp.ne.s32.totalorder %s128, %s130
      %p137 = scmp.eq.s32.totalorder %s36, 1
      %p138 = por %p136, %p137
      %p139 = scmp.ne.s32.totalorder %s130, %s131
      %p140 = scmp.eq.s32.totalorder %s36, 0
      %p141 = por %p139, %p140
      %p142 = scmp.ne.s32.totalorder %s130, %s131
      %p143 = scmp.eq.s32.totalorder %s37, 1
      %p144 = por %p142, %p143
      %p146 = scmp.ne.s32.totalorder %s131, %s145
      %p147 = scmp.eq.s32.totalorder %s37, 0
      %p148 = por %p146, %p147
      %s150 = sadd.s32 %s149, 1
      %p153 = scmp.eq.s32.totalorder %s31, 1
      %p154 = scmp.ne.s32.totalorder %s149, %s151
      %p155 = scmp.eq.s32.totalorder %s31, 0
      %p156 = por %p154, %p155
      %p157 = scmp.ne.s32.totalorder %s149, %s151
      %p158 = scmp.eq.s32.totalorder %s36, 1
      %p159 = por %p157, %p158
      %p160 = scmp.ne.s32.totalorder %s151, %s152
      %p161 = scmp.eq.s32.totalorder %s36, 0
      %p162 = por %p160, %p161
      %p163 = scmp.ne.s32.totalorder %s151, %s152
      %p164 = scmp.eq.s32.totalorder %s37, 1
      %p165 = por %p163, %p164
      %p167 = scmp.ne.s32.totalorder %s152, %s166
      %p168 = scmp.eq.s32.totalorder %s37, 0
      %p169 = por %p167, %p168
      %s171 = sadd.s32 %s170, 1
      %p174 = scmp.eq.s32.totalorder %s31, 1
      %p175 = scmp.ne.s32.totalorder %s170, %s172
      %p176 = scmp.eq.s32.totalorder %s31, 0
      %p177 = por %p175, %p176
      %p178 = scmp.ne.s32.totalorder %s170, %s172
      %p179 = scmp.eq.s32.totalorder %s36, 1
      %p180 = por %p178, %p179
      %p181 = scmp.ne.s32.totalorder %s172, %s173
      %p182 = scmp.eq.s32.totalorder %s36, 0
      %p183 = por %p181, %p182
      %p184 = scmp.ne.s32.totalorder %s172, %s173
      %p185 = scmp.eq.s32.totalorder %s37, 1
      %p186 = por %p184, %p185
      %p188 = scmp.ne.s32.totalorder %s173, %s187
      %p189 = scmp.eq.s32.totalorder %s37, 0
      %p190 = por %p188, %p189
      %s192 = sadd.s32 %s191, 1
      %p195 = scmp.eq.s32.totalorder %s31, 1
      %p196 = scmp.ne.s32.totalorder %s191, %s193
      %p197 = scmp.eq.s32.totalorder %s31, 0
      %p198 = por %p196, %p197
      %p199 = scmp.ne.s32.totalorder %s191, %s193
      %p200 = scmp.eq.s32.totalorder %s36, 1
      %p201 = por %p199, %p200
      %p202 = scmp.ne.s32.totalorder %s193, %s194
      %p203 = scmp.eq.s32.totalorder %s36, 0
      %p204 = por %p202, %p203
      %p205 = scmp.ne.s32.totalorder %s193, %s194
      %p206 = scmp.eq.s32.totalorder %s37, 1
      %p207 = por %p205, %p206
      %p209 = scmp.ne.s32.totalorder %s194, %s208
      %p210 = scmp.eq.s32.totalorder %s37, 0
      %p211 = por %p209, %p210
      %s213 = sadd.s32 %s212, 1
      %p216 = scmp.eq.s32.totalorder %s31, 1
      %p217 = scmp.ne.s32.totalorder %s212, %s214
      %p218 = scmp.eq.s32.totalorder %s31, 0
      %p219 = por %p217, %p218
      %p220 = scmp.ne.s32.totalorder %s212, %s214
      %p221 = scmp.eq.s32.totalorder %s36, 1
      %p222 = por %p220, %p221
      %p223 = scmp.ne.s32.totalorder %s214, %s215
      %p224 = scmp.eq.s32.totalorder %s36, 0
      %p225 = por %p223, %p224
      %p226 = scmp.ne.s32.totalorder %s214, %s215
      %p227 = scmp.eq.s32.totalorder %s37, 1
      %p228 = por %p226, %p227
      %p230 = scmp.ne.s32.totalorder %s215, %s229
      %p231 = scmp.eq.s32.totalorder %s37, 0
      %p232 = por %p230, %p231
      %s234 = sadd.s32 %s233, 1
      %p237 = scmp.eq.s32.totalorder %s31, 1
      %p238 = scmp.ne.s32.totalorder %s233, %s235
      %p239 = scmp.eq.s32.totalorder %s31, 0
      %p240 = por %p238, %p239
      %p241 = scmp.ne.s32.totalorder %s233, %s235
      %p242 = scmp.eq.s32.totalorder %s36, 1
      %p243 = por %p241, %p242
      %p244 = scmp.ne.s32.totalorder %s235, %s236
      %p245 = scmp.eq.s32.totalorder %s36, 0
      %p246 = por %p244, %p245
      %p247 = scmp.ne.s32.totalorder %s235, %s236
      %p248 = scmp.eq.s32.totalorder %s37, 1
      %p249 = por %p247, %p248
      %p251 = scmp.ne.s32.totalorder %s236, %s250
      %p252 = scmp.eq.s32.totalorder %s37, 0
      %p253 = por %p251, %p252
      %s255 = sadd.s32 %s254, 1
      %p258 = scmp.eq.s32.totalorder %s31, 1
      %p259 = scmp.ne.s32.totalorder %s254, %s256
      %p260 = scmp.eq.s32.totalorder %s31, 0
      %p261 = por %p259, %p260
      %p262 = scmp.ne.s32.totalorder %s254, %s256
      %p263 = scmp.eq.s32.totalorder %s36, 1
      %p264 = por %p262, %p263
      %p265 = scmp.ne.s32.totalorder %s256, %s257
      %p266 = scmp.eq.s32.totalorder %s36, 0
      %p267 = por %p265, %p266
      %p268 = scmp.ne.s32.totalorder %s256, %s257
      %p269 = scmp.eq.s32.totalorder %s37, 1
      %p270 = por %p268, %p269
      %p272 = scmp.ne.s32.totalorder %s257, %s271
      %p273 = scmp.eq.s32.totalorder %s37, 0
      %p274 = por %p272, %p273
      %s276 = sadd.s32 %s275, 1
      %p279 = scmp.eq.s32.totalorder %s31, 1
      %p280 = scmp.ne.s32.totalorder %s275, %s277
      %p281 = scmp.eq.s32.totalorder %s31, 0
      %p282 = por %p280, %p281
      %p283 = scmp.ne.s32.totalorder %s275, %s277
      %p284 = scmp.eq.s32.totalorder %s36, 1
      %p285 = por %p283, %p284
      %p286 = scmp.ne.s32.totalorder %s277, %s278
      %p287 = scmp.eq.s32.totalorder %s36, 0
      %p288 = por %p286, %p287
      %p289 = scmp.ne.s32.totalorder %s277, %s278
      %p290 = scmp.eq.s32.totalorder %s37, 1
      %p291 = por %p289, %p290
      %p293 = scmp.ne.s32.totalorder %s278, %s292
      %p294 = scmp.eq.s32.totalorder %s37, 0
      %p295 = por %p293, %p294
      %s297 = sadd.s32 %s296, 1
      %p300 = scmp.eq.s32.totalorder %s31, 1
      %p301 = scmp.ne.s32.totalorder %s296, %s298
      %p302 = scmp.eq.s32.totalorder %s31, 0
      %p303 = por %p301, %p302
      %p304 = scmp.ne.s32.totalorder %s296, %s298
      %p305 = scmp.eq.s32.totalorder %s36, 1
      %p306 = por %p304, %p305
      %p307 = scmp.ne.s32.totalorder %s298, %s299
      %p308 = scmp.eq.s32.totalorder %s36, 0
      %p309 = por %p307, %p308
      %p310 = scmp.ne.s32.totalorder %s298, %s299
      %p311 = scmp.eq.s32.totalorder %s37, 1
      %p312 = por %p310, %p311
      %p314 = scmp.ne.s32.totalorder %s299, %s313
      %p315 = scmp.eq.s32.totalorder %s37, 0
      %p316 = por %p314, %p315
      %s317 = ssub.s32 %s31, %s38
      %p318 = scmp.eq.s32.totalorder %s317, 0
      %s320 = sadd.s32 %s319, 1
      %s321 = scalar_select %p318, %s319, %s320
      %p324 = pneg %p318
      %p325 = scmp.eq.s32.totalorder %s31, 1
      %p326 = por %p324, %p325
      %p327 = scmp.ne.s32.totalorder %s319, %s322
      %p328 = scmp.eq.s32.totalorder %s31, 0
      %p329 = por %p327, %p328
      %p330 = scmp.ne.s32.totalorder %s319, %s322
      %p331 = scmp.eq.s32.totalorder %s36, 1
      %p332 = por %p330, %p331
      %p333 = scmp.ne.s32.totalorder %s322, %s323
      %p334 = scmp.eq.s32.totalorder %s36, 0
      %p335 = por %p333, %p334
      %p336 = scmp.ne.s32.totalorder %s322, %s323
      %p337 = scmp.eq.s32.totalorder %s37, 1
      %p338 = por %p336, %p337
      %p340 = scmp.ne.s32.totalorder %s323, %s339
      %p341 = scmp.eq.s32.totalorder %s37, 0
      %p342 = por %p340, %p341
      %p343 = scmp.le.s32.totalorder 1, %s31
      %p344 = scmp.lt.s32.totalorder %s31, 3
      %p345 = pnand %p343, %p344
      %p346 = pneg %p345
      // Predicated region
      $region9: #{tpu_custom_call.1} parent=5 // pred_check
        _
      $region10: #{tpu_custom_call.1} parent=5 // pred_check_branch
        %348 = sbr.rel (%p345) target = $region12
      $region11: #{tpu_custom_call.1} parent=5 // pred_region
        %s349 = ssub.s32 %s31, 1
        // Predicated region
        $region13: #{tpu_custom_call.1} parent=11 // pred_check
          %p350 = pneg %p78
        $region14: #{tpu_custom_call.1} parent=11 // pred_check_branch
          %352 = sbr.rel (%p350) target = $region16
        $region15: #{tpu_custom_call.1} parent=11 // pred_region
          %s354 = ssub.s32 16, 16
          %355 = vsyncadd [#allocation8], %s354
          %s357 = sshll.u32 [#allocation7], 4
          %s358 = int_to_ptr.vmem [resolvable:$true] %s357
          %360 = dma.hbm_to_vmem [thread:$0]  %s1, 16, %s358, [#allocation8]
        $region16: #{tpu_custom_call.1} parent=11 // pred_fallthru
          _
        // Predicated region
        $region17: #{tpu_custom_call.1} parent=11 // pred_check
          %p361 = pneg %p99
        $region18: #{tpu_custom_call.1} parent=11 // pred_check_branch
          %363 = sbr.rel (%p361) target = $region20
        $region19: #{tpu_custom_call.1} parent=11 // pred_region
          %s365 = ssub.s32 16, 16
          %366 = vsyncadd [#allocation8], %s365
          %s368 = sshll.u32 [#allocation9], 4
          %s369 = int_to_ptr.vmem [resolvable:$true] %s368
          %371 = dma.hbm_to_vmem [thread:$0]  %s2, 16, %s369, [#allocation8]
        $region20: #{tpu_custom_call.1} parent=11 // pred_fallthru
          _
        // Predicated region
        $region21: #{tpu_custom_call.1} parent=11 // pred_check
          %p372 = pneg %p120
        $region22: #{tpu_custom_call.1} parent=11 // pred_check_branch
          %374 = sbr.rel (%p372) target = $region24
        $region23: #{tpu_custom_call.1} parent=11 // pred_region
          %s376 = ssub.s32 3072, 3072
          %377 = vsyncadd [#allocation11], %s376
          %s378 = sshll.u32 [#allocation10], 4
          %s379 = int_to_ptr.vmem [resolvable:$true] %s378
          %384 = dma.hbm_to_vmem [thread:$0]  %s3, 3072, %s379, [#allocation11], 192, 192, 12
        $region24: #{tpu_custom_call.1} parent=11 // pred_fallthru
          _
        // Predicated region
        $region25: #{tpu_custom_call.1} parent=11 // pred_check
          %p385 = pneg %p141
        $region26: #{tpu_custom_call.1} parent=11 // pred_check_branch
          %387 = sbr.rel (%p385) target = $region28
        $region27: #{tpu_custom_call.1} parent=11 // pred_region
          %s389 = ssub.s32 48, 48
          %390 = vsyncadd [#allocation11], %s389
          %s392 = sshll.u32 [#allocation12], 4
          %s393 = int_to_ptr.vmem [resolvable:$true] %s392
          %395 = dma.hbm_to_vmem [thread:$0]  %s4, 48, %s393, [#allocation11]
        $region28: #{tpu_custom_call.1} parent=11 // pred_fallthru
          _
        // Predicated region
        $region29: #{tpu_custom_call.1} parent=11 // pred_check
          %p396 = pneg %p162
        $region30: #{tpu_custom_call.1} parent=11 // pred_check_branch
          %398 = sbr.rel (%p396) target = $region32
        $region31: #{tpu_custom_call.1} parent=11 // pred_region
          %s400 = ssub.s32 1024, 1024
          %401 = vsyncadd [#allocation14], %s400
          %s402 = sshll.u32 [#allocation13], 4
          %s403 = int_to_ptr.vmem [resolvable:$true] %s402
          %408 = dma.hbm_to_vmem [thread:$0]  %s5, 1024, %s403, [#allocation14], 64, 64, 4
        $region32: #{tpu_custom_call.1} parent=11 // pred_fallthru
          _
        // Predicated region
        $region33: #{tpu_custom_call.1} parent=11 // pred_check
          %p409 = pneg %p183
        $region34: #{tpu_custom_call.1} parent=11 // pred_check_branch
          %411 = sbr.rel (%p409) target = $region36
        $region35: #{tpu_custom_call.1} parent=11 // pred_region
          %s413 = ssub.s32 16, 16
          %414 = vsyncadd [#allocation14], %s413
          %s416 = sshll.u32 [#allocation15], 4
          %s417 = int_to_ptr.vmem [resolvable:$true] %s416
          %419 = dma.hbm_to_vmem [thread:$0]  %s6, 16, %s417, [#allocation14]
        $region36: #{tpu_custom_call.1} parent=11 // pred_fallthru
          _
        // Predicated region
        $region37: #{tpu_custom_call.1} parent=11 // pred_check
          %p420 = pneg %p204
        $region38: #{tpu_custom_call.1} parent=11 // pred_check_branch
          %422 = sbr.rel (%p420) target = $region40
        $region39: #{tpu_custom_call.1} parent=11 // pred_region
          %s424 = ssub.s32 16, 16
          %425 = vsyncadd [#allocation17], %s424
          %s427 = sshll.u32 [#allocation16], 4
          %s428 = int_to_ptr.vmem [resolvable:$true] %s427
          %430 = dma.hbm_to_vmem [thread:$0]  %s7, 16, %s428, [#allocation17]
        $region40: #{tpu_custom_call.1} parent=11 // pred_fallthru
          _
        // Predicated region
        $region41: #{tpu_custom_call.1} parent=11 // pred_check
          %p431 = pneg %p225
        $region42: #{tpu_custom_call.1} parent=11 // pred_check_branch
          %433 = sbr.rel (%p431) target = $region44
        $region43: #{tpu_custom_call.1} parent=11 // pred_region
          %s435 = ssub.s32 16, 16
          %436 = vsyncadd [#allocation17], %s435
          %s438 = sshll.u32 [#allocation18], 4
          %s439 = int_to_ptr.vmem [resolvable:$true] %s438
          %441 = dma.hbm_to_vmem [thread:$0]  %s8, 16, %s439, [#allocation17]
        $region44: #{tpu_custom_call.1} parent=11 // pred_fallthru
          _
        // Predicated region
        $region45: #{tpu_custom_call.1} parent=11 // pred_check
          %p442 = pneg %p246
        $region46: #{tpu_custom_call.1} parent=11 // pred_check_branch
          %444 = sbr.rel (%p442) target = $region48
        $region47: #{tpu_custom_call.1} parent=11 // pred_region
          %s446 = ssub.s32 2048, 2048
          %447 = vsyncadd [#allocation20], %s446
          %s448 = sshll.u32 [#allocation19], 4
          %s449 = int_to_ptr.vmem [resolvable:$true] %s448
          %454 = dma.hbm_to_vmem [thread:$0]  %s9, 2048, %s449, [#allocation20], 128, 128, 8
        $region48: #{tpu_custom_call.1} parent=11 // pred_fallthru
          _
        // Predicated region
        $region49: #{tpu_custom_call.1} parent=11 // pred_check
          %p455 = pneg %p267
        $region50: #{tpu_custom_call.1} parent=11 // pred_check_branch
          %457 = sbr.rel (%p455) target = $region52
        $region51: #{tpu_custom_call.1} parent=11 // pred_region
          %s459 = ssub.s32 32, 32
          %460 = vsyncadd [#allocation20], %s459
          %s462 = sshll.u32 [#allocation21], 4
          %s463 = int_to_ptr.vmem [resolvable:$true] %s462
          %465 = dma.hbm_to_vmem [thread:$0]  %s10, 32, %s463, [#allocation20]
        $region52: #{tpu_custom_call.1} parent=11 // pred_fallthru
          _
        // Predicated region
        $region53: #{tpu_custom_call.1} parent=11 // pred_check
          %p466 = pneg %p288
        $region54: #{tpu_custom_call.1} parent=11 // pred_check_branch
          %468 = sbr.rel (%p466) target = $region56
        $region55: #{tpu_custom_call.1} parent=11 // pred_region
          %s470 = ssub.s32 2048, 2048
          %471 = vsyncadd [#allocation23], %s470
          %s472 = sshll.u32 [#allocation22], 4
          %s473 = int_to_ptr.vmem [resolvable:$true] %s472
          %478 = dma.hbm_to_vmem [thread:$0]  %s11, 2048, %s473, [#allocation23], 64, 64, 4
        $region56: #{tpu_custom_call.1} parent=11 // pred_fallthru
          _
        // Predicated region
        $region57: #{tpu_custom_call.1} parent=11 // pred_check
          %p479 = pneg %p309
        $region58: #{tpu_custom_call.1} parent=11 // pred_check_branch
          %481 = sbr.rel (%p479) target = $region60
        $region59: #{tpu_custom_call.1} parent=11 // pred_region
          %s483 = ssub.s32 16, 16
          %484 = vsyncadd [#allocation23], %s483
          %s486 = sshll.u32 [#allocation24], 4
          %s487 = int_to_ptr.vmem [resolvable:$true] %s486
          %489 = dma.hbm_to_vmem [thread:$0]  %s12, 16, %s487, [#allocation23]
        $region60: #{tpu_custom_call.1} parent=11 // pred_fallthru
          _
      $region12: #{tpu_custom_call.1} parent=5 // pred_fallthru
        _
      %p490 = scmp.lt.s32.totalorder %s31, 2
      // Predicated region
      $region61: #{tpu_custom_call.1} parent=5 // pred_check
        %p491 = pneg %p490
      $region62: #{tpu_custom_call.1} parent=5 // pred_check_branch
        %493 = sbr.rel (%p491) target = $region64
      $region63: #{tpu_custom_call.1} parent=5 // pred_region
        // Predicated region
        $region65: #{tpu_custom_call.1} parent=63 // pred_check
          %p494 = pneg %p51
        $region66: #{tpu_custom_call.1} parent=63 // pred_check_branch
          %496 = sbr.rel (%p494) target = $region68
        $region67: #{tpu_custom_call.1} parent=63 // pred_region
          %s497 = sand.u32 %s41, 1
          %s498 = scalar_lea.sflag [#allocation5], %s497
          %s499 = sand.u32 %s41, 1
          %s500 = smul.addr %s499, 16
          %s501 = scalar_lea.vmem [#allocation4], %s500
          %s503 = ssub.s32 256, 256
          %504 = vsyncadd %s498, %s503
          %s505 = smul.addr %s31, 2
          %s506 = smul.addr %s505, 128
          %s507 = scalar_lea.hbm %s0, %s506
          %s508 = sshll.u32 %s501, 4
          %s509 = int_to_ptr.vmem [resolvable:$true] %s508
          %514 = dma.hbm_to_vmem [thread:$0]  %s507, 256, %s509, %s498, 128, 128, 8
        $region68: #{tpu_custom_call.1} parent=63 // pred_fallthru
          _
      $region64: #{tpu_custom_call.1} parent=5 // pred_fallthru
        _
      %p515 = scmp.le.s32.totalorder 1, %s31
      %p516 = scmp.lt.s32.totalorder %s31, 3
      %p517 = pnand %p515, %p516
      %p518 = pneg %p517
      // Predicated region
      $region69: #{tpu_custom_call.1} parent=5 // pred_check
        _
      $region70: #{tpu_custom_call.1} parent=5 // pred_check_branch
        %520 = sbr.rel (%p517) target = $region72
      $region71: #{tpu_custom_call.1} parent=5 // pred_region
        %s521 = ssub.s32 %s31, 1
        %s522 = sand.u32 %s44, 1
        %s523 = scalar_lea.sflag [#allocation5], %s522
        %s524 = sand.u32 %s44, 1
        %s525 = smul.addr %s524, 16
        %s526 = scalar_lea.vmem [#allocation4], %s525
        // Predicated region
        $region73: #{tpu_custom_call.1} parent=71 // pred_check
          %p527 = pneg %p57
        $region74: #{tpu_custom_call.1} parent=71 // pred_check_branch
          %529 = sbr.rel (%p527) target = $region76
        $region75: #{tpu_custom_call.1} parent=71 // pred_region
          %530 = dma.done %s523, 256
        $region76: #{tpu_custom_call.1} parent=71 // pred_fallthru
          _
        // Predicated region
        $region77: #{tpu_custom_call.1} parent=71 // pred_check
          %p531 = pneg %p78
        $region78: #{tpu_custom_call.1} parent=71 // pred_check_branch
          %533 = sbr.rel (%p531) target = $region80
        $region79: #{tpu_custom_call.1} parent=71 // pred_region
          %534 = dma.done [#allocation8], 16
        $region80: #{tpu_custom_call.1} parent=71 // pred_fallthru
          _
        // Predicated region
        $region81: #{tpu_custom_call.1} parent=71 // pred_check
          %p535 = pneg %p99
        $region82: #{tpu_custom_call.1} parent=71 // pred_check_branch
          %537 = sbr.rel (%p535) target = $region84
        $region83: #{tpu_custom_call.1} parent=71 // pred_region
          %538 = dma.done [#allocation8], 16
        $region84: #{tpu_custom_call.1} parent=71 // pred_fallthru
          _
        // Predicated region
        $region85: #{tpu_custom_call.1} parent=71 // pred_check
          %p539 = pneg %p120
        $region86: #{tpu_custom_call.1} parent=71 // pred_check_branch
          %541 = sbr.rel (%p539) target = $region88
        $region87: #{tpu_custom_call.1} parent=71 // pred_region
          %542 = dma.done [#allocation11], 3072
        $region88: #{tpu_custom_call.1} parent=71 // pred_fallthru
          _
        // Predicated region
        $region89: #{tpu_custom_call.1} parent=71 // pred_check
          %p543 = pneg %p141
        $region90: #{tpu_custom_call.1} parent=71 // pred_check_branch
          %545 = sbr.rel (%p543) target = $region92
        $region91: #{tpu_custom_call.1} parent=71 // pred_region
          %546 = dma.done [#allocation11], 48
        $region92: #{tpu_custom_call.1} parent=71 // pred_fallthru
          _
        // Predicated region
        $region93: #{tpu_custom_call.1} parent=71 // pred_check
          %p547 = pneg %p162
        $region94: #{tpu_custom_call.1} parent=71 // pred_check_branch
          %549 = sbr.rel (%p547) target = $region96
        $region95: #{tpu_custom_call.1} parent=71 // pred_region
          %550 = dma.done [#allocation14], 1024
        $region96: #{tpu_custom_call.1} parent=71 // pred_fallthru
          _
        // Predicated region
        $region97: #{tpu_custom_call.1} parent=71 // pred_check
          %p551 = pneg %p183
        $region98: #{tpu_custom_call.1} parent=71 // pred_check_branch
          %553 = sbr.rel (%p551) target = $region100
        $region99: #{tpu_custom_call.1} parent=71 // pred_region
          %554 = dma.done [#allocation14], 16
        $region100: #{tpu_custom_call.1} parent=71 // pred_fallthru
          _
        // Predicated region
        $region101: #{tpu_custom_call.1} parent=71 // pred_check
          %p555 = pneg %p204
        $region102: #{tpu_custom_call.1} parent=71 // pred_check_branch
          %557 = sbr.rel (%p555) target = $region104
        $region103: #{tpu_custom_call.1} parent=71 // pred_region
          %558 = dma.done [#allocation17], 16
        $region104: #{tpu_custom_call.1} parent=71 // pred_fallthru
          _
        // Predicated region
        $region105: #{tpu_custom_call.1} parent=71 // pred_check
          %p559 = pneg %p225
        $region106: #{tpu_custom_call.1} parent=71 // pred_check_branch
          %561 = sbr.rel (%p559) target = $region108
        $region107: #{tpu_custom_call.1} parent=71 // pred_region
          %562 = dma.done [#allocation17], 16
        $region108: #{tpu_custom_call.1} parent=71 // pred_fallthru
          _
        // Predicated region
        $region109: #{tpu_custom_call.1} parent=71 // pred_check
          %p563 = pneg %p246
        $region110: #{tpu_custom_call.1} parent=71 // pred_check_branch
          %565 = sbr.rel (%p563) target = $region112
        $region111: #{tpu_custom_call.1} parent=71 // pred_region
          %566 = dma.done [#allocation20], 2048
        $region112: #{tpu_custom_call.1} parent=71 // pred_fallthru
          _
        // Predicated region
        $region113: #{tpu_custom_call.1} parent=71 // pred_check
          %p567 = pneg %p267
        $region114: #{tpu_custom_call.1} parent=71 // pred_check_branch
          %569 = sbr.rel (%p567) target = $region116
        $region115: #{tpu_custom_call.1} parent=71 // pred_region
          %570 = dma.done [#allocation20], 32
        $region116: #{tpu_custom_call.1} parent=71 // pred_fallthru
          _
        // Predicated region
        $region117: #{tpu_custom_call.1} parent=71 // pred_check
          %p571 = pneg %p288
        $region118: #{tpu_custom_call.1} parent=71 // pred_check_branch
          %573 = sbr.rel (%p571) target = $region120
        $region119: #{tpu_custom_call.1} parent=71 // pred_region
          %574 = dma.done [#allocation23], 2048
        $region120: #{tpu_custom_call.1} parent=71 // pred_fallthru
          _
        // Predicated region
        $region121: #{tpu_custom_call.1} parent=71 // pred_check
          %p575 = pneg %p309
        $region122: #{tpu_custom_call.1} parent=71 // pred_check_branch
          %577 = sbr.rel (%p575) target = $region124
        $region123: #{tpu_custom_call.1} parent=71 // pred_region
          %578 = dma.done [#allocation23], 16
        $region124: #{tpu_custom_call.1} parent=71 // pred_fallthru
          _
        %s579 = sand.u32 %s44, 1
        %s580 = scalar_lea.sflag [#allocation5], %s579
        %s581 = sand.u32 %s44, 1
        %s582 = smul.addr %s581, 16
        %s583 = scalar_lea.vmem [#allocation4], %s582
        %p584 = pneg %p57
        %p585 = pneg %p54
        %p586 = pneg %p78
        %p587 = pneg %p75
        %p588 = pneg %p99
        %p589 = pneg %p96
        %p590 = pneg %p120
        %p591 = pneg %p117
        %p592 = pneg %p141
        %p593 = pneg %p138
        %p594 = pneg %p162
        %p595 = pneg %p159
        %p596 = pneg %p183
        %p597 = pneg %p180
        %p598 = pneg %p204
        %p599 = pneg %p201
        %p600 = pneg %p225
        %p601 = pneg %p222
        %p602 = pneg %p246
        %p603 = pneg %p243
        %p604 = pneg %p267
        %p605 = pneg %p264
        %p606 = pneg %p288
        %p607 = pneg %p285
        %p608 = pneg %p309
        %p609 = pneg %p306
        %p610 = pneg %p335
        %p611 = pneg %p332
        %s612 = sand.u32 %s322, 1
        %s613 = scalar_lea.sflag [#allocation6], %s612
        %s614 = sand.u32 %s322, 1
        %s615 = smul.addr %s614, 16
        %s616 = scalar_lea.vmem [#allocation25], %s615
        %v622 = vld [vmem:[%s526] sm:$0xff]
        %v623 = vld [vmem:[%s526 + $0x8] sm:$0xff]
        %v624 = vld [vmem:[#allocation7] sm:$0x1]
        %v625 = vld [vmem:[#allocation9] sm:$0x1]
        %626 = vadd.xlane.f32.xlu0 %v622
        %v627 = vpop.xlane.xlu0 %626
        %628 = vadd.xlane.f32.xlu0 %v623
        %v629 = vpop.xlane.xlu0 %628
        %v630 = vrcp.pop 128.0
        %v631 = vmul.f32 %v627, %v630
        %v632 = vmul.f32 %v629, %v630
        %v633 = vsub.f32 %v622, %v631
        %v634 = vsub.f32 %v623, %v632
        %v635 = vmul.f32 %v633, %v633
        %v636 = vmul.f32 %v634, %v634
        %637 = vadd.xlane.f32.xlu0 %v635
        %v638 = vpop.xlane.xlu0 %637
        %639 = vadd.xlane.f32.xlu0 %v636
        %v640 = vpop.xlane.xlu0 %639
        %v641 = vmul.f32 %v638, %v630
        %v642 = vmul.f32 %v640, %v630
        %v643 = vadd.f32 %v641, 1e-05
        %v644 = vadd.f32 %v642, 1e-05
        %v645 = vrsqrt.pop %v643
        %v646 = vrsqrt.pop %v644
        %v647 = vmul.f32 %v633, %v645
        %v648 = vmul.f32 %v634, %v646
        %v650 = vlaneseq
        %v651 = vshrl.u32 %v650, 7
        %v652 = vsub.s32 0, %v651
        %v653 = vrot.slane %v624, %v652
        %v655 = vmul.f32 %v647, %v653
        %v656 = vmul.f32 %v648, %v653
        %v658 = vlaneseq
        %v659 = vshrl.u32 %v658, 7
        %v660 = vsub.s32 0, %v659
        %v661 = vrot.slane %v625, %v660
        %v663 = vadd.f32 %v655, %v661
        %v664 = vadd.f32 %v656, %v661
        %v665 = vpack.c.bf16 %v664, %v663
        %v666 = vld [vmem:[#allocation10] sm:$0xff]
        %v667 = vld [vmem:[#allocation10 + $0x8] sm:$0xf]
        %v668 = vld [vmem:[#allocation10 + $0xc] sm:$0xff]
        %v669 = vld [vmem:[#allocation10 + $0x14] sm:$0xf]
        %v670 = vld [vmem:[#allocation10 + $0x18] sm:$0xff]
        %v671 = vld [vmem:[#allocation10 + $0x20] sm:$0xf]
        %v672 = vld [vmem:[#allocation10 + $0x24] sm:$0xff]
        %v673 = vld [vmem:[#allocation10 + $0x2c] sm:$0xf]
        %v674 = vld [vmem:[#allocation10 + $0x30] sm:$0xff]
        %v675 = vld [vmem:[#allocation10 + $0x38] sm:$0xf]
        %v676 = vld [vmem:[#allocation10 + $0x3c] sm:$0xff]
        %v677 = vld [vmem:[#allocation10 + $0x44] sm:$0xf]
        %v678 = vld [vmem:[#allocation10 + $0x48] sm:$0xff]
        %v679 = vld [vmem:[#allocation10 + $0x50] sm:$0xf]
        %v680 = vld [vmem:[#allocation10 + $0x54] sm:$0xff]
        %v681 = vld [vmem:[#allocation10 + $0x5c] sm:$0xf]
        %v682 = vld [vmem:[#allocation10 + $0x60] sm:$0xff]
        %v683 = vld [vmem:[#allocation10 + $0x68] sm:$0xf]
        %v684 = vld [vmem:[#allocation10 + $0x6c] sm:$0xff]
        %v685 = vld [vmem:[#allocation10 + $0x74] sm:$0xf]
        %v686 = vld [vmem:[#allocation10 + $0x78] sm:$0xff]
        %v687 = vld [vmem:[#allocation10 + $0x80] sm:$0xf]
        %v688 = vld [vmem:[#allocation10 + $0x84] sm:$0xff]
        %v689 = vld [vmem:[#allocation10 + $0x8c] sm:$0xf]
        %v690 = vld [vmem:[#allocation10 + $0x90] sm:$0xff]
        %v691 = vld [vmem:[#allocation10 + $0x98] sm:$0xf]
        %v692 = vld [vmem:[#allocation10 + $0x9c] sm:$0xff]
        %v693 = vld [vmem:[#allocation10 + $0xa4] sm:$0xf]
        %v694 = vld [vmem:[#allocation10 + $0xa8] sm:$0xff]
        %v695 = vld [vmem:[#allocation10 + $0xb0] sm:$0xf]
        %v696 = vld [vmem:[#allocation10 + $0xb4] sm:$0xff]
        %v697 = vld [vmem:[#allocation10 + $0xbc] sm:$0xf]
        %v698 = vld [vmem:[#allocation12] sm:$0x7]
        %v700 = vlaneseq
        %v701 = vshrl.u32 %v700, 7
        %v702 = vsub.s32 0, %v701
        %v703 = vrot.slane %v698, %v702
        %v704 = vlaneseq
        %v705 = vshrl.u32 %v704, 7
        %v706 = vsub.s32 1, %v705
        %v707 = vrot.slane %v698, %v706
        %v708 = vlaneseq
        %v709 = vshrl.u32 %v708, 7
        %v710 = vsub.s32 2, %v709
        %v711 = vrot.slane %v698, %v710
        %v747 = vunpack.c.l.b16 %v666
        %v748 = vunpack.c.h.b16 %v666
        %v749 = vunpack.c.l.b16 %v667
        %v750 = vunpack.c.l.b16 %v668
        %v751 = vunpack.c.h.b16 %v668
        %v752 = vunpack.c.l.b16 %v669
        %v753 = vunpack.c.l.b16 %v670
        %v754 = vunpack.c.h.b16 %v670
        %v755 = vunpack.c.l.b16 %v671
        %v756 = vunpack.c.l.b16 %v672
        %v757 = vunpack.c.h.b16 %v672
        %v758 = vunpack.c.l.b16 %v673
        %v759 = vunpack.c.l.b16 %v674
        %v760 = vunpack.c.h.b16 %v674
        %v761 = vunpack.c.l.b16 %v675
        %v762 = vunpack.c.l.b16 %v676
        %v763 = vunpack.c.h.b16 %v676
        %v764 = vunpack.c.l.b16 %v677
        %v765 = vunpack.c.l.b16 %v678
        %v766 = vunpack.c.h.b16 %v678
        %v767 = vunpack.c.l.b16 %v679
        %v768 = vunpack.c.l.b16 %v680
        %v769 = vunpack.c.h.b16 %v680
        %v770 = vunpack.c.l.b16 %v681
        %v771 = vunpack.c.l.b16 %v682
        %v772 = vunpack.c.h.b16 %v682
        %v773 = vunpack.c.l.b16 %v683
        %v774 = vunpack.c.l.b16 %v684
        %v775 = vunpack.c.h.b16 %v684
        %v776 = vunpack.c.l.b16 %v685
        %v777 = vunpack.c.l.b16 %v686
        %v778 = vunpack.c.h.b16 %v686
        %v779 = vunpack.c.l.b16 %v687
        %v780 = vunpack.c.l.b16 %v688
        %v781 = vunpack.c.h.b16 %v688
        %v782 = vunpack.c.l.b16 %v689
        %v783 = vunpack.c.l.b16 %v690
        %v784 = vunpack.c.h.b16 %v690
        %v785 = vunpack.c.l.b16 %v691
        %v786 = vunpack.c.l.b16 %v692
        %v787 = vunpack.c.h.b16 %v692
        %v788 = vunpack.c.l.b16 %v693
        %v789 = vunpack.c.l.b16 %v694
        %v790 = vunpack.c.h.b16 %v694
        %v791 = vunpack.c.l.b16 %v695
        %v792 = vunpack.c.l.b16 %v696
        %v793 = vunpack.c.h.b16 %v696
        %v794 = vunpack.c.l.b16 %v697
        %v795 = vpack.c.b16 %v750, %v747
        %v796 = vpack.c.b16 %v751, %v748
        %v797 = vpack.c.b16 %v752, %v749
        %v798 = vpack.c.b16 %v756, %v753
        %v799 = vpack.c.b16 %v757, %v754
        %v800 = vpack.c.b16 %v758, %v755
        %v801 = vpack.c.b16 %v762, %v759
        %v802 = vpack.c.b16 %v763, %v760
        %v803 = vpack.c.b16 %v764, %v761
        %v804 = vpack.c.b16 %v768, %v765
        %v805 = vpack.c.b16 %v769, %v766
        %v806 = vpack.c.b16 %v770, %v767
        %v807 = vpack.c.b16 %v774, %v771
        %v808 = vpack.c.b16 %v775, %v772
        %v809 = vpack.c.b16 %v776, %v773
        %v810 = vpack.c.b16 %v780, %v777
        %v811 = vpack.c.b16 %v781, %v778
        %v812 = vpack.c.b16 %v782, %v779
        %v813 = vpack.c.b16 %v786, %v783
        %v814 = vpack.c.b16 %v787, %v784
        %v815 = vpack.c.b16 %v788, %v785
        %v816 = vpack.c.b16 %v792, %v789
        %v817 = vpack.c.b16 %v793, %v790
        %v818 = vpack.c.b16 %v794, %v791
        %843 = vmatprep.subr.bf16.mxu0 %v796
        %844 = vmatpush1.bf16.msra.mxu0 %v795
        %845 = vmatprep.subr.bf16.mxu0 %v799
        %846 = vmatpush1.bf16.msra.mxu0 %v798
        %847 = vmatprep.subr.bf16.mxu0 %v802
        %848 = vmatpush1.bf16.msra.mxu0 %v801
        %849 = vmatprep.subr.bf16.mxu0 %v805
        %850 = vmatpush1.bf16.msra.mxu0 %v804
        %851 = vmatprep.subr.bf16.mxu0 %v808
        %852 = vmatpush1.bf16.msra.mxu0 %v807
        %853 = vmatprep.subr.bf16.mxu0 %v811
        %854 = vmatpush1.bf16.msra.mxu0 %v810
        %855 = vmatprep.subr.bf16.mxu0 %v814
        %856 = vmatpush1.bf16.msra.mxu0 %v813
        %857 = vmatprep.subr.bf16.mxu0 %v817
        %858 = vmatpush1.bf16.msra.mxu0 %v816
        %859 = vmatprep.subr.bf16.mxu0 0
        %860 = vmatpush1.bf16.msra.mxu0 0
        %861 = vmatprep.subr.bf16.mxu0 0
        %862 = vmatpush1.bf16.msra.mxu0 0
        %863 = vmatprep.subr.bf16.mxu0 0
        %864 = vmatpush1.bf16.msra.mxu0 0
        %865 = vmatprep.subr.bf16.mxu0 0
        %866 = vmatpush1.bf16.msra.mxu0 0
        %867 = vmatprep.subr.bf16.mxu0 0
        %868 = vmatpush1.bf16.msra.mxu0 0
        %869 = vmatprep.subr.bf16.mxu0 0
        %870 = vmatpush1.bf16.msra.mxu0 0
        %871 = vmatprep.subr.bf16.mxu0 0
        %872 = vmatpush1.bf16.msra.mxu0 0
        %873 = vmatprep.subr.bf16.mxu0 0
        %874 = vmatpush1.bf16.msra.mxu0 0
        %875 = vmatprep.mubr.bf16.mxu0 0
        %876 = vmatmul.mubr.bf16.gmra.mrb[0].mxu0 %v665
        %v877 = vpop.f32.mrb[0].mxu0
        %v878 = vadd.f32 %v703, %v877
        %v879 = vpop.f32.mrb[0].mxu0
        %v880 = vadd.f32 %v707, %v879
        %v881 = vpop.f32.mrb[0].mxu0
        %v882 = vadd.f32 %v703, %v881
        %v883 = vpop.f32.mrb[0].mxu0
        %v884 = vadd.f32 %v707, %v883
        %885 = vdwg.mxu0
        %886 = vmatprep.subr.bf16.mxu0 0
        %887 = vmatpush1.bf16.msra.mxu0 %v797
        %888 = vmatprep.subr.bf16.mxu0 0
        %889 = vmatpush1.bf16.msra.mxu0 %v800
        %890 = vmatprep.subr.bf16.mxu0 0
        %891 = vmatpush1.bf16.msra.mxu0 %v803
        %892 = vmatprep.subr.bf16.mxu0 0
        %893 = vmatpush1.bf16.msra.mxu0 %v806
        %894 = vmatprep.subr.bf16.mxu0 0
        %895 = vmatpush1.bf16.msra.mxu0 %v809
        %896 = vmatprep.subr.bf16.mxu0 0
        %897 = vmatpush1.bf16.msra.mxu0 %v812
        %898 = vmatprep.subr.bf16.mxu0 0
        %899 = vmatpush1.bf16.msra.mxu0 %v815
        %900 = vmatprep.subr.bf16.mxu0 0
        %901 = vmatpush1.bf16.msra.mxu0 %v818
        %902 = vmatprep.subr.bf16.mxu0 0
        %903 = vmatpush1.bf16.msra.mxu0 0
        %904 = vmatprep.subr.bf16.mxu0 0
        %905 = vmatpush1.bf16.msra.mxu0 0
        %906 = vmatprep.subr.bf16.mxu0 0
        %907 = vmatpush1.bf16.msra.mxu0 0
        %908 = vmatprep.subr.bf16.mxu0 0
        %909 = vmatpush1.bf16.msra.mxu0 0
        %910 = vmatprep.subr.bf16.mxu0 0
        %911 = vmatpush1.bf16.msra.mxu0 0
        %912 = vmatprep.subr.bf16.mxu0 0
        %913 = vmatpush1.bf16.msra.mxu0 0
        %914 = vmatprep.subr.bf16.mxu0 0
        %915 = vmatpush1.bf16.msra.mxu0 0
        %916 = vmatprep.subr.bf16.mxu0 0
        %917 = vmatpush1.bf16.msra.mxu0 0
        %918 = vmatprep.mubr.bf16.mxu0 0
        %919 = vmatmul.mubr.bf16.gmra.mrb[0].mxu0 %v665
        %v920 = vpop.f32.mrb[0].mxu0
        %v921 = vadd.f32 %v711, %v920
        %v922 = vpop.f32.mrb[0].mxu0
        %v923 = vpop.f32.mrb[0].mxu0
        %v924 = vadd.f32 %v711, %v923
        %v925 = vpop.f32.mrb[0].mxu0
        %926 = vdwg.mxu0
        %929 = vrot.lane.b32.xlu0 %v878, 96
        %v930 = vpop.permute.xlu0 %929
        %931 = vrot.lane.b32.xlu0 %v882, 96
        %v932 = vpop.permute.xlu0 %931
        %935 = vrot.lane.b32.xlu0 %v878, 64
        %v936 = vpop.permute.xlu0 %935
        %937 = vrot.lane.b32.xlu0 %v882, 64
        %v938 = vpop.permute.xlu0 %937
        %941 = vrot.lane.b32.xlu0 %v878, 32
        %v942 = vpop.permute.xlu0 %941
        %943 = vrot.lane.b32.xlu0 %v882, 32
        %v944 = vpop.permute.xlu0 %943
        %v947 = vcombine.low %v878, %v936
        %v948 = vcombine.high %v878, %v936
        %v950 = vunpack.c.l.s4 1983009808
        %v951 = vunpack.c.0.s8 %v950
        %v952 = vlaneseq
        %v953 = vshrl.u32 %v952, 7
        %v954 = vsub.s32 %v951, %v953
        %v955 = vrot.slane %v947, %v954
        %v957 = vunpack.c.l.s4 1983009808
        %v958 = vunpack.c.0.s8 %v957
        %v959 = vlaneseq
        %v960 = vshrl.u32 %v959, 7
        %v961 = vsub.s32 %v958, %v960
        %v962 = vrot.slane %v948, %v961
        %v963 = vcombine.low %v930, %v942
        %v964 = vcombine.high %v930, %v942
        %v966 = vunpack.c.l.s4 1983009808
        %v967 = vunpack.c.0.s8 %v966
        %v968 = vlaneseq
        %v969 = vshrl.u32 %v968, 7
        %v970 = vsub.s32 %v967, %v969
        %v971 = vrot.slane %v963, %v970
        %v973 = vunpack.c.l.s4 1983009808
        %v974 = vunpack.c.0.s8 %v973
        %v975 = vlaneseq
        %v976 = vshrl.u32 %v975, 7
        %v977 = vsub.s32 %v974, %v976
        %v978 = vrot.slane %v964, %v977
        %v979 = vcombine.low %v955, %v971
        %v980 = vcombine.high %v955, %v971
        %v982 = vunpack.c.l.s4 1934713408
        %v983 = vunpack.c.0.s8 %v982
        %v984 = vlaneseq
        %v985 = vshrl.u32 %v984, 7
        %v986 = vsub.s32 %v983, %v985
        %v987 = vrot.slane %v979, %v986
        %v989 = vunpack.c.l.s4 1934713408
        %v990 = vunpack.c.0.s8 %v989
        %v991 = vlaneseq
        %v992 = vshrl.u32 %v991, 7
        %v993 = vsub.s32 %v990, %v992
        %v994 = vrot.slane %v980, %v993
        %v995 = vcombine.low %v962, %v978
        %v996 = vcombine.high %v962, %v978
        %v998 = vunpack.c.l.s4 1934713408
        %v999 = vunpack.c.0.s8 %v998
        %v1000 = vlaneseq
        %v1001 = vshrl.u32 %v1000, 7
        %v1002 = vsub.s32 %v999, %v1001
        %v1003 = vrot.slane %v995, %v1002
        %v1005 = vunpack.c.l.s4 1934713408
        %v1006 = vunpack.c.0.s8 %v1005
        %v1007 = vlaneseq
        %v1008 = vshrl.u32 %v1007, 7
        %v1009 = vsub.s32 %v1006, %v1008
        %v1010 = vrot.slane %v996, %v1009
        %v1011 = vcombine.high %v987, 0.0
        %v1012 = vcombine.high %v994, 0.0
        %v1013 = vcombine.high %v1003, 0.0
        %v1014 = vcombine.high %v1010, 0.0
        %v1015 = vcombine.low %v882, %v938
        %v1016 = vcombine.high %v882, %v938
        %v1018 = vunpack.c.l.s4 1983009808
        %v1019 = vunpack.c.0.s8 %v1018
        %v1020 = vlaneseq
        %v1021 = vshrl.u32 %v1020, 7
        %v1022 = vsub.s32 %v1019, %v1021
        %v1023 = vrot.slane %v1015, %v1022
        %v1025 = vunpack.c.l.s4 1983009808
        %v1026 = vunpack.c.0.s8 %v1025
        %v1027 = vlaneseq
        %v1028 = vshrl.u32 %v1027, 7
        %v1029 = vsub.s32 %v1026, %v1028
        %v1030 = vrot.slane %v1016, %v1029
        %v1031 = vcombine.low %v932, %v944
        %v1032 = vcombine.high %v932, %v944
        %v1034 = vunpack.c.l.s4 1983009808
        %v1035 = vunpack.c.0.s8 %v1034
        %v1036 = vlaneseq
        %v1037 = vshrl.u32 %v1036, 7
        %v1038 = vsub.s32 %v1035, %v1037
        %v1039 = vrot.slane %v1031, %v1038
        %v1041 = vunpack.c.l.s4 1983009808
        %v1042 = vunpack.c.0.s8 %v1041
        %v1043 = vlaneseq
        %v1044 = vshrl.u32 %v1043, 7
        %v1045 = vsub.s32 %v1042, %v1044
        %v1046 = vrot.slane %v1032, %v1045
        %v1047 = vcombine.low %v1023, %v1039
        %v1048 = vcombine.high %v1023, %v1039
        %v1050 = vunpack.c.l.s4 1934713408
        %v1051 = vunpack.c.0.s8 %v1050
        %v1052 = vlaneseq
        %v1053 = vshrl.u32 %v1052, 7
        %v1054 = vsub.s32 %v1051, %v1053
        %v1055 = vrot.slane %v1047, %v1054
        %v1057 = vunpack.c.l.s4 1934713408
        %v1058 = vunpack.c.0.s8 %v1057
        %v1059 = vlaneseq
        %v1060 = vshrl.u32 %v1059, 7
        %v1061 = vsub.s32 %v1058, %v1060
        %v1062 = vrot.slane %v1048, %v1061
        %v1063 = vcombine.low %v1030, %v1046
        %v1064 = vcombine.high %v1030, %v1046
        %v1066 = vunpack.c.l.s4 1934713408
        %v1067 = vunpack.c.0.s8 %v1066
        %v1068 = vlaneseq
        %v1069 = vshrl.u32 %v1068, 7
        %v1070 = vsub.s32 %v1067, %v1069
        %v1071 = vrot.slane %v1063, %v1070
        %v1073 = vunpack.c.l.s4 1934713408
        %v1074 = vunpack.c.0.s8 %v1073
        %v1075 = vlaneseq
        %v1076 = vshrl.u32 %v1075, 7
        %v1077 = vsub.s32 %v1074, %v1076
        %v1078 = vrot.slane %v1064, %v1077
        %v1079 = vcombine.high %v1055, 0.0
        %v1080 = vcombine.high %v1062, 0.0
        %v1081 = vcombine.high %v1071, 0.0
        %v1082 = vcombine.high %v1078, 0.0
        %v1083 = vcombine.low %v987, %v994
        %v1085 = vunpack.c.l.s4 1983009808
        %v1086 = vunpack.c.0.s8 %v1085
        %v1087 = vlaneseq
        %v1088 = vshrl.u32 %v1087, 7
        %v1089 = vsub.s32 %v1086, %v1088
        %v1090 = vrot.slane %v1083, %v1089
        %v1091 = vcombine.low %v1011, %v1012
        %v1093 = vunpack.c.l.s4 1983009808
        %v1094 = vunpack.c.0.s8 %v1093
        %v1095 = vlaneseq
        %v1096 = vshrl.u32 %v1095, 7
        %v1097 = vsub.s32 %v1094, %v1096
        %v1098 = vrot.slane %v1091, %v1097
        %v1099 = vcombine.low %v1003, %v1010
        %v1101 = vunpack.c.l.s4 1983009808
        %v1102 = vunpack.c.0.s8 %v1101
        %v1103 = vlaneseq
        %v1104 = vshrl.u32 %v1103, 7
        %v1105 = vsub.s32 %v1102, %v1104
        %v1106 = vrot.slane %v1099, %v1105
        %v1107 = vcombine.low %v1013, %v1014
        %v1109 = vunpack.c.l.s4 1983009808
        %v1110 = vunpack.c.0.s8 %v1109
        %v1111 = vlaneseq
        %v1112 = vshrl.u32 %v1111, 7
        %v1113 = vsub.s32 %v1110, %v1112
        %v1114 = vrot.slane %v1107, %v1113
        %v1115 = vcombine.low %v1090, %v1098
        %v1116 = vcombine.high %v1090, %v1098
        %v1118 = vunpack.c.l.s4 1934713408
        %v1119 = vunpack.c.0.s8 %v1118
        %v1120 = vlaneseq
        %v1121 = vshrl.u32 %v1120, 7
        %v1122 = vsub.s32 %v1119, %v1121
        %v1123 = vrot.slane %v1115, %v1122
        %v1125 = vunpack.c.l.s4 1934713408
        %v1126 = vunpack.c.0.s8 %v1125
        %v1127 = vlaneseq
        %v1128 = vshrl.u32 %v1127, 7
        %v1129 = vsub.s32 %v1126, %v1128
        %v1130 = vrot.slane %v1116, %v1129
        %v1131 = vcombine.low %v1106, %v1114
        %v1132 = vcombine.high %v1106, %v1114
        %v1134 = vunpack.c.l.s4 1934713408
        %v1135 = vunpack.c.0.s8 %v1134
        %v1136 = vlaneseq
        %v1137 = vshrl.u32 %v1136, 7
        %v1138 = vsub.s32 %v1135, %v1137
        %v1139 = vrot.slane %v1131, %v1138
        %v1141 = vunpack.c.l.s4 1934713408
        %v1142 = vunpack.c.0.s8 %v1141
        %v1143 = vlaneseq
        %v1144 = vshrl.u32 %v1143, 7
        %v1145 = vsub.s32 %v1142, %v1144
        %v1146 = vrot.slane %v1132, %v1145
        %v1147 = vcombine.low %v1123, %v1139
        %v1148 = vcombine.high %v1123, %v1139
        %v1149 = vcombine.low %v1130, %v1146
        %v1150 = vcombine.high %v1130, %v1146
        %v1151 = vcombine.low %v1055, %v1062
        %v1153 = vunpack.c.l.s4 1983009808
        %v1154 = vunpack.c.0.s8 %v1153
        %v1155 = vlaneseq
        %v1156 = vshrl.u32 %v1155, 7
        %v1157 = vsub.s32 %v1154, %v1156
        %v1158 = vrot.slane %v1151, %v1157
        %v1159 = vcombine.low %v1079, %v1080
        %v1161 = vunpack.c.l.s4 1983009808
        %v1162 = vunpack.c.0.s8 %v1161
        %v1163 = vlaneseq
        %v1164 = vshrl.u32 %v1163, 7
        %v1165 = vsub.s32 %v1162, %v1164
        %v1166 = vrot.slane %v1159, %v1165
        %v1167 = vcombine.low %v1071, %v1078
        %v1169 = vunpack.c.l.s4 1983009808
        %v1170 = vunpack.c.0.s8 %v1169
        %v1171 = vlaneseq
        %v1172 = vshrl.u32 %v1171, 7
        %v1173 = vsub.s32 %v1170, %v1172
        %v1174 = vrot.slane %v1167, %v1173
        %v1175 = vcombine.low %v1081, %v1082
        %v1177 = vunpack.c.l.s4 1983009808
        %v1178 = vunpack.c.0.s8 %v1177
        %v1179 = vlaneseq
        %v1180 = vshrl.u32 %v1179, 7
        %v1181 = vsub.s32 %v1178, %v1180
        %v1182 = vrot.slane %v1175, %v1181
        %v1183 = vcombine.low %v1158, %v1166
        %v1184 = vcombine.high %v1158, %v1166
        %v1186 = vunpack.c.l.s4 1934713408
        %v1187 = vunpack.c.0.s8 %v1186
        %v1188 = vlaneseq
        %v1189 = vshrl.u32 %v1188, 7
        %v1190 = vsub.s32 %v1187, %v1189
        %v1191 = vrot.slane %v1183, %v1190
        %v1193 = vunpack.c.l.s4 1934713408
        %v1194 = vunpack.c.0.s8 %v1193
        %v1195 = vlaneseq
        %v1196 = vshrl.u32 %v1195, 7
        %v1197 = vsub.s32 %v1194, %v1196
        %v1198 = vrot.slane %v1184, %v1197
        %v1199 = vcombine.low %v1174, %v1182
        %v1200 = vcombine.high %v1174, %v1182
        %v1202 = vunpack.c.l.s4 1934713408
        %v1203 = vunpack.c.0.s8 %v1202
        %v1204 = vlaneseq
        %v1205 = vshrl.u32 %v1204, 7
        %v1206 = vsub.s32 %v1203, %v1205
        %v1207 = vrot.slane %v1199, %v1206
        %v1209 = vunpack.c.l.s4 1934713408
        %v1210 = vunpack.c.0.s8 %v1209
        %v1211 = vlaneseq
        %v1212 = vshrl.u32 %v1211, 7
        %v1213 = vsub.s32 %v1210, %v1212
        %v1214 = vrot.slane %v1200, %v1213
        %v1215 = vcombine.low %v1191, %v1207
        %v1216 = vcombine.high %v1191, %v1207
        %v1217 = vcombine.low %v1198, %v1214
        %v1218 = vcombine.high %v1198, %v1214
        %v1219 = vpack.c.bf16 %v1215, %v1147
        %v1220 = vpack.c.bf16 %v1216, %v1148
        %v1221 = vpack.c.bf16 %v1217, %v1149
        %v1222 = vpack.c.bf16 %v1218, %v1150
        %1225 = vrot.lane.b32.xlu0 %v880, 96
        %v1226 = vpop.permute.xlu0 %1225
        %1227 = vrot.lane.b32.xlu0 %v884, 96
        %v1228 = vpop.permute.xlu0 %1227
        %1231 = vrot.lane.b32.xlu0 %v880, 64
        %v1232 = vpop.permute.xlu0 %1231
        %1233 = vrot.lane.b32.xlu0 %v884, 64
        %v1234 = vpop.permute.xlu0 %1233
        %1237 = vrot.lane.b32.xlu0 %v880, 32
        %v1238 = vpop.permute.xlu0 %1237
        %1239 = vrot.lane.b32.xlu0 %v884, 32
        %v1240 = vpop.permute.xlu0 %1239
        %v1243 = vcombine.low %v880, %v1232
        %v1244 = vcombine.high %v880, %v1232
        %v1246 = vunpack.c.l.s4 1983009808
        %v1247 = vunpack.c.0.s8 %v1246
        %v1248 = vlaneseq
        %v1249 = vshrl.u32 %v1248, 7
        %v1250 = vsub.s32 %v1247, %v1249
        %v1251 = vrot.slane %v1243, %v1250
        %v1253 = vunpack.c.l.s4 1983009808
        %v1254 = vunpack.c.0.s8 %v1253
        %v1255 = vlaneseq
        %v1256 = vshrl.u32 %v1255, 7
        %v1257 = vsub.s32 %v1254, %v1256
        %v1258 = vrot.slane %v1244, %v1257
        %v1259 = vcombine.low %v1226, %v1238
        %v1260 = vcombine.high %v1226, %v1238
        %v1262 = vunpack.c.l.s4 1983009808
        %v1263 = vunpack.c.0.s8 %v1262
        %v1264 = vlaneseq
        %v1265 = vshrl.u32 %v1264, 7
        %v1266 = vsub.s32 %v1263, %v1265
        %v1267 = vrot.slane %v1259, %v1266
        %v1269 = vunpack.c.l.s4 1983009808
        %v1270 = vunpack.c.0.s8 %v1269
        %v1271 = vlaneseq
        %v1272 = vshrl.u32 %v1271, 7
        %v1273 = vsub.s32 %v1270, %v1272
        %v1274 = vrot.slane %v1260, %v1273
        %v1275 = vcombine.low %v1251, %v1267
        %v1276 = vcombine.high %v1251, %v1267
        %v1278 = vunpack.c.l.s4 1934713408
        %v1279 = vunpack.c.0.s8 %v1278
        %v1280 = vlaneseq
        %v1281 = vshrl.u32 %v1280, 7
        %v1282 = vsub.s32 %v1279, %v1281
        %v1283 = vrot.slane %v1275, %v1282
        %v1285 = vunpack.c.l.s4 1934713408
        %v1286 = vunpack.c.0.s8 %v1285
        %v1287 = vlaneseq
        %v1288 = vshrl.u32 %v1287, 7
        %v1289 = vsub.s32 %v1286, %v1288
        %v1290 = vrot.slane %v1276, %v1289
        %v1291 = vcombine.low %v1258, %v1274
        %v1292 = vcombine.high %v1258, %v1274
        %v1294 = vunpack.c.l.s4 1934713408
        %v1295 = vunpack.c.0.s8 %v1294
        %v1296 = vlaneseq
        %v1297 = vshrl.u32 %v1296, 7
        %v1298 = vsub.s32 %v1295, %v1297
        %v1299 = vrot.slane %v1291, %v1298
        %v1301 = vunpack.c.l.s4 1934713408
        %v1302 = vunpack.c.0.s8 %v1301
        %v1303 = vlaneseq
        %v1304 = vshrl.u32 %v1303, 7
        %v1305 = vsub.s32 %v1302, %v1304
        %v1306 = vrot.slane %v1292, %v1305
        %v1307 = vcombine.high %v1283, 0.0
        %v1308 = vcombine.high %v1290, 0.0
        %v1309 = vcombine.high %v1299, 0.0
        %v1310 = vcombine.high %v1306, 0.0
        %v1311 = vcombine.low %v884, %v1234
        %v1312 = vcombine.high %v884, %v1234
        %v1314 = vunpack.c.l.s4 1983009808
        %v1315 = vunpack.c.0.s8 %v1314
        %v1316 = vlaneseq
        %v1317 = vshrl.u32 %v1316, 7
        %v1318 = vsub.s32 %v1315, %v1317
        %v1319 = vrot.slane %v1311, %v1318
        %v1321 = vunpack.c.l.s4 1983009808
        %v1322 = vunpack.c.0.s8 %v1321
        %v1323 = vlaneseq
        %v1324 = vshrl.u32 %v1323, 7
        %v1325 = vsub.s32 %v1322, %v1324
        %v1326 = vrot.slane %v1312, %v1325
        %v1327 = vcombine.low %v1228, %v1240
        %v1328 = vcombine.high %v1228, %v1240
        %v1330 = vunpack.c.l.s4 1983009808
        %v1331 = vunpack.c.0.s8 %v1330
        %v1332 = vlaneseq
        %v1333 = vshrl.u32 %v1332, 7
        %v1334 = vsub.s32 %v1331, %v1333
        %v1335 = vrot.slane %v1327, %v1334
        %v1337 = vunpack.c.l.s4 1983009808
        %v1338 = vunpack.c.0.s8 %v1337
        %v1339 = vlaneseq
        %v1340 = vshrl.u32 %v1339, 7
        %v1341 = vsub.s32 %v1338, %v1340
        %v1342 = vrot.slane %v1328, %v1341
        %v1343 = vcombine.low %v1319, %v1335
        %v1344 = vcombine.high %v1319, %v1335
        %v1346 = vunpack.c.l.s4 1934713408
        %v1347 = vunpack.c.0.s8 %v1346
        %v1348 = vlaneseq
        %v1349 = vshrl.u32 %v1348, 7
        %v1350 = vsub.s32 %v1347, %v1349
        %v1351 = vrot.slane %v1343, %v1350
        %v1353 = vunpack.c.l.s4 1934713408
        %v1354 = vunpack.c.0.s8 %v1353
        %v1355 = vlaneseq
        %v1356 = vshrl.u32 %v1355, 7
        %v1357 = vsub.s32 %v1354, %v1356
        %v1358 = vrot.slane %v1344, %v1357
        %v1359 = vcombine.low %v1326, %v1342
        %v1360 = vcombine.high %v1326, %v1342
        %v1362 = vunpack.c.l.s4 1934713408
        %v1363 = vunpack.c.0.s8 %v1362
        %v1364 = vlaneseq
        %v1365 = vshrl.u32 %v1364, 7
        %v1366 = vsub.s32 %v1363, %v1365
        %v1367 = vrot.slane %v1359, %v1366
        %v1369 = vunpack.c.l.s4 1934713408
        %v1370 = vunpack.c.0.s8 %v1369
        %v1371 = vlaneseq
        %v1372 = vshrl.u32 %v1371, 7
        %v1373 = vsub.s32 %v1370, %v1372
        %v1374 = vrot.slane %v1360, %v1373
        %v1375 = vcombine.high %v1351, 0.0
        %v1376 = vcombine.high %v1358, 0.0
        %v1377 = vcombine.high %v1367, 0.0
        %v1378 = vcombine.high %v1374, 0.0
        %v1379 = vcombine.low %v1283, %v1290
        %v1381 = vunpack.c.l.s4 1983009808
        %v1382 = vunpack.c.0.s8 %v1381
        %v1383 = vlaneseq
        %v1384 = vshrl.u32 %v1383, 7
        %v1385 = vsub.s32 %v1382, %v1384
        %v1386 = vrot.slane %v1379, %v1385
        %v1387 = vcombine.low %v1307, %v1308
        %v1389 = vunpack.c.l.s4 1983009808
        %v1390 = vunpack.c.0.s8 %v1389
        %v1391 = vlaneseq
        %v1392 = vshrl.u32 %v1391, 7
        %v1393 = vsub.s32 %v1390, %v1392
        %v1394 = vrot.slane %v1387, %v1393
        %v1395 = vcombine.low %v1299, %v1306
        %v1397 = vunpack.c.l.s4 1983009808
        %v1398 = vunpack.c.0.s8 %v1397
        %v1399 = vlaneseq
        %v1400 = vshrl.u32 %v1399, 7
        %v1401 = vsub.s32 %v1398, %v1400
        %v1402 = vrot.slane %v1395, %v1401
        %v1403 = vcombine.low %v1309, %v1310
        %v1405 = vunpack.c.l.s4 1983009808
        %v1406 = vunpack.c.0.s8 %v1405
        %v1407 = vlaneseq
        %v1408 = vshrl.u32 %v1407, 7
        %v1409 = vsub.s32 %v1406, %v1408
        %v1410 = vrot.slane %v1403, %v1409
        %v1411 = vcombine.low %v1386, %v1394
        %v1412 = vcombine.high %v1386, %v1394
        %v1414 = vunpack.c.l.s4 1934713408
        %v1415 = vunpack.c.0.s8 %v1414
        %v1416 = vlaneseq
        %v1417 = vshrl.u32 %v1416, 7
        %v1418 = vsub.s32 %v1415, %v1417
        %v1419 = vrot.slane %v1411, %v1418
        %v1421 = vunpack.c.l.s4 1934713408
        %v1422 = vunpack.c.0.s8 %v1421
        %v1423 = vlaneseq
        %v1424 = vshrl.u32 %v1423, 7
        %v1425 = vsub.s32 %v1422, %v1424
        %v1426 = vrot.slane %v1412, %v1425
        %v1427 = vcombine.low %v1402, %v1410
        %v1428 = vcombine.high %v1402, %v1410
        %v1430 = vunpack.c.l.s4 1934713408
        %v1431 = vunpack.c.0.s8 %v1430
        %v1432 = vlaneseq
        %v1433 = vshrl.u32 %v1432, 7
        %v1434 = vsub.s32 %v1431, %v1433
        %v1435 = vrot.slane %v1427, %v1434
        %v1437 = vunpack.c.l.s4 1934713408
        %v1438 = vunpack.c.0.s8 %v1437
        %v1439 = vlaneseq
        %v1440 = vshrl.u32 %v1439, 7
        %v1441 = vsub.s32 %v1438, %v1440
        %v1442 = vrot.slane %v1428, %v1441
        %v1443 = vcombine.low %v1419, %v1435
        %v1444 = vcombine.high %v1419, %v1435
        %v1445 = vcombine.low %v1426, %v1442
        %v1446 = vcombine.high %v1426, %v1442
        %v1447 = vcombine.low %v1351, %v1358
        %v1449 = vunpack.c.l.s4 1983009808
        %v1450 = vunpack.c.0.s8 %v1449
        %v1451 = vlaneseq
        %v1452 = vshrl.u32 %v1451, 7
        %v1453 = vsub.s32 %v1450, %v1452
        %v1454 = vrot.slane %v1447, %v1453
        %v1455 = vcombine.low %v1375, %v1376
        %v1457 = vunpack.c.l.s4 1983009808
        %v1458 = vunpack.c.0.s8 %v1457
        %v1459 = vlaneseq
        %v1460 = vshrl.u32 %v1459, 7
        %v1461 = vsub.s32 %v1458, %v1460
        %v1462 = vrot.slane %v1455, %v1461
        %v1463 = vcombine.low %v1367, %v1374
        %v1465 = vunpack.c.l.s4 1983009808
        %v1466 = vunpack.c.0.s8 %v1465
        %v1467 = vlaneseq
        %v1468 = vshrl.u32 %v1467, 7
        %v1469 = vsub.s32 %v1466, %v1468
        %v1470 = vrot.slane %v1463, %v1469
        %v1471 = vcombine.low %v1377, %v1378
        %v1473 = vunpack.c.l.s4 1983009808
        %v1474 = vunpack.c.0.s8 %v1473
        %v1475 = vlaneseq
        %v1476 = vshrl.u32 %v1475, 7
        %v1477 = vsub.s32 %v1474, %v1476
        %v1478 = vrot.slane %v1471, %v1477
        %v1479 = vcombine.low %v1454, %v1462
        %v1480 = vcombine.high %v1454, %v1462
        %v1482 = vunpack.c.l.s4 1934713408
        %v1483 = vunpack.c.0.s8 %v1482
        %v1484 = vlaneseq
        %v1485 = vshrl.u32 %v1484, 7
        %v1486 = vsub.s32 %v1483, %v1485
        %v1487 = vrot.slane %v1479, %v1486
        %v1489 = vunpack.c.l.s4 1934713408
        %v1490 = vunpack.c.0.s8 %v1489
        %v1491 = vlaneseq
        %v1492 = vshrl.u32 %v1491, 7
        %v1493 = vsub.s32 %v1490, %v1492
        %v1494 = vrot.slane %v1480, %v1493
        %v1495 = vcombine.low %v1470, %v1478
        %v1496 = vcombine.high %v1470, %v1478
        %v1498 = vunpack.c.l.s4 1934713408
        %v1499 = vunpack.c.0.s8 %v1498
        %v1500 = vlaneseq
        %v1501 = vshrl.u32 %v1500, 7
        %v1502 = vsub.s32 %v1499, %v1501
        %v1503 = vrot.slane %v1495, %v1502
        %v1505 = vunpack.c.l.s4 1934713408
        %v1506 = vunpack.c.0.s8 %v1505
        %v1507 = vlaneseq
        %v1508 = vshrl.u32 %v1507, 7
        %v1509 = vsub.s32 %v1506, %v1508
        %v1510 = vrot.slane %v1496, %v1509
        %v1511 = vcombine.low %v1487, %v1503
        %v1512 = vcombine.high %v1487, %v1503
        %v1513 = vcombine.low %v1494, %v1510
        %v1514 = vcombine.high %v1494, %v1510
        %v1515 = vpack.c.bf16 %v1511, %v1443
        %v1516 = vpack.c.bf16 %v1512, %v1444
        %v1517 = vpack.c.bf16 %v1513, %v1445
        %v1518 = vpack.c.bf16 %v1514, %v1446
        %vm1519 = vcmask 261120
        %1520 = vst.msk [vmem:[#allocation2] sm:$0xff] %vm1519, %v1515
        %1521 = vst.msk [vmem:[#allocation2 + $0x8] sm:$0xff] %vm1519, %v1516
        %1522 = vst.msk [vmem:[#allocation2 + $0x10] sm:$0xff] %vm1519, %v1517
        %1523 = vst.msk [vmem:[#allocation2 + $0x18] sm:$0xff] %vm1519, %v1518
        %1526 = vrot.lane.b32.xlu0 %v921, 96
        %v1527 = vpop.permute.xlu0 %1526
        %1528 = vrot.lane.b32.xlu0 %v924, 96
        %v1529 = vpop.permute.xlu0 %1528
        %1532 = vrot.lane.b32.xlu0 %v921, 64
        %v1533 = vpop.permute.xlu0 %1532
        %1534 = vrot.lane.b32.xlu0 %v924, 64
        %v1535 = vpop.permute.xlu0 %1534
        %1538 = vrot.lane.b32.xlu0 %v921, 32
        %v1539 = vpop.permute.xlu0 %1538
        %1540 = vrot.lane.b32.xlu0 %v924, 32
        %v1541 = vpop.permute.xlu0 %1540
        %v1544 = vcombine.low %v921, %v1533
        %v1545 = vcombine.high %v921, %v1533
        %v1547 = vunpack.c.l.s4 1983009808
        %v1548 = vunpack.c.0.s8 %v1547
        %v1549 = vlaneseq
        %v1550 = vshrl.u32 %v1549, 7
        %v1551 = vsub.s32 %v1548, %v1550
        %v1552 = vrot.slane %v1544, %v1551
        %v1554 = vunpack.c.l.s4 1983009808
        %v1555 = vunpack.c.0.s8 %v1554
        %v1556 = vlaneseq
        %v1557 = vshrl.u32 %v1556, 7
        %v1558 = vsub.s32 %v1555, %v1557
        %v1559 = vrot.slane %v1545, %v1558
        %v1560 = vcombine.low %v1527, %v1539
        %v1561 = vcombine.high %v1527, %v1539
        %v1563 = vunpack.c.l.s4 1983009808
        %v1564 = vunpack.c.0.s8 %v1563
        %v1565 = vlaneseq
        %v1566 = vshrl.u32 %v1565, 7
        %v1567 = vsub.s32 %v1564, %v1566
        %v1568 = vrot.slane %v1560, %v1567
        %v1570 = vunpack.c.l.s4 1983009808
        %v1571 = vunpack.c.0.s8 %v1570
        %v1572 = vlaneseq
        %v1573 = vshrl.u32 %v1572, 7
        %v1574 = vsub.s32 %v1571, %v1573
        %v1575 = vrot.slane %v1561, %v1574
        %v1576 = vcombine.low %v1552, %v1568
        %v1577 = vcombine.high %v1552, %v1568
        %v1579 = vunpack.c.l.s4 1934713408
        %v1580 = vunpack.c.0.s8 %v1579
        %v1581 = vlaneseq
        %v1582 = vshrl.u32 %v1581, 7
        %v1583 = vsub.s32 %v1580, %v1582
        %v1584 = vrot.slane %v1576, %v1583
        %v1586 = vunpack.c.l.s4 1934713408
        %v1587 = vunpack.c.0.s8 %v1586
        %v1588 = vlaneseq
        %v1589 = vshrl.u32 %v1588, 7
        %v1590 = vsub.s32 %v1587, %v1589
        %v1591 = vrot.slane %v1577, %v1590
        %v1592 = vcombine.low %v1559, %v1575
        %v1593 = vcombine.high %v1559, %v1575
        %v1595 = vunpack.c.l.s4 1934713408
        %v1596 = vunpack.c.0.s8 %v1595
        %v1597 = vlaneseq
        %v1598 = vshrl.u32 %v1597, 7
        %v1599 = vsub.s32 %v1596, %v1598
        %v1600 = vrot.slane %v1592, %v1599
        %v1602 = vunpack.c.l.s4 1934713408
        %v1603 = vunpack.c.0.s8 %v1602
        %v1604 = vlaneseq
        %v1605 = vshrl.u32 %v1604, 7
        %v1606 = vsub.s32 %v1603, %v1605
        %v1607 = vrot.slane %v1593, %v1606
        %v1608 = vcombine.high %v1584, 0.0
        %v1609 = vcombine.high %v1591, 0.0
        %v1610 = vcombine.high %v1600, 0.0
        %v1611 = vcombine.high %v1607, 0.0
        %v1612 = vcombine.low %v924, %v1535
        %v1613 = vcombine.high %v924, %v1535
        %v1615 = vunpack.c.l.s4 1983009808
        %v1616 = vunpack.c.0.s8 %v1615
        %v1617 = vlaneseq
        %v1618 = vshrl.u32 %v1617, 7
        %v1619 = vsub.s32 %v1616, %v1618
        %v1620 = vrot.slane %v1612, %v1619
        %v1622 = vunpack.c.l.s4 1983009808
        %v1623 = vunpack.c.0.s8 %v1622
        %v1624 = vlaneseq
        %v1625 = vshrl.u32 %v1624, 7
        %v1626 = vsub.s32 %v1623, %v1625
        %v1627 = vrot.slane %v1613, %v1626
        %v1628 = vcombine.low %v1529, %v1541
        %v1629 = vcombine.high %v1529, %v1541
        %v1631 = vunpack.c.l.s4 1983009808
        %v1632 = vunpack.c.0.s8 %v1631
        %v1633 = vlaneseq
        %v1634 = vshrl.u32 %v1633, 7
        %v1635 = vsub.s32 %v1632, %v1634
        %v1636 = vrot.slane %v1628, %v1635
        %v1638 = vunpack.c.l.s4 1983009808
        %v1639 = vunpack.c.0.s8 %v1638
        %v1640 = vlaneseq
        %v1641 = vshrl.u32 %v1640, 7
        %v1642 = vsub.s32 %v1639, %v1641
        %v1643 = vrot.slane %v1629, %v1642
        %v1644 = vcombine.low %v1620, %v1636
        %v1645 = vcombine.high %v1620, %v1636
        %v1647 = vunpack.c.l.s4 1934713408
        %v1648 = vunpack.c.0.s8 %v1647
        %v1649 = vlaneseq
        %v1650 = vshrl.u32 %v1649, 7
        %v1651 = vsub.s32 %v1648, %v1650
        %v1652 = vrot.slane %v1644, %v1651
        %v1654 = vunpack.c.l.s4 1934713408
        %v1655 = vunpack.c.0.s8 %v1654
        %v1656 = vlaneseq
        %v1657 = vshrl.u32 %v1656, 7
        %v1658 = vsub.s32 %v1655, %v1657
        %v1659 = vrot.slane %v1645, %v1658
        %v1660 = vcombine.low %v1627, %v1643
        %v1661 = vcombine.high %v1627, %v1643
        %v1663 = vunpack.c.l.s4 1934713408
        %v1664 = vunpack.c.0.s8 %v1663
        %v1665 = vlaneseq
        %v1666 = vshrl.u32 %v1665, 7
        %v1667 = vsub.s32 %v1664, %v1666
        %v1668 = vrot.slane %v1660, %v1667
        %v1670 = vunpack.c.l.s4 1934713408
        %v1671 = vunpack.c.0.s8 %v1670
        %v1672 = vlaneseq
        %v1673 = vshrl.u32 %v1672, 7
        %v1674 = vsub.s32 %v1671, %v1673
        %v1675 = vrot.slane %v1661, %v1674
        %v1676 = vcombine.high %v1652, 0.0
        %v1677 = vcombine.high %v1659, 0.0
        %v1678 = vcombine.high %v1668, 0.0
        %v1679 = vcombine.high %v1675, 0.0
        %v1680 = vcombine.low %v1584, %v1591
        %v1682 = vunpack.c.l.s4 1983009808
        %v1683 = vunpack.c.0.s8 %v1682
        %v1684 = vlaneseq
        %v1685 = vshrl.u32 %v1684, 7
        %v1686 = vsub.s32 %v1683, %v1685
        %v1687 = vrot.slane %v1680, %v1686
        %v1688 = vcombine.low %v1608, %v1609
        %v1690 = vunpack.c.l.s4 1983009808
        %v1691 = vunpack.c.0.s8 %v1690
        %v1692 = vlaneseq
        %v1693 = vshrl.u32 %v1692, 7
        %v1694 = vsub.s32 %v1691, %v1693
        %v1695 = vrot.slane %v1688, %v1694
        %v1696 = vcombine.low %v1600, %v1607
        %v1698 = vunpack.c.l.s4 1983009808
        %v1699 = vunpack.c.0.s8 %v1698
        %v1700 = vlaneseq
        %v1701 = vshrl.u32 %v1700, 7
        %v1702 = vsub.s32 %v1699, %v1701
        %v1703 = vrot.slane %v1696, %v1702
        %v1704 = vcombine.low %v1610, %v1611
        %v1706 = vunpack.c.l.s4 1983009808
        %v1707 = vunpack.c.0.s8 %v1706
        %v1708 = vlaneseq
        %v1709 = vshrl.u32 %v1708, 7
        %v1710 = vsub.s32 %v1707, %v1709
        %v1711 = vrot.slane %v1704, %v1710
        %v1712 = vcombine.low %v1687, %v1695
        %v1713 = vcombine.high %v1687, %v1695
        %v1715 = vunpack.c.l.s4 1934713408
        %v1716 = vunpack.c.0.s8 %v1715
        %v1717 = vlaneseq
        %v1718 = vshrl.u32 %v1717, 7
        %v1719 = vsub.s32 %v1716, %v1718
        %v1720 = vrot.slane %v1712, %v1719
        %v1722 = vunpack.c.l.s4 1934713408
        %v1723 = vunpack.c.0.s8 %v1722
        %v1724 = vlaneseq
        %v1725 = vshrl.u32 %v1724, 7
        %v1726 = vsub.s32 %v1723, %v1725
        %v1727 = vrot.slane %v1713, %v1726
        %v1728 = vcombine.low %v1703, %v1711
        %v1729 = vcombine.high %v1703, %v1711
        %v1731 = vunpack.c.l.s4 1934713408
        %v1732 = vunpack.c.0.s8 %v1731
        %v1733 = vlaneseq
        %v1734 = vshrl.u32 %v1733, 7
        %v1735 = vsub.s32 %v1732, %v1734
        %v1736 = vrot.slane %v1728, %v1735
        %v1738 = vunpack.c.l.s4 1934713408
        %v1739 = vunpack.c.0.s8 %v1738
        %v1740 = vlaneseq
        %v1741 = vshrl.u32 %v1740, 7
        %v1742 = vsub.s32 %v1739, %v1741
        %v1743 = vrot.slane %v1729, %v1742
        %v1744 = vcombine.low %v1720, %v1736
        %v1745 = vcombine.high %v1720, %v1736
        %v1746 = vcombine.low %v1727, %v1743
        %v1747 = vcombine.high %v1727, %v1743
        %v1748 = vcombine.low %v1652, %v1659
        %v1750 = vunpack.c.l.s4 1983009808
        %v1751 = vunpack.c.0.s8 %v1750
        %v1752 = vlaneseq
        %v1753 = vshrl.u32 %v1752, 7
        %v1754 = vsub.s32 %v1751, %v1753
        %v1755 = vrot.slane %v1748, %v1754
        %v1756 = vcombine.low %v1676, %v1677
        %v1758 = vunpack.c.l.s4 1983009808
        %v1759 = vunpack.c.0.s8 %v1758
        %v1760 = vlaneseq
        %v1761 = vshrl.u32 %v1760, 7
        %v1762 = vsub.s32 %v1759, %v1761
        %v1763 = vrot.slane %v1756, %v1762
        %v1764 = vcombine.low %v1668, %v1675
        %v1766 = vunpack.c.l.s4 1983009808
        %v1767 = vunpack.c.0.s8 %v1766
        %v1768 = vlaneseq
        %v1769 = vshrl.u32 %v1768, 7
        %v1770 = vsub.s32 %v1767, %v1769
        %v1771 = vrot.slane %v1764, %v1770
        %v1772 = vcombine.low %v1678, %v1679
        %v1774 = vunpack.c.l.s4 1983009808
        %v1775 = vunpack.c.0.s8 %v1774
        %v1776 = vlaneseq
        %v1777 = vshrl.u32 %v1776, 7
        %v1778 = vsub.s32 %v1775, %v1777
        %v1779 = vrot.slane %v1772, %v1778
        %v1780 = vcombine.low %v1755, %v1763
        %v1781 = vcombine.high %v1755, %v1763
        %v1783 = vunpack.c.l.s4 1934713408
        %v1784 = vunpack.c.0.s8 %v1783
        %v1785 = vlaneseq
        %v1786 = vshrl.u32 %v1785, 7
        %v1787 = vsub.s32 %v1784, %v1786
        %v1788 = vrot.slane %v1780, %v1787
        %v1790 = vunpack.c.l.s4 1934713408
        %v1791 = vunpack.c.0.s8 %v1790
        %v1792 = vlaneseq
        %v1793 = vshrl.u32 %v1792, 7
        %v1794 = vsub.s32 %v1791, %v1793
        %v1795 = vrot.slane %v1781, %v1794
        %v1796 = vcombine.low %v1771, %v1779
        %v1797 = vcombine.high %v1771, %v1779
        %v1799 = vunpack.c.l.s4 1934713408
        %v1800 = vunpack.c.0.s8 %v1799
        %v1801 = vlaneseq
        %v1802 = vshrl.u32 %v1801, 7
        %v1803 = vsub.s32 %v1800, %v1802
        %v1804 = vrot.slane %v1796, %v1803
        %v1806 = vunpack.c.l.s4 1934713408
        %v1807 = vunpack.c.0.s8 %v1806
        %v1808 = vlaneseq
        %v1809 = vshrl.u32 %v1808, 7
        %v1810 = vsub.s32 %v1807, %v1809
        %v1811 = vrot.slane %v1797, %v1810
        %v1812 = vcombine.low %v1788, %v1804
        %v1813 = vcombine.high %v1788, %v1804
        %v1814 = vcombine.low %v1795, %v1811
        %v1815 = vcombine.high %v1795, %v1811
        %v1816 = vpack.c.bf16 %v1812, %v1744
        %v1817 = vpack.c.bf16 %v1813, %v1745
        %v1818 = vpack.c.bf16 %v1814, %v1746
        %v1819 = vpack.c.bf16 %v1815, %v1747
        %1820 = vst.msk [vmem:[#allocation3] sm:$0xff] %vm1519, %v1816
        %1821 = vst.msk [vmem:[#allocation3 + $0x8] sm:$0xff] %vm1519, %v1817
        %1822 = vst.msk [vmem:[#allocation3 + $0x10] sm:$0xff] %vm1519, %v1818
        %1823 = vst.msk [vmem:[#allocation3 + $0x18] sm:$0xff] %vm1519, %v1819
        %v1824 = vlaneseq
        %v1825 = vshrl.u32 %v1824, 7
        %v1826 = vadd.s32 %v1825, 8
        %v1827 = vlaneseq
        %v1828 = vand.u32 %v1827, 127
        %v1829 = vld [vmem:[#allocation2] sm:$0xff]
        %v1830 = vld [vmem:[#allocation2 + $0x8] sm:$0xff]
        %v1831 = vld [vmem:[#allocation2 + $0x10] sm:$0xff]
        %v1832 = vld [vmem:[#allocation2 + $0x18] sm:$0xff]
        %v1833 = vld [vmem:[#allocation3] sm:$0xff]
        %v1834 = vld [vmem:[#allocation3 + $0x8] sm:$0xff]
        %v1835 = vld [vmem:[#allocation3 + $0x10] sm:$0xff]
        %v1836 = vld [vmem:[#allocation3 + $0x18] sm:$0xff]
        %v1838 = vsel %vm1519, %v1219, 0
        %v1841 = vsel %vm1519, %v1829, 0
        %1843 = vmatprep.subr.bf16.mxu0 0
        %1844 = vmatpush1.bf16.xpose.msra.mxu0 %v1841
        %1845 = vmatprep.subr.bf16.mxu0 0
        %1846 = vmatpush1.bf16.xpose.msra.mxu0 0
        %1847 = vmatprep.subr.bf16.mxu0 0
        %1848 = vmatpush1.bf16.xpose.msra.mxu0 0
        %1849 = vmatprep.subr.bf16.mxu0 0
        %1850 = vmatpush1.bf16.xpose.msra.mxu0 0
        %1851 = vmatprep.subr.bf16.mxu0 0
        %1852 = vmatpush1.bf16.xpose.msra.mxu0 0
        %1853 = vmatprep.subr.bf16.mxu0 0
        %1854 = vmatpush1.bf16.xpose.msra.mxu0 0
        %1855 = vmatprep.subr.bf16.mxu0 0
        %1856 = vmatpush1.bf16.xpose.msra.mxu0 0
        %1857 = vmatprep.subr.bf16.mxu0 0
        %1858 = vmatpush1.bf16.xpose.msra.mxu0 0
        %1859 = vmatprep.subr.bf16.mxu0 0
        %1860 = vmatpush1.bf16.xpose.msra.mxu0 0
        %1861 = vmatprep.subr.bf16.mxu0 0
        %1862 = vmatpush1.bf16.xpose.msra.mxu0 0
        %1863 = vmatprep.subr.bf16.mxu0 0
        %1864 = vmatpush1.bf16.xpose.msra.mxu0 0
        %1865 = vmatprep.subr.bf16.mxu0 0
        %1866 = vmatpush1.bf16.xpose.msra.mxu0 0
        %1867 = vmatprep.subr.bf16.mxu0 0
        %1868 = vmatpush1.bf16.xpose.msra.mxu0 0
        %1869 = vmatprep.subr.bf16.mxu0 0
        %1870 = vmatpush1.bf16.xpose.msra.mxu0 0
        %1871 = vmatprep.subr.bf16.mxu0 0
        %1872 = vmatpush1.bf16.xpose.msra.mxu0 0
        %1873 = vmatprep.subr.bf16.mxu0 0
        %1874 = vmatpush1.bf16.xpose.msra.mxu0 0
        %1875 = vmatprep.mubr.bf16.mxu0 0
        %1876 = vmatmul.mubr.bf16.gmra.mrb[0].mxu0 %v1838
        %v1877 = vpop.f32.mrb[0].mxu0
        %v1878 = vadd.f32 0.0, %v1877
        %v1879 = vpop.f32.mrb[0].mxu0
        %v1880 = vpop.f32.mrb[0].mxu0
        %v1881 = vadd.f32 0.0, %v1880
        %v1882 = vpop.f32.mrb[0].mxu0
        %1883 = vdwg.mxu0
        %v1885 = vsel %vm1519, %v1220, 0
        %v1888 = vsel %vm1519, %v1830, 0
        %1890 = vmatprep.subr.bf16.mxu0 0
        %1891 = vmatpush1.bf16.xpose.msra.mxu0 %v1888
        %1892 = vmatprep.subr.bf16.mxu0 0
        %1893 = vmatpush1.bf16.xpose.msra.mxu0 0
        %1894 = vmatprep.subr.bf16.mxu0 0
        %1895 = vmatpush1.bf16.xpose.msra.mxu0 0
        %1896 = vmatprep.subr.bf16.mxu0 0
        %1897 = vmatpush1.bf16.xpose.msra.mxu0 0
        %1898 = vmatprep.subr.bf16.mxu0 0
        %1899 = vmatpush1.bf16.xpose.msra.mxu0 0
        %1900 = vmatprep.subr.bf16.mxu0 0
        %1901 = vmatpush1.bf16.xpose.msra.mxu0 0
        %1902 = vmatprep.subr.bf16.mxu0 0
        %1903 = vmatpush1.bf16.xpose.msra.mxu0 0
        %1904 = vmatprep.subr.bf16.mxu0 0
        %1905 = vmatpush1.bf16.xpose.msra.mxu0 0
        %1906 = vmatprep.subr.bf16.mxu0 0
        %1907 = vmatpush1.bf16.xpose.msra.mxu0 0
        %1908 = vmatprep.subr.bf16.mxu0 0
        %1909 = vmatpush1.bf16.xpose.msra.mxu0 0
        %1910 = vmatprep.subr.bf16.mxu0 0
        %1911 = vmatpush1.bf16.xpose.msra.mxu0 0
        %1912 = vmatprep.subr.bf16.mxu0 0
        %1913 = vmatpush1.bf16.xpose.msra.mxu0 0
        %1914 = vmatprep.subr.bf16.mxu0 0
        %1915 = vmatpush1.bf16.xpose.msra.mxu0 0
        %1916 = vmatprep.subr.bf16.mxu0 0
        %1917 = vmatpush1.bf16.xpose.msra.mxu0 0
        %1918 = vmatprep.subr.bf16.mxu0 0
        %1919 = vmatpush1.bf16.xpose.msra.mxu0 0
        %1920 = vmatprep.subr.bf16.mxu0 0
        %1921 = vmatpush1.bf16.xpose.msra.mxu0 0
        %1922 = vmatprep.mubr.bf16.mxu0 0
        %1923 = vmatmul.mubr.bf16.gmra.mrb[0].mxu0 %v1885
        %v1924 = vpop.f32.mrb[0].mxu0
        %v1925 = vadd.f32 0.0, %v1924
        %v1926 = vpop.f32.mrb[0].mxu0
        %v1927 = vpop.f32.mrb[0].mxu0
        %v1928 = vadd.f32 0.0, %v1927
        %v1929 = vpop.f32.mrb[0].mxu0
        %1930 = vdwg.mxu0
        %v1932 = vsel %vm1519, %v1221, 0
        %v1935 = vsel %vm1519, %v1831, 0
        %1937 = vmatprep.subr.bf16.mxu0 0
        %1938 = vmatpush1.bf16.xpose.msra.mxu0 %v1935
        %1939 = vmatprep.subr.bf16.mxu0 0
        %1940 = vmatpush1.bf16.xpose.msra.mxu0 0
        %1941 = vmatprep.subr.bf16.mxu0 0
        %1942 = vmatpush1.bf16.xpose.msra.mxu0 0
        %1943 = vmatprep.subr.bf16.mxu0 0
        %1944 = vmatpush1.bf16.xpose.msra.mxu0 0
        %1945 = vmatprep.subr.bf16.mxu0 0
        %1946 = vmatpush1.bf16.xpose.msra.mxu0 0
        %1947 = vmatprep.subr.bf16.mxu0 0
        %1948 = vmatpush1.bf16.xpose.msra.mxu0 0
        %1949 = vmatprep.subr.bf16.mxu0 0
        %1950 = vmatpush1.bf16.xpose.msra.mxu0 0
        %1951 = vmatprep.subr.bf16.mxu0 0
        %1952 = vmatpush1.bf16.xpose.msra.mxu0 0
        %1953 = vmatprep.subr.bf16.mxu0 0
        %1954 = vmatpush1.bf16.xpose.msra.mxu0 0
        %1955 = vmatprep.subr.bf16.mxu0 0
        %1956 = vmatpush1.bf16.xpose.msra.mxu0 0
        %1957 = vmatprep.subr.bf16.mxu0 0
        %1958 = vmatpush1.bf16.xpose.msra.mxu0 0
        %1959 = vmatprep.subr.bf16.mxu0 0
        %1960 = vmatpush1.bf16.xpose.msra.mxu0 0
        %1961 = vmatprep.subr.bf16.mxu0 0
        %1962 = vmatpush1.bf16.xpose.msra.mxu0 0
        %1963 = vmatprep.subr.bf16.mxu0 0
        %1964 = vmatpush1.bf16.xpose.msra.mxu0 0
        %1965 = vmatprep.subr.bf16.mxu0 0
        %1966 = vmatpush1.bf16.xpose.msra.mxu0 0
        %1967 = vmatprep.subr.bf16.mxu0 0
        %1968 = vmatpush1.bf16.xpose.msra.mxu0 0
        %1969 = vmatprep.mubr.bf16.mxu0 0
        %1970 = vmatmul.mubr.bf16.gmra.mrb[0].mxu0 %v1932
        %v1971 = vpop.f32.mrb[0].mxu0
        %v1972 = vadd.f32 0.0, %v1971
        %v1973 = vpop.f32.mrb[0].mxu0
        %v1974 = vpop.f32.mrb[0].mxu0
        %v1975 = vadd.f32 0.0, %v1974
        %v1976 = vpop.f32.mrb[0].mxu0
        %1977 = vdwg.mxu0
        %v1979 = vsel %vm1519, %v1222, 0
        %v1982 = vsel %vm1519, %v1832, 0
        %1984 = vmatprep.subr.bf16.mxu0 0
        %1985 = vmatpush1.bf16.xpose.msra.mxu0 %v1982
        %1986 = vmatprep.subr.bf16.mxu0 0
        %1987 = vmatpush1.bf16.xpose.msra.mxu0 0
        %1988 = vmatprep.subr.bf16.mxu0 0
        %1989 = vmatpush1.bf16.xpose.msra.mxu0 0
        %1990 = vmatprep.subr.bf16.mxu0 0
        %1991 = vmatpush1.bf16.xpose.msra.mxu0 0
        %1992 = vmatprep.subr.bf16.mxu0 0
        %1993 = vmatpush1.bf16.xpose.msra.mxu0 0
        %1994 = vmatprep.subr.bf16.mxu0 0
        %1995 = vmatpush1.bf16.xpose.msra.mxu0 0
        %1996 = vmatprep.subr.bf16.mxu0 0
        %1997 = vmatpush1.bf16.xpose.msra.mxu0 0
        %1998 = vmatprep.subr.bf16.mxu0 0
        %1999 = vmatpush1.bf16.xpose.msra.mxu0 0
        %2000 = vmatprep.subr.bf16.mxu0 0
        %2001 = vmatpush1.bf16.xpose.msra.mxu0 0
        %2002 = vmatprep.subr.bf16.mxu0 0
        %2003 = vmatpush1.bf16.xpose.msra.mxu0 0
        %2004 = vmatprep.subr.bf16.mxu0 0
        %2005 = vmatpush1.bf16.xpose.msra.mxu0 0
        %2006 = vmatprep.subr.bf16.mxu0 0
        %2007 = vmatpush1.bf16.xpose.msra.mxu0 0
        %2008 = vmatprep.subr.bf16.mxu0 0
        %2009 = vmatpush1.bf16.xpose.msra.mxu0 0
        %2010 = vmatprep.subr.bf16.mxu0 0
        %2011 = vmatpush1.bf16.xpose.msra.mxu0 0
        %2012 = vmatprep.subr.bf16.mxu0 0
        %2013 = vmatpush1.bf16.xpose.msra.mxu0 0
        %2014 = vmatprep.subr.bf16.mxu0 0
        %2015 = vmatpush1.bf16.xpose.msra.mxu0 0
        %2016 = vmatprep.mubr.bf16.mxu0 0
        %2017 = vmatmul.mubr.bf16.gmra.mrb[0].mxu0 %v1979
        %v2018 = vpop.f32.mrb[0].mxu0
        %v2019 = vadd.f32 0.0, %v2018
        %v2020 = vpop.f32.mrb[0].mxu0
        %v2021 = vpop.f32.mrb[0].mxu0
        %v2022 = vadd.f32 0.0, %v2021
        %v2023 = vpop.f32.mrb[0].mxu0
        %2024 = vdwg.mxu0
        %v2025 = vstv 0
        %v2026 = vadd.s32 %v1828, %v2025
        %vm2027 = vcmp.gt.s32.totalorder %v2026, %v1825
        %vm2028 = vcmp.gt.s32.totalorder %v2026, %v1826
        %v2029 = vsel %vm2027, 1, 0
        %v2030 = vsel %vm2028, 1, 0
        %vm2031 = vcmp.eq.s32.totalorder %v2029, 1
        %vm2032 = vcmp.eq.s32.totalorder %v2030, 1
        %v2033 = vsel %vm2031, -100000.0, %v1878
        %v2034 = vsel %vm2032, -100000.0, %v1881
        %v2035 = vsel %vm2031, -100000.0, %v1925
        %v2036 = vsel %vm2032, -100000.0, %v1928
        %v2037 = vsel %vm2031, -100000.0, %v1972
        %v2038 = vsel %vm2032, -100000.0, %v1975
        %v2039 = vsel %vm2031, -100000.0, %v2019
        %v2040 = vsel %vm2032, -100000.0, %v2022
        %vm2041 = vcmask 130048
        %v2042 = vsel %vm2041, %v2033, -inf
        %2043 = vmax.xlane.f32.xlu0 %v2042
        %v2044 = vpop.xlane.xlu0 %2043
        %v2045 = vsel %vm2041, %v2034, -inf
        %2046 = vmax.xlane.f32.xlu0 %v2045
        %v2047 = vpop.xlane.xlu0 %2046
        %v2048 = vsel %vm2041, %v2035, -inf
        %2049 = vmax.xlane.f32.xlu0 %v2048
        %v2050 = vpop.xlane.xlu0 %2049
        %v2051 = vsel %vm2041, %v2036, -inf
        %2052 = vmax.xlane.f32.xlu0 %v2051
        %v2053 = vpop.xlane.xlu0 %2052
        %v2054 = vsel %vm2041, %v2037, -inf
        %2055 = vmax.xlane.f32.xlu0 %v2054
        %v2056 = vpop.xlane.xlu0 %2055
        %v2057 = vsel %vm2041, %v2038, -inf
        %2058 = vmax.xlane.f32.xlu0 %v2057
        %v2059 = vpop.xlane.xlu0 %2058
        %v2060 = vsel %vm2041, %v2039, -inf
        %2061 = vmax.xlane.f32.xlu0 %v2060
        %v2062 = vpop.xlane.xlu0 %2061
        %v2063 = vsel %vm2041, %v2040, -inf
        %2064 = vmax.xlane.f32.xlu0 %v2063
        %v2065 = vpop.xlane.xlu0 %2064
        %v2066 = vmax.f32 %v2044, -1e+30
        %v2067 = vmax.f32 %v2047, -1e+30
        %v2068 = vmax.f32 %v2050, -1e+30
        %v2069 = vmax.f32 %v2053, -1e+30
        %v2070 = vmax.f32 %v2056, -1e+30
        %v2071 = vmax.f32 %v2059, -1e+30
        %v2072 = vmax.f32 %v2062, -1e+30
        %v2073 = vmax.f32 %v2065, -1e+30
        %v2074 = vsub.f32 -1e+30, %v2066
        %v2075 = vsub.f32 -1e+30, %v2067
        %v2076 = vsub.f32 -1e+30, %v2068
        %v2077 = vsub.f32 -1e+30, %v2069
        %v2078 = vsub.f32 -1e+30, %v2070
        %v2079 = vsub.f32 -1e+30, %v2071
        %v2080 = vsub.f32 -1e+30, %v2072
        %v2081 = vsub.f32 -1e+30, %v2073
        %v2082 = vmul.f32 %v2074, 1.442695
        %v2083 = vpow.pop %v2082
        %v2084 = vmul.f32 %v2075, 1.442695
        %v2085 = vpow.pop %v2084
        %v2086 = vmul.f32 %v2076, 1.442695
        %v2087 = vpow.pop %v2086
        %v2088 = vmul.f32 %v2077, 1.442695
        %v2089 = vpow.pop %v2088
        %v2090 = vmul.f32 %v2078, 1.442695
        %v2091 = vpow.pop %v2090
        %v2092 = vmul.f32 %v2079, 1.442695
        %v2093 = vpow.pop %v2092
        %v2094 = vmul.f32 %v2080, 1.442695
        %v2095 = vpow.pop %v2094
        %v2096 = vmul.f32 %v2081, 1.442695
        %v2097 = vpow.pop %v2096
        %v2098 = vsub.f32 %v2033, %v2066
        %v2099 = vsub.f32 %v2034, %v2067
        %v2100 = vsub.f32 %v2035, %v2068
        %v2101 = vsub.f32 %v2036, %v2069
        %v2102 = vsub.f32 %v2037, %v2070
        %v2103 = vsub.f32 %v2038, %v2071
        %v2104 = vsub.f32 %v2039, %v2072
        %v2105 = vsub.f32 %v2040, %v2073
        %v2106 = vmul.f32 %v2098, 1.442695
        %v2107 = vpow.pop %v2106
        %v2108 = vmul.f32 %v2099, 1.442695
        %v2109 = vpow.pop %v2108
        %v2110 = vmul.f32 %v2100, 1.442695
        %v2111 = vpow.pop %v2110
        %v2112 = vmul.f32 %v2101, 1.442695
        %v2113 = vpow.pop %v2112
        %v2114 = vmul.f32 %v2102, 1.442695
        %v2115 = vpow.pop %v2114
        %v2116 = vmul.f32 %v2103, 1.442695
        %v2117 = vpow.pop %v2116
        %v2118 = vmul.f32 %v2104, 1.442695
        %v2119 = vpow.pop %v2118
        %v2120 = vmul.f32 %v2105, 1.442695
        %v2121 = vpow.pop %v2120
        %v2122 = vmul.f32 %v2083, 0.0
        %v2123 = vmul.f32 %v2085, 0.0
        %v2124 = vmul.f32 %v2087, 0.0
        %v2125 = vmul.f32 %v2089, 0.0
        %v2126 = vmul.f32 %v2091, 0.0
        %v2127 = vmul.f32 %v2093, 0.0
        %v2128 = vmul.f32 %v2095, 0.0
        %v2129 = vmul.f32 %v2097, 0.0
        %v2130 = vsel %vm2041, %v2107, 0.0
        %2131 = vadd.xlane.f32.xlu0 %v2130
        %v2132 = vpop.xlane.xlu0 %2131
        %v2133 = vsel %vm2041, %v2109, 0.0
        %2134 = vadd.xlane.f32.xlu0 %v2133
        %v2135 = vpop.xlane.xlu0 %2134
        %v2136 = vsel %vm2041, %v2111, 0.0
        %2137 = vadd.xlane.f32.xlu0 %v2136
        %v2138 = vpop.xlane.xlu0 %2137
        %v2139 = vsel %vm2041, %v2113, 0.0
        %2140 = vadd.xlane.f32.xlu0 %v2139
        %v2141 = vpop.xlane.xlu0 %2140
        %v2142 = vsel %vm2041, %v2115, 0.0
        %2143 = vadd.xlane.f32.xlu0 %v2142
        %v2144 = vpop.xlane.xlu0 %2143
        %v2145 = vsel %vm2041, %v2117, 0.0
        %2146 = vadd.xlane.f32.xlu0 %v2145
        %v2147 = vpop.xlane.xlu0 %2146
        %v2148 = vsel %vm2041, %v2119, 0.0
        %2149 = vadd.xlane.f32.xlu0 %v2148
        %v2150 = vpop.xlane.xlu0 %2149
        %v2151 = vsel %vm2041, %v2121, 0.0
        %2152 = vadd.xlane.f32.xlu0 %v2151
        %v2153 = vpop.xlane.xlu0 %2152
        %v2154 = vadd.f32 %v2122, %v2132
        %v2155 = vadd.f32 %v2123, %v2135
        %v2156 = vadd.f32 %v2124, %v2138
        %v2157 = vadd.f32 %v2125, %v2141
        %v2158 = vadd.f32 %v2126, %v2144
        %v2159 = vadd.f32 %v2127, %v2147
        %v2160 = vadd.f32 %v2128, %v2150
        %v2161 = vadd.f32 %v2129, %v2153
        %v2162 = vpack.c.bf16 %v2109, %v2107
        %v2163 = vpack.c.bf16 %v2113, %v2111
        %v2164 = vpack.c.bf16 %v2117, %v2115
        %v2165 = vpack.c.bf16 %v2121, %v2119
        %v2167 = vsel %vm2041, %v2162, 0
        %2169 = vmatprep.subr.bf16.mxu0 0
        %2170 = vmatpush1.bf16.msra.mxu0 %v1833
        %2171 = vmatprep.subr.bf16.mxu0 0
        %2172 = vmatpush1.bf16.msra.mxu0 0
        %2173 = vmatprep.subr.bf16.mxu0 0
        %2174 = vmatpush1.bf16.msra.mxu0 0
        %2175 = vmatprep.subr.bf16.mxu0 0
        %2176 = vmatpush1.bf16.msra.mxu0 0
        %2177 = vmatprep.subr.bf16.mxu0 0
        %2178 = vmatpush1.bf16.msra.mxu0 0
        %2179 = vmatprep.subr.bf16.mxu0 0
        %2180 = vmatpush1.bf16.msra.mxu0 0
        %2181 = vmatprep.subr.bf16.mxu0 0
        %2182 = vmatpush1.bf16.msra.mxu0 0
        %2183 = vmatprep.subr.bf16.mxu0 0
        %2184 = vmatpush1.bf16.msra.mxu0 0
        %2185 = vmatprep.subr.bf16.mxu0 0
        %2186 = vmatpush1.bf16.msra.mxu0 0
        %2187 = vmatprep.subr.bf16.mxu0 0
        %2188 = vmatpush1.bf16.msra.mxu0 0
        %2189 = vmatprep.subr.bf16.mxu0 0
        %2190 = vmatpush1.bf16.msra.mxu0 0
        %2191 = vmatprep.subr.bf16.mxu0 0
        %2192 = vmatpush1.bf16.msra.mxu0 0
        %2193 = vmatprep.subr.bf16.mxu0 0
        %2194 = vmatpush1.bf16.msra.mxu0 0
        %2195 = vmatprep.subr.bf16.mxu0 0
        %2196 = vmatpush1.bf16.msra.mxu0 0
        %2197 = vmatprep.subr.bf16.mxu0 0
        %2198 = vmatpush1.bf16.msra.mxu0 0
        %2199 = vmatprep.subr.bf16.mxu0 0
        %2200 = vmatpush1.bf16.msra.mxu0 0
        %2201 = vmatprep.mubr.bf16.mxu0 0
        %2202 = vmatmul.mubr.bf16.gmra.mrb[0].mxu0 %v2167
        %v2203 = vpop.f32.mrb[0].mxu0
        %v2204 = vadd.f32 0.0, %v2203
        %v2205 = vpop.f32.mrb[0].mxu0
        %v2206 = vpop.f32.mrb[0].mxu0
        %v2207 = vadd.f32 0.0, %v2206
        %v2208 = vpop.f32.mrb[0].mxu0
        %2209 = vdwg.mxu0
        %v2211 = vsel %vm2041, %v2163, 0
        %2213 = vmatprep.subr.bf16.mxu0 0
        %2214 = vmatpush1.bf16.msra.mxu0 %v1834
        %2215 = vmatprep.subr.bf16.mxu0 0
        %2216 = vmatpush1.bf16.msra.mxu0 0
        %2217 = vmatprep.subr.bf16.mxu0 0
        %2218 = vmatpush1.bf16.msra.mxu0 0
        %2219 = vmatprep.subr.bf16.mxu0 0
        %2220 = vmatpush1.bf16.msra.mxu0 0
        %2221 = vmatprep.subr.bf16.mxu0 0
        %2222 = vmatpush1.bf16.msra.mxu0 0
        %2223 = vmatprep.subr.bf16.mxu0 0
        %2224 = vmatpush1.bf16.msra.mxu0 0
        %2225 = vmatprep.subr.bf16.mxu0 0
        %2226 = vmatpush1.bf16.msra.mxu0 0
        %2227 = vmatprep.subr.bf16.mxu0 0
        %2228 = vmatpush1.bf16.msra.mxu0 0
        %2229 = vmatprep.subr.bf16.mxu0 0
        %2230 = vmatpush1.bf16.msra.mxu0 0
        %2231 = vmatprep.subr.bf16.mxu0 0
        %2232 = vmatpush1.bf16.msra.mxu0 0
        %2233 = vmatprep.subr.bf16.mxu0 0
        %2234 = vmatpush1.bf16.msra.mxu0 0
        %2235 = vmatprep.subr.bf16.mxu0 0
        %2236 = vmatpush1.bf16.msra.mxu0 0
        %2237 = vmatprep.subr.bf16.mxu0 0
        %2238 = vmatpush1.bf16.msra.mxu0 0
        %2239 = vmatprep.subr.bf16.mxu0 0
        %2240 = vmatpush1.bf16.msra.mxu0 0
        %2241 = vmatprep.subr.bf16.mxu0 0
        %2242 = vmatpush1.bf16.msra.mxu0 0
        %2243 = vmatprep.subr.bf16.mxu0 0
        %2244 = vmatpush1.bf16.msra.mxu0 0
        %2245 = vmatprep.mubr.bf16.mxu0 0
        %2246 = vmatmul.mubr.bf16.gmra.mrb[0].mxu0 %v2211
        %v2247 = vpop.f32.mrb[0].mxu0
        %v2248 = vadd.f32 0.0, %v2247
        %v2249 = vpop.f32.mrb[0].mxu0
        %v2250 = vpop.f32.mrb[0].mxu0
        %v2251 = vadd.f32 0.0, %v2250
        %v2252 = vpop.f32.mrb[0].mxu0
        %2253 = vdwg.mxu0
        %v2255 = vsel %vm2041, %v2164, 0
        %2257 = vmatprep.subr.bf16.mxu0 0
        %2258 = vmatpush1.bf16.msra.mxu0 %v1835
        %2259 = vmatprep.subr.bf16.mxu0 0
        %2260 = vmatpush1.bf16.msra.mxu0 0
        %2261 = vmatprep.subr.bf16.mxu0 0
        %2262 = vmatpush1.bf16.msra.mxu0 0
        %2263 = vmatprep.subr.bf16.mxu0 0
        %2264 = vmatpush1.bf16.msra.mxu0 0
        %2265 = vmatprep.subr.bf16.mxu0 0
        %2266 = vmatpush1.bf16.msra.mxu0 0
        %2267 = vmatprep.subr.bf16.mxu0 0
        %2268 = vmatpush1.bf16.msra.mxu0 0
        %2269 = vmatprep.subr.bf16.mxu0 0
        %2270 = vmatpush1.bf16.msra.mxu0 0
        %2271 = vmatprep.subr.bf16.mxu0 0
        %2272 = vmatpush1.bf16.msra.mxu0 0
        %2273 = vmatprep.subr.bf16.mxu0 0
        %2274 = vmatpush1.bf16.msra.mxu0 0
        %2275 = vmatprep.subr.bf16.mxu0 0
        %2276 = vmatpush1.bf16.msra.mxu0 0
        %2277 = vmatprep.subr.bf16.mxu0 0
        %2278 = vmatpush1.bf16.msra.mxu0 0
        %2279 = vmatprep.subr.bf16.mxu0 0
        %2280 = vmatpush1.bf16.msra.mxu0 0
        %2281 = vmatprep.subr.bf16.mxu0 0
        %2282 = vmatpush1.bf16.msra.mxu0 0
        %2283 = vmatprep.subr.bf16.mxu0 0
        %2284 = vmatpush1.bf16.msra.mxu0 0
        %2285 = vmatprep.subr.bf16.mxu0 0
        %2286 = vmatpush1.bf16.msra.mxu0 0
        %2287 = vmatprep.subr.bf16.mxu0 0
        %2288 = vmatpush1.bf16.msra.mxu0 0
        %2289 = vmatprep.mubr.bf16.mxu0 0
        %2290 = vmatmul.mubr.bf16.gmra.mrb[0].mxu0 %v2255
        %v2291 = vpop.f32.mrb[0].mxu0
        %v2292 = vadd.f32 0.0, %v2291
        %v2293 = vpop.f32.mrb[0].mxu0
        %v2294 = vpop.f32.mrb[0].mxu0
        %v2295 = vadd.f32 0.0, %v2294
        %v2296 = vpop.f32.mrb[0].mxu0
        %2297 = vdwg.mxu0
        %v2299 = vsel %vm2041, %v2165, 0
        %2301 = vmatprep.subr.bf16.mxu0 0
        %2302 = vmatpush1.bf16.msra.mxu0 %v1836
        %2303 = vmatprep.subr.bf16.mxu0 0
        %2304 = vmatpush1.bf16.msra.mxu0 0
        %2305 = vmatprep.subr.bf16.mxu0 0
        %2306 = vmatpush1.bf16.msra.mxu0 0
        %2307 = vmatprep.subr.bf16.mxu0 0
        %2308 = vmatpush1.bf16.msra.mxu0 0
        %2309 = vmatprep.subr.bf16.mxu0 0
        %2310 = vmatpush1.bf16.msra.mxu0 0
        %2311 = vmatprep.subr.bf16.mxu0 0
        %2312 = vmatpush1.bf16.msra.mxu0 0
        %2313 = vmatprep.subr.bf16.mxu0 0
        %2314 = vmatpush1.bf16.msra.mxu0 0
        %2315 = vmatprep.subr.bf16.mxu0 0
        %2316 = vmatpush1.bf16.msra.mxu0 0
        %2317 = vmatprep.subr.bf16.mxu0 0
        %2318 = vmatpush1.bf16.msra.mxu0 0
        %2319 = vmatprep.subr.bf16.mxu0 0
        %2320 = vmatpush1.bf16.msra.mxu0 0
        %2321 = vmatprep.subr.bf16.mxu0 0
        %2322 = vmatpush1.bf16.msra.mxu0 0
        %2323 = vmatprep.subr.bf16.mxu0 0
        %2324 = vmatpush1.bf16.msra.mxu0 0
        %2325 = vmatprep.subr.bf16.mxu0 0
        %2326 = vmatpush1.bf16.msra.mxu0 0
        %2327 = vmatprep.subr.bf16.mxu0 0
        %2328 = vmatpush1.bf16.msra.mxu0 0
        %2329 = vmatprep.subr.bf16.mxu0 0
        %2330 = vmatpush1.bf16.msra.mxu0 0
        %2331 = vmatprep.subr.bf16.mxu0 0
        %2332 = vmatpush1.bf16.msra.mxu0 0
        %2333 = vmatprep.mubr.bf16.mxu0 0
        %2334 = vmatmul.mubr.bf16.gmra.mrb[0].mxu0 %v2299
        %v2335 = vpop.f32.mrb[0].mxu0
        %v2336 = vadd.f32 0.0, %v2335
        %v2337 = vpop.f32.mrb[0].mxu0
        %v2338 = vpop.f32.mrb[0].mxu0
        %v2339 = vadd.f32 0.0, %v2338
        %v2340 = vpop.f32.mrb[0].mxu0
        %2341 = vdwg.mxu0
        %v2342 = vadd.f32 %v2122, %v2204
        %v2343 = vadd.f32 %v2123, %v2207
        %v2344 = vadd.f32 %v2124, %v2248
        %v2345 = vadd.f32 %v2125, %v2251
        %v2346 = vadd.f32 %v2126, %v2292
        %v2347 = vadd.f32 %v2127, %v2295
        %v2348 = vadd.f32 %v2128, %v2336
        %v2349 = vadd.f32 %v2129, %v2339
        %v2350 = vrcp.pop %v2154
        %v2351 = vrcp.pop %v2155
        %v2352 = vrcp.pop %v2156
        %v2353 = vrcp.pop %v2157
        %v2354 = vrcp.pop %v2158
        %v2355 = vrcp.pop %v2159
        %v2356 = vrcp.pop %v2160
        %v2357 = vrcp.pop %v2161
        %v2358 = vmul.f32 %v2342, %v2350
        %v2359 = vmul.f32 %v2343, %v2351
        %v2360 = vmul.f32 %v2344, %v2352
        %v2361 = vmul.f32 %v2345, %v2353
        %v2362 = vmul.f32 %v2346, %v2354
        %v2363 = vmul.f32 %v2347, %v2355
        %v2364 = vmul.f32 %v2348, %v2356
        %v2365 = vmul.f32 %v2349, %v2357
        %v2366 = vcombine.low %v2358, %v2362
        %v2367 = vcombine.high %v2358, %v2362
        %v2369 = vunpack.c.l.s4 1983009808
        %v2370 = vunpack.c.0.s8 %v2369
        %v2371 = vlaneseq
        %v2372 = vshrl.u32 %v2371, 7
        %v2373 = vsub.s32 %v2370, %v2372
        %v2374 = vrot.slane %v2366, %v2373
        %v2376 = vunpack.c.l.s4 1983009808
        %v2377 = vunpack.c.0.s8 %v2376
        %v2378 = vlaneseq
        %v2379 = vshrl.u32 %v2378, 7
        %v2380 = vsub.s32 %v2377, %v2379
        %v2381 = vrot.slane %v2367, %v2380
        %v2382 = vcombine.low %v2360, %v2364
        %v2383 = vcombine.high %v2360, %v2364
        %v2385 = vunpack.c.l.s4 1983009808
        %v2386 = vunpack.c.0.s8 %v2385
        %v2387 = vlaneseq
        %v2388 = vshrl.u32 %v2387, 7
        %v2389 = vsub.s32 %v2386, %v2388
        %v2390 = vrot.slane %v2382, %v2389
        %v2392 = vunpack.c.l.s4 1983009808
        %v2393 = vunpack.c.0.s8 %v2392
        %v2394 = vlaneseq
        %v2395 = vshrl.u32 %v2394, 7
        %v2396 = vsub.s32 %v2393, %v2395
        %v2397 = vrot.slane %v2383, %v2396
        %v2398 = vcombine.low %v2374, %v2390
        %v2399 = vcombine.high %v2374, %v2390
        %v2401 = vunpack.c.l.s4 1934713408
        %v2402 = vunpack.c.0.s8 %v2401
        %v2403 = vlaneseq
        %v2404 = vshrl.u32 %v2403, 7
        %v2405 = vsub.s32 %v2402, %v2404
        %v2406 = vrot.slane %v2398, %v2405
        %v2408 = vunpack.c.l.s4 1934713408
        %v2409 = vunpack.c.0.s8 %v2408
        %v2410 = vlaneseq
        %v2411 = vshrl.u32 %v2410, 7
        %v2412 = vsub.s32 %v2409, %v2411
        %v2413 = vrot.slane %v2399, %v2412
        %v2414 = vcombine.low %v2381, %v2397
        %v2415 = vcombine.high %v2381, %v2397
        %v2417 = vunpack.c.l.s4 1934713408
        %v2418 = vunpack.c.0.s8 %v2417
        %v2419 = vlaneseq
        %v2420 = vshrl.u32 %v2419, 7
        %v2421 = vsub.s32 %v2418, %v2420
        %v2422 = vrot.slane %v2414, %v2421
        %v2424 = vunpack.c.l.s4 1934713408
        %v2425 = vunpack.c.0.s8 %v2424
        %v2426 = vlaneseq
        %v2427 = vshrl.u32 %v2426, 7
        %v2428 = vsub.s32 %v2425, %v2427
        %v2429 = vrot.slane %v2415, %v2428
        %v2430 = vcombine.high %v2406, 0.0
        %v2431 = vcombine.high %v2413, 0.0
        %v2432 = vcombine.high %v2422, 0.0
        %v2433 = vcombine.high %v2429, 0.0
        %v2434 = vcombine.low %v2359, %v2363
        %v2435 = vcombine.high %v2359, %v2363
        %v2437 = vunpack.c.l.s4 1983009808
        %v2438 = vunpack.c.0.s8 %v2437
        %v2439 = vlaneseq
        %v2440 = vshrl.u32 %v2439, 7
        %v2441 = vsub.s32 %v2438, %v2440
        %v2442 = vrot.slane %v2434, %v2441
        %v2444 = vunpack.c.l.s4 1983009808
        %v2445 = vunpack.c.0.s8 %v2444
        %v2446 = vlaneseq
        %v2447 = vshrl.u32 %v2446, 7
        %v2448 = vsub.s32 %v2445, %v2447
        %v2449 = vrot.slane %v2435, %v2448
        %v2450 = vcombine.low %v2361, %v2365
        %v2451 = vcombine.high %v2361, %v2365
        %v2453 = vunpack.c.l.s4 1983009808
        %v2454 = vunpack.c.0.s8 %v2453
        %v2455 = vlaneseq
        %v2456 = vshrl.u32 %v2455, 7
        %v2457 = vsub.s32 %v2454, %v2456
        %v2458 = vrot.slane %v2450, %v2457
        %v2460 = vunpack.c.l.s4 1983009808
        %v2461 = vunpack.c.0.s8 %v2460
        %v2462 = vlaneseq
        %v2463 = vshrl.u32 %v2462, 7
        %v2464 = vsub.s32 %v2461, %v2463
        %v2465 = vrot.slane %v2451, %v2464
        %v2466 = vcombine.low %v2442, %v2458
        %v2467 = vcombine.high %v2442, %v2458
        %v2469 = vunpack.c.l.s4 1934713408
        %v2470 = vunpack.c.0.s8 %v2469
        %v2471 = vlaneseq
        %v2472 = vshrl.u32 %v2471, 7
        %v2473 = vsub.s32 %v2470, %v2472
        %v2474 = vrot.slane %v2466, %v2473
        %v2476 = vunpack.c.l.s4 1934713408
        %v2477 = vunpack.c.0.s8 %v2476
        %v2478 = vlaneseq
        %v2479 = vshrl.u32 %v2478, 7
        %v2480 = vsub.s32 %v2477, %v2479
        %v2481 = vrot.slane %v2467, %v2480
        %v2482 = vcombine.low %v2449, %v2465
        %v2483 = vcombine.high %v2449, %v2465
        %v2485 = vunpack.c.l.s4 1934713408
        %v2486 = vunpack.c.0.s8 %v2485
        %v2487 = vlaneseq
        %v2488 = vshrl.u32 %v2487, 7
        %v2489 = vsub.s32 %v2486, %v2488
        %v2490 = vrot.slane %v2482, %v2489
        %v2492 = vunpack.c.l.s4 1934713408
        %v2493 = vunpack.c.0.s8 %v2492
        %v2494 = vlaneseq
        %v2495 = vshrl.u32 %v2494, 7
        %v2496 = vsub.s32 %v2493, %v2495
        %v2497 = vrot.slane %v2483, %v2496
        %v2498 = vcombine.high %v2474, 0.0
        %v2499 = vcombine.high %v2481, 0.0
        %v2500 = vcombine.high %v2490, 0.0
        %v2501 = vcombine.high %v2497, 0.0
        %v2502 = vcombine.low %v2406, %v2413
        %v2504 = vunpack.c.l.s4 1983009808
        %v2505 = vunpack.c.0.s8 %v2504
        %v2506 = vlaneseq
        %v2507 = vshrl.u32 %v2506, 7
        %v2508 = vsub.s32 %v2505, %v2507
        %v2509 = vrot.slane %v2502, %v2508
        %v2510 = vcombine.low %v2430, %v2431
        %v2512 = vunpack.c.l.s4 1983009808
        %v2513 = vunpack.c.0.s8 %v2512
        %v2514 = vlaneseq
        %v2515 = vshrl.u32 %v2514, 7
        %v2516 = vsub.s32 %v2513, %v2515
        %v2517 = vrot.slane %v2510, %v2516
        %v2518 = vcombine.low %v2422, %v2429
        %v2520 = vunpack.c.l.s4 1983009808
        %v2521 = vunpack.c.0.s8 %v2520
        %v2522 = vlaneseq
        %v2523 = vshrl.u32 %v2522, 7
        %v2524 = vsub.s32 %v2521, %v2523
        %v2525 = vrot.slane %v2518, %v2524
        %v2526 = vcombine.low %v2432, %v2433
        %v2528 = vunpack.c.l.s4 1983009808
        %v2529 = vunpack.c.0.s8 %v2528
        %v2530 = vlaneseq
        %v2531 = vshrl.u32 %v2530, 7
        %v2532 = vsub.s32 %v2529, %v2531
        %v2533 = vrot.slane %v2526, %v2532
        %v2534 = vcombine.low %v2509, %v2517
        %v2535 = vcombine.high %v2509, %v2517
        %v2537 = vunpack.c.l.s4 1934713408
        %v2538 = vunpack.c.0.s8 %v2537
        %v2539 = vlaneseq
        %v2540 = vshrl.u32 %v2539, 7
        %v2541 = vsub.s32 %v2538, %v2540
        %v2542 = vrot.slane %v2534, %v2541
        %v2544 = vunpack.c.l.s4 1934713408
        %v2545 = vunpack.c.0.s8 %v2544
        %v2546 = vlaneseq
        %v2547 = vshrl.u32 %v2546, 7
        %v2548 = vsub.s32 %v2545, %v2547
        %v2549 = vrot.slane %v2535, %v2548
        %v2550 = vcombine.low %v2525, %v2533
        %v2551 = vcombine.high %v2525, %v2533
        %v2553 = vunpack.c.l.s4 1934713408
        %v2554 = vunpack.c.0.s8 %v2553
        %v2555 = vlaneseq
        %v2556 = vshrl.u32 %v2555, 7
        %v2557 = vsub.s32 %v2554, %v2556
        %v2558 = vrot.slane %v2550, %v2557
        %v2560 = vunpack.c.l.s4 1934713408
        %v2561 = vunpack.c.0.s8 %v2560
        %v2562 = vlaneseq
        %v2563 = vshrl.u32 %v2562, 7
        %v2564 = vsub.s32 %v2561, %v2563
        %v2565 = vrot.slane %v2551, %v2564
        %v2566 = vcombine.low %v2542, %v2558
        %v2567 = vcombine.high %v2542, %v2558
        %v2568 = vcombine.low %v2549, %v2565
        %v2569 = vcombine.high %v2549, %v2565
        %v2570 = vcombine.low %v2474, %v2481
        %v2572 = vunpack.c.l.s4 1983009808
        %v2573 = vunpack.c.0.s8 %v2572
        %v2574 = vlaneseq
        %v2575 = vshrl.u32 %v2574, 7
        %v2576 = vsub.s32 %v2573, %v2575
        %v2577 = vrot.slane %v2570, %v2576
        %v2578 = vcombine.low %v2498, %v2499
        %v2580 = vunpack.c.l.s4 1983009808
        %v2581 = vunpack.c.0.s8 %v2580
        %v2582 = vlaneseq
        %v2583 = vshrl.u32 %v2582, 7
        %v2584 = vsub.s32 %v2581, %v2583
        %v2585 = vrot.slane %v2578, %v2584
        %v2586 = vcombine.low %v2490, %v2497
        %v2588 = vunpack.c.l.s4 1983009808
        %v2589 = vunpack.c.0.s8 %v2588
        %v2590 = vlaneseq
        %v2591 = vshrl.u32 %v2590, 7
        %v2592 = vsub.s32 %v2589, %v2591
        %v2593 = vrot.slane %v2586, %v2592
        %v2594 = vcombine.low %v2500, %v2501
        %v2596 = vunpack.c.l.s4 1983009808
        %v2597 = vunpack.c.0.s8 %v2596
        %v2598 = vlaneseq
        %v2599 = vshrl.u32 %v2598, 7
        %v2600 = vsub.s32 %v2597, %v2599
        %v2601 = vrot.slane %v2594, %v2600
        %v2602 = vcombine.low %v2577, %v2585
        %v2603 = vcombine.high %v2577, %v2585
        %v2605 = vunpack.c.l.s4 1934713408
        %v2606 = vunpack.c.0.s8 %v2605
        %v2607 = vlaneseq
        %v2608 = vshrl.u32 %v2607, 7
        %v2609 = vsub.s32 %v2606, %v2608
        %v2610 = vrot.slane %v2602, %v2609
        %v2612 = vunpack.c.l.s4 1934713408
        %v2613 = vunpack.c.0.s8 %v2612
        %v2614 = vlaneseq
        %v2615 = vshrl.u32 %v2614, 7
        %v2616 = vsub.s32 %v2613, %v2615
        %v2617 = vrot.slane %v2603, %v2616
        %v2618 = vcombine.low %v2593, %v2601
        %v2619 = vcombine.high %v2593, %v2601
        %v2621 = vunpack.c.l.s4 1934713408
        %v2622 = vunpack.c.0.s8 %v2621
        %v2623 = vlaneseq
        %v2624 = vshrl.u32 %v2623, 7
        %v2625 = vsub.s32 %v2622, %v2624
        %v2626 = vrot.slane %v2618, %v2625
        %v2628 = vunpack.c.l.s4 1934713408
        %v2629 = vunpack.c.0.s8 %v2628
        %v2630 = vlaneseq
        %v2631 = vshrl.u32 %v2630, 7
        %v2632 = vsub.s32 %v2629, %v2631
        %v2633 = vrot.slane %v2619, %v2632
        %v2634 = vcombine.low %v2610, %v2626
        %v2635 = vcombine.high %v2610, %v2626
        %v2636 = vcombine.low %v2617, %v2633
        %v2637 = vcombine.high %v2617, %v2633
        %2640 = vrot.lane.b32.xlu0 %v2567, 32
        %v2641 = vpop.permute.xlu0 %2640
        %2642 = vrot.lane.b32.xlu0 %v2635, 32
        %v2643 = vpop.permute.xlu0 %2642
        %2648 = vrot.lane.b32.xlu0 %v2568, 64
        %v2649 = vpop.permute.xlu0 %2648
        %2650 = vrot.lane.b32.xlu0 %v2636, 64
        %v2651 = vpop.permute.xlu0 %2650
        %2656 = vrot.lane.b32.xlu0 %v2569, 96
        %v2657 = vpop.permute.xlu0 %2656
        %2658 = vrot.lane.b32.xlu0 %v2637, 96
        %v2659 = vpop.permute.xlu0 %2658
        %v2662 = vsel %vm1519, %v2566, %v2641
        %v2663 = vsel %vm1519, %v2634, %v2643
        %vm2664 = vcmask 523264
        %v2665 = vsel %vm2664, %v2662, %v2649
        %v2666 = vsel %vm2664, %v2663, %v2651
        %vm2667 = vcmask 785408
        %v2668 = vsel %vm2667, %v2665, %v2657
        %v2669 = vsel %vm2667, %v2666, %v2659
        %v2670 = vpack.c.bf16 %v2669, %v2668
        %v2671 = vld [vmem:[#allocation13] sm:$0xf]
        %v2672 = vld [vmem:[#allocation13 + $0x4] sm:$0xf]
        %v2673 = vld [vmem:[#allocation13 + $0x8] sm:$0xf]
        %v2674 = vld [vmem:[#allocation13 + $0xc] sm:$0xf]
        %v2675 = vld [vmem:[#allocation13 + $0x10] sm:$0xf]
        %v2676 = vld [vmem:[#allocation13 + $0x14] sm:$0xf]
        %v2677 = vld [vmem:[#allocation13 + $0x18] sm:$0xf]
        %v2678 = vld [vmem:[#allocation13 + $0x1c] sm:$0xf]
        %v2679 = vld [vmem:[#allocation13 + $0x20] sm:$0xf]
        %v2680 = vld [vmem:[#allocation13 + $0x24] sm:$0xf]
        %v2681 = vld [vmem:[#allocation13 + $0x28] sm:$0xf]
        %v2682 = vld [vmem:[#allocation13 + $0x2c] sm:$0xf]
        %v2683 = vld [vmem:[#allocation13 + $0x30] sm:$0xf]
        %v2684 = vld [vmem:[#allocation13 + $0x34] sm:$0xf]
        %v2685 = vld [vmem:[#allocation13 + $0x38] sm:$0xf]
        %v2686 = vld [vmem:[#allocation13 + $0x3c] sm:$0xf]
        %v2687 = vld [vmem:[#allocation15] sm:$0x1]
        %v2689 = vlaneseq
        %v2690 = vshrl.u32 %v2689, 7
        %v2691 = vsub.s32 0, %v2690
        %v2692 = vrot.slane %v2687, %v2691
        %v2710 = vunpack.c.l.b16 %v2671
        %v2711 = vunpack.c.l.b16 %v2672
        %v2712 = vunpack.c.l.b16 %v2673
        %v2713 = vunpack.c.l.b16 %v2674
        %v2714 = vunpack.c.l.b16 %v2675
        %v2715 = vunpack.c.l.b16 %v2676
        %v2716 = vunpack.c.l.b16 %v2677
        %v2717 = vunpack.c.l.b16 %v2678
        %v2718 = vunpack.c.l.b16 %v2679
        %v2719 = vunpack.c.l.b16 %v2680
        %v2720 = vunpack.c.l.b16 %v2681
        %v2721 = vunpack.c.l.b16 %v2682
        %v2722 = vunpack.c.l.b16 %v2683
        %v2723 = vunpack.c.l.b16 %v2684
        %v2724 = vunpack.c.l.b16 %v2685
        %v2725 = vunpack.c.l.b16 %v2686
        %v2726 = vpack.c.b16 %v2711, %v2710
        %v2727 = vpack.c.b16 %v2713, %v2712
        %v2728 = vpack.c.b16 %v2715, %v2714
        %v2729 = vpack.c.b16 %v2717, %v2716
        %v2730 = vpack.c.b16 %v2719, %v2718
        %v2731 = vpack.c.b16 %v2721, %v2720
        %v2732 = vpack.c.b16 %v2723, %v2722
        %v2733 = vpack.c.b16 %v2725, %v2724
        %2742 = vmatprep.subr.bf16.mxu0 0
        %2743 = vmatpush1.bf16.msra.mxu0 %v2726
        %2744 = vmatprep.subr.bf16.mxu0 0
        %2745 = vmatpush1.bf16.msra.mxu0 %v2727
        %2746 = vmatprep.subr.bf16.mxu0 0
        %2747 = vmatpush1.bf16.msra.mxu0 %v2728
        %2748 = vmatprep.subr.bf16.mxu0 0
        %2749 = vmatpush1.bf16.msra.mxu0 %v2729
        %2750 = vmatprep.subr.bf16.mxu0 0
        %2751 = vmatpush1.bf16.msra.mxu0 %v2730
        %2752 = vmatprep.subr.bf16.mxu0 0
        %2753 = vmatpush1.bf16.msra.mxu0 %v2731
        %2754 = vmatprep.subr.bf16.mxu0 0
        %2755 = vmatpush1.bf16.msra.mxu0 %v2732
        %2756 = vmatprep.subr.bf16.mxu0 0
        %2757 = vmatpush1.bf16.msra.mxu0 %v2733
        %2758 = vmatprep.subr.bf16.mxu0 0
        %2759 = vmatpush1.bf16.msra.mxu0 0
        %2760 = vmatprep.subr.bf16.mxu0 0
        %2761 = vmatpush1.bf16.msra.mxu0 0
        %2762 = vmatprep.subr.bf16.mxu0 0
        %2763 = vmatpush1.bf16.msra.mxu0 0
        %2764 = vmatprep.subr.bf16.mxu0 0
        %2765 = vmatpush1.bf16.msra.mxu0 0
        %2766 = vmatprep.subr.bf16.mxu0 0
        %2767 = vmatpush1.bf16.msra.mxu0 0
        %2768 = vmatprep.subr.bf16.mxu0 0
        %2769 = vmatpush1.bf16.msra.mxu0 0
        %2770 = vmatprep.subr.bf16.mxu0 0
        %2771 = vmatpush1.bf16.msra.mxu0 0
        %2772 = vmatprep.subr.bf16.mxu0 0
        %2773 = vmatpush1.bf16.msra.mxu0 0
        %2774 = vmatprep.mubr.bf16.mxu0 0
        %2775 = vmatmul.mubr.bf16.gmra.mrb[0].mxu0 %v2670
        %v2776 = vpop.f32.mrb[0].mxu0
        %v2777 = vadd.f32 %v2692, %v2776
        %v2778 = vpop.f32.mrb[0].mxu0
        %v2779 = vpop.f32.mrb[0].mxu0
        %v2780 = vadd.f32 %v2692, %v2779
        %v2781 = vpop.f32.mrb[0].mxu0
        %2782 = vdwg.mxu0
        %v2783 = vadd.f32 %v622, %v2777
        %v2784 = vadd.f32 %v623, %v2780
        %v2785 = vld [vmem:[#allocation16] sm:$0x1]
        %v2786 = vld [vmem:[#allocation18] sm:$0x1]
        %2787 = vadd.xlane.f32.xlu0 %v2783
        %v2788 = vpop.xlane.xlu0 %2787
        %2789 = vadd.xlane.f32.xlu0 %v2784
        %v2790 = vpop.xlane.xlu0 %2789
        %v2791 = vmul.f32 %v2788, %v630
        %v2792 = vmul.f32 %v2790, %v630
        %v2793 = vsub.f32 %v2783, %v2791
        %v2794 = vsub.f32 %v2784, %v2792
        %v2795 = vmul.f32 %v2793, %v2793
        %v2796 = vmul.f32 %v2794, %v2794
        %2797 = vadd.xlane.f32.xlu0 %v2795
        %v2798 = vpop.xlane.xlu0 %2797
        %2799 = vadd.xlane.f32.xlu0 %v2796
        %v2800 = vpop.xlane.xlu0 %2799
        %v2801 = vmul.f32 %v2798, %v630
        %v2802 = vmul.f32 %v2800, %v630
        %v2803 = vadd.f32 %v2801, 1e-05
        %v2804 = vadd.f32 %v2802, 1e-05
        %v2805 = vrsqrt.pop %v2803
        %v2806 = vrsqrt.pop %v2804
        %v2807 = vmul.f32 %v2793, %v2805
        %v2808 = vmul.f32 %v2794, %v2806
        %v2810 = vlaneseq
        %v2811 = vshrl.u32 %v2810, 7
        %v2812 = vsub.s32 0, %v2811
        %v2813 = vrot.slane %v2785, %v2812
        %v2815 = vmul.f32 %v2807, %v2813
        %v2816 = vmul.f32 %v2808, %v2813
        %v2818 = vlaneseq
        %v2819 = vshrl.u32 %v2818, 7
        %v2820 = vsub.s32 0, %v2819
        %v2821 = vrot.slane %v2786, %v2820
        %v2823 = vadd.f32 %v2815, %v2821
        %v2824 = vadd.f32 %v2816, %v2821
        %v2825 = vpack.c.bf16 %v2824, %v2823
        %v2826 = vld [vmem:[#allocation19] sm:$0xff]
        %v2827 = vld [vmem:[#allocation19 + $0x8] sm:$0xff]
        %v2828 = vld [vmem:[#allocation19 + $0x10] sm:$0xff]
        %v2829 = vld [vmem:[#allocation19 + $0x18] sm:$0xff]
        %v2830 = vld [vmem:[#allocation19 + $0x20] sm:$0xff]
        %v2831 = vld [vmem:[#allocation19 + $0x28] sm:$0xff]
        %v2832 = vld [vmem:[#allocation19 + $0x30] sm:$0xff]
        %v2833 = vld [vmem:[#allocation19 + $0x38] sm:$0xff]
        %v2834 = vld [vmem:[#allocation19 + $0x40] sm:$0xff]
        %v2835 = vld [vmem:[#allocation19 + $0x48] sm:$0xff]
        %v2836 = vld [vmem:[#allocation19 + $0x50] sm:$0xff]
        %v2837 = vld [vmem:[#allocation19 + $0x58] sm:$0xff]
        %v2838 = vld [vmem:[#allocation19 + $0x60] sm:$0xff]
        %v2839 = vld [vmem:[#allocation19 + $0x68] sm:$0xff]
        %v2840 = vld [vmem:[#allocation19 + $0x70] sm:$0xff]
        %v2841 = vld [vmem:[#allocation19 + $0x78] sm:$0xff]
        %v2842 = vld [vmem:[#allocation21] sm:$0x3]
        %v2844 = vlaneseq
        %v2845 = vshrl.u32 %v2844, 7
        %v2846 = vsub.s32 0, %v2845
        %v2847 = vrot.slane %v2842, %v2846
        %v2848 = vlaneseq
        %v2849 = vshrl.u32 %v2848, 7
        %v2850 = vsub.s32 1, %v2849
        %v2851 = vrot.slane %v2842, %v2850
        %v2870 = vunpack.c.l.b16 %v2826
        %v2871 = vunpack.c.h.b16 %v2826
        %v2872 = vunpack.c.l.b16 %v2827
        %v2873 = vunpack.c.h.b16 %v2827
        %v2874 = vunpack.c.l.b16 %v2828
        %v2875 = vunpack.c.h.b16 %v2828
        %v2876 = vunpack.c.l.b16 %v2829
        %v2877 = vunpack.c.h.b16 %v2829
        %v2878 = vunpack.c.l.b16 %v2830
        %v2879 = vunpack.c.h.b16 %v2830
        %v2880 = vunpack.c.l.b16 %v2831
        %v2881 = vunpack.c.h.b16 %v2831
        %v2882 = vunpack.c.l.b16 %v2832
        %v2883 = vunpack.c.h.b16 %v2832
        %v2884 = vunpack.c.l.b16 %v2833
        %v2885 = vunpack.c.h.b16 %v2833
        %v2886 = vunpack.c.l.b16 %v2834
        %v2887 = vunpack.c.h.b16 %v2834
        %v2888 = vunpack.c.l.b16 %v2835
        %v2889 = vunpack.c.h.b16 %v2835
        %v2890 = vunpack.c.l.b16 %v2836
        %v2891 = vunpack.c.h.b16 %v2836
        %v2892 = vunpack.c.l.b16 %v2837
        %v2893 = vunpack.c.h.b16 %v2837
        %v2894 = vunpack.c.l.b16 %v2838
        %v2895 = vunpack.c.h.b16 %v2838
        %v2896 = vunpack.c.l.b16 %v2839
        %v2897 = vunpack.c.h.b16 %v2839
        %v2898 = vunpack.c.l.b16 %v2840
        %v2899 = vunpack.c.h.b16 %v2840
        %v2900 = vunpack.c.l.b16 %v2841
        %v2901 = vunpack.c.h.b16 %v2841
        %v2902 = vpack.c.b16 %v2872, %v2870
        %v2903 = vpack.c.b16 %v2873, %v2871
        %v2904 = vpack.c.b16 %v2876, %v2874
        %v2905 = vpack.c.b16 %v2877, %v2875
        %v2906 = vpack.c.b16 %v2880, %v2878
        %v2907 = vpack.c.b16 %v2881, %v2879
        %v2908 = vpack.c.b16 %v2884, %v2882
        %v2909 = vpack.c.b16 %v2885, %v2883
        %v2910 = vpack.c.b16 %v2888, %v2886
        %v2911 = vpack.c.b16 %v2889, %v2887
        %v2912 = vpack.c.b16 %v2892, %v2890
        %v2913 = vpack.c.b16 %v2893, %v2891
        %v2914 = vpack.c.b16 %v2896, %v2894
        %v2915 = vpack.c.b16 %v2897, %v2895
        %v2916 = vpack.c.b16 %v2900, %v2898
        %v2917 = vpack.c.b16 %v2901, %v2899
        %2934 = vmatprep.subr.bf16.mxu0 %v2903
        %2935 = vmatpush1.bf16.msra.mxu0 %v2902
        %2936 = vmatprep.subr.bf16.mxu0 %v2905
        %2937 = vmatpush1.bf16.msra.mxu0 %v2904
        %2938 = vmatprep.subr.bf16.mxu0 %v2907
        %2939 = vmatpush1.bf16.msra.mxu0 %v2906
        %2940 = vmatprep.subr.bf16.mxu0 %v2909
        %2941 = vmatpush1.bf16.msra.mxu0 %v2908
        %2942 = vmatprep.subr.bf16.mxu0 %v2911
        %2943 = vmatpush1.bf16.msra.mxu0 %v2910
        %2944 = vmatprep.subr.bf16.mxu0 %v2913
        %2945 = vmatpush1.bf16.msra.mxu0 %v2912
        %2946 = vmatprep.subr.bf16.mxu0 %v2915
        %2947 = vmatpush1.bf16.msra.mxu0 %v2914
        %2948 = vmatprep.subr.bf16.mxu0 %v2917
        %2949 = vmatpush1.bf16.msra.mxu0 %v2916
        %2950 = vmatprep.subr.bf16.mxu0 0
        %2951 = vmatpush1.bf16.msra.mxu0 0
        %2952 = vmatprep.subr.bf16.mxu0 0
        %2953 = vmatpush1.bf16.msra.mxu0 0
        %2954 = vmatprep.subr.bf16.mxu0 0
        %2955 = vmatpush1.bf16.msra.mxu0 0
        %2956 = vmatprep.subr.bf16.mxu0 0
        %2957 = vmatpush1.bf16.msra.mxu0 0
        %2958 = vmatprep.subr.bf16.mxu0 0
        %2959 = vmatpush1.bf16.msra.mxu0 0
        %2960 = vmatprep.subr.bf16.mxu0 0
        %2961 = vmatpush1.bf16.msra.mxu0 0
        %2962 = vmatprep.subr.bf16.mxu0 0
        %2963 = vmatpush1.bf16.msra.mxu0 0
        %2964 = vmatprep.subr.bf16.mxu0 0
        %2965 = vmatpush1.bf16.msra.mxu0 0
        %2966 = vmatprep.mubr.bf16.mxu0 0
        %2967 = vmatmul.mubr.bf16.gmra.mrb[0].mxu0 %v2825
        %v2968 = vpop.f32.mrb[0].mxu0
        %v2969 = vadd.f32 %v2847, %v2968
        %v2970 = vpop.f32.mrb[0].mxu0
        %v2971 = vadd.f32 %v2851, %v2970
        %v2972 = vpop.f32.mrb[0].mxu0
        %v2973 = vadd.f32 %v2847, %v2972
        %v2974 = vpop.f32.mrb[0].mxu0
        %v2975 = vadd.f32 %v2851, %v2974
        %2976 = vdwg.mxu0
        %v2977 = vpack.c.bf16 %v2973, %v2969
        %v2978 = vpack.c.bf16 %v2975, %v2971
        %v2979 = vmul.bf16 %v2977, 1056980736
        %v2980 = vmul.bf16 %v2978, 1056980736
        %v2981 = vmul.bf16 %v2977, %v2977
        %v2982 = vmul.bf16 %v2978, %v2978
        %v2983 = vmul.bf16 %v2981, %v2977
        %v2984 = vmul.bf16 %v2982, %v2978
        %v2985 = vmul.bf16 %v2983, 1027030327
        %v2986 = vmul.bf16 %v2984, 1027030327
        %v2987 = vadd.bf16 %v2977, %v2985
        %v2988 = vadd.bf16 %v2978, %v2986
        %v2989 = vmul.bf16 %v2987, 1061961548
        %v2990 = vmul.bf16 %v2988, 1061961548
        %v2991 = vtanh.bf16.pop %v2989
        %v2992 = vtanh.bf16.pop %v2990
        %v2993 = vadd.bf16 %v2991, 1065369472
        %v2994 = vadd.bf16 %v2992, 1065369472
        %v2995 = vmul.bf16 %v2979, %v2993
        %v2996 = vmul.bf16 %v2980, %v2994
        %v2997 = vld [vmem:[#allocation22] sm:$0xf]
        %v2998 = vld [vmem:[#allocation22 + $0x4] sm:$0xf]
        %v2999 = vld [vmem:[#allocation22 + $0x8] sm:$0xf]
        %v3000 = vld [vmem:[#allocation22 + $0xc] sm:$0xf]
        %v3001 = vld [vmem:[#allocation22 + $0x10] sm:$0xf]
        %v3002 = vld [vmem:[#allocation22 + $0x14] sm:$0xf]
        %v3003 = vld [vmem:[#allocation22 + $0x18] sm:$0xf]
        %v3004 = vld [vmem:[#allocation22 + $0x1c] sm:$0xf]
        %v3005 = vld [vmem:[#allocation22 + $0x20] sm:$0xf]
        %v3006 = vld [vmem:[#allocation22 + $0x24] sm:$0xf]
        %v3007 = vld [vmem:[#allocation22 + $0x28] sm:$0xf]
        %v3008 = vld [vmem:[#allocation22 + $0x2c] sm:$0xf]
        %v3009 = vld [vmem:[#allocation22 + $0x30] sm:$0xf]
        %v3010 = vld [vmem:[#allocation22 + $0x34] sm:$0xf]
        %v3011 = vld [vmem:[#allocation22 + $0x38] sm:$0xf]
        %v3012 = vld [vmem:[#allocation22 + $0x3c] sm:$0xf]
        %v3013 = vld [vmem:[#allocation22 + $0x40] sm:$0xf]
        %v3014 = vld [vmem:[#allocation22 + $0x44] sm:$0xf]
        %v3015 = vld [vmem:[#allocation22 + $0x48] sm:$0xf]
        %v3016 = vld [vmem:[#allocation22 + $0x4c] sm:$0xf]
        %v3017 = vld [vmem:[#allocation22 + $0x50] sm:$0xf]
        %v3018 = vld [vmem:[#allocation22 + $0x54] sm:$0xf]
        %v3019 = vld [vmem:[#allocation22 + $0x58] sm:$0xf]
        %v3020 = vld [vmem:[#allocation22 + $0x5c] sm:$0xf]
        %v3021 = vld [vmem:[#allocation22 + $0x60] sm:$0xf]
        %v3022 = vld [vmem:[#allocation22 + $0x64] sm:$0xf]
        %v3023 = vld [vmem:[#allocation22 + $0x68] sm:$0xf]
        %v3024 = vld [vmem:[#allocation22 + $0x6c] sm:$0xf]
        %v3025 = vld [vmem:[#allocation22 + $0x70] sm:$0xf]
        %v3026 = vld [vmem:[#allocation22 + $0x74] sm:$0xf]
        %v3027 = vld [vmem:[#allocation22 + $0x78] sm:$0xf]
        %v3028 = vld [vmem:[#allocation22 + $0x7c] sm:$0xf]
        %v3029 = vld [vmem:[#allocation24] sm:$0x1]
        %v3031 = vlaneseq
        %v3032 = vshrl.u32 %v3031, 7
        %v3033 = vsub.s32 0, %v3032
        %v3034 = vrot.slane %v3029, %v3033
        %v3068 = vunpack.c.l.b16 %v2997
        %v3069 = vunpack.c.l.b16 %v2998
        %v3070 = vunpack.c.l.b16 %v2999
        %v3071 = vunpack.c.l.b16 %v3000
        %v3072 = vunpack.c.l.b16 %v3001
        %v3073 = vunpack.c.l.b16 %v3002
        %v3074 = vunpack.c.l.b16 %v3003
        %v3075 = vunpack.c.l.b16 %v3004
        %v3076 = vunpack.c.l.b16 %v3005
        %v3077 = vunpack.c.l.b16 %v3006
        %v3078 = vunpack.c.l.b16 %v3007
        %v3079 = vunpack.c.l.b16 %v3008
        %v3080 = vunpack.c.l.b16 %v3009
        %v3081 = vunpack.c.l.b16 %v3010
        %v3082 = vunpack.c.l.b16 %v3011
        %v3083 = vunpack.c.l.b16 %v3012
        %v3084 = vunpack.c.l.b16 %v3013
        %v3085 = vunpack.c.l.b16 %v3014
        %v3086 = vunpack.c.l.b16 %v3015
        %v3087 = vunpack.c.l.b16 %v3016
        %v3088 = vunpack.c.l.b16 %v3017
        %v3089 = vunpack.c.l.b16 %v3018
        %v3090 = vunpack.c.l.b16 %v3019
        %v3091 = vunpack.c.l.b16 %v3020
        %v3092 = vunpack.c.l.b16 %v3021
        %v3093 = vunpack.c.l.b16 %v3022
        %v3094 = vunpack.c.l.b16 %v3023
        %v3095 = vunpack.c.l.b16 %v3024
        %v3096 = vunpack.c.l.b16 %v3025
        %v3097 = vunpack.c.l.b16 %v3026
        %v3098 = vunpack.c.l.b16 %v3027
        %v3099 = vunpack.c.l.b16 %v3028
        %v3100 = vpack.c.b16 %v3069, %v3068
        %v3101 = vpack.c.b16 %v3071, %v3070
        %v3102 = vpack.c.b16 %v3073, %v3072
        %v3103 = vpack.c.b16 %v3075, %v3074
        %v3104 = vpack.c.b16 %v3077, %v3076
        %v3105 = vpack.c.b16 %v3079, %v3078
        %v3106 = vpack.c.b16 %v3081, %v3080
        %v3107 = vpack.c.b16 %v3083, %v3082
        %v3108 = vpack.c.b16 %v3085, %v3084
        %v3109 = vpack.c.b16 %v3087, %v3086
        %v3110 = vpack.c.b16 %v3089, %v3088
        %v3111 = vpack.c.b16 %v3091, %v3090
        %v3112 = vpack.c.b16 %v3093, %v3092
        %v3113 = vpack.c.b16 %v3095, %v3094
        %v3114 = vpack.c.b16 %v3097, %v3096
        %v3115 = vpack.c.b16 %v3099, %v3098
        %3132 = vmatprep.subr.bf16.mxu0 0
        %3133 = vmatpush1.bf16.msra.mxu0 %v3100
        %3134 = vmatprep.subr.bf16.mxu0 0
        %3135 = vmatpush1.bf16.msra.mxu0 %v3101
        %3136 = vmatprep.subr.bf16.mxu0 0
        %3137 = vmatpush1.bf16.msra.mxu0 %v3102
        %3138 = vmatprep.subr.bf16.mxu0 0
        %3139 = vmatpush1.bf16.msra.mxu0 %v3103
        %3140 = vmatprep.subr.bf16.mxu0 0
        %3141 = vmatpush1.bf16.msra.mxu0 %v3104
        %3142 = vmatprep.subr.bf16.mxu0 0
        %3143 = vmatpush1.bf16.msra.mxu0 %v3105
        %3144 = vmatprep.subr.bf16.mxu0 0
        %3145 = vmatpush1.bf16.msra.mxu0 %v3106
        %3146 = vmatprep.subr.bf16.mxu0 0
        %3147 = vmatpush1.bf16.msra.mxu0 %v3107
        %3148 = vmatprep.subr.bf16.mxu0 0
        %3149 = vmatpush1.bf16.msra.mxu0 %v3108
        %3150 = vmatprep.subr.bf16.mxu0 0
        %3151 = vmatpush1.bf16.msra.mxu0 %v3109
        %3152 = vmatprep.subr.bf16.mxu0 0
        %3153 = vmatpush1.bf16.msra.mxu0 %v3110
        %3154 = vmatprep.subr.bf16.mxu0 0
        %3155 = vmatpush1.bf16.msra.mxu0 %v3111
        %3156 = vmatprep.subr.bf16.mxu0 0
        %3157 = vmatpush1.bf16.msra.mxu0 %v3112
        %3158 = vmatprep.subr.bf16.mxu0 0
        %3159 = vmatpush1.bf16.msra.mxu0 %v3113
        %3160 = vmatprep.subr.bf16.mxu0 0
        %3161 = vmatpush1.bf16.msra.mxu0 %v3114
        %3162 = vmatprep.subr.bf16.mxu0 0
        %3163 = vmatpush1.bf16.msra.mxu0 %v3115
        %3164 = vmatprep.mubr.bf16.mxu0 %v2996
        %3165 = vmatmul.mubr.bf16.gmra.mrb[0].mxu0 %v2995
        %v3166 = vpop.f32.mrb[0].mxu0
        %v3167 = vadd.f32 %v3034, %v3166
        %v3168 = vpop.f32.mrb[0].mxu0
        %v3169 = vpop.f32.mrb[0].mxu0
        %v3170 = vadd.f32 %v3034, %v3169
        %v3171 = vpop.f32.mrb[0].mxu0
        %3172 = vdwg.mxu0
        %v3173 = vadd.f32 %v2783, %v3167
        %v3174 = vadd.f32 %v2784, %v3170
        %3175 = vst [vmem:[%s616] sm:$0xff] %v3173
        %3176 = vst [vmem:[%s616 + $0x8] sm:$0xff] %v3174
        %s3177 = sand.u32 %s322, 1
        %s3178 = scalar_lea.sflag [#allocation6], %s3177
        %s3179 = sand.u32 %s322, 1
        %s3180 = smul.addr %s3179, 16
        %s3181 = scalar_lea.vmem [#allocation25], %s3180
        // Predicated region
        $region125: #{tpu_custom_call.1} parent=71 // pred_check
          %p3182 = pneg %p332
        $region126: #{tpu_custom_call.1} parent=71 // pred_check_branch
          %3184 = sbr.rel (%p3182) target = $region128
        $region127: #{tpu_custom_call.1} parent=71 // pred_region
          %s3186 = ssub.s32 256, 256
          %3187 = vsyncadd %s3178, %s3186
          %s3188 = smul.addr %s36, 2
          %s3189 = smul.addr %s3188, 128
          %s3190 = scalar_lea.hbm %s13, %s3189
          %s3191 = sshll.u32 %s3181, 4
          %s3192 = int_to_ptr.vmem [resolvable:$true] %s3191
          %3197 = dma.vmem_to_hbm [thread:$0]  %s3192, 256, %s3190, %s3178, 128, 128, 8
        $region128: #{tpu_custom_call.1} parent=71 // pred_fallthru
          _
      $region72: #{tpu_custom_call.1} parent=5 // pred_fallthru
        _
      %p3198 = scmp.le.s32.totalorder 2, %s31
      // Predicated region
      $region129: #{tpu_custom_call.1} parent=5 // pred_check
        %p3199 = pneg %p3198
      $region130: #{tpu_custom_call.1} parent=5 // pred_check_branch
        %3201 = sbr.rel (%p3199) target = $region132
      $region131: #{tpu_custom_call.1} parent=5 // pred_region
        %s3202 = ssub.s32 %s31, 2
        // Predicated region
        $region133: #{tpu_custom_call.1} parent=131 // pred_check
          %p3203 = pneg %p338
        $region134: #{tpu_custom_call.1} parent=131 // pred_check_branch
          %3205 = sbr.rel (%p3203) target = $region136
        $region135: #{tpu_custom_call.1} parent=131 // pred_region
          %s3206 = sand.u32 %s323, 1
          %s3207 = scalar_lea.sflag [#allocation6], %s3206
          %s3208 = sand.u32 %s323, 1
          %s3209 = smul.addr %s3208, 16
          %s3210 = scalar_lea.vmem [#allocation25], %s3209
          %3211 = dma.done %s3207, 256
        $region136: #{tpu_custom_call.1} parent=131 // pred_fallthru
          _
      $region132: #{tpu_custom_call.1} parent=5 // pred_fallthru
        _
    $region6: #{tpu_custom_call.1} parent=1 // loop_footer
      %s35 = sadd.s32 1, %s31
    $region7: #{tpu_custom_call.1} parent=1 // loop_footer_branch
      %30 = sbr.rel target = $region3
    $region8: #{tpu_custom_call.1} parent=1 // loop_exit
      _
    %3212 = vsyncpa [#allocation5], 1
    %s3213 = scalar_lea.sflag [#allocation5], 1
    %3214 = vsyncpa %s3213, 1
    %3215 = vsyncpa [#allocation8], 1
    %3216 = vsyncpa [#allocation11], 1
    %3217 = vsyncpa [#allocation14], 1
    %3218 = vsyncpa [#allocation17], 1
    %3219 = vsyncpa [#allocation20], 1
    %3220 = vsyncpa [#allocation23], 1
    %3221 = vsyncpa [#allocation6], 1
    %s3222 = scalar_lea.sflag [#allocation6], 1
    %3223 = vsyncpa %s3222, 1

</llo_original>
